<compile_context>
chip_gen: v6e
topology: v6e:2x2x1
jax: 0.10.0
libtpu: 0.0.40
codegen_flags: <defaults>
</compile_context>

<pallas_src>
import functools

import jax
import jax.numpy as jnp
import numpy as np
from jax.experimental import pallas as pl
from jax.experimental.pallas import tpu as pltpu

WH = 96          # CNET.getSize default -> fixes the Flatten->Linear input size.
PH = WH // 2     # 48: phase-plane height/width (2x2 phase decomposition)
NQ = PH * PH     # 2304: flattened phase-plane size (lane dim, multiple of 128)

NETDATA = {
    "iSize": 4,
    "nLayer": 4,
    "fSize": [3, 3, -1, 32],
    "nUnit": [8, 8],
    "padding": [1, 1],
    "stride": [1, 2],
    "act": ["relu", "leakyRelu", "linear", "tanh"],
    "linear": False,
    # 'BN' omitted -> defaults to all False (as in CNET.__init__)
}

C_IN = NETDATA["iSize"]       # 4
C1 = NETDATA["nUnit"][0]      # 8
C2 = NETDATA["nUnit"][1]      # 8
F_OUT = NETDATA["fSize"][3]   # 32
LIN_IN = C2 * NQ              # 18432 == CNET.getSize(WH=96)
LEAKY_SLOPE = 0.2             # getActivation default for 'leakyRelu'

# Tie the hard-coded WH to the Linear size so a future shape change fails loudly.
assert WH % 2 == 0 and PH == WH // 2 and NQ == PH * PH
assert NQ % 128 == 0, "phase planes must be lane-dense"
assert LIN_IN == C2 * NQ, "Linear in-features must match the conv2 output size"


# ----------------------------------------------------------------------------
# Fused Pallas kernel: `nb` images per grid step (concatenated along lanes).
# ----------------------------------------------------------------------------
def _cnet_fused_kernel(nb, x_ref, mask_ref, w1_ref, w2_ref, wl_ref, o_ref,
                       taps_ref, o1_ref):
    """conv1+ReLU -> conv2+LeakyReLU(0.2) -> flatten -> linear+tanh.

    Layouts (channel-major / lane-dense, flat q = y*48 + x, image b at lane
    offset b*NQ):
      x_ref    [1, 4, C_IN, L]     input phases, phase p = (row%2)*2 + (col%2)
      mask_ref [9, 1, L]           validity mask for shift (dy,dx), idx (dy+1)*3+(dx+1)
      w1_ref   [4*C1, 16*C_IN]     conv1 weights, row = phase*C1+co, col = plane*C_IN+ci
      w2_ref   [C2, 9*C1]          conv2 weights, col = tap*C1+ci
      wl_ref   [NQ, C2*F_OUT]      linear weights, col = c*F_OUT+f (block-diag trick)
      o_ref    [1, nb, F_OUT]
      taps_ref [9*C1, L] bf16      VMEM scratch: staged dot operands (shared)
      o1_ref   [4*C1, L] f32       VMEM scratch: conv1 output (4 phases stacked)
    """
    f32 = jnp.float32
    bf16 = jnp.bfloat16
    L = nb * NQ

    def shifted(src, dy, dx):
        # Value at output position q becomes src[:, q + dy*48 + dx]; positions
        # whose shifted (row, col) leaves the 48x48 phase plane are zeroed.
        # The same mask also kills cross-row / cross-image roll wrap-around.
        d = dy * PH + dx
        v = src
        if d != 0:
            v = pltpu.roll(v, shift=(-d) % L, axis=1)
            v = v * mask_ref[(dy + 1) * 3 + (dx + 1)]   # [1, L] broadcast
        return v

    # ---- stage the 16 DISTINCT shifted conv1 input planes (dedup 36 -> 16) --
    for vr in range(-1, 3):                 # full-res row offset of the tap
        pr, dy = vr % 2, vr // 2
        for vc in range(-1, 3):             # full-res col offset of the tap
            pc, dx = vc % 2, vc // 2
            s = (vr + 1) * 4 + (vc + 1)     # plane index in [0, 16)
            v = shifted(x_ref[0, pr * 2 + pc], dy, dx)          # [C_IN, L] f32
            taps_ref[pl.ds(s * C_IN, C_IN), :] = v.astype(bf16)

    # ---- conv1: ALL 4 output phases in ONE K=64 bf16 MXU matmul, then ReLU --
    c1 = jnp.dot(w1_ref[...], taps_ref[pl.ds(0, 16 * C_IN), :],
                 preferred_element_type=f32)                    # [4*C1, L]
    o1_ref[...] = jnp.maximum(c1, 0.0)                          # ReLU

    # ---- stage the 9 stride-2 conv2 taps (bf16) -----------------------------
    for ky in range(3):
        vr = ky - 1
        pr, dy = vr % 2, vr // 2
        for kx in range(3):
            vc = kx - 1
            pc, dx = vc % 2, vc // 2
            src = o1_ref[pl.ds((pr * 2 + pc) * C1, C1), :]      # [C1, L] f32
            v = shifted(src, dy, dx)
            taps_ref[pl.ds((ky * 3 + kx) * C1, C1), :] = v.astype(bf16)

    # ---- conv2: ONE K=72 bf16 matmul, then LeakyReLU(0.2) -------------------
    c2 = jnp.dot(w2_ref[...], taps_ref[...], preferred_element_type=f32)  # [C2, L]
    a2 = jnp.where(c2 > 0, c2, LEAKY_SLOPE * c2)

    # ---- flatten (NCHW order == (channel, q) here) + Linear + tanh ----------
    # wl is packed as [q, c*F_OUT + f]; one [C2, NQ] @ [NQ, C2*F_OUT] dot per
    # image, then the C2 diagonal 32-wide blocks are summed (block-diag trick:
    # lane-dense RHS, no a2 scratch round trip, one MXU pass with K=2304).
    outs = []
    for b in range(nb):
        a2b = a2[:, b * NQ:(b + 1) * NQ].astype(bf16)                 # [C2, NQ]
        r = jnp.dot(a2b, wl_ref[...], preferred_element_type=f32)     # [C2, C2*F_OUT]
        acc = r[0:1, 0:F_OUT]
        for c in range(1, C2):
            acc = acc + r[c:c + 1, c * F_OUT:(c + 1) * F_OUT]
        outs.append(jnp.tanh(acc))                                    # [1, F_OUT]
    o_ref[0] = outs[0] if nb == 1 else jnp.concatenate(outs, axis=0)


# ----------------------------------------------------------------------------
# Build-time parameter construction and one-time re-layout for the kernel.
# ----------------------------------------------------------------------------
def build_cnet_params(key):
    """PyTorch-layout CNET parameters for NETDATA (all bias=False)."""
    k1, k2, k3 = jax.random.split(key, 3)
    return {
        "conv_1": 0.1 * jax.random.normal(k1, (C1, C_IN, 3, 3), jnp.float32),
        "conv_2": 0.1 * jax.random.normal(k2, (C2, C1, 3, 3), jnp.float32),
        "MLP_4": 0.01 * jax.random.normal(k3, (F_OUT, LIN_IN), jnp.float32),
    }


def _build_shift_masks():
    y = jnp.arange(PH).reshape(PH, 1)
    x = jnp.arange(PH).reshape(1, PH)
    rows = []
    for dy in (-1, 0, 1):
        for dx in (-1, 0, 1):
            ok = (y + dy >= 0) & (y + dy < PH) & (x + dx >= 0) & (x + dx < PH)
            rows.append(ok.reshape(1, NQ).astype(jnp.float32))
    return jnp.stack(rows, axis=0)                       # [9, 1, NQ] f32


def pack_cnet_params(params):
    """One-time weight re-layout (tap-stacked, bf16, lane-dense linear)."""
    w1 = np.asarray(params["conv_1"], np.float32)        # [C1, C_IN, 3, 3]
    w2 = np.asarray(params["conv_2"], np.float32)        # [C2, C1, 3, 3]
    wl = np.asarray(params["MLP_4"], np.float32)         # [F_OUT, LIN_IN]

    # conv1: per-output-phase weights over the 16 distinct shifted planes,
    # stacked along M so all 4 phases come out of a single matmul.
    w1all = np.zeros((4 * C1, 16 * C_IN), np.float32)
    for ry in range(2):
        for rx in range(2):
            ph = ry * 2 + rx
            for ky in range(3):
                for kx in range(3):
                    s = (ry + ky) * 4 + (rx + kx)        # == (vr+1)*4 + (vc+1)
                    w1all[ph * C1:(ph + 1) * C1,
                          s * C_IN:(s + 1) * C_IN] = w1[:, :, ky, kx]

    # conv2: 9 taps stacked along K; col = (ky*3+kx)*C1 + ci.
    w2s = np.transpose(w2, (0, 2, 3, 1)).reshape(C2, 9 * C1)

    # linear: in-feature index is c*NQ + q (PyTorch NCHW flatten) -> repack to
    # [q, c*F_OUT + f]: lane dim 256 (multiple of 128), no padding, no stride.
    wlp = np.transpose(wl.reshape(F_OUT, C2, NQ), (2, 1, 0)).reshape(NQ, C2 * F_OUT)

    return (jnp.asarray(w1all, jnp.bfloat16),
            jnp.asarray(w2s, jnp.bfloat16),
            jnp.asarray(wlp, jnp.bfloat16),
            _build_shift_masks())


# ----------------------------------------------------------------------------
# Forward pass: phase-decompose the input (layout plumbing only) + fused kernel.
# ----------------------------------------------------------------------------
@functools.partial(jax.jit, static_argnames=("images_per_step",))
def cnet_forward(x_nchw, w1all, w2s, wlp, masks_img, images_per_step=1):
    n, c, h, w = x_nchw.shape
    assert (c, h, w) == (C_IN, WH, WH), (c, h, w)
    nb = images_per_step                  # images merged along lanes per step
    assert n % nb == 0, (n, nb)
    steps = n // nb
    L = nb * NQ

    # 2x2 phase decomposition via one reshape+transpose (single fused XLA op):
    # phase index = (row%2)*2 + (col%2), within-phase q = (row//2)*48 + (col//2).
    xph = x_nchw.reshape(n, c, PH, 2, PH, 2)
    xph = jnp.transpose(xph, (0, 3, 5, 1, 2, 4)).reshape(n, 4, c, NQ)
    # Group nb consecutive images side by side along the lane axis.
    xph = xph.reshape(steps, nb, 4, c, NQ)
    xph = jnp.transpose(xph, (0, 2, 3, 1, 4)).reshape(steps, 4, c, L)

    masks = jnp.tile(masks_img, (1, 1, nb))              # [9, 1, L]

    kernel = functools.partial(_cnet_fused_kernel, nb)
    out = pl.pallas_call(
        kernel,
        out_shape=jax.ShapeDtypeStruct((steps, nb, F_OUT), jnp.float32),
        grid=(steps,),
        in_specs=[
            pl.BlockSpec((1, 4, C_IN, L), lambda i: (i, 0, 0, 0)),
            pl.BlockSpec((9, 1, L), lambda i: (0, 0, 0)),
            pl.BlockSpec((4 * C1, 16 * C_IN), lambda i: (0, 0)),
            pl.BlockSpec((C2, 9 * C1), lambda i: (0, 0)),
            pl.BlockSpec((NQ, C2 * F_OUT), lambda i: (0, 0)),
        ],
        out_specs=pl.BlockSpec((1, nb, F_OUT), lambda i: (i, 0, 0)),
        scratch_shapes=[
            pltpu.VMEM((9 * C1, L), jnp.bfloat16),   # staged bf16 dot operands
            pltpu.VMEM((4 * C1, L), jnp.float32),    # conv1 output (4 phases)
        ],
        compiler_params=pltpu.CompilerParams(
            # One image per step -> both v7x TensorCores; single-TC chips
            # (v5e/v6e) should instead pass images_per_step=batch (one wide step).
            dimension_semantics=("parallel",),
        ),
    )(xph, masks, w1all, w2s, wlp)
    return out.reshape(n, F_OUT)


# ----------------------------------------------------------------------------
# Plain-XLA reference of the same forward pass (for a numerical self-check).
# ----------------------------------------------------------------------------
def cnet_reference(x_nchw, params):
    hp = jax.lax.Precision.HIGHEST
    y = jax.lax.conv_general_dilated(
        x_nchw, params["conv_1"], window_strides=(1, 1), padding=((1, 1), (1, 1)),
        dimension_numbers=("NCHW", "OIHW", "NCHW"), precision=hp)
    y = jnp.maximum(y, 0.0)                              # ReLU
    y = jax.lax.conv_general_dilated(
        y, params["conv_2"], window_strides=(2, 2), padding=((1, 1), (1, 1)),
        dimension_numbers=("NCHW", "OIHW", "NCHW"), precision=hp)
    y = jnp.where(y > 0, y, LEAKY_SLOPE * y)             # LeakyReLU(0.2)
    y = y.reshape(y.shape[0], -1)                        # nn.Flatten (NCHW order)
    return jnp.tanh(jnp.dot(y, params["MLP_4"].T, precision=hp))


if __name__ == "__main__":
    key = jax.random.PRNGKey(0)
    k_param, k_x = jax.random.split(key)

    params = build_cnet_params(k_param)
    packed = pack_cnet_params(params)                    # w1all, w2s, wlp, masks

    # Input: batch=2, channels=iSize=4, spatial=96x96 (CNET.getSize hardcodes
    # WH=96, which sizes the Linear layer, so the runtime input must be 96x96).
    x = jax.random.normal(k_x, (2, C_IN, WH, WH), jnp.float32)
    ref = cnet_reference(x, params)

    # v7x-style: one image per grid step, both TensorCores in parallel.
    out_par = jax.block_until_ready(cnet_forward(x, *packed, images_per_step=1))
    # v5e/v6e-style: both images merged along the lane axis in a single step.
    out_mrg = jax.block_until_ready(cnet_forward(x, *packed, images_per_step=2))

    for out in (out_par, out_mrg):
        assert out.shape == (2, F_OUT), out.shape
        assert out.dtype == jnp.float32
        max_err = float(jnp.max(jnp.abs(out - ref)))
        assert max_err < 2e-2, f"max abs error vs reference: {max_err}"

    print("KERNEL_OK")
</pallas_src>

<mosaic_0001>
module attributes {stable_mosaic.version = 11 : i64} {
  func.func @_cnet_fused_kernel(%arg0: i32, %arg1: memref<1x4x4x2304xf32, #tpu.memory_space<vmem>>, %arg2: memref<9x1x2304xf32, #tpu.memory_space<vmem>>, %arg3: memref<32x64xbf16, #tpu.memory_space<vmem>>, %arg4: memref<8x72xbf16, #tpu.memory_space<vmem>>, %arg5: memref<2304x256xbf16, #tpu.memory_space<vmem>>, %arg6: memref<1x1x32xf32, #tpu.memory_space<vmem>>, %arg7: memref<72x2304xbf16, #tpu.memory_space<vmem>>, %arg8: memref<32x2304xf32, #tpu.memory_space<vmem>>) attributes {dimension_semantics = [#tpu.dimension_semantics<parallel>], iteration_bounds = array<i64: 2>, scalar_prefetch = 0 : i64, scratch_operands = 2 : i64, tpu.core_type = #tpu.core_type<tc>, window_params = [{transform_indices = @transform_0, window_bounds = array<i64: 1, 4, 4, 2304>}, {pipeline_mode = #tpu.pipeline_mode<synchronous>, transform_indices = @transform_1, window_bounds = array<i64: 9, 1, 2304>}, {pipeline_mode = #tpu.pipeline_mode<synchronous>, transform_indices = @transform_2, window_bounds = array<i64: 32, 64>}, {pipeline_mode = #tpu.pipeline_mode<synchronous>, transform_indices = @transform_3, window_bounds = array<i64: 8, 72>}, {pipeline_mode = #tpu.pipeline_mode<synchronous>, transform_indices = @transform_4, window_bounds = array<i64: 2304, 256>}, {transform_indices = @transform_5, window_bounds = array<i64: 1, 1, 32>}]} {
    %c0 = arith.constant 0 : index
    %c3 = arith.constant 3 : index
    %c0_0 = arith.constant 0 : index
    %c0_1 = arith.constant 0 : index
    %0 = vector.load %arg1[%c0, %c3, %c0_0, %c0_1] : memref<1x4x4x2304xf32, #tpu.memory_space<vmem>>, vector<1x1x4x2304xf32>
    %1 = vector.shape_cast %0 : vector<1x1x4x2304xf32> to vector<4x2304xf32>
    %c49_i32 = arith.constant 49 : i32
    %2 = tpu.dynamic_rotate %1 by %c49_i32 dim 1 : vector<4x2304xf32>, i32 -> vector<4x2304xf32>
    %c0_2 = arith.constant 0 : index
    %c0_3 = arith.constant 0 : index
    %c0_4 = arith.constant 0 : index
    %3 = vector.load %arg2[%c0_2, %c0_3, %c0_4] : memref<9x1x2304xf32, #tpu.memory_space<vmem>>, vector<1x1x2304xf32>
    %4 = vector.shape_cast %3 : vector<1x1x2304xf32> to vector<1x2304xf32>
    %5 = vector.broadcast %4 : vector<1x2304xf32> to vector<4x2304xf32>
    %6 = arith.mulf %2, %5 : vector<4x2304xf32>
    %7 = arith.truncf %6 : vector<4x2304xf32> to vector<4x2304xbf16>
    %c0_5 = arith.constant 0 : index
    %c0_6 = arith.constant 0 : index
    %8 = vector.load %arg7[%c0_5, %c0_6] : memref<72x2304xbf16, #tpu.memory_space<vmem>>, vector<4x2304xbf16>
    tpu.vector_store %arg7[%c0_5, %c0_6], %7 {strides = array<i32>} : memref<72x2304xbf16, #tpu.memory_space<vmem>>, vector<4x2304xbf16>,
    %c0_7 = arith.constant 0 : index
    %c2 = arith.constant 2 : index
    %c0_8 = arith.constant 0 : index
    %c0_9 = arith.constant 0 : index
    %9 = vector.load %arg1[%c0_7, %c2, %c0_8, %c0_9] : memref<1x4x4x2304xf32, #tpu.memory_space<vmem>>, vector<1x1x4x2304xf32>
    %10 = vector.shape_cast %9 : vector<1x1x4x2304xf32> to vector<4x2304xf32>
    %c48_i32 = arith.constant 48 : i32
    %11 = tpu.dynamic_rotate %10 by %c48_i32 dim 1 : vector<4x2304xf32>, i32 -> vector<4x2304xf32>
    %c1 = arith.constant 1 : index
    %c0_10 = arith.constant 0 : index
    %c0_11 = arith.constant 0 : index
    %12 = vector.load %arg2[%c1, %c0_10, %c0_11] : memref<9x1x2304xf32, #tpu.memory_space<vmem>>, vector<1x1x2304xf32>
    %13 = vector.shape_cast %12 : vector<1x1x2304xf32> to vector<1x2304xf32>
    %14 = vector.broadcast %13 : vector<1x2304xf32> to vector<4x2304xf32>
    %15 = arith.mulf %11, %14 : vector<4x2304xf32>
    %16 = arith.truncf %15 : vector<4x2304xf32> to vector<4x2304xbf16>
    %c4 = arith.constant 4 : index
    %c0_12 = arith.constant 0 : index
    %17 = vector.load %arg7[%c4, %c0_12] : memref<72x2304xbf16, #tpu.memory_space<vmem>>, vector<4x2304xbf16>
    tpu.vector_store %arg7[%c4, %c0_12], %16 {strides = array<i32>} : memref<72x2304xbf16, #tpu.memory_space<vmem>>, vector<4x2304xbf16>,
    %c0_13 = arith.constant 0 : index
    %c3_14 = arith.constant 3 : index
    %c0_15 = arith.constant 0 : index
    %c0_16 = arith.constant 0 : index
    %18 = vector.load %arg1[%c0_13, %c3_14, %c0_15, %c0_16] : memref<1x4x4x2304xf32, #tpu.memory_space<vmem>>, vector<1x1x4x2304xf32>
    %19 = vector.shape_cast %18 : vector<1x1x4x2304xf32> to vector<4x2304xf32>
    %c48_i32_17 = arith.constant 48 : i32
    %20 = tpu.dynamic_rotate %19 by %c48_i32_17 dim 1 : vector<4x2304xf32>, i32 -> vector<4x2304xf32>
    %c1_18 = arith.constant 1 : index
    %c0_19 = arith.constant 0 : index
    %c0_20 = arith.constant 0 : index
    %21 = vector.load %arg2[%c1_18, %c0_19, %c0_20] : memref<9x1x2304xf32, #tpu.memory_space<vmem>>, vector<1x1x2304xf32>
    %22 = vector.shape_cast %21 : vector<1x1x2304xf32> to vector<1x2304xf32>
    %23 = vector.broadcast %22 : vector<1x2304xf32> to vector<4x2304xf32>
    %24 = arith.mulf %20, %23 : vector<4x2304xf32>
    %25 = arith.truncf %24 : vector<4x2304xf32> to vector<4x2304xbf16>
    %c8 = arith.constant 8 : index
    %c0_21 = arith.constant 0 : index
    %26 = vector.load %arg7[%c8, %c0_21] : memref<72x2304xbf16, #tpu.memory_space<vmem>>, vector<4x2304xbf16>
    tpu.vector_store %arg7[%c8, %c0_21], %25 {strides = array<i32>} : memref<72x2304xbf16, #tpu.memory_space<vmem>>, vector<4x2304xbf16>,
    %c0_22 = arith.constant 0 : index
    %c2_23 = arith.constant 2 : index
    %c0_24 = arith.constant 0 : index
    %c0_25 = arith.constant 0 : index
    %27 = vector.load %arg1[%c0_22, %c2_23, %c0_24, %c0_25] : memref<1x4x4x2304xf32, #tpu.memory_space<vmem>>, vector<1x1x4x2304xf32>
    %28 = vector.shape_cast %27 : vector<1x1x4x2304xf32> to vector<4x2304xf32>
    %c47_i32 = arith.constant 47 : i32
    %29 = tpu.dynamic_rotate %28 by %c47_i32 dim 1 : vector<4x2304xf32>, i32 -> vector<4x2304xf32>
    %c2_26 = arith.constant 2 : index
    %c0_27 = arith.constant 0 : index
    %c0_28 = arith.constant 0 : index
    %30 = vector.load %arg2[%c2_26, %c0_27, %c0_28] : memref<9x1x2304xf32, #tpu.memory_space<vmem>>, vector<1x1x2304xf32>
    %31 = vector.shape_cast %30 : vector<1x1x2304xf32> to vector<1x2304xf32>
    %32 = vector.broadcast %31 : vector<1x2304xf32> to vector<4x2304xf32>
    %33 = arith.mulf %29, %32 : vector<4x2304xf32>
    %34 = arith.truncf %33 : vector<4x2304xf32> to vector<4x2304xbf16>
    %c12 = arith.constant 12 : index
    %c0_29 = arith.constant 0 : index
    %35 = vector.load %arg7[%c12, %c0_29] : memref<72x2304xbf16, #tpu.memory_space<vmem>>, vector<4x2304xbf16>
    tpu.vector_store %arg7[%c12, %c0_29], %34 {strides = array<i32>} : memref<72x2304xbf16, #tpu.memory_space<vmem>>, vector<4x2304xbf16>,
    %c0_30 = arith.constant 0 : index
    %c1_31 = arith.constant 1 : index
    %c0_32 = arith.constant 0 : index
    %c0_33 = arith.constant 0 : index
    %36 = vector.load %arg1[%c0_30, %c1_31, %c0_32, %c0_33] : memref<1x4x4x2304xf32, #tpu.memory_space<vmem>>, vector<1x1x4x2304xf32>
    %37 = vector.shape_cast %36 : vector<1x1x4x2304xf32> to vector<4x2304xf32>
    %c1_i32 = arith.constant 1 : i32
    %38 = tpu.dynamic_rotate %37 by %c1_i32 dim 1 : vector<4x2304xf32>, i32 -> vector<4x2304xf32>
    %c3_34 = arith.constant 3 : index
    %c0_35 = arith.constant 0 : index
    %c0_36 = arith.constant 0 : index
    %39 = vector.load %arg2[%c3_34, %c0_35, %c0_36] : memref<9x1x2304xf32, #tpu.memory_space<vmem>>, vector<1x1x2304xf32>
    %40 = vector.shape_cast %39 : vector<1x1x2304xf32> to vector<1x2304xf32>
    %41 = vector.broadcast %40 : vector<1x2304xf32> to vector<4x2304xf32>
    %42 = arith.mulf %38, %41 : vector<4x2304xf32>
    %43 = arith.truncf %42 : vector<4x2304xf32> to vector<4x2304xbf16>
    %c16 = arith.constant 16 : index
    %c0_37 = arith.constant 0 : index
    %44 = vector.load %arg7[%c16, %c0_37] : memref<72x2304xbf16, #tpu.memory_space<vmem>>, vector<4x2304xbf16>
    tpu.vector_store %arg7[%c16, %c0_37], %43 {strides = array<i32>} : memref<72x2304xbf16, #tpu.memory_space<vmem>>, vector<4x2304xbf16>,
    %c0_38 = arith.constant 0 : index
    %c0_39 = arith.constant 0 : index
    %c0_40 = arith.constant 0 : index
    %c0_41 = arith.constant 0 : index
    %45 = vector.load %arg1[%c0_38, %c0_39, %c0_40, %c0_41] : memref<1x4x4x2304xf32, #tpu.memory_space<vmem>>, vector<1x1x4x2304xf32>
    %46 = vector.shape_cast %45 : vector<1x1x4x2304xf32> to vector<4x2304xf32>
    %47 = arith.truncf %46 : vector<4x2304xf32> to vector<4x2304xbf16>
    %c20 = arith.constant 20 : index
    %c0_42 = arith.constant 0 : index
    %48 = vector.load %arg7[%c20, %c0_42] : memref<72x2304xbf16, #tpu.memory_space<vmem>>, vector<4x2304xbf16>
    tpu.vector_store %arg7[%c20, %c0_42], %47 {strides = array<i32>} : memref<72x2304xbf16, #tpu.memory_space<vmem>>, vector<4x2304xbf16>,
    %c0_43 = arith.constant 0 : index
    %c1_44 = arith.constant 1 : index
    %c0_45 = arith.constant 0 : index
    %c0_46 = arith.constant 0 : index
    %49 = vector.load %arg1[%c0_43, %c1_44, %c0_45, %c0_46] : memref<1x4x4x2304xf32, #tpu.memory_space<vmem>>, vector<1x1x4x2304xf32>
    %50 = vector.shape_cast %49 : vector<1x1x4x2304xf32> to vector<4x2304xf32>
    %51 = arith.truncf %50 : vector<4x2304xf32> to vector<4x2304xbf16>
    %c24 = arith.constant 24 : index
    %c0_47 = arith.constant 0 : index
    %52 = vector.load %arg7[%c24, %c0_47] : memref<72x2304xbf16, #tpu.memory_space<vmem>>, vector<4x2304xbf16>
    tpu.vector_store %arg7[%c24, %c0_47], %51 {strides = array<i32>} : memref<72x2304xbf16, #tpu.memory_space<vmem>>, vector<4x2304xbf16>,
    %c0_48 = arith.constant 0 : index
    %c0_49 = arith.constant 0 : index
    %c0_50 = arith.constant 0 : index
    %c0_51 = arith.constant 0 : index
    %53 = vector.load %arg1[%c0_48, %c0_49, %c0_50, %c0_51] : memref<1x4x4x2304xf32, #tpu.memory_space<vmem>>, vector<1x1x4x2304xf32>
    %54 = vector.shape_cast %53 : vector<1x1x4x2304xf32> to vector<4x2304xf32>
    %c2303_i32 = arith.constant 2303 : i32
    %55 = tpu.dynamic_rotate %54 by %c2303_i32 dim 1 : vector<4x2304xf32>, i32 -> vector<4x2304xf32>
    %c5 = arith.constant 5 : index
    %c0_52 = arith.constant 0 : index
    %c0_53 = arith.constant 0 : index
    %56 = vector.load %arg2[%c5, %c0_52, %c0_53] : memref<9x1x2304xf32, #tpu.memory_space<vmem>>, vector<1x1x2304xf32>
    %57 = vector.shape_cast %56 : vector<1x1x2304xf32> to vector<1x2304xf32>
    %58 = vector.broadcast %57 : vector<1x2304xf32> to vector<4x2304xf32>
    %59 = arith.mulf %55, %58 : vector<4x2304xf32>
    %60 = arith.truncf %59 : vector<4x2304xf32> to vector<4x2304xbf16>
    %c28 = arith.constant 28 : index
    %c0_54 = arith.constant 0 : index
    %61 = vector.load %arg7[%c28, %c0_54] : memref<72x2304xbf16, #tpu.memory_space<vmem>>, vector<4x2304xbf16>
    tpu.vector_store %arg7[%c28, %c0_54], %60 {strides = array<i32>} : memref<72x2304xbf16, #tpu.memory_space<vmem>>, vector<4x2304xbf16>,
    %c0_55 = arith.constant 0 : index
    %c3_56 = arith.constant 3 : index
    %c0_57 = arith.constant 0 : index
    %c0_58 = arith.constant 0 : index
    %62 = vector.load %arg1[%c0_55, %c3_56, %c0_57, %c0_58] : memref<1x4x4x2304xf32, #tpu.memory_space<vmem>>, vector<1x1x4x2304xf32>
    %63 = vector.shape_cast %62 : vector<1x1x4x2304xf32> to vector<4x2304xf32>
    %c1_i32_59 = arith.constant 1 : i32
    %64 = tpu.dynamic_rotate %63 by %c1_i32_59 dim 1 : vector<4x2304xf32>, i32 -> vector<4x2304xf32>
    %c3_60 = arith.constant 3 : index
    %c0_61 = arith.constant 0 : index
    %c0_62 = arith.constant 0 : index
    %65 = vector.load %arg2[%c3_60, %c0_61, %c0_62] : memref<9x1x2304xf32, #tpu.memory_space<vmem>>, vector<1x1x2304xf32>
    %66 = vector.shape_cast %65 : vector<1x1x2304xf32> to vector<1x2304xf32>
    %67 = vector.broadcast %66 : vector<1x2304xf32> to vector<4x2304xf32>
    %68 = arith.mulf %64, %67 : vector<4x2304xf32>
    %69 = arith.truncf %68 : vector<4x2304xf32> to vector<4x2304xbf16>
    %c32 = arith.constant 32 : index
    %c0_63 = arith.constant 0 : index
    %70 = vector.load %arg7[%c32, %c0_63] : memref<72x2304xbf16, #tpu.memory_space<vmem>>, vector<4x2304xbf16>
    tpu.vector_store %arg7[%c32, %c0_63], %69 {strides = array<i32>} : memref<72x2304xbf16, #tpu.memory_space<vmem>>, vector<4x2304xbf16>,
    %c0_64 = arith.constant 0 : index
    %c2_65 = arith.constant 2 : index
    %c0_66 = arith.constant 0 : index
    %c0_67 = arith.constant 0 : index
    %71 = vector.load %arg1[%c0_64, %c2_65, %c0_66, %c0_67] : memref<1x4x4x2304xf32, #tpu.memory_space<vmem>>, vector<1x1x4x2304xf32>
    %72 = vector.shape_cast %71 : vector<1x1x4x2304xf32> to vector<4x2304xf32>
    %73 = arith.truncf %72 : vector<4x2304xf32> to vector<4x2304xbf16>
    %c36 = arith.constant 36 : index
    %c0_68 = arith.constant 0 : index
    %74 = vector.load %arg7[%c36, %c0_68] : memref<72x2304xbf16, #tpu.memory_space<vmem>>, vector<4x2304xbf16>
    tpu.vector_store %arg7[%c36, %c0_68], %73 {strides = array<i32>} : memref<72x2304xbf16, #tpu.memory_space<vmem>>, vector<4x2304xbf16>,
    %c0_69 = arith.constant 0 : index
    %c3_70 = arith.constant 3 : index
    %c0_71 = arith.constant 0 : index
    %c0_72 = arith.constant 0 : index
    %75 = vector.load %arg1[%c0_69, %c3_70, %c0_71, %c0_72] : memref<1x4x4x2304xf32, #tpu.memory_space<vmem>>, vector<1x1x4x2304xf32>
    %76 = vector.shape_cast %75 : vector<1x1x4x2304xf32> to vector<4x2304xf32>
    %77 = arith.truncf %76 : vector<4x2304xf32> to vector<4x2304xbf16>
    %c40 = arith.constant 40 : index
    %c0_73 = arith.constant 0 : index
    %78 = vector.load %arg7[%c40, %c0_73] : memref<72x2304xbf16, #tpu.memory_space<vmem>>, vector<4x2304xbf16>
    tpu.vector_store %arg7[%c40, %c0_73], %77 {strides = array<i32>} : memref<72x2304xbf16, #tpu.memory_space<vmem>>, vector<4x2304xbf16>,
    %c0_74 = arith.constant 0 : index
    %c2_75 = arith.constant 2 : index
    %c0_76 = arith.constant 0 : index
    %c0_77 = arith.constant 0 : index
    %79 = vector.load %arg1[%c0_74, %c2_75, %c0_76, %c0_77] : memref<1x4x4x2304xf32, #tpu.memory_space<vmem>>, vector<1x1x4x2304xf32>
    %80 = vector.shape_cast %79 : vector<1x1x4x2304xf32> to vector<4x2304xf32>
    %c2303_i32_78 = arith.constant 2303 : i32
    %81 = tpu.dynamic_rotate %80 by %c2303_i32_78 dim 1 : vector<4x2304xf32>, i32 -> vector<4x2304xf32>
    %c5_79 = arith.constant 5 : index
    %c0_80 = arith.constant 0 : index
    %c0_81 = arith.constant 0 : index
    %82 = vector.load %arg2[%c5_79, %c0_80, %c0_81] : memref<9x1x2304xf32, #tpu.memory_space<vmem>>, vector<1x1x2304xf32>
    %83 = vector.shape_cast %82 : vector<1x1x2304xf32> to vector<1x2304xf32>
    %84 = vector.broadcast %83 : vector<1x2304xf32> to vector<4x2304xf32>
    %85 = arith.mulf %81, %84 : vector<4x2304xf32>
    %86 = arith.truncf %85 : vector<4x2304xf32> to vector<4x2304xbf16>
    %c44 = arith.constant 44 : index
    %c0_82 = arith.constant 0 : index
    %87 = vector.load %arg7[%c44, %c0_82] : memref<72x2304xbf16, #tpu.memory_space<vmem>>, vector<4x2304xbf16>
    tpu.vector_store %arg7[%c44, %c0_82], %86 {strides = array<i32>} : memref<72x2304xbf16, #tpu.memory_space<vmem>>, vector<4x2304xbf16>,
    %c0_83 = arith.constant 0 : index
    %c1_84 = arith.constant 1 : index
    %c0_85 = arith.constant 0 : index
    %c0_86 = arith.constant 0 : index
    %88 = vector.load %arg1[%c0_83, %c1_84, %c0_85, %c0_86] : memref<1x4x4x2304xf32, #tpu.memory_space<vmem>>, vector<1x1x4x2304xf32>
    %89 = vector.shape_cast %88 : vector<1x1x4x2304xf32> to vector<4x2304xf32>
    %c2257_i32 = arith.constant 2257 : i32
    %90 = tpu.dynamic_rotate %89 by %c2257_i32 dim 1 : vector<4x2304xf32>, i32 -> vector<4x2304xf32>
    %c6 = arith.constant 6 : index
    %c0_87 = arith.constant 0 : index
    %c0_88 = arith.constant 0 : index
    %91 = vector.load %arg2[%c6, %c0_87, %c0_88] : memref<9x1x2304xf32, #tpu.memory_space<vmem>>, vector<1x1x2304xf32>
    %92 = vector.shape_cast %91 : vector<1x1x2304xf32> to vector<1x2304xf32>
    %93 = vector.broadcast %92 : vector<1x2304xf32> to vector<4x2304xf32>
    %94 = arith.mulf %90, %93 : vector<4x2304xf32>
    %95 = arith.truncf %94 : vector<4x2304xf32> to vector<4x2304xbf16>
    %c48 = arith.constant 48 : index
    %c0_89 = arith.constant 0 : index
    %96 = vector.load %arg7[%c48, %c0_89] : memref<72x2304xbf16, #tpu.memory_space<vmem>>, vector<4x2304xbf16>
    tpu.vector_store %arg7[%c48, %c0_89], %95 {strides = array<i32>} : memref<72x2304xbf16, #tpu.memory_space<vmem>>, vector<4x2304xbf16>,
    %c0_90 = arith.constant 0 : index
    %c0_91 = arith.constant 0 : index
    %c0_92 = arith.constant 0 : index
    %c0_93 = arith.constant 0 : index
    %97 = vector.load %arg1[%c0_90, %c0_91, %c0_92, %c0_93] : memref<1x4x4x2304xf32, #tpu.memory_space<vmem>>, vector<1x1x4x2304xf32>
    %98 = vector.shape_cast %97 : vector<1x1x4x2304xf32> to vector<4x2304xf32>
    %c2256_i32 = arith.constant 2256 : i32
    %99 = tpu.dynamic_rotate %98 by %c2256_i32 dim 1 : vector<4x2304xf32>, i32 -> vector<4x2304xf32>
    %c7 = arith.constant 7 : index
    %c0_94 = arith.constant 0 : index
    %c0_95 = arith.constant 0 : index
    %100 = vector.load %arg2[%c7, %c0_94, %c0_95] : memref<9x1x2304xf32, #tpu.memory_space<vmem>>, vector<1x1x2304xf32>
    %101 = vector.shape_cast %100 : vector<1x1x2304xf32> to vector<1x2304xf32>
    %102 = vector.broadcast %101 : vector<1x2304xf32> to vector<4x2304xf32>
    %103 = arith.mulf %99, %102 : vector<4x2304xf32>
    %104 = arith.truncf %103 : vector<4x2304xf32> to vector<4x2304xbf16>
    %c52 = arith.constant 52 : index
    %c0_96 = arith.constant 0 : index
    %105 = vector.load %arg7[%c52, %c0_96] : memref<72x2304xbf16, #tpu.memory_space<vmem>>, vector<4x2304xbf16>
    tpu.vector_store %arg7[%c52, %c0_96], %104 {strides = array<i32>} : memref<72x2304xbf16, #tpu.memory_space<vmem>>, vector<4x2304xbf16>,
    %c0_97 = arith.constant 0 : index
    %c1_98 = arith.constant 1 : index
    %c0_99 = arith.constant 0 : index
    %c0_100 = arith.constant 0 : index
    %106 = vector.load %arg1[%c0_97, %c1_98, %c0_99, %c0_100] : memref<1x4x4x2304xf32, #tpu.memory_space<vmem>>, vector<1x1x4x2304xf32>
    %107 = vector.shape_cast %106 : vector<1x1x4x2304xf32> to vector<4x2304xf32>
    %c2256_i32_101 = arith.constant 2256 : i32
    %108 = tpu.dynamic_rotate %107 by %c2256_i32_101 dim 1 : vector<4x2304xf32>, i32 -> vector<4x2304xf32>
    %c7_102 = arith.constant 7 : index
    %c0_103 = arith.constant 0 : index
    %c0_104 = arith.constant 0 : index
    %109 = vector.load %arg2[%c7_102, %c0_103, %c0_104] : memref<9x1x2304xf32, #tpu.memory_space<vmem>>, vector<1x1x2304xf32>
    %110 = vector.shape_cast %109 : vector<1x1x2304xf32> to vector<1x2304xf32>
    %111 = vector.broadcast %110 : vector<1x2304xf32> to vector<4x2304xf32>
    %112 = arith.mulf %108, %111 : vector<4x2304xf32>
    %113 = arith.truncf %112 : vector<4x2304xf32> to vector<4x2304xbf16>
    %c56 = arith.constant 56 : index
    %c0_105 = arith.constant 0 : index
    %114 = vector.load %arg7[%c56, %c0_105] : memref<72x2304xbf16, #tpu.memory_space<vmem>>, vector<4x2304xbf16>
    tpu.vector_store %arg7[%c56, %c0_105], %113 {strides = array<i32>} : memref<72x2304xbf16, #tpu.memory_space<vmem>>, vector<4x2304xbf16>,
    %c0_106 = arith.constant 0 : index
    %c0_107 = arith.constant 0 : index
    %c0_108 = arith.constant 0 : index
    %c0_109 = arith.constant 0 : index
    %115 = vector.load %arg1[%c0_106, %c0_107, %c0_108, %c0_109] : memref<1x4x4x2304xf32, #tpu.memory_space<vmem>>, vector<1x1x4x2304xf32>
    %116 = vector.shape_cast %115 : vector<1x1x4x2304xf32> to vector<4x2304xf32>
    %c2255_i32 = arith.constant 2255 : i32
    %117 = tpu.dynamic_rotate %116 by %c2255_i32 dim 1 : vector<4x2304xf32>, i32 -> vector<4x2304xf32>
    %c8_110 = arith.constant 8 : index
    %c0_111 = arith.constant 0 : index
    %c0_112 = arith.constant 0 : index
    %118 = vector.load %arg2[%c8_110, %c0_111, %c0_112] : memref<9x1x2304xf32, #tpu.memory_space<vmem>>, vector<1x1x2304xf32>
    %119 = vector.shape_cast %118 : vector<1x1x2304xf32> to vector<1x2304xf32>
    %120 = vector.broadcast %119 : vector<1x2304xf32> to vector<4x2304xf32>
    %121 = arith.mulf %117, %120 : vector<4x2304xf32>
    %122 = arith.truncf %121 : vector<4x2304xf32> to vector<4x2304xbf16>
    %c60 = arith.constant 60 : index
    %c0_113 = arith.constant 0 : index
    %123 = vector.load %arg7[%c60, %c0_113] : memref<72x2304xbf16, #tpu.memory_space<vmem>>, vector<4x2304xbf16>
    tpu.vector_store %arg7[%c60, %c0_113], %122 {strides = array<i32>} : memref<72x2304xbf16, #tpu.memory_space<vmem>>, vector<4x2304xbf16>,
    %c0_114 = arith.constant 0 : index
    %c0_115 = arith.constant 0 : index
    %124 = vector.load %arg3[%c0_114, %c0_115] : memref<32x64xbf16, #tpu.memory_space<vmem>>, vector<32x64xbf16>
    %c0_116 = arith.constant 0 : index
    %c0_117 = arith.constant 0 : index
    %125 = vector.load %arg7[%c0_116, %c0_117] : memref<72x2304xbf16, #tpu.memory_space<vmem>>, vector<64x2304xbf16>
    %cst = arith.constant dense<0.000000e+00> : vector<32x2304xf32>
    %126 = tpu.matmul %124, %125, %cst {dimension_numbers = #tpu.dot_dimension_numbers<[1], [0], [0], [1], [0, 0, 1, 1], [], []>} : vector<32x64xbf16>, vector<64x2304xbf16>, vector<32x2304xf32> -> vector<32x2304xf32>
    %cst_118 = arith.constant 0.000000e+00 : f32
    %127 = vector.broadcast %cst_118 : f32 to vector<32x2304xf32>
    %128 = arith.maximumf %126, %127 : vector<32x2304xf32>
    %c0_119 = arith.constant 0 : index
    %c0_120 = arith.constant 0 : index
    %129 = vector.load %arg8[%c0_119, %c0_120] : memref<32x2304xf32, #tpu.memory_space<vmem>>, vector<32x2304xf32>
    tpu.vector_store %arg8[%c0_119, %c0_120], %128 {strides = array<i32>} : memref<32x2304xf32, #tpu.memory_space<vmem>>, vector<32x2304xf32>,
    %c24_121 = arith.constant 24 : index
    %c0_122 = arith.constant 0 : index
    %130 = vector.load %arg8[%c24_121, %c0_122] : memref<32x2304xf32, #tpu.memory_space<vmem>>, vector<8x2304xf32>
    %c49_i32_123 = arith.constant 49 : i32
    %131 = tpu.dynamic_rotate %130 by %c49_i32_123 dim 1 : vector<8x2304xf32>, i32 -> vector<8x2304xf32>
    %c0_124 = arith.constant 0 : index
    %c0_125 = arith.constant 0 : index
    %c0_126 = arith.constant 0 : index
    %132 = vector.load %arg2[%c0_124, %c0_125, %c0_126] : memref<9x1x2304xf32, #tpu.memory_space<vmem>>, vector<1x1x2304xf32>
    %133 = vector.shape_cast %132 : vector<1x1x2304xf32> to vector<1x2304xf32>
    %134 = vector.broadcast %133 : vector<1x2304xf32> to vector<8x2304xf32>
    %135 = arith.mulf %131, %134 : vector<8x2304xf32>
    %136 = arith.truncf %135 : vector<8x2304xf32> to vector<8x2304xbf16>
    %c0_127 = arith.constant 0 : index
    %c0_128 = arith.constant 0 : index
    %137 = vector.load %arg7[%c0_127, %c0_128] : memref<72x2304xbf16, #tpu.memory_space<vmem>>, vector<8x2304xbf16>
    tpu.vector_store %arg7[%c0_127, %c0_128], %136 {strides = array<i32>} : memref<72x2304xbf16, #tpu.memory_space<vmem>>, vector<8x2304xbf16>,
    %c16_129 = arith.constant 16 : index
    %c0_130 = arith.constant 0 : index
    %138 = vector.load %arg8[%c16_129, %c0_130] : memref<32x2304xf32, #tpu.memory_space<vmem>>, vector<8x2304xf32>
    %c48_i32_131 = arith.constant 48 : i32
    %139 = tpu.dynamic_rotate %138 by %c48_i32_131 dim 1 : vector<8x2304xf32>, i32 -> vector<8x2304xf32>
    %c1_132 = arith.constant 1 : index
    %c0_133 = arith.constant 0 : index
    %c0_134 = arith.constant 0 : index
    %140 = vector.load %arg2[%c1_132, %c0_133, %c0_134] : memref<9x1x2304xf32, #tpu.memory_space<vmem>>, vector<1x1x2304xf32>
    %141 = vector.shape_cast %140 : vector<1x1x2304xf32> to vector<1x2304xf32>
    %142 = vector.broadcast %141 : vector<1x2304xf32> to vector<8x2304xf32>
    %143 = arith.mulf %139, %142 : vector<8x2304xf32>
    %144 = arith.truncf %143 : vector<8x2304xf32> to vector<8x2304xbf16>
    %c8_135 = arith.constant 8 : index
    %c0_136 = arith.constant 0 : index
    %145 = vector.load %arg7[%c8_135, %c0_136] : memref<72x2304xbf16, #tpu.memory_space<vmem>>, vector<8x2304xbf16>
    tpu.vector_store %arg7[%c8_135, %c0_136], %144 {strides = array<i32>} : memref<72x2304xbf16, #tpu.memory_space<vmem>>, vector<8x2304xbf16>,
    %c24_137 = arith.constant 24 : index
    %c0_138 = arith.constant 0 : index
    %146 = vector.load %arg8[%c24_137, %c0_138] : memref<32x2304xf32, #tpu.memory_space<vmem>>, vector<8x2304xf32>
    %c48_i32_139 = arith.constant 48 : i32
    %147 = tpu.dynamic_rotate %146 by %c48_i32_139 dim 1 : vector<8x2304xf32>, i32 -> vector<8x2304xf32>
    %c1_140 = arith.constant 1 : index
    %c0_141 = arith.constant 0 : index
    %c0_142 = arith.constant 0 : index
    %148 = vector.load %arg2[%c1_140, %c0_141, %c0_142] : memref<9x1x2304xf32, #tpu.memory_space<vmem>>, vector<1x1x2304xf32>
    %149 = vector.shape_cast %148 : vector<1x1x2304xf32> to vector<1x2304xf32>
    %150 = vector.broadcast %149 : vector<1x2304xf32> to vector<8x2304xf32>
    %151 = arith.mulf %147, %150 : vector<8x2304xf32>
    %152 = arith.truncf %151 : vector<8x2304xf32> to vector<8x2304xbf16>
    %c16_143 = arith.constant 16 : index
    %c0_144 = arith.constant 0 : index
    %153 = vector.load %arg7[%c16_143, %c0_144] : memref<72x2304xbf16, #tpu.memory_space<vmem>>, vector<8x2304xbf16>
    tpu.vector_store %arg7[%c16_143, %c0_144], %152 {strides = array<i32>} : memref<72x2304xbf16, #tpu.memory_space<vmem>>, vector<8x2304xbf16>,
    %c8_145 = arith.constant 8 : index
    %c0_146 = arith.constant 0 : index
    %154 = vector.load %arg8[%c8_145, %c0_146] : memref<32x2304xf32, #tpu.memory_space<vmem>>, vector<8x2304xf32>
    %c1_i32_147 = arith.constant 1 : i32
    %155 = tpu.dynamic_rotate %154 by %c1_i32_147 dim 1 : vector<8x2304xf32>, i32 -> vector<8x2304xf32>
    %c3_148 = arith.constant 3 : index
    %c0_149 = arith.constant 0 : index
    %c0_150 = arith.constant 0 : index
    %156 = vector.load %arg2[%c3_148, %c0_149, %c0_150] : memref<9x1x2304xf32, #tpu.memory_space<vmem>>, vector<1x1x2304xf32>
    %157 = vector.shape_cast %156 : vector<1x1x2304xf32> to vector<1x2304xf32>
    %158 = vector.broadcast %157 : vector<1x2304xf32> to vector<8x2304xf32>
    %159 = arith.mulf %155, %158 : vector<8x2304xf32>
    %160 = arith.truncf %159 : vector<8x2304xf32> to vector<8x2304xbf16>
    %c24_151 = arith.constant 24 : index
    %c0_152 = arith.constant 0 : index
    %161 = vector.load %arg7[%c24_151, %c0_152] : memref<72x2304xbf16, #tpu.memory_space<vmem>>, vector<8x2304xbf16>
    tpu.vector_store %arg7[%c24_151, %c0_152], %160 {strides = array<i32>} : memref<72x2304xbf16, #tpu.memory_space<vmem>>, vector<8x2304xbf16>,
    %c0_153 = arith.constant 0 : index
    %c0_154 = arith.constant 0 : index
    %162 = vector.load %arg8[%c0_153, %c0_154] : memref<32x2304xf32, #tpu.memory_space<vmem>>, vector<8x2304xf32>
    %163 = arith.truncf %162 : vector<8x2304xf32> to vector<8x2304xbf16>
    %c32_155 = arith.constant 32 : index
    %c0_156 = arith.constant 0 : index
    %164 = vector.load %arg7[%c32_155, %c0_156] : memref<72x2304xbf16, #tpu.memory_space<vmem>>, vector<8x2304xbf16>
    tpu.vector_store %arg7[%c32_155, %c0_156], %163 {strides = array<i32>} : memref<72x2304xbf16, #tpu.memory_space<vmem>>, vector<8x2304xbf16>,
    %c8_157 = arith.constant 8 : index
    %c0_158 = arith.constant 0 : index
    %165 = vector.load %arg8[%c8_157, %c0_158] : memref<32x2304xf32, #tpu.memory_space<vmem>>, vector<8x2304xf32>
    %166 = arith.truncf %165 : vector<8x2304xf32> to vector<8x2304xbf16>
    %c40_159 = arith.constant 40 : index
    %c0_160 = arith.constant 0 : index
    %167 = vector.load %arg7[%c40_159, %c0_160] : memref<72x2304xbf16, #tpu.memory_space<vmem>>, vector<8x2304xbf16>
    tpu.vector_store %arg7[%c40_159, %c0_160], %166 {strides = array<i32>} : memref<72x2304xbf16, #tpu.memory_space<vmem>>, vector<8x2304xbf16>,
    %c24_161 = arith.constant 24 : index
    %c0_162 = arith.constant 0 : index
    %168 = vector.load %arg8[%c24_161, %c0_162] : memref<32x2304xf32, #tpu.memory_space<vmem>>, vector<8x2304xf32>
    %c1_i32_163 = arith.constant 1 : i32
    %169 = tpu.dynamic_rotate %168 by %c1_i32_163 dim 1 : vector<8x2304xf32>, i32 -> vector<8x2304xf32>
    %c3_164 = arith.constant 3 : index
    %c0_165 = arith.constant 0 : index
    %c0_166 = arith.constant 0 : index
    %170 = vector.load %arg2[%c3_164, %c0_165, %c0_166] : memref<9x1x2304xf32, #tpu.memory_space<vmem>>, vector<1x1x2304xf32>
    %171 = vector.shape_cast %170 : vector<1x1x2304xf32> to vector<1x2304xf32>
    %172 = vector.broadcast %171 : vector<1x2304xf32> to vector<8x2304xf32>
    %173 = arith.mulf %169, %172 : vector<8x2304xf32>
    %174 = arith.truncf %173 : vector<8x2304xf32> to vector<8x2304xbf16>
    %c48_167 = arith.constant 48 : index
    %c0_168 = arith.constant 0 : index
    %175 = vector.load %arg7[%c48_167, %c0_168] : memref<72x2304xbf16, #tpu.memory_space<vmem>>, vector<8x2304xbf16>
    tpu.vector_store %arg7[%c48_167, %c0_168], %174 {strides = array<i32>} : memref<72x2304xbf16, #tpu.memory_space<vmem>>, vector<8x2304xbf16>,
    %c16_169 = arith.constant 16 : index
    %c0_170 = arith.constant 0 : index
    %176 = vector.load %arg8[%c16_169, %c0_170] : memref<32x2304xf32, #tpu.memory_space<vmem>>, vector<8x2304xf32>
    %177 = arith.truncf %176 : vector<8x2304xf32> to vector<8x2304xbf16>
    %c56_171 = arith.constant 56 : index
    %c0_172 = arith.constant 0 : index
    %178 = vector.load %arg7[%c56_171, %c0_172] : memref<72x2304xbf16, #tpu.memory_space<vmem>>, vector<8x2304xbf16>
    tpu.vector_store %arg7[%c56_171, %c0_172], %177 {strides = array<i32>} : memref<72x2304xbf16, #tpu.memory_space<vmem>>, vector<8x2304xbf16>,
    %c24_173 = arith.constant 24 : index
    %c0_174 = arith.constant 0 : index
    %179 = vector.load %arg8[%c24_173, %c0_174] : memref<32x2304xf32, #tpu.memory_space<vmem>>, vector<8x2304xf32>
    %180 = arith.truncf %179 : vector<8x2304xf32> to vector<8x2304xbf16>
    %c64 = arith.constant 64 : index
    %c0_175 = arith.constant 0 : index
    %181 = vector.load %arg7[%c64, %c0_175] : memref<72x2304xbf16, #tpu.memory_space<vmem>>, vector<8x2304xbf16>
    tpu.vector_store %arg7[%c64, %c0_175], %180 {strides = array<i32>} : memref<72x2304xbf16, #tpu.memory_space<vmem>>, vector<8x2304xbf16>,
    %c0_176 = arith.constant 0 : index
    %c0_177 = arith.constant 0 : index
    %182 = vector.load %arg4[%c0_176, %c0_177] : memref<8x72xbf16, #tpu.memory_space<vmem>>, vector<8x72xbf16>
    %c0_178 = arith.constant 0 : index
    %c0_179 = arith.constant 0 : index
    %183 = vector.load %arg7[%c0_178, %c0_179] : memref<72x2304xbf16, #tpu.memory_space<vmem>>, vector<72x2304xbf16>
    %cst_180 = arith.constant dense<0.000000e+00> : vector<8x2304xf32>
    %184 = tpu.matmul %182, %183, %cst_180 {dimension_numbers = #tpu.dot_dimension_numbers<[1], [0], [0], [1], [0, 0, 1, 1], [], []>} : vector<8x72xbf16>, vector<72x2304xbf16>, vector<8x2304xf32> -> vector<8x2304xf32>
    %cst_181 = arith.constant 0.000000e+00 : f32
    %185 = vector.broadcast %cst_181 : f32 to vector<8x2304xf32>
    %186 = arith.cmpf ogt, %184, %185 : vector<8x2304xf32>
    %cst_182 = arith.constant 2.000000e-01 : f32
    %187 = vector.broadcast %cst_182 : f32 to vector<8x2304xf32>
    %188 = arith.mulf %187, %184 : vector<8x2304xf32>
    %189 = arith.select %186, %184, %188 : vector<8x2304xi1>, vector<8x2304xf32>
    %190 = arith.truncf %189 : vector<8x2304xf32> to vector<8x2304xbf16>
    %c0_183 = arith.constant 0 : index
    %c0_184 = arith.constant 0 : index
    %191 = vector.load %arg5[%c0_183, %c0_184] : memref<2304x256xbf16, #tpu.memory_space<vmem>>, vector<2304x256xbf16>
    %cst_185 = arith.constant dense<0.000000e+00> : vector<8x256xf32>
    %192 = tpu.matmul %190, %191, %cst_185 {dimension_numbers = #tpu.dot_dimension_numbers<[1], [0], [0], [1], [0, 0, 1, 1], [], []>} : vector<8x2304xbf16>, vector<2304x256xbf16>, vector<8x256xf32> -> vector<8x256xf32>
    %193 = vector.extract_strided_slice %192 {offsets = [0, 0], sizes = [1, 32], strides = [1, 1]} : vector<8x256xf32> to vector<1x32xf32>
    %194 = vector.extract_strided_slice %192 {offsets = [1, 32], sizes = [1, 32], strides = [1, 1]} : vector<8x256xf32> to vector<1x32xf32>
    %195 = arith.addf %193, %194 : vector<1x32xf32>
    %196 = vector.extract_strided_slice %192 {offsets = [2, 64], sizes = [1, 32], strides = [1, 1]} : vector<8x256xf32> to vector<1x32xf32>
    %197 = arith.addf %195, %196 : vector<1x32xf32>
    %198 = vector.extract_strided_slice %192 {offsets = [3, 96], sizes = [1, 32], strides = [1, 1]} : vector<8x256xf32> to vector<1x32xf32>
    %199 = arith.addf %197, %198 : vector<1x32xf32>
    %200 = vector.extract_strided_slice %192 {offsets = [4, 128], sizes = [1, 32], strides = [1, 1]} : vector<8x256xf32> to vector<1x32xf32>
    %201 = arith.addf %199, %200 : vector<1x32xf32>
    %202 = vector.extract_strided_slice %192 {offsets = [5, 160], sizes = [1, 32], strides = [1, 1]} : vector<8x256xf32> to vector<1x32xf32>
    %203 = arith.addf %201, %202 : vector<1x32xf32>
    %204 = vector.extract_strided_slice %192 {offsets = [6, 192], sizes = [1, 32], strides = [1, 1]} : vector<8x256xf32> to vector<1x32xf32>
    %205 = arith.addf %203, %204 : vector<1x32xf32>
    %206 = vector.extract_strided_slice %192 {offsets = [7, 224], sizes = [1, 32], strides = [1, 1]} : vector<8x256xf32> to vector<1x32xf32>
    %207 = arith.addf %205, %206 : vector<1x32xf32>
    %208 = math.tanh %207 : vector<1x32xf32>
    %c0_186 = arith.constant 0 : index
    %c0_187 = arith.constant 0 : index
    %c0_188 = arith.constant 0 : index
    %209 = vector.load %arg6[%c0_186, %c0_187, %c0_188] : memref<1x1x32xf32, #tpu.memory_space<vmem>>, vector<1x1x32xf32>
    %210 = vector.shape_cast %209 : vector<1x1x32xf32> to vector<1x32xf32>
    %211 = vector.shape_cast %208 : vector<1x32xf32> to vector<1x1x32xf32>
    tpu.vector_store %arg6[%c0_186, %c0_187, %c0_188], %211 {strides = array<i32>} : memref<1x1x32xf32, #tpu.memory_space<vmem>>, vector<1x1x32xf32>,
    return
  }
  func.func @transform_0(%arg0: i32) -> (i32, i32, i32, i32) {
    %c0_i32 = arith.constant 0 : i32
    %c0_i32_0 = arith.constant 0 : i32
    %c0_i32_1 = arith.constant 0 : i32
    %c0_i32_2 = arith.constant 0 : i32
    return %arg0, %c0_i32, %c0_i32_0, %c0_i32_1 : i32, i32, i32, i32
  }
  func.func @transform_1(%arg0: i32) -> (i32, i32, i32) {
    %c0_i32 = arith.constant 0 : i32
    %c0_i32_0 = arith.constant 0 : i32
    %c0_i32_1 = arith.constant 0 : i32
    %c0_i32_2 = arith.constant 0 : i32
    return %c0_i32, %c0_i32_0, %c0_i32_1 : i32, i32, i32
  }
  func.func @transform_2(%arg0: i32) -> (i32, i32) {
    %c0_i32 = arith.constant 0 : i32
    %c0_i32_0 = arith.constant 0 : i32
    %c0_i32_1 = arith.constant 0 : i32
    return %c0_i32, %c0_i32_0 : i32, i32
  }
  func.func @transform_3(%arg0: i32) -> (i32, i32) {
    %c0_i32 = arith.constant 0 : i32
    %c0_i32_0 = arith.constant 0 : i32
    %c0_i32_1 = arith.constant 0 : i32
    return %c0_i32, %c0_i32_0 : i32, i32
  }
  func.func @transform_4(%arg0: i32) -> (i32, i32) {
    %c0_i32 = arith.constant 0 : i32
    %c0_i32_0 = arith.constant 0 : i32
    %c0_i32_1 = arith.constant 0 : i32
    return %c0_i32, %c0_i32_0 : i32, i32
  }
  func.func @transform_5(%arg0: i32) -> (i32, i32, i32) {
    %c0_i32 = arith.constant 0 : i32
    %c0_i32_0 = arith.constant 0 : i32
    %c0_i32_1 = arith.constant 0 : i32
    return %arg0, %c0_i32, %c0_i32_0 : i32, i32, i32
  }
}

</mosaic_0001>

<llo_original>
// kernel: cnet_forward.1
$region0: #{cnet_forward.1}
  #allocation0 [shape = 'u32[]', space=smem, size = 0x4, offset = 0x4, fixed_abs, tag = 'smem constant byte address 0x4 - core index']
  #allocation1 [shape = 'u32[144,128]{1,0:T(1,128)}', space=vmem, size = 0x12000, scoped, tag = 'internal scratch']
  #allocation2 [shape = 'bf16[72,2304]{1,0:T(8,128)(2,1)}', space=vmem, size = 0x51000, scoped, tag = 'scratch operand']
  #allocation3 [shape = 'f32[32,2304]{1,0:T(8,128)}', space=vmem, size = 0x48000, scoped, tag = 'scratch operand']
  %s0 = inlined_call_operand.vmem [shape: f32[2,4,4,2304], index: 0, kind: input, shape index: {}]
  %s1 = inlined_call_operand.vmem [shape: f32[9,1,2304], index: 1, kind: input, shape index: {}]
  %s2 = inlined_call_operand.vmem [shape: bf16[32,64], index: 2, kind: input, shape index: {}]
  %s3 = inlined_call_operand.vmem [shape: bf16[8,72], index: 3, kind: input, shape index: {}]
  %s4 = inlined_call_operand.vmem [shape: bf16[2304,256], index: 4, kind: input, shape index: {}]
  %s5 = inlined_call_operand.hbm [shape: f32[2,1,32], index: 5, kind: output, shape index: {}]
  %s6 = sld [smem:[#allocation0]]
  $region53: #{cnet_forward.1} parent=0
    _
  %s8 = ssub.s32 1, %s6
  %s9 = scalar_select 0, %s8, %s6
  $region1: #{cnet_forward.1} parent=0
    #allocation4 [shape = 'u8[1024]{0}', space=vmem, size = 0x400, scoped, tag = 'output window, operand 0']
    #allocation5 [shape = 's32[2]{0}', space=sflag, size = 0x8, scoped, tag = 'scoped memory for cnet_forward.1']
    %10 = vsyncpa [#allocation5], 0
    %s11 = scalar_lea.sflag [#allocation5], 1
    %12 = vsyncpa %s11, 0
    loop: start=0, step=1, limit=4
    $region2: #{cnet_forward.1} parent=1 // loop_pre_header
      _
    $region3: #{cnet_forward.1} parent=1 // loop_header
      %s14 = sphi 0, %s18
      %p15 = scmp.ge.s32.totalorder %s14, 4
      %s24 = sphi 0, %s26
      %s27 = sphi 0, %s24
      %s28 = sphi 0, %s27
      %s44 = sphi 0, %s28
      %s48 = sphi 0, %s48
      %s50 = sphi 0, %s48
      %s51 = sphi 0, %s50
      %s65 = sphi 0, %s51
      %s69 = sphi 0, %s69
      %s71 = sphi 0, %s69
      %s72 = sphi 0, %s71
      %s86 = sphi 0, %s72
      %s90 = sphi 0, %s90
      %s92 = sphi 0, %s90
      %s93 = sphi 0, %s92
      %s107 = sphi 0, %s93
      %s111 = sphi 0, %s111
      %s113 = sphi 0, %s111
      %s114 = sphi 0, %s113
      %s128 = sphi 0, %s114
      %s134 = sphi 0, %s136
      %s137 = sphi 0, %s134
      %s138 = sphi 0, %s137
      %s154 = sphi 0, %s138
    $region4: #{cnet_forward.1} parent=1 // loop_header_branch
      %17 = sbr.rel (%p15) target = $region8
    $region5: #{cnet_forward.1} parent=1 // loop_body
      %s19 = ssub.s32 %s14, 1
      %s20 = ssub.s32 %s14, 2
      %s21 = sadd.s32 %s14, 1
      %s22 = ssub.s32 %s14, %s21
      %p23 = scmp.eq.s32.totalorder %s22, 0
      %s25 = sadd.s32 %s24, 1
      %s26 = scalar_select %p23, %s24, %s25
      %p29 = pneg %p23
      %p30 = scmp.eq.s32.totalorder %s14, 1
      %p31 = por %p29, %p30
      %p32 = scmp.ne.s32.totalorder %s24, %s27
      %p33 = scmp.eq.s32.totalorder %s14, 0
      %p34 = por %p32, %p33
      %p35 = scmp.ne.s32.totalorder %s24, %s27
      %p36 = scmp.eq.s32.totalorder %s19, 1
      %p37 = por %p35, %p36
      %p38 = scmp.ne.s32.totalorder %s27, %s28
      %p39 = scmp.eq.s32.totalorder %s19, 0
      %p40 = por %p38, %p39
      %p41 = scmp.ne.s32.totalorder %s27, %s28
      %p42 = scmp.eq.s32.totalorder %s20, 1
      %p43 = por %p41, %p42
      %p45 = scmp.ne.s32.totalorder %s28, %s44
      %p46 = scmp.eq.s32.totalorder %s20, 0
      %p47 = por %p45, %p46
      %s49 = sadd.s32 %s48, 1
      %p52 = scmp.eq.s32.totalorder %s14, 1
      %p53 = scmp.ne.s32.totalorder %s48, %s50
      %p54 = scmp.eq.s32.totalorder %s14, 0
      %p55 = por %p53, %p54
      %p56 = scmp.ne.s32.totalorder %s48, %s50
      %p57 = scmp.eq.s32.totalorder %s19, 1
      %p58 = por %p56, %p57
      %p59 = scmp.ne.s32.totalorder %s50, %s51
      %p60 = scmp.eq.s32.totalorder %s19, 0
      %p61 = por %p59, %p60
      %p62 = scmp.ne.s32.totalorder %s50, %s51
      %p63 = scmp.eq.s32.totalorder %s20, 1
      %p64 = por %p62, %p63
      %p66 = scmp.ne.s32.totalorder %s51, %s65
      %p67 = scmp.eq.s32.totalorder %s20, 0
      %p68 = por %p66, %p67
      %s70 = sadd.s32 %s69, 1
      %p73 = scmp.eq.s32.totalorder %s14, 1
      %p74 = scmp.ne.s32.totalorder %s69, %s71
      %p75 = scmp.eq.s32.totalorder %s14, 0
      %p76 = por %p74, %p75
      %p77 = scmp.ne.s32.totalorder %s69, %s71
      %p78 = scmp.eq.s32.totalorder %s19, 1
      %p79 = por %p77, %p78
      %p80 = scmp.ne.s32.totalorder %s71, %s72
      %p81 = scmp.eq.s32.totalorder %s19, 0
      %p82 = por %p80, %p81
      %p83 = scmp.ne.s32.totalorder %s71, %s72
      %p84 = scmp.eq.s32.totalorder %s20, 1
      %p85 = por %p83, %p84
      %p87 = scmp.ne.s32.totalorder %s72, %s86
      %p88 = scmp.eq.s32.totalorder %s20, 0
      %p89 = por %p87, %p88
      %s91 = sadd.s32 %s90, 1
      %p94 = scmp.eq.s32.totalorder %s14, 1
      %p95 = scmp.ne.s32.totalorder %s90, %s92
      %p96 = scmp.eq.s32.totalorder %s14, 0
      %p97 = por %p95, %p96
      %p98 = scmp.ne.s32.totalorder %s90, %s92
      %p99 = scmp.eq.s32.totalorder %s19, 1
      %p100 = por %p98, %p99
      %p101 = scmp.ne.s32.totalorder %s92, %s93
      %p102 = scmp.eq.s32.totalorder %s19, 0
      %p103 = por %p101, %p102
      %p104 = scmp.ne.s32.totalorder %s92, %s93
      %p105 = scmp.eq.s32.totalorder %s20, 1
      %p106 = por %p104, %p105
      %p108 = scmp.ne.s32.totalorder %s93, %s107
      %p109 = scmp.eq.s32.totalorder %s20, 0
      %p110 = por %p108, %p109
      %s112 = sadd.s32 %s111, 1
      %p115 = scmp.eq.s32.totalorder %s14, 1
      %p116 = scmp.ne.s32.totalorder %s111, %s113
      %p117 = scmp.eq.s32.totalorder %s14, 0
      %p118 = por %p116, %p117
      %p119 = scmp.ne.s32.totalorder %s111, %s113
      %p120 = scmp.eq.s32.totalorder %s19, 1
      %p121 = por %p119, %p120
      %p122 = scmp.ne.s32.totalorder %s113, %s114
      %p123 = scmp.eq.s32.totalorder %s19, 0
      %p124 = por %p122, %p123
      %p125 = scmp.ne.s32.totalorder %s113, %s114
      %p126 = scmp.eq.s32.totalorder %s20, 1
      %p127 = por %p125, %p126
      %p129 = scmp.ne.s32.totalorder %s114, %s128
      %p130 = scmp.eq.s32.totalorder %s20, 0
      %p131 = por %p129, %p130
      %s132 = ssub.s32 %s14, %s21
      %p133 = scmp.eq.s32.totalorder %s132, 0
      %s135 = sadd.s32 %s134, 1
      %s136 = scalar_select %p133, %s134, %s135
      %p139 = pneg %p133
      %p140 = scmp.eq.s32.totalorder %s14, 1
      %p141 = por %p139, %p140
      %p142 = scmp.ne.s32.totalorder %s134, %s137
      %p143 = scmp.eq.s32.totalorder %s14, 0
      %p144 = por %p142, %p143
      %p145 = scmp.ne.s32.totalorder %s134, %s137
      %p146 = scmp.eq.s32.totalorder %s19, 1
      %p147 = por %p145, %p146
      %p148 = scmp.ne.s32.totalorder %s137, %s138
      %p149 = scmp.eq.s32.totalorder %s19, 0
      %p150 = por %p148, %p149
      %p151 = scmp.ne.s32.totalorder %s137, %s138
      %p152 = scmp.eq.s32.totalorder %s20, 1
      %p153 = por %p151, %p152
      %p155 = scmp.ne.s32.totalorder %s138, %s154
      %p156 = scmp.eq.s32.totalorder %s20, 0
      %p157 = por %p155, %p156
      %p158 = scmp.le.s32.totalorder 1, %s14
      %p159 = scmp.lt.s32.totalorder %s14, 3
      %p160 = pnand %p158, %p159
      %p161 = pneg %p160
      // Predicated region
      $region9: #{cnet_forward.1} parent=5 // pred_check
        _
      $region10: #{cnet_forward.1} parent=5 // pred_check_branch
        %163 = sbr.rel (%p160) target = $region12
      $region11: #{cnet_forward.1} parent=5 // pred_region
        %s164 = ssub.s32 %s14, 1
        // Predicated region
        $region13: #{cnet_forward.1} parent=11 // pred_check
          %p165 = pneg %p61
        $region14: #{cnet_forward.1} parent=11 // pred_check_branch
          %167 = sbr.rel (%p165) target = $region16
        $region15: #{cnet_forward.1} parent=11 // pred_region
          _
        $region16: #{cnet_forward.1} parent=11 // pred_fallthru
          _
        // Predicated region
        $region17: #{cnet_forward.1} parent=11 // pred_check
          %p168 = pneg %p82
        $region18: #{cnet_forward.1} parent=11 // pred_check_branch
          %170 = sbr.rel (%p168) target = $region20
        $region19: #{cnet_forward.1} parent=11 // pred_region
          _
        $region20: #{cnet_forward.1} parent=11 // pred_fallthru
          _
        // Predicated region
        $region21: #{cnet_forward.1} parent=11 // pred_check
          %p171 = pneg %p103
        $region22: #{cnet_forward.1} parent=11 // pred_check_branch
          %173 = sbr.rel (%p171) target = $region24
        $region23: #{cnet_forward.1} parent=11 // pred_region
          _
        $region24: #{cnet_forward.1} parent=11 // pred_fallthru
          _
        // Predicated region
        $region25: #{cnet_forward.1} parent=11 // pred_check
          %p174 = pneg %p124
        $region26: #{cnet_forward.1} parent=11 // pred_check_branch
          %176 = sbr.rel (%p174) target = $region28
        $region27: #{cnet_forward.1} parent=11 // pred_region
          _
        $region28: #{cnet_forward.1} parent=11 // pred_fallthru
          _
      $region12: #{cnet_forward.1} parent=5 // pred_fallthru
        _
      %p177 = scmp.lt.s32.totalorder %s14, 2
      // Predicated region
      $region29: #{cnet_forward.1} parent=5 // pred_check
        %p178 = pneg %p177
      $region30: #{cnet_forward.1} parent=5 // pred_check_branch
        %180 = sbr.rel (%p178) target = $region32
      $region31: #{cnet_forward.1} parent=5 // pred_region
        // Predicated region
        $region33: #{cnet_forward.1} parent=31 // pred_check
          %p181 = pneg %p34
        $region34: #{cnet_forward.1} parent=31 // pred_check_branch
          %183 = sbr.rel (%p181) target = $region36
        $region35: #{cnet_forward.1} parent=31 // pred_region
          %p184 = scmp.lt.s32.totalorder %s14, 1
          %s185 = scalar_select %p184, %s14, 1
          %s186 = smul.addr %s185, 72
          %s187 = smul.addr %s186, 4
          %s188 = scalar_lea.vmem %s0, %s187
        $region36: #{cnet_forward.1} parent=31 // pred_fallthru
          _
      $region32: #{cnet_forward.1} parent=5 // pred_fallthru
        _
      %p189 = scmp.le.s32.totalorder 1, %s14
      %p190 = scmp.lt.s32.totalorder %s14, 3
      %p191 = pnand %p189, %p190
      %p192 = pneg %p191
      // Predicated region
      $region37: #{cnet_forward.1} parent=5 // pred_check
        _
      $region38: #{cnet_forward.1} parent=5 // pred_check_branch
        %194 = sbr.rel (%p191) target = $region40
      $region39: #{cnet_forward.1} parent=5 // pred_region
        %s195 = ssub.s32 %s14, 1
        %p196 = scmp.lt.s32.totalorder %s19, 1
        %s197 = scalar_select %p196, %s19, 1
        %s198 = smul.addr %s197, 72
        %s199 = smul.addr %s198, 4
        %s200 = scalar_lea.vmem %s0, %s199
        %p201 = pneg %p40
        %p202 = pneg %p37
        %p203 = pneg %p61
        %p204 = pneg %p58
        %p205 = pneg %p82
        %p206 = pneg %p79
        %p207 = pneg %p103
        %p208 = pneg %p100
        %p209 = pneg %p124
        %p210 = pneg %p121
        %p211 = pneg %p150
        %p212 = pneg %p147
        %s213 = sand.u32 %s137, 1
        %s214 = scalar_lea.sflag [#allocation5], %s213
        %s215 = sand.u32 %s137, 1
        %s216 = scalar_lea.vmem [#allocation4], %s215
        %p217 = scmp.lt.s32.totalorder %s19, 1
        %s218 = scalar_select %p217, %s19, 1
        %s219 = smul.addr %s218, 72
        %s220 = smul.addr %s219, 4
        %s221 = scalar_lea.vmem %s0, %s220
        %s223 = scalar_lea.vmem %s221, 216
        %v224 = vld [vmem:[%s223] sm:$0xff]
        %v225 = vld [vmem:[%s223 + $0x8] sm:$0xff]
        %v226 = vld [vmem:[%s223 + $0x10] sm:$0xff]
        %v227 = vld [vmem:[%s223 + $0x18] sm:$0xff]
        %v228 = vld [vmem:[%s223 + $0x20] sm:$0xff]
        %v229 = vld [vmem:[%s223 + $0x28] sm:$0xff]
        %v230 = vld [vmem:[%s223 + $0x30] sm:$0xff]
        %v231 = vld [vmem:[%s223 + $0x38] sm:$0xff]
        %v232 = vld [vmem:[%s223 + $0x40] sm:$0xff]
        %v242 = vcombine.high %v224, %v224
        %v243 = vcombine.high %v225, %v225
        %v244 = vcombine.high %v226, %v226
        %v245 = vcombine.high %v227, %v227
        %v246 = vcombine.high %v228, %v228
        %v247 = vcombine.high %v229, %v229
        %v248 = vcombine.high %v230, %v230
        %v249 = vcombine.high %v231, %v231
        %v250 = vcombine.high %v232, %v232
        %260 = vrot.lane.b32.xlu0 %v224, 49
        %v261 = vpop.permute.xlu0 %260
        %262 = vrot.lane.b32.xlu0 %v242, 49
        %v263 = vpop.permute.xlu0 %262
        %264 = vrot.lane.b32.xlu0 %v225, 49
        %v265 = vpop.permute.xlu0 %264
        %266 = vrot.lane.b32.xlu0 %v243, 49
        %v267 = vpop.permute.xlu0 %266
        %268 = vrot.lane.b32.xlu0 %v226, 49
        %v269 = vpop.permute.xlu0 %268
        %270 = vrot.lane.b32.xlu0 %v244, 49
        %v271 = vpop.permute.xlu0 %270
        %272 = vrot.lane.b32.xlu0 %v227, 49
        %v273 = vpop.permute.xlu0 %272
        %274 = vrot.lane.b32.xlu0 %v245, 49
        %v275 = vpop.permute.xlu0 %274
        %276 = vrot.lane.b32.xlu0 %v228, 49
        %v277 = vpop.permute.xlu0 %276
        %278 = vrot.lane.b32.xlu0 %v246, 49
        %v279 = vpop.permute.xlu0 %278
        %280 = vrot.lane.b32.xlu0 %v229, 49
        %v281 = vpop.permute.xlu0 %280
        %282 = vrot.lane.b32.xlu0 %v247, 49
        %v283 = vpop.permute.xlu0 %282
        %284 = vrot.lane.b32.xlu0 %v230, 49
        %v285 = vpop.permute.xlu0 %284
        %286 = vrot.lane.b32.xlu0 %v248, 49
        %v287 = vpop.permute.xlu0 %286
        %288 = vrot.lane.b32.xlu0 %v231, 49
        %v289 = vpop.permute.xlu0 %288
        %290 = vrot.lane.b32.xlu0 %v249, 49
        %v291 = vpop.permute.xlu0 %290
        %292 = vrot.lane.b32.xlu0 %v232, 49
        %v293 = vpop.permute.xlu0 %292
        %294 = vrot.lane.b32.xlu0 %v250, 49
        %v295 = vpop.permute.xlu0 %294
        %v296 = vlaneseq
        %v297 = vand.u32 %v296, 127
        %vm298 = vcmp.lt.s32.totalorder %v297, 49
        %v299 = vsel %vm298, %v293, %v295
        %v300 = vsel %vm298, %v291, %v293
        %v301 = vsel %vm298, %v289, %v291
        %v302 = vsel %vm298, %v287, %v289
        %v303 = vsel %vm298, %v285, %v287
        %v304 = vsel %vm298, %v283, %v285
        %v305 = vsel %vm298, %v281, %v283
        %v306 = vsel %vm298, %v279, %v281
        %v307 = vsel %vm298, %v277, %v279
        %v308 = vsel %vm298, %v275, %v277
        %v309 = vsel %vm298, %v273, %v275
        %v310 = vsel %vm298, %v271, %v273
        %v311 = vsel %vm298, %v269, %v271
        %v312 = vsel %vm298, %v267, %v269
        %v313 = vsel %vm298, %v265, %v267
        %v314 = vsel %vm298, %v263, %v265
        %v315 = vsel %vm298, %v261, %v263
        %v316 = vsel %vm298, %v295, %v261
        %v317 = vld [vmem:[%s1] sm:$0xff]
        %v318 = vld [vmem:[%s1 + $0x8] sm:$0xff]
        %v319 = vld [vmem:[%s1 + $0x10] sm:$0x3]
        %v323 = vlaneseq
        %v324 = vshrl.u32 %v323, 7
        %v325 = vsub.s32 0, %v324
        %v326 = vrot.slane %v317, %v325
        %v327 = vlaneseq
        %v328 = vshrl.u32 %v327, 7
        %v329 = vsub.s32 1, %v328
        %v330 = vrot.slane %v317, %v329
        %v331 = vlaneseq
        %v332 = vshrl.u32 %v331, 7
        %v333 = vsub.s32 2, %v332
        %v334 = vrot.slane %v317, %v333
        %v335 = vlaneseq
        %v336 = vshrl.u32 %v335, 7
        %v337 = vsub.s32 3, %v336
        %v338 = vrot.slane %v317, %v337
        %v339 = vlaneseq
        %v340 = vshrl.u32 %v339, 7
        %v341 = vsub.s32 4, %v340
        %v342 = vrot.slane %v317, %v341
        %v343 = vlaneseq
        %v344 = vshrl.u32 %v343, 7
        %v345 = vsub.s32 5, %v344
        %v346 = vrot.slane %v317, %v345
        %v347 = vlaneseq
        %v348 = vshrl.u32 %v347, 7
        %v349 = vsub.s32 6, %v348
        %v350 = vrot.slane %v317, %v349
        %v351 = vlaneseq
        %v352 = vshrl.u32 %v351, 7
        %v353 = vsub.s32 7, %v352
        %v354 = vrot.slane %v317, %v353
        %v355 = vlaneseq
        %v356 = vshrl.u32 %v355, 7
        %v357 = vsub.s32 0, %v356
        %v358 = vrot.slane %v318, %v357
        %v359 = vlaneseq
        %v360 = vshrl.u32 %v359, 7
        %v361 = vsub.s32 1, %v360
        %v362 = vrot.slane %v318, %v361
        %v363 = vlaneseq
        %v364 = vshrl.u32 %v363, 7
        %v365 = vsub.s32 2, %v364
        %v366 = vrot.slane %v318, %v365
        %v367 = vlaneseq
        %v368 = vshrl.u32 %v367, 7
        %v369 = vsub.s32 3, %v368
        %v370 = vrot.slane %v318, %v369
        %v371 = vlaneseq
        %v372 = vshrl.u32 %v371, 7
        %v373 = vsub.s32 4, %v372
        %v374 = vrot.slane %v318, %v373
        %v375 = vlaneseq
        %v376 = vshrl.u32 %v375, 7
        %v377 = vsub.s32 5, %v376
        %v378 = vrot.slane %v318, %v377
        %v379 = vlaneseq
        %v380 = vshrl.u32 %v379, 7
        %v381 = vsub.s32 6, %v380
        %v382 = vrot.slane %v318, %v381
        %v383 = vlaneseq
        %v384 = vshrl.u32 %v383, 7
        %v385 = vsub.s32 7, %v384
        %v386 = vrot.slane %v318, %v385
        %v387 = vlaneseq
        %v388 = vshrl.u32 %v387, 7
        %v389 = vsub.s32 0, %v388
        %v390 = vrot.slane %v319, %v389
        %v391 = vlaneseq
        %v392 = vshrl.u32 %v391, 7
        %v393 = vsub.s32 1, %v392
        %v394 = vrot.slane %v319, %v393
        %v413 = vmul.f32 %v316, %v326
        %v414 = vmul.f32 %v315, %v330
        %v415 = vmul.f32 %v314, %v334
        %v416 = vmul.f32 %v313, %v338
        %v417 = vmul.f32 %v312, %v342
        %v418 = vmul.f32 %v311, %v346
        %v419 = vmul.f32 %v310, %v350
        %v420 = vmul.f32 %v309, %v354
        %v421 = vmul.f32 %v308, %v358
        %v422 = vmul.f32 %v307, %v362
        %v423 = vmul.f32 %v306, %v366
        %v424 = vmul.f32 %v305, %v370
        %v425 = vmul.f32 %v304, %v374
        %v426 = vmul.f32 %v303, %v378
        %v427 = vmul.f32 %v302, %v382
        %v428 = vmul.f32 %v301, %v386
        %v429 = vmul.f32 %v300, %v390
        %v430 = vmul.f32 %v299, %v394
        %v431 = vpack.c.bf16 %v413, %v413
        %v432 = vpack.c.bf16 %v414, %v414
        %v433 = vpack.c.bf16 %v415, %v415
        %v434 = vpack.c.bf16 %v416, %v416
        %v435 = vpack.c.bf16 %v417, %v417
        %v436 = vpack.c.bf16 %v418, %v418
        %v437 = vpack.c.bf16 %v419, %v419
        %v438 = vpack.c.bf16 %v420, %v420
        %v439 = vpack.c.bf16 %v421, %v421
        %v440 = vpack.c.bf16 %v422, %v422
        %v441 = vpack.c.bf16 %v423, %v423
        %v442 = vpack.c.bf16 %v424, %v424
        %v443 = vpack.c.bf16 %v425, %v425
        %v444 = vpack.c.bf16 %v426, %v426
        %v445 = vpack.c.bf16 %v427, %v427
        %v446 = vpack.c.bf16 %v428, %v428
        %v447 = vpack.c.bf16 %v429, %v429
        %v448 = vpack.c.bf16 %v430, %v430
        %v467 = vunpack.c.l.b16 %v431
        %v468 = vunpack.c.l.b16 %v432
        %v469 = vunpack.c.l.b16 %v433
        %v470 = vunpack.c.l.b16 %v434
        %v471 = vunpack.c.l.b16 %v435
        %v472 = vunpack.c.l.b16 %v436
        %v473 = vunpack.c.l.b16 %v437
        %v474 = vunpack.c.l.b16 %v438
        %v475 = vunpack.c.l.b16 %v439
        %v476 = vunpack.c.l.b16 %v440
        %v477 = vunpack.c.l.b16 %v441
        %v478 = vunpack.c.l.b16 %v442
        %v479 = vunpack.c.l.b16 %v443
        %v480 = vunpack.c.l.b16 %v444
        %v481 = vunpack.c.l.b16 %v445
        %v482 = vunpack.c.l.b16 %v446
        %v483 = vunpack.c.l.b16 %v447
        %v484 = vunpack.c.l.b16 %v448
        %v485 = vpack.c.b16 %v468, %v467
        %v486 = vpack.c.b16 %v470, %v469
        %v487 = vpack.c.b16 %v472, %v471
        %v488 = vpack.c.b16 %v474, %v473
        %v489 = vpack.c.b16 %v476, %v475
        %v490 = vpack.c.b16 %v478, %v477
        %v491 = vpack.c.b16 %v480, %v479
        %v492 = vpack.c.b16 %v482, %v481
        %v493 = vpack.c.b16 %v484, %v483
        %503 = vst [vmem:[#allocation2] sm:$0x33] %v485
        %504 = vst [vmem:[#allocation2 + $0x8] sm:$0x33] %v486
        %505 = vst [vmem:[#allocation2 + $0x10] sm:$0x33] %v487
        %506 = vst [vmem:[#allocation2 + $0x18] sm:$0x33] %v488
        %507 = vst [vmem:[#allocation2 + $0x20] sm:$0x33] %v489
        %508 = vst [vmem:[#allocation2 + $0x28] sm:$0x33] %v490
        %509 = vst [vmem:[#allocation2 + $0x30] sm:$0x33] %v491
        %510 = vst [vmem:[#allocation2 + $0x38] sm:$0x33] %v492
        %511 = vst [vmem:[#allocation2 + $0x40] sm:$0x33] %v493
        %s512 = scalar_lea.vmem %s221, 144
        %v513 = vld [vmem:[%s512] sm:$0xff]
        %v514 = vld [vmem:[%s512 + $0x8] sm:$0xff]
        %v515 = vld [vmem:[%s512 + $0x10] sm:$0xff]
        %v516 = vld [vmem:[%s512 + $0x18] sm:$0xff]
        %v517 = vld [vmem:[%s512 + $0x20] sm:$0xff]
        %v518 = vld [vmem:[%s512 + $0x28] sm:$0xff]
        %v519 = vld [vmem:[%s512 + $0x30] sm:$0xff]
        %v520 = vld [vmem:[%s512 + $0x38] sm:$0xff]
        %v521 = vld [vmem:[%s512 + $0x40] sm:$0xff]
        %v531 = vcombine.high %v513, %v513
        %v532 = vcombine.high %v514, %v514
        %v533 = vcombine.high %v515, %v515
        %v534 = vcombine.high %v516, %v516
        %v535 = vcombine.high %v517, %v517
        %v536 = vcombine.high %v518, %v518
        %v537 = vcombine.high %v519, %v519
        %v538 = vcombine.high %v520, %v520
        %v539 = vcombine.high %v521, %v521
        %549 = vrot.lane.b32.xlu0 %v513, 48
        %v550 = vpop.permute.xlu0 %549
        %551 = vrot.lane.b32.xlu0 %v531, 48
        %v552 = vpop.permute.xlu0 %551
        %553 = vrot.lane.b32.xlu0 %v514, 48
        %v554 = vpop.permute.xlu0 %553
        %555 = vrot.lane.b32.xlu0 %v532, 48
        %v556 = vpop.permute.xlu0 %555
        %557 = vrot.lane.b32.xlu0 %v515, 48
        %v558 = vpop.permute.xlu0 %557
        %559 = vrot.lane.b32.xlu0 %v533, 48
        %v560 = vpop.permute.xlu0 %559
        %561 = vrot.lane.b32.xlu0 %v516, 48
        %v562 = vpop.permute.xlu0 %561
        %563 = vrot.lane.b32.xlu0 %v534, 48
        %v564 = vpop.permute.xlu0 %563
        %565 = vrot.lane.b32.xlu0 %v517, 48
        %v566 = vpop.permute.xlu0 %565
        %567 = vrot.lane.b32.xlu0 %v535, 48
        %v568 = vpop.permute.xlu0 %567
        %569 = vrot.lane.b32.xlu0 %v518, 48
        %v570 = vpop.permute.xlu0 %569
        %571 = vrot.lane.b32.xlu0 %v536, 48
        %v572 = vpop.permute.xlu0 %571
        %573 = vrot.lane.b32.xlu0 %v519, 48
        %v574 = vpop.permute.xlu0 %573
        %575 = vrot.lane.b32.xlu0 %v537, 48
        %v576 = vpop.permute.xlu0 %575
        %577 = vrot.lane.b32.xlu0 %v520, 48
        %v578 = vpop.permute.xlu0 %577
        %579 = vrot.lane.b32.xlu0 %v538, 48
        %v580 = vpop.permute.xlu0 %579
        %581 = vrot.lane.b32.xlu0 %v521, 48
        %v582 = vpop.permute.xlu0 %581
        %583 = vrot.lane.b32.xlu0 %v539, 48
        %v584 = vpop.permute.xlu0 %583
        %vm585 = vcmp.lt.s32.totalorder %v297, 48
        %v586 = vsel %vm585, %v582, %v584
        %v587 = vsel %vm585, %v580, %v582
        %v588 = vsel %vm585, %v578, %v580
        %v589 = vsel %vm585, %v576, %v578
        %v590 = vsel %vm585, %v574, %v576
        %v591 = vsel %vm585, %v572, %v574
        %v592 = vsel %vm585, %v570, %v572
        %v593 = vsel %vm585, %v568, %v570
        %v594 = vsel %vm585, %v566, %v568
        %v595 = vsel %vm585, %v564, %v566
        %v596 = vsel %vm585, %v562, %v564
        %v597 = vsel %vm585, %v560, %v562
        %v598 = vsel %vm585, %v558, %v560
        %v599 = vsel %vm585, %v556, %v558
        %v600 = vsel %vm585, %v554, %v556
        %v601 = vsel %vm585, %v552, %v554
        %v602 = vsel %vm585, %v550, %v552
        %v603 = vsel %vm585, %v584, %v550
        %s604 = scalar_lea.vmem %s1, 18
        %v605 = vld [vmem:[%s604] sm:$0xff]
        %v606 = vld [vmem:[%s604 + $0x8] sm:$0xff]
        %v607 = vld [vmem:[%s604 + $0x10] sm:$0x3]
        %v611 = vlaneseq
        %v612 = vshrl.u32 %v611, 7
        %v613 = vsub.s32 0, %v612
        %v614 = vrot.slane %v605, %v613
        %v615 = vlaneseq
        %v616 = vshrl.u32 %v615, 7
        %v617 = vsub.s32 1, %v616
        %v618 = vrot.slane %v605, %v617
        %v619 = vlaneseq
        %v620 = vshrl.u32 %v619, 7
        %v621 = vsub.s32 2, %v620
        %v622 = vrot.slane %v605, %v621
        %v623 = vlaneseq
        %v624 = vshrl.u32 %v623, 7
        %v625 = vsub.s32 3, %v624
        %v626 = vrot.slane %v605, %v625
        %v627 = vlaneseq
        %v628 = vshrl.u32 %v627, 7
        %v629 = vsub.s32 4, %v628
        %v630 = vrot.slane %v605, %v629
        %v631 = vlaneseq
        %v632 = vshrl.u32 %v631, 7
        %v633 = vsub.s32 5, %v632
        %v634 = vrot.slane %v605, %v633
        %v635 = vlaneseq
        %v636 = vshrl.u32 %v635, 7
        %v637 = vsub.s32 6, %v636
        %v638 = vrot.slane %v605, %v637
        %v639 = vlaneseq
        %v640 = vshrl.u32 %v639, 7
        %v641 = vsub.s32 7, %v640
        %v642 = vrot.slane %v605, %v641
        %v643 = vlaneseq
        %v644 = vshrl.u32 %v643, 7
        %v645 = vsub.s32 0, %v644
        %v646 = vrot.slane %v606, %v645
        %v647 = vlaneseq
        %v648 = vshrl.u32 %v647, 7
        %v649 = vsub.s32 1, %v648
        %v650 = vrot.slane %v606, %v649
        %v651 = vlaneseq
        %v652 = vshrl.u32 %v651, 7
        %v653 = vsub.s32 2, %v652
        %v654 = vrot.slane %v606, %v653
        %v655 = vlaneseq
        %v656 = vshrl.u32 %v655, 7
        %v657 = vsub.s32 3, %v656
        %v658 = vrot.slane %v606, %v657
        %v659 = vlaneseq
        %v660 = vshrl.u32 %v659, 7
        %v661 = vsub.s32 4, %v660
        %v662 = vrot.slane %v606, %v661
        %v663 = vlaneseq
        %v664 = vshrl.u32 %v663, 7
        %v665 = vsub.s32 5, %v664
        %v666 = vrot.slane %v606, %v665
        %v667 = vlaneseq
        %v668 = vshrl.u32 %v667, 7
        %v669 = vsub.s32 6, %v668
        %v670 = vrot.slane %v606, %v669
        %v671 = vlaneseq
        %v672 = vshrl.u32 %v671, 7
        %v673 = vsub.s32 7, %v672
        %v674 = vrot.slane %v606, %v673
        %v675 = vlaneseq
        %v676 = vshrl.u32 %v675, 7
        %v677 = vsub.s32 0, %v676
        %v678 = vrot.slane %v607, %v677
        %v679 = vlaneseq
        %v680 = vshrl.u32 %v679, 7
        %v681 = vsub.s32 1, %v680
        %v682 = vrot.slane %v607, %v681
        %v701 = vmul.f32 %v603, %v614
        %v702 = vmul.f32 %v602, %v618
        %v703 = vmul.f32 %v601, %v622
        %v704 = vmul.f32 %v600, %v626
        %v705 = vmul.f32 %v599, %v630
        %v706 = vmul.f32 %v598, %v634
        %v707 = vmul.f32 %v597, %v638
        %v708 = vmul.f32 %v596, %v642
        %v709 = vmul.f32 %v595, %v646
        %v710 = vmul.f32 %v594, %v650
        %v711 = vmul.f32 %v593, %v654
        %v712 = vmul.f32 %v592, %v658
        %v713 = vmul.f32 %v591, %v662
        %v714 = vmul.f32 %v590, %v666
        %v715 = vmul.f32 %v589, %v670
        %v716 = vmul.f32 %v588, %v674
        %v717 = vmul.f32 %v587, %v678
        %v718 = vmul.f32 %v586, %v682
        %v719 = vpack.c.bf16 %v701, %v701
        %v720 = vpack.c.bf16 %v702, %v702
        %v721 = vpack.c.bf16 %v703, %v703
        %v722 = vpack.c.bf16 %v704, %v704
        %v723 = vpack.c.bf16 %v705, %v705
        %v724 = vpack.c.bf16 %v706, %v706
        %v725 = vpack.c.bf16 %v707, %v707
        %v726 = vpack.c.bf16 %v708, %v708
        %v727 = vpack.c.bf16 %v709, %v709
        %v728 = vpack.c.bf16 %v710, %v710
        %v729 = vpack.c.bf16 %v711, %v711
        %v730 = vpack.c.bf16 %v712, %v712
        %v731 = vpack.c.bf16 %v713, %v713
        %v732 = vpack.c.bf16 %v714, %v714
        %v733 = vpack.c.bf16 %v715, %v715
        %v734 = vpack.c.bf16 %v716, %v716
        %v735 = vpack.c.bf16 %v717, %v717
        %v736 = vpack.c.bf16 %v718, %v718
        %v755 = vunpack.c.l.b16 %v719
        %v756 = vunpack.c.l.b16 %v720
        %v757 = vunpack.c.l.b16 %v721
        %v758 = vunpack.c.l.b16 %v722
        %v759 = vunpack.c.l.b16 %v723
        %v760 = vunpack.c.l.b16 %v724
        %v761 = vunpack.c.l.b16 %v725
        %v762 = vunpack.c.l.b16 %v726
        %v763 = vunpack.c.l.b16 %v727
        %v764 = vunpack.c.l.b16 %v728
        %v765 = vunpack.c.l.b16 %v729
        %v766 = vunpack.c.l.b16 %v730
        %v767 = vunpack.c.l.b16 %v731
        %v768 = vunpack.c.l.b16 %v732
        %v769 = vunpack.c.l.b16 %v733
        %v770 = vunpack.c.l.b16 %v734
        %v771 = vunpack.c.l.b16 %v735
        %v772 = vunpack.c.l.b16 %v736
        %v773 = vpack.c.b16 %v756, %v755
        %v774 = vpack.c.b16 %v758, %v757
        %v775 = vpack.c.b16 %v760, %v759
        %v776 = vpack.c.b16 %v762, %v761
        %v777 = vpack.c.b16 %v764, %v763
        %v778 = vpack.c.b16 %v766, %v765
        %v779 = vpack.c.b16 %v768, %v767
        %v780 = vpack.c.b16 %v770, %v769
        %v781 = vpack.c.b16 %v772, %v771
        %v782 = vrot.slane %v773, 6
        %v783 = vrot.slane %v774, 6
        %v784 = vrot.slane %v775, 6
        %v785 = vrot.slane %v776, 6
        %v786 = vrot.slane %v777, 6
        %v787 = vrot.slane %v778, 6
        %v788 = vrot.slane %v779, 6
        %v789 = vrot.slane %v780, 6
        %v790 = vrot.slane %v781, 6
        %800 = vst [vmem:[#allocation2] sm:$0xcc] %v782
        %801 = vst [vmem:[#allocation2 + $0x8] sm:$0xcc] %v783
        %802 = vst [vmem:[#allocation2 + $0x10] sm:$0xcc] %v784
        %803 = vst [vmem:[#allocation2 + $0x18] sm:$0xcc] %v785
        %804 = vst [vmem:[#allocation2 + $0x20] sm:$0xcc] %v786
        %805 = vst [vmem:[#allocation2 + $0x28] sm:$0xcc] %v787
        %806 = vst [vmem:[#allocation2 + $0x30] sm:$0xcc] %v788
        %807 = vst [vmem:[#allocation2 + $0x38] sm:$0xcc] %v789
        %808 = vst [vmem:[#allocation2 + $0x40] sm:$0xcc] %v790
        %v809 = vld [vmem:[%s223] sm:$0xff]
        %v810 = vld [vmem:[%s223 + $0x8] sm:$0xff]
        %v811 = vld [vmem:[%s223 + $0x10] sm:$0xff]
        %v812 = vld [vmem:[%s223 + $0x18] sm:$0xff]
        %v813 = vld [vmem:[%s223 + $0x20] sm:$0xff]
        %v814 = vld [vmem:[%s223 + $0x28] sm:$0xff]
        %v815 = vld [vmem:[%s223 + $0x30] sm:$0xff]
        %v816 = vld [vmem:[%s223 + $0x38] sm:$0xff]
        %v817 = vld [vmem:[%s223 + $0x40] sm:$0xff]
        %v827 = vcombine.high %v809, %v809
        %v828 = vcombine.high %v810, %v810
        %v829 = vcombine.high %v811, %v811
        %v830 = vcombine.high %v812, %v812
        %v831 = vcombine.high %v813, %v813
        %v832 = vcombine.high %v814, %v814
        %v833 = vcombine.high %v815, %v815
        %v834 = vcombine.high %v816, %v816
        %v835 = vcombine.high %v817, %v817
        %845 = vrot.lane.b32.xlu0 %v809, 48
        %v846 = vpop.permute.xlu0 %845
        %847 = vrot.lane.b32.xlu0 %v827, 48
        %v848 = vpop.permute.xlu0 %847
        %849 = vrot.lane.b32.xlu0 %v810, 48
        %v850 = vpop.permute.xlu0 %849
        %851 = vrot.lane.b32.xlu0 %v828, 48
        %v852 = vpop.permute.xlu0 %851
        %853 = vrot.lane.b32.xlu0 %v811, 48
        %v854 = vpop.permute.xlu0 %853
        %855 = vrot.lane.b32.xlu0 %v829, 48
        %v856 = vpop.permute.xlu0 %855
        %857 = vrot.lane.b32.xlu0 %v812, 48
        %v858 = vpop.permute.xlu0 %857
        %859 = vrot.lane.b32.xlu0 %v830, 48
        %v860 = vpop.permute.xlu0 %859
        %861 = vrot.lane.b32.xlu0 %v813, 48
        %v862 = vpop.permute.xlu0 %861
        %863 = vrot.lane.b32.xlu0 %v831, 48
        %v864 = vpop.permute.xlu0 %863
        %865 = vrot.lane.b32.xlu0 %v814, 48
        %v866 = vpop.permute.xlu0 %865
        %867 = vrot.lane.b32.xlu0 %v832, 48
        %v868 = vpop.permute.xlu0 %867
        %869 = vrot.lane.b32.xlu0 %v815, 48
        %v870 = vpop.permute.xlu0 %869
        %871 = vrot.lane.b32.xlu0 %v833, 48
        %v872 = vpop.permute.xlu0 %871
        %873 = vrot.lane.b32.xlu0 %v816, 48
        %v874 = vpop.permute.xlu0 %873
        %875 = vrot.lane.b32.xlu0 %v834, 48
        %v876 = vpop.permute.xlu0 %875
        %877 = vrot.lane.b32.xlu0 %v817, 48
        %v878 = vpop.permute.xlu0 %877
        %879 = vrot.lane.b32.xlu0 %v835, 48
        %v880 = vpop.permute.xlu0 %879
        %v881 = vsel %vm585, %v878, %v880
        %v882 = vsel %vm585, %v876, %v878
        %v883 = vsel %vm585, %v874, %v876
        %v884 = vsel %vm585, %v872, %v874
        %v885 = vsel %vm585, %v870, %v872
        %v886 = vsel %vm585, %v868, %v870
        %v887 = vsel %vm585, %v866, %v868
        %v888 = vsel %vm585, %v864, %v866
        %v889 = vsel %vm585, %v862, %v864
        %v890 = vsel %vm585, %v860, %v862
        %v891 = vsel %vm585, %v858, %v860
        %v892 = vsel %vm585, %v856, %v858
        %v893 = vsel %vm585, %v854, %v856
        %v894 = vsel %vm585, %v852, %v854
        %v895 = vsel %vm585, %v850, %v852
        %v896 = vsel %vm585, %v848, %v850
        %v897 = vsel %vm585, %v846, %v848
        %v898 = vsel %vm585, %v880, %v846
        %v899 = vld [vmem:[%s604] sm:$0xff]
        %v900 = vld [vmem:[%s604 + $0x8] sm:$0xff]
        %v901 = vld [vmem:[%s604 + $0x10] sm:$0x3]
        %v905 = vlaneseq
        %v906 = vshrl.u32 %v905, 7
        %v907 = vsub.s32 0, %v906
        %v908 = vrot.slane %v899, %v907
        %v909 = vlaneseq
        %v910 = vshrl.u32 %v909, 7
        %v911 = vsub.s32 1, %v910
        %v912 = vrot.slane %v899, %v911
        %v913 = vlaneseq
        %v914 = vshrl.u32 %v913, 7
        %v915 = vsub.s32 2, %v914
        %v916 = vrot.slane %v899, %v915
        %v917 = vlaneseq
        %v918 = vshrl.u32 %v917, 7
        %v919 = vsub.s32 3, %v918
        %v920 = vrot.slane %v899, %v919
        %v921 = vlaneseq
        %v922 = vshrl.u32 %v921, 7
        %v923 = vsub.s32 4, %v922
        %v924 = vrot.slane %v899, %v923
        %v925 = vlaneseq
        %v926 = vshrl.u32 %v925, 7
        %v927 = vsub.s32 5, %v926
        %v928 = vrot.slane %v899, %v927
        %v929 = vlaneseq
        %v930 = vshrl.u32 %v929, 7
        %v931 = vsub.s32 6, %v930
        %v932 = vrot.slane %v899, %v931
        %v933 = vlaneseq
        %v934 = vshrl.u32 %v933, 7
        %v935 = vsub.s32 7, %v934
        %v936 = vrot.slane %v899, %v935
        %v937 = vlaneseq
        %v938 = vshrl.u32 %v937, 7
        %v939 = vsub.s32 0, %v938
        %v940 = vrot.slane %v900, %v939
        %v941 = vlaneseq
        %v942 = vshrl.u32 %v941, 7
        %v943 = vsub.s32 1, %v942
        %v944 = vrot.slane %v900, %v943
        %v945 = vlaneseq
        %v946 = vshrl.u32 %v945, 7
        %v947 = vsub.s32 2, %v946
        %v948 = vrot.slane %v900, %v947
        %v949 = vlaneseq
        %v950 = vshrl.u32 %v949, 7
        %v951 = vsub.s32 3, %v950
        %v952 = vrot.slane %v900, %v951
        %v953 = vlaneseq
        %v954 = vshrl.u32 %v953, 7
        %v955 = vsub.s32 4, %v954
        %v956 = vrot.slane %v900, %v955
        %v957 = vlaneseq
        %v958 = vshrl.u32 %v957, 7
        %v959 = vsub.s32 5, %v958
        %v960 = vrot.slane %v900, %v959
        %v961 = vlaneseq
        %v962 = vshrl.u32 %v961, 7
        %v963 = vsub.s32 6, %v962
        %v964 = vrot.slane %v900, %v963
        %v965 = vlaneseq
        %v966 = vshrl.u32 %v965, 7
        %v967 = vsub.s32 7, %v966
        %v968 = vrot.slane %v900, %v967
        %v969 = vlaneseq
        %v970 = vshrl.u32 %v969, 7
        %v971 = vsub.s32 0, %v970
        %v972 = vrot.slane %v901, %v971
        %v973 = vlaneseq
        %v974 = vshrl.u32 %v973, 7
        %v975 = vsub.s32 1, %v974
        %v976 = vrot.slane %v901, %v975
        %v995 = vmul.f32 %v898, %v908
        %v996 = vmul.f32 %v897, %v912
        %v997 = vmul.f32 %v896, %v916
        %v998 = vmul.f32 %v895, %v920
        %v999 = vmul.f32 %v894, %v924
        %v1000 = vmul.f32 %v893, %v928
        %v1001 = vmul.f32 %v892, %v932
        %v1002 = vmul.f32 %v891, %v936
        %v1003 = vmul.f32 %v890, %v940
        %v1004 = vmul.f32 %v889, %v944
        %v1005 = vmul.f32 %v888, %v948
        %v1006 = vmul.f32 %v887, %v952
        %v1007 = vmul.f32 %v886, %v956
        %v1008 = vmul.f32 %v885, %v960
        %v1009 = vmul.f32 %v884, %v964
        %v1010 = vmul.f32 %v883, %v968
        %v1011 = vmul.f32 %v882, %v972
        %v1012 = vmul.f32 %v881, %v976
        %v1013 = vpack.c.bf16 %v995, %v995
        %v1014 = vpack.c.bf16 %v996, %v996
        %v1015 = vpack.c.bf16 %v997, %v997
        %v1016 = vpack.c.bf16 %v998, %v998
        %v1017 = vpack.c.bf16 %v999, %v999
        %v1018 = vpack.c.bf16 %v1000, %v1000
        %v1019 = vpack.c.bf16 %v1001, %v1001
        %v1020 = vpack.c.bf16 %v1002, %v1002
        %v1021 = vpack.c.bf16 %v1003, %v1003
        %v1022 = vpack.c.bf16 %v1004, %v1004
        %v1023 = vpack.c.bf16 %v1005, %v1005
        %v1024 = vpack.c.bf16 %v1006, %v1006
        %v1025 = vpack.c.bf16 %v1007, %v1007
        %v1026 = vpack.c.bf16 %v1008, %v1008
        %v1027 = vpack.c.bf16 %v1009, %v1009
        %v1028 = vpack.c.bf16 %v1010, %v1010
        %v1029 = vpack.c.bf16 %v1011, %v1011
        %v1030 = vpack.c.bf16 %v1012, %v1012
        %v1049 = vunpack.c.l.b16 %v1013
        %v1050 = vunpack.c.l.b16 %v1014
        %v1051 = vunpack.c.l.b16 %v1015
        %v1052 = vunpack.c.l.b16 %v1016
        %v1053 = vunpack.c.l.b16 %v1017
        %v1054 = vunpack.c.l.b16 %v1018
        %v1055 = vunpack.c.l.b16 %v1019
        %v1056 = vunpack.c.l.b16 %v1020
        %v1057 = vunpack.c.l.b16 %v1021
        %v1058 = vunpack.c.l.b16 %v1022
        %v1059 = vunpack.c.l.b16 %v1023
        %v1060 = vunpack.c.l.b16 %v1024
        %v1061 = vunpack.c.l.b16 %v1025
        %v1062 = vunpack.c.l.b16 %v1026
        %v1063 = vunpack.c.l.b16 %v1027
        %v1064 = vunpack.c.l.b16 %v1028
        %v1065 = vunpack.c.l.b16 %v1029
        %v1066 = vunpack.c.l.b16 %v1030
        %v1067 = vpack.c.b16 %v1050, %v1049
        %v1068 = vpack.c.b16 %v1052, %v1051
        %v1069 = vpack.c.b16 %v1054, %v1053
        %v1070 = vpack.c.b16 %v1056, %v1055
        %v1071 = vpack.c.b16 %v1058, %v1057
        %v1072 = vpack.c.b16 %v1060, %v1059
        %v1073 = vpack.c.b16 %v1062, %v1061
        %v1074 = vpack.c.b16 %v1064, %v1063
        %v1075 = vpack.c.b16 %v1066, %v1065
        %1085 = vst [vmem:[#allocation2 + $0x48] sm:$0x33] %v1067
        %1086 = vst [vmem:[#allocation2 + $0x50] sm:$0x33] %v1068
        %1087 = vst [vmem:[#allocation2 + $0x58] sm:$0x33] %v1069
        %1088 = vst [vmem:[#allocation2 + $0x60] sm:$0x33] %v1070
        %1089 = vst [vmem:[#allocation2 + $0x68] sm:$0x33] %v1071
        %1090 = vst [vmem:[#allocation2 + $0x70] sm:$0x33] %v1072
        %1091 = vst [vmem:[#allocation2 + $0x78] sm:$0x33] %v1073
        %1092 = vst [vmem:[#allocation2 + $0x80] sm:$0x33] %v1074
        %1093 = vst [vmem:[#allocation2 + $0x88] sm:$0x33] %v1075
        %v1094 = vld [vmem:[%s512] sm:$0xff]
        %v1095 = vld [vmem:[%s512 + $0x8] sm:$0xff]
        %v1096 = vld [vmem:[%s512 + $0x10] sm:$0xff]
        %v1097 = vld [vmem:[%s512 + $0x18] sm:$0xff]
        %v1098 = vld [vmem:[%s512 + $0x20] sm:$0xff]
        %v1099 = vld [vmem:[%s512 + $0x28] sm:$0xff]
        %v1100 = vld [vmem:[%s512 + $0x30] sm:$0xff]
        %v1101 = vld [vmem:[%s512 + $0x38] sm:$0xff]
        %v1102 = vld [vmem:[%s512 + $0x40] sm:$0xff]
        %v1112 = vcombine.high %v1094, %v1094
        %v1113 = vcombine.high %v1095, %v1095
        %v1114 = vcombine.high %v1096, %v1096
        %v1115 = vcombine.high %v1097, %v1097
        %v1116 = vcombine.high %v1098, %v1098
        %v1117 = vcombine.high %v1099, %v1099
        %v1118 = vcombine.high %v1100, %v1100
        %v1119 = vcombine.high %v1101, %v1101
        %v1120 = vcombine.high %v1102, %v1102
        %1130 = vrot.lane.b32.xlu0 %v1094, 47
        %v1131 = vpop.permute.xlu0 %1130
        %1132 = vrot.lane.b32.xlu0 %v1112, 47
        %v1133 = vpop.permute.xlu0 %1132
        %1134 = vrot.lane.b32.xlu0 %v1095, 47
        %v1135 = vpop.permute.xlu0 %1134
        %1136 = vrot.lane.b32.xlu0 %v1113, 47
        %v1137 = vpop.permute.xlu0 %1136
        %1138 = vrot.lane.b32.xlu0 %v1096, 47
        %v1139 = vpop.permute.xlu0 %1138
        %1140 = vrot.lane.b32.xlu0 %v1114, 47
        %v1141 = vpop.permute.xlu0 %1140
        %1142 = vrot.lane.b32.xlu0 %v1097, 47
        %v1143 = vpop.permute.xlu0 %1142
        %1144 = vrot.lane.b32.xlu0 %v1115, 47
        %v1145 = vpop.permute.xlu0 %1144
        %1146 = vrot.lane.b32.xlu0 %v1098, 47
        %v1147 = vpop.permute.xlu0 %1146
        %1148 = vrot.lane.b32.xlu0 %v1116, 47
        %v1149 = vpop.permute.xlu0 %1148
        %1150 = vrot.lane.b32.xlu0 %v1099, 47
        %v1151 = vpop.permute.xlu0 %1150
        %1152 = vrot.lane.b32.xlu0 %v1117, 47
        %v1153 = vpop.permute.xlu0 %1152
        %1154 = vrot.lane.b32.xlu0 %v1100, 47
        %v1155 = vpop.permute.xlu0 %1154
        %1156 = vrot.lane.b32.xlu0 %v1118, 47
        %v1157 = vpop.permute.xlu0 %1156
        %1158 = vrot.lane.b32.xlu0 %v1101, 47
        %v1159 = vpop.permute.xlu0 %1158
        %1160 = vrot.lane.b32.xlu0 %v1119, 47
        %v1161 = vpop.permute.xlu0 %1160
        %1162 = vrot.lane.b32.xlu0 %v1102, 47
        %v1163 = vpop.permute.xlu0 %1162
        %1164 = vrot.lane.b32.xlu0 %v1120, 47
        %v1165 = vpop.permute.xlu0 %1164
        %vm1166 = vcmp.lt.s32.totalorder %v297, 47
        %v1167 = vsel %vm1166, %v1163, %v1165
        %v1168 = vsel %vm1166, %v1161, %v1163
        %v1169 = vsel %vm1166, %v1159, %v1161
        %v1170 = vsel %vm1166, %v1157, %v1159
        %v1171 = vsel %vm1166, %v1155, %v1157
        %v1172 = vsel %vm1166, %v1153, %v1155
        %v1173 = vsel %vm1166, %v1151, %v1153
        %v1174 = vsel %vm1166, %v1149, %v1151
        %v1175 = vsel %vm1166, %v1147, %v1149
        %v1176 = vsel %vm1166, %v1145, %v1147
        %v1177 = vsel %vm1166, %v1143, %v1145
        %v1178 = vsel %vm1166, %v1141, %v1143
        %v1179 = vsel %vm1166, %v1139, %v1141
        %v1180 = vsel %vm1166, %v1137, %v1139
        %v1181 = vsel %vm1166, %v1135, %v1137
        %v1182 = vsel %vm1166, %v1133, %v1135
        %v1183 = vsel %vm1166, %v1131, %v1133
        %v1184 = vsel %vm1166, %v1165, %v1131
        %s1185 = scalar_lea.vmem %s1, 36
        %v1186 = vld [vmem:[%s1185] sm:$0xff]
        %v1187 = vld [vmem:[%s1185 + $0x8] sm:$0xff]
        %v1188 = vld [vmem:[%s1185 + $0x10] sm:$0x3]
        %v1192 = vlaneseq
        %v1193 = vshrl.u32 %v1192, 7
        %v1194 = vsub.s32 0, %v1193
        %v1195 = vrot.slane %v1186, %v1194
        %v1196 = vlaneseq
        %v1197 = vshrl.u32 %v1196, 7
        %v1198 = vsub.s32 1, %v1197
        %v1199 = vrot.slane %v1186, %v1198
        %v1200 = vlaneseq
        %v1201 = vshrl.u32 %v1200, 7
        %v1202 = vsub.s32 2, %v1201
        %v1203 = vrot.slane %v1186, %v1202
        %v1204 = vlaneseq
        %v1205 = vshrl.u32 %v1204, 7
        %v1206 = vsub.s32 3, %v1205
        %v1207 = vrot.slane %v1186, %v1206
        %v1208 = vlaneseq
        %v1209 = vshrl.u32 %v1208, 7
        %v1210 = vsub.s32 4, %v1209
        %v1211 = vrot.slane %v1186, %v1210
        %v1212 = vlaneseq
        %v1213 = vshrl.u32 %v1212, 7
        %v1214 = vsub.s32 5, %v1213
        %v1215 = vrot.slane %v1186, %v1214
        %v1216 = vlaneseq
        %v1217 = vshrl.u32 %v1216, 7
        %v1218 = vsub.s32 6, %v1217
        %v1219 = vrot.slane %v1186, %v1218
        %v1220 = vlaneseq
        %v1221 = vshrl.u32 %v1220, 7
        %v1222 = vsub.s32 7, %v1221
        %v1223 = vrot.slane %v1186, %v1222
        %v1224 = vlaneseq
        %v1225 = vshrl.u32 %v1224, 7
        %v1226 = vsub.s32 0, %v1225
        %v1227 = vrot.slane %v1187, %v1226
        %v1228 = vlaneseq
        %v1229 = vshrl.u32 %v1228, 7
        %v1230 = vsub.s32 1, %v1229
        %v1231 = vrot.slane %v1187, %v1230
        %v1232 = vlaneseq
        %v1233 = vshrl.u32 %v1232, 7
        %v1234 = vsub.s32 2, %v1233
        %v1235 = vrot.slane %v1187, %v1234
        %v1236 = vlaneseq
        %v1237 = vshrl.u32 %v1236, 7
        %v1238 = vsub.s32 3, %v1237
        %v1239 = vrot.slane %v1187, %v1238
        %v1240 = vlaneseq
        %v1241 = vshrl.u32 %v1240, 7
        %v1242 = vsub.s32 4, %v1241
        %v1243 = vrot.slane %v1187, %v1242
        %v1244 = vlaneseq
        %v1245 = vshrl.u32 %v1244, 7
        %v1246 = vsub.s32 5, %v1245
        %v1247 = vrot.slane %v1187, %v1246
        %v1248 = vlaneseq
        %v1249 = vshrl.u32 %v1248, 7
        %v1250 = vsub.s32 6, %v1249
        %v1251 = vrot.slane %v1187, %v1250
        %v1252 = vlaneseq
        %v1253 = vshrl.u32 %v1252, 7
        %v1254 = vsub.s32 7, %v1253
        %v1255 = vrot.slane %v1187, %v1254
        %v1256 = vlaneseq
        %v1257 = vshrl.u32 %v1256, 7
        %v1258 = vsub.s32 0, %v1257
        %v1259 = vrot.slane %v1188, %v1258
        %v1260 = vlaneseq
        %v1261 = vshrl.u32 %v1260, 7
        %v1262 = vsub.s32 1, %v1261
        %v1263 = vrot.slane %v1188, %v1262
        %v1282 = vmul.f32 %v1184, %v1195
        %v1283 = vmul.f32 %v1183, %v1199
        %v1284 = vmul.f32 %v1182, %v1203
        %v1285 = vmul.f32 %v1181, %v1207
        %v1286 = vmul.f32 %v1180, %v1211
        %v1287 = vmul.f32 %v1179, %v1215
        %v1288 = vmul.f32 %v1178, %v1219
        %v1289 = vmul.f32 %v1177, %v1223
        %v1290 = vmul.f32 %v1176, %v1227
        %v1291 = vmul.f32 %v1175, %v1231
        %v1292 = vmul.f32 %v1174, %v1235
        %v1293 = vmul.f32 %v1173, %v1239
        %v1294 = vmul.f32 %v1172, %v1243
        %v1295 = vmul.f32 %v1171, %v1247
        %v1296 = vmul.f32 %v1170, %v1251
        %v1297 = vmul.f32 %v1169, %v1255
        %v1298 = vmul.f32 %v1168, %v1259
        %v1299 = vmul.f32 %v1167, %v1263
        %v1300 = vpack.c.bf16 %v1282, %v1282
        %v1301 = vpack.c.bf16 %v1283, %v1283
        %v1302 = vpack.c.bf16 %v1284, %v1284
        %v1303 = vpack.c.bf16 %v1285, %v1285
        %v1304 = vpack.c.bf16 %v1286, %v1286
        %v1305 = vpack.c.bf16 %v1287, %v1287
        %v1306 = vpack.c.bf16 %v1288, %v1288
        %v1307 = vpack.c.bf16 %v1289, %v1289
        %v1308 = vpack.c.bf16 %v1290, %v1290
        %v1309 = vpack.c.bf16 %v1291, %v1291
        %v1310 = vpack.c.bf16 %v1292, %v1292
        %v1311 = vpack.c.bf16 %v1293, %v1293
        %v1312 = vpack.c.bf16 %v1294, %v1294
        %v1313 = vpack.c.bf16 %v1295, %v1295
        %v1314 = vpack.c.bf16 %v1296, %v1296
        %v1315 = vpack.c.bf16 %v1297, %v1297
        %v1316 = vpack.c.bf16 %v1298, %v1298
        %v1317 = vpack.c.bf16 %v1299, %v1299
        %v1336 = vunpack.c.l.b16 %v1300
        %v1337 = vunpack.c.l.b16 %v1301
        %v1338 = vunpack.c.l.b16 %v1302
        %v1339 = vunpack.c.l.b16 %v1303
        %v1340 = vunpack.c.l.b16 %v1304
        %v1341 = vunpack.c.l.b16 %v1305
        %v1342 = vunpack.c.l.b16 %v1306
        %v1343 = vunpack.c.l.b16 %v1307
        %v1344 = vunpack.c.l.b16 %v1308
        %v1345 = vunpack.c.l.b16 %v1309
        %v1346 = vunpack.c.l.b16 %v1310
        %v1347 = vunpack.c.l.b16 %v1311
        %v1348 = vunpack.c.l.b16 %v1312
        %v1349 = vunpack.c.l.b16 %v1313
        %v1350 = vunpack.c.l.b16 %v1314
        %v1351 = vunpack.c.l.b16 %v1315
        %v1352 = vunpack.c.l.b16 %v1316
        %v1353 = vunpack.c.l.b16 %v1317
        %v1354 = vpack.c.b16 %v1337, %v1336
        %v1355 = vpack.c.b16 %v1339, %v1338
        %v1356 = vpack.c.b16 %v1341, %v1340
        %v1357 = vpack.c.b16 %v1343, %v1342
        %v1358 = vpack.c.b16 %v1345, %v1344
        %v1359 = vpack.c.b16 %v1347, %v1346
        %v1360 = vpack.c.b16 %v1349, %v1348
        %v1361 = vpack.c.b16 %v1351, %v1350
        %v1362 = vpack.c.b16 %v1353, %v1352
        %v1363 = vrot.slane %v1354, 6
        %v1364 = vrot.slane %v1355, 6
        %v1365 = vrot.slane %v1356, 6
        %v1366 = vrot.slane %v1357, 6
        %v1367 = vrot.slane %v1358, 6
        %v1368 = vrot.slane %v1359, 6
        %v1369 = vrot.slane %v1360, 6
        %v1370 = vrot.slane %v1361, 6
        %v1371 = vrot.slane %v1362, 6
        %1381 = vst [vmem:[#allocation2 + $0x48] sm:$0xcc] %v1363
        %1382 = vst [vmem:[#allocation2 + $0x50] sm:$0xcc] %v1364
        %1383 = vst [vmem:[#allocation2 + $0x58] sm:$0xcc] %v1365
        %1384 = vst [vmem:[#allocation2 + $0x60] sm:$0xcc] %v1366
        %1385 = vst [vmem:[#allocation2 + $0x68] sm:$0xcc] %v1367
        %1386 = vst [vmem:[#allocation2 + $0x70] sm:$0xcc] %v1368
        %1387 = vst [vmem:[#allocation2 + $0x78] sm:$0xcc] %v1369
        %1388 = vst [vmem:[#allocation2 + $0x80] sm:$0xcc] %v1370
        %1389 = vst [vmem:[#allocation2 + $0x88] sm:$0xcc] %v1371
        %s1390 = scalar_lea.vmem %s221, 72
        %v1391 = vld [vmem:[%s1390] sm:$0xff]
        %v1392 = vld [vmem:[%s1390 + $0x8] sm:$0xff]
        %v1393 = vld [vmem:[%s1390 + $0x10] sm:$0xff]
        %v1394 = vld [vmem:[%s1390 + $0x18] sm:$0xff]
        %v1395 = vld [vmem:[%s1390 + $0x20] sm:$0xff]
        %v1396 = vld [vmem:[%s1390 + $0x28] sm:$0xff]
        %v1397 = vld [vmem:[%s1390 + $0x30] sm:$0xff]
        %v1398 = vld [vmem:[%s1390 + $0x38] sm:$0xff]
        %v1399 = vld [vmem:[%s1390 + $0x40] sm:$0xff]
        %v1409 = vcombine.high %v1391, %v1391
        %v1410 = vcombine.high %v1392, %v1392
        %v1411 = vcombine.high %v1393, %v1393
        %v1412 = vcombine.high %v1394, %v1394
        %v1413 = vcombine.high %v1395, %v1395
        %v1414 = vcombine.high %v1396, %v1396
        %v1415 = vcombine.high %v1397, %v1397
        %v1416 = vcombine.high %v1398, %v1398
        %v1417 = vcombine.high %v1399, %v1399
        %1427 = vrot.lane.b32.xlu0 %v1391, 1
        %v1428 = vpop.permute.xlu0 %1427
        %1429 = vrot.lane.b32.xlu0 %v1409, 1
        %v1430 = vpop.permute.xlu0 %1429
        %1431 = vrot.lane.b32.xlu0 %v1392, 1
        %v1432 = vpop.permute.xlu0 %1431
        %1433 = vrot.lane.b32.xlu0 %v1410, 1
        %v1434 = vpop.permute.xlu0 %1433
        %1435 = vrot.lane.b32.xlu0 %v1393, 1
        %v1436 = vpop.permute.xlu0 %1435
        %1437 = vrot.lane.b32.xlu0 %v1411, 1
        %v1438 = vpop.permute.xlu0 %1437
        %1439 = vrot.lane.b32.xlu0 %v1394, 1
        %v1440 = vpop.permute.xlu0 %1439
        %1441 = vrot.lane.b32.xlu0 %v1412, 1
        %v1442 = vpop.permute.xlu0 %1441
        %1443 = vrot.lane.b32.xlu0 %v1395, 1
        %v1444 = vpop.permute.xlu0 %1443
        %1445 = vrot.lane.b32.xlu0 %v1413, 1
        %v1446 = vpop.permute.xlu0 %1445
        %1447 = vrot.lane.b32.xlu0 %v1396, 1
        %v1448 = vpop.permute.xlu0 %1447
        %1449 = vrot.lane.b32.xlu0 %v1414, 1
        %v1450 = vpop.permute.xlu0 %1449
        %1451 = vrot.lane.b32.xlu0 %v1397, 1
        %v1452 = vpop.permute.xlu0 %1451
        %1453 = vrot.lane.b32.xlu0 %v1415, 1
        %v1454 = vpop.permute.xlu0 %1453
        %1455 = vrot.lane.b32.xlu0 %v1398, 1
        %v1456 = vpop.permute.xlu0 %1455
        %1457 = vrot.lane.b32.xlu0 %v1416, 1
        %v1458 = vpop.permute.xlu0 %1457
        %1459 = vrot.lane.b32.xlu0 %v1399, 1
        %v1460 = vpop.permute.xlu0 %1459
        %1461 = vrot.lane.b32.xlu0 %v1417, 1
        %v1462 = vpop.permute.xlu0 %1461
        %vm1463 = vcmp.lt.s32.totalorder %v297, 1
        %v1464 = vsel %vm1463, %v1460, %v1462
        %v1465 = vsel %vm1463, %v1458, %v1460
        %v1466 = vsel %vm1463, %v1456, %v1458
        %v1467 = vsel %vm1463, %v1454, %v1456
        %v1468 = vsel %vm1463, %v1452, %v1454
        %v1469 = vsel %vm1463, %v1450, %v1452
        %v1470 = vsel %vm1463, %v1448, %v1450
        %v1471 = vsel %vm1463, %v1446, %v1448
        %v1472 = vsel %vm1463, %v1444, %v1446
        %v1473 = vsel %vm1463, %v1442, %v1444
        %v1474 = vsel %vm1463, %v1440, %v1442
        %v1475 = vsel %vm1463, %v1438, %v1440
        %v1476 = vsel %vm1463, %v1436, %v1438
        %v1477 = vsel %vm1463, %v1434, %v1436
        %v1478 = vsel %vm1463, %v1432, %v1434
        %v1479 = vsel %vm1463, %v1430, %v1432
        %v1480 = vsel %vm1463, %v1428, %v1430
        %v1481 = vsel %vm1463, %v1462, %v1428
        %s1482 = scalar_lea.vmem %s1, 54
        %v1483 = vld [vmem:[%s1482] sm:$0xff]
        %v1484 = vld [vmem:[%s1482 + $0x8] sm:$0xff]
        %v1485 = vld [vmem:[%s1482 + $0x10] sm:$0x3]
        %v1489 = vlaneseq
        %v1490 = vshrl.u32 %v1489, 7
        %v1491 = vsub.s32 0, %v1490
        %v1492 = vrot.slane %v1483, %v1491
        %v1493 = vlaneseq
        %v1494 = vshrl.u32 %v1493, 7
        %v1495 = vsub.s32 1, %v1494
        %v1496 = vrot.slane %v1483, %v1495
        %v1497 = vlaneseq
        %v1498 = vshrl.u32 %v1497, 7
        %v1499 = vsub.s32 2, %v1498
        %v1500 = vrot.slane %v1483, %v1499
        %v1501 = vlaneseq
        %v1502 = vshrl.u32 %v1501, 7
        %v1503 = vsub.s32 3, %v1502
        %v1504 = vrot.slane %v1483, %v1503
        %v1505 = vlaneseq
        %v1506 = vshrl.u32 %v1505, 7
        %v1507 = vsub.s32 4, %v1506
        %v1508 = vrot.slane %v1483, %v1507
        %v1509 = vlaneseq
        %v1510 = vshrl.u32 %v1509, 7
        %v1511 = vsub.s32 5, %v1510
        %v1512 = vrot.slane %v1483, %v1511
        %v1513 = vlaneseq
        %v1514 = vshrl.u32 %v1513, 7
        %v1515 = vsub.s32 6, %v1514
        %v1516 = vrot.slane %v1483, %v1515
        %v1517 = vlaneseq
        %v1518 = vshrl.u32 %v1517, 7
        %v1519 = vsub.s32 7, %v1518
        %v1520 = vrot.slane %v1483, %v1519
        %v1521 = vlaneseq
        %v1522 = vshrl.u32 %v1521, 7
        %v1523 = vsub.s32 0, %v1522
        %v1524 = vrot.slane %v1484, %v1523
        %v1525 = vlaneseq
        %v1526 = vshrl.u32 %v1525, 7
        %v1527 = vsub.s32 1, %v1526
        %v1528 = vrot.slane %v1484, %v1527
        %v1529 = vlaneseq
        %v1530 = vshrl.u32 %v1529, 7
        %v1531 = vsub.s32 2, %v1530
        %v1532 = vrot.slane %v1484, %v1531
        %v1533 = vlaneseq
        %v1534 = vshrl.u32 %v1533, 7
        %v1535 = vsub.s32 3, %v1534
        %v1536 = vrot.slane %v1484, %v1535
        %v1537 = vlaneseq
        %v1538 = vshrl.u32 %v1537, 7
        %v1539 = vsub.s32 4, %v1538
        %v1540 = vrot.slane %v1484, %v1539
        %v1541 = vlaneseq
        %v1542 = vshrl.u32 %v1541, 7
        %v1543 = vsub.s32 5, %v1542
        %v1544 = vrot.slane %v1484, %v1543
        %v1545 = vlaneseq
        %v1546 = vshrl.u32 %v1545, 7
        %v1547 = vsub.s32 6, %v1546
        %v1548 = vrot.slane %v1484, %v1547
        %v1549 = vlaneseq
        %v1550 = vshrl.u32 %v1549, 7
        %v1551 = vsub.s32 7, %v1550
        %v1552 = vrot.slane %v1484, %v1551
        %v1553 = vlaneseq
        %v1554 = vshrl.u32 %v1553, 7
        %v1555 = vsub.s32 0, %v1554
        %v1556 = vrot.slane %v1485, %v1555
        %v1557 = vlaneseq
        %v1558 = vshrl.u32 %v1557, 7
        %v1559 = vsub.s32 1, %v1558
        %v1560 = vrot.slane %v1485, %v1559
        %v1579 = vmul.f32 %v1481, %v1492
        %v1580 = vmul.f32 %v1480, %v1496
        %v1581 = vmul.f32 %v1479, %v1500
        %v1582 = vmul.f32 %v1478, %v1504
        %v1583 = vmul.f32 %v1477, %v1508
        %v1584 = vmul.f32 %v1476, %v1512
        %v1585 = vmul.f32 %v1475, %v1516
        %v1586 = vmul.f32 %v1474, %v1520
        %v1587 = vmul.f32 %v1473, %v1524
        %v1588 = vmul.f32 %v1472, %v1528
        %v1589 = vmul.f32 %v1471, %v1532
        %v1590 = vmul.f32 %v1470, %v1536
        %v1591 = vmul.f32 %v1469, %v1540
        %v1592 = vmul.f32 %v1468, %v1544
        %v1593 = vmul.f32 %v1467, %v1548
        %v1594 = vmul.f32 %v1466, %v1552
        %v1595 = vmul.f32 %v1465, %v1556
        %v1596 = vmul.f32 %v1464, %v1560
        %v1597 = vpack.c.bf16 %v1579, %v1579
        %v1598 = vpack.c.bf16 %v1580, %v1580
        %v1599 = vpack.c.bf16 %v1581, %v1581
        %v1600 = vpack.c.bf16 %v1582, %v1582
        %v1601 = vpack.c.bf16 %v1583, %v1583
        %v1602 = vpack.c.bf16 %v1584, %v1584
        %v1603 = vpack.c.bf16 %v1585, %v1585
        %v1604 = vpack.c.bf16 %v1586, %v1586
        %v1605 = vpack.c.bf16 %v1587, %v1587
        %v1606 = vpack.c.bf16 %v1588, %v1588
        %v1607 = vpack.c.bf16 %v1589, %v1589
        %v1608 = vpack.c.bf16 %v1590, %v1590
        %v1609 = vpack.c.bf16 %v1591, %v1591
        %v1610 = vpack.c.bf16 %v1592, %v1592
        %v1611 = vpack.c.bf16 %v1593, %v1593
        %v1612 = vpack.c.bf16 %v1594, %v1594
        %v1613 = vpack.c.bf16 %v1595, %v1595
        %v1614 = vpack.c.bf16 %v1596, %v1596
        %v1633 = vunpack.c.l.b16 %v1597
        %v1634 = vunpack.c.l.b16 %v1598
        %v1635 = vunpack.c.l.b16 %v1599
        %v1636 = vunpack.c.l.b16 %v1600
        %v1637 = vunpack.c.l.b16 %v1601
        %v1638 = vunpack.c.l.b16 %v1602
        %v1639 = vunpack.c.l.b16 %v1603
        %v1640 = vunpack.c.l.b16 %v1604
        %v1641 = vunpack.c.l.b16 %v1605
        %v1642 = vunpack.c.l.b16 %v1606
        %v1643 = vunpack.c.l.b16 %v1607
        %v1644 = vunpack.c.l.b16 %v1608
        %v1645 = vunpack.c.l.b16 %v1609
        %v1646 = vunpack.c.l.b16 %v1610
        %v1647 = vunpack.c.l.b16 %v1611
        %v1648 = vunpack.c.l.b16 %v1612
        %v1649 = vunpack.c.l.b16 %v1613
        %v1650 = vunpack.c.l.b16 %v1614
        %v1651 = vpack.c.b16 %v1634, %v1633
        %v1652 = vpack.c.b16 %v1636, %v1635
        %v1653 = vpack.c.b16 %v1638, %v1637
        %v1654 = vpack.c.b16 %v1640, %v1639
        %v1655 = vpack.c.b16 %v1642, %v1641
        %v1656 = vpack.c.b16 %v1644, %v1643
        %v1657 = vpack.c.b16 %v1646, %v1645
        %v1658 = vpack.c.b16 %v1648, %v1647
        %v1659 = vpack.c.b16 %v1650, %v1649
        %1669 = vst [vmem:[#allocation2 + $0x90] sm:$0x33] %v1651
        %1670 = vst [vmem:[#allocation2 + $0x98] sm:$0x33] %v1652
        %1671 = vst [vmem:[#allocation2 + $0xa0] sm:$0x33] %v1653
        %1672 = vst [vmem:[#allocation2 + $0xa8] sm:$0x33] %v1654
        %1673 = vst [vmem:[#allocation2 + $0xb0] sm:$0x33] %v1655
        %1674 = vst [vmem:[#allocation2 + $0xb8] sm:$0x33] %v1656
        %1675 = vst [vmem:[#allocation2 + $0xc0] sm:$0x33] %v1657
        %1676 = vst [vmem:[#allocation2 + $0xc8] sm:$0x33] %v1658
        %1677 = vst [vmem:[#allocation2 + $0xd0] sm:$0x33] %v1659
        %v1678 = vld [vmem:[%s221] sm:$0xff]
        %v1679 = vld [vmem:[%s221 + $0x8] sm:$0xff]
        %v1680 = vld [vmem:[%s221 + $0x10] sm:$0xff]
        %v1681 = vld [vmem:[%s221 + $0x18] sm:$0xff]
        %v1682 = vld [vmem:[%s221 + $0x20] sm:$0xff]
        %v1683 = vld [vmem:[%s221 + $0x28] sm:$0xff]
        %v1684 = vld [vmem:[%s221 + $0x30] sm:$0xff]
        %v1685 = vld [vmem:[%s221 + $0x38] sm:$0xff]
        %v1686 = vld [vmem:[%s221 + $0x40] sm:$0xff]
        %v1696 = vcombine.high %v1678, %v1678
        %v1697 = vcombine.high %v1679, %v1679
        %v1698 = vcombine.high %v1680, %v1680
        %v1699 = vcombine.high %v1681, %v1681
        %v1700 = vcombine.high %v1682, %v1682
        %v1701 = vcombine.high %v1683, %v1683
        %v1702 = vcombine.high %v1684, %v1684
        %v1703 = vcombine.high %v1685, %v1685
        %v1704 = vcombine.high %v1686, %v1686
        %v1714 = vpack.c.bf16 %v1678, %v1678
        %v1715 = vpack.c.bf16 %v1696, %v1696
        %v1716 = vpack.c.bf16 %v1679, %v1679
        %v1717 = vpack.c.bf16 %v1697, %v1697
        %v1718 = vpack.c.bf16 %v1680, %v1680
        %v1719 = vpack.c.bf16 %v1698, %v1698
        %v1720 = vpack.c.bf16 %v1681, %v1681
        %v1721 = vpack.c.bf16 %v1699, %v1699
        %v1722 = vpack.c.bf16 %v1682, %v1682
        %v1723 = vpack.c.bf16 %v1700, %v1700
        %v1724 = vpack.c.bf16 %v1683, %v1683
        %v1725 = vpack.c.bf16 %v1701, %v1701
        %v1726 = vpack.c.bf16 %v1684, %v1684
        %v1727 = vpack.c.bf16 %v1702, %v1702
        %v1728 = vpack.c.bf16 %v1685, %v1685
        %v1729 = vpack.c.bf16 %v1703, %v1703
        %v1730 = vpack.c.bf16 %v1686, %v1686
        %v1731 = vpack.c.bf16 %v1704, %v1704
        %v1750 = vunpack.c.l.b16 %v1714
        %v1751 = vunpack.c.l.b16 %v1715
        %v1752 = vunpack.c.l.b16 %v1716
        %v1753 = vunpack.c.l.b16 %v1717
        %v1754 = vunpack.c.l.b16 %v1718
        %v1755 = vunpack.c.l.b16 %v1719
        %v1756 = vunpack.c.l.b16 %v1720
        %v1757 = vunpack.c.l.b16 %v1721
        %v1758 = vunpack.c.l.b16 %v1722
        %v1759 = vunpack.c.l.b16 %v1723
        %v1760 = vunpack.c.l.b16 %v1724
        %v1761 = vunpack.c.l.b16 %v1725
        %v1762 = vunpack.c.l.b16 %v1726
        %v1763 = vunpack.c.l.b16 %v1727
        %v1764 = vunpack.c.l.b16 %v1728
        %v1765 = vunpack.c.l.b16 %v1729
        %v1766 = vunpack.c.l.b16 %v1730
        %v1767 = vunpack.c.l.b16 %v1731
        %v1768 = vpack.c.b16 %v1751, %v1750
        %v1769 = vpack.c.b16 %v1753, %v1752
        %v1770 = vpack.c.b16 %v1755, %v1754
        %v1771 = vpack.c.b16 %v1757, %v1756
        %v1772 = vpack.c.b16 %v1759, %v1758
        %v1773 = vpack.c.b16 %v1761, %v1760
        %v1774 = vpack.c.b16 %v1763, %v1762
        %v1775 = vpack.c.b16 %v1765, %v1764
        %v1776 = vpack.c.b16 %v1767, %v1766
        %v1777 = vrot.slane %v1768, 6
        %v1778 = vrot.slane %v1769, 6
        %v1779 = vrot.slane %v1770, 6
        %v1780 = vrot.slane %v1771, 6
        %v1781 = vrot.slane %v1772, 6
        %v1782 = vrot.slane %v1773, 6
        %v1783 = vrot.slane %v1774, 6
        %v1784 = vrot.slane %v1775, 6
        %v1785 = vrot.slane %v1776, 6
        %1795 = vst [vmem:[#allocation2 + $0x90] sm:$0xcc] %v1777
        %1796 = vst [vmem:[#allocation2 + $0x98] sm:$0xcc] %v1778
        %1797 = vst [vmem:[#allocation2 + $0xa0] sm:$0xcc] %v1779
        %1798 = vst [vmem:[#allocation2 + $0xa8] sm:$0xcc] %v1780
        %1799 = vst [vmem:[#allocation2 + $0xb0] sm:$0xcc] %v1781
        %1800 = vst [vmem:[#allocation2 + $0xb8] sm:$0xcc] %v1782
        %1801 = vst [vmem:[#allocation2 + $0xc0] sm:$0xcc] %v1783
        %1802 = vst [vmem:[#allocation2 + $0xc8] sm:$0xcc] %v1784
        %1803 = vst [vmem:[#allocation2 + $0xd0] sm:$0xcc] %v1785
        %v1804 = vld [vmem:[%s1390] sm:$0xff]
        %v1805 = vld [vmem:[%s1390 + $0x8] sm:$0xff]
        %v1806 = vld [vmem:[%s1390 + $0x10] sm:$0xff]
        %v1807 = vld [vmem:[%s1390 + $0x18] sm:$0xff]
        %v1808 = vld [vmem:[%s1390 + $0x20] sm:$0xff]
        %v1809 = vld [vmem:[%s1390 + $0x28] sm:$0xff]
        %v1810 = vld [vmem:[%s1390 + $0x30] sm:$0xff]
        %v1811 = vld [vmem:[%s1390 + $0x38] sm:$0xff]
        %v1812 = vld [vmem:[%s1390 + $0x40] sm:$0xff]
        %v1822 = vcombine.high %v1804, %v1804
        %v1823 = vcombine.high %v1805, %v1805
        %v1824 = vcombine.high %v1806, %v1806
        %v1825 = vcombine.high %v1807, %v1807
        %v1826 = vcombine.high %v1808, %v1808
        %v1827 = vcombine.high %v1809, %v1809
        %v1828 = vcombine.high %v1810, %v1810
        %v1829 = vcombine.high %v1811, %v1811
        %v1830 = vcombine.high %v1812, %v1812
        %v1840 = vpack.c.bf16 %v1804, %v1804
        %v1841 = vpack.c.bf16 %v1822, %v1822
        %v1842 = vpack.c.bf16 %v1805, %v1805
        %v1843 = vpack.c.bf16 %v1823, %v1823
        %v1844 = vpack.c.bf16 %v1806, %v1806
        %v1845 = vpack.c.bf16 %v1824, %v1824
        %v1846 = vpack.c.bf16 %v1807, %v1807
        %v1847 = vpack.c.bf16 %v1825, %v1825
        %v1848 = vpack.c.bf16 %v1808, %v1808
        %v1849 = vpack.c.bf16 %v1826, %v1826
        %v1850 = vpack.c.bf16 %v1809, %v1809
        %v1851 = vpack.c.bf16 %v1827, %v1827
        %v1852 = vpack.c.bf16 %v1810, %v1810
        %v1853 = vpack.c.bf16 %v1828, %v1828
        %v1854 = vpack.c.bf16 %v1811, %v1811
        %v1855 = vpack.c.bf16 %v1829, %v1829
        %v1856 = vpack.c.bf16 %v1812, %v1812
        %v1857 = vpack.c.bf16 %v1830, %v1830
        %v1876 = vunpack.c.l.b16 %v1840
        %v1877 = vunpack.c.l.b16 %v1841
        %v1878 = vunpack.c.l.b16 %v1842
        %v1879 = vunpack.c.l.b16 %v1843
        %v1880 = vunpack.c.l.b16 %v1844
        %v1881 = vunpack.c.l.b16 %v1845
        %v1882 = vunpack.c.l.b16 %v1846
        %v1883 = vunpack.c.l.b16 %v1847
        %v1884 = vunpack.c.l.b16 %v1848
        %v1885 = vunpack.c.l.b16 %v1849
        %v1886 = vunpack.c.l.b16 %v1850
        %v1887 = vunpack.c.l.b16 %v1851
        %v1888 = vunpack.c.l.b16 %v1852
        %v1889 = vunpack.c.l.b16 %v1853
        %v1890 = vunpack.c.l.b16 %v1854
        %v1891 = vunpack.c.l.b16 %v1855
        %v1892 = vunpack.c.l.b16 %v1856
        %v1893 = vunpack.c.l.b16 %v1857
        %v1894 = vpack.c.b16 %v1877, %v1876
        %v1895 = vpack.c.b16 %v1879, %v1878
        %v1896 = vpack.c.b16 %v1881, %v1880
        %v1897 = vpack.c.b16 %v1883, %v1882
        %v1898 = vpack.c.b16 %v1885, %v1884
        %v1899 = vpack.c.b16 %v1887, %v1886
        %v1900 = vpack.c.b16 %v1889, %v1888
        %v1901 = vpack.c.b16 %v1891, %v1890
        %v1902 = vpack.c.b16 %v1893, %v1892
        %1912 = vst [vmem:[#allocation2 + $0xd8] sm:$0x33] %v1894
        %1913 = vst [vmem:[#allocation2 + $0xe0] sm:$0x33] %v1895
        %1914 = vst [vmem:[#allocation2 + $0xe8] sm:$0x33] %v1896
        %1915 = vst [vmem:[#allocation2 + $0xf0] sm:$0x33] %v1897
        %1916 = vst [vmem:[#allocation2 + $0xf8] sm:$0x33] %v1898
        %1917 = vst [vmem:[#allocation2 + $0x100] sm:$0x33] %v1899
        %1918 = vst [vmem:[#allocation2 + $0x108] sm:$0x33] %v1900
        %1919 = vst [vmem:[#allocation2 + $0x110] sm:$0x33] %v1901
        %1920 = vst [vmem:[#allocation2 + $0x118] sm:$0x33] %v1902
        %v1921 = vld [vmem:[%s221] sm:$0xff]
        %v1922 = vld [vmem:[%s221 + $0x8] sm:$0xff]
        %v1923 = vld [vmem:[%s221 + $0x10] sm:$0xff]
        %v1924 = vld [vmem:[%s221 + $0x18] sm:$0xff]
        %v1925 = vld [vmem:[%s221 + $0x20] sm:$0xff]
        %v1926 = vld [vmem:[%s221 + $0x28] sm:$0xff]
        %v1927 = vld [vmem:[%s221 + $0x30] sm:$0xff]
        %v1928 = vld [vmem:[%s221 + $0x38] sm:$0xff]
        %v1929 = vld [vmem:[%s221 + $0x40] sm:$0xff]
        %v1939 = vcombine.high %v1921, %v1921
        %v1940 = vcombine.high %v1922, %v1922
        %v1941 = vcombine.high %v1923, %v1923
        %v1942 = vcombine.high %v1924, %v1924
        %v1943 = vcombine.high %v1925, %v1925
        %v1944 = vcombine.high %v1926, %v1926
        %v1945 = vcombine.high %v1927, %v1927
        %v1946 = vcombine.high %v1928, %v1928
        %v1947 = vcombine.high %v1929, %v1929
        %1957 = vrot.lane.b32.xlu0 %v1921, 127
        %v1958 = vpop.permute.xlu0 %1957
        %1959 = vrot.lane.b32.xlu0 %v1939, 127
        %v1960 = vpop.permute.xlu0 %1959
        %1961 = vrot.lane.b32.xlu0 %v1922, 127
        %v1962 = vpop.permute.xlu0 %1961
        %1963 = vrot.lane.b32.xlu0 %v1940, 127
        %v1964 = vpop.permute.xlu0 %1963
        %1965 = vrot.lane.b32.xlu0 %v1923, 127
        %v1966 = vpop.permute.xlu0 %1965
        %1967 = vrot.lane.b32.xlu0 %v1941, 127
        %v1968 = vpop.permute.xlu0 %1967
        %1969 = vrot.lane.b32.xlu0 %v1924, 127
        %v1970 = vpop.permute.xlu0 %1969
        %1971 = vrot.lane.b32.xlu0 %v1942, 127
        %v1972 = vpop.permute.xlu0 %1971
        %1973 = vrot.lane.b32.xlu0 %v1925, 127
        %v1974 = vpop.permute.xlu0 %1973
        %1975 = vrot.lane.b32.xlu0 %v1943, 127
        %v1976 = vpop.permute.xlu0 %1975
        %1977 = vrot.lane.b32.xlu0 %v1926, 127
        %v1978 = vpop.permute.xlu0 %1977
        %1979 = vrot.lane.b32.xlu0 %v1944, 127
        %v1980 = vpop.permute.xlu0 %1979
        %1981 = vrot.lane.b32.xlu0 %v1927, 127
        %v1982 = vpop.permute.xlu0 %1981
        %1983 = vrot.lane.b32.xlu0 %v1945, 127
        %v1984 = vpop.permute.xlu0 %1983
        %1985 = vrot.lane.b32.xlu0 %v1928, 127
        %v1986 = vpop.permute.xlu0 %1985
        %1987 = vrot.lane.b32.xlu0 %v1946, 127
        %v1988 = vpop.permute.xlu0 %1987
        %1989 = vrot.lane.b32.xlu0 %v1929, 127
        %v1990 = vpop.permute.xlu0 %1989
        %1991 = vrot.lane.b32.xlu0 %v1947, 127
        %v1992 = vpop.permute.xlu0 %1991
        %vm1993 = vcmp.lt.s32.totalorder %v297, 127
        %v1994 = vsel %vm1993, %v1990, %v1992
        %v1995 = vsel %vm1993, %v1988, %v1990
        %v1996 = vsel %vm1993, %v1986, %v1988
        %v1997 = vsel %vm1993, %v1984, %v1986
        %v1998 = vsel %vm1993, %v1982, %v1984
        %v1999 = vsel %vm1993, %v1980, %v1982
        %v2000 = vsel %vm1993, %v1978, %v1980
        %v2001 = vsel %vm1993, %v1976, %v1978
        %v2002 = vsel %vm1993, %v1974, %v1976
        %v2003 = vsel %vm1993, %v1972, %v1974
        %v2004 = vsel %vm1993, %v1970, %v1972
        %v2005 = vsel %vm1993, %v1968, %v1970
        %v2006 = vsel %vm1993, %v1966, %v1968
        %v2007 = vsel %vm1993, %v1964, %v1966
        %v2008 = vsel %vm1993, %v1962, %v1964
        %v2009 = vsel %vm1993, %v1960, %v1962
        %v2010 = vsel %vm1993, %v1958, %v1960
        %v2011 = vsel %vm1993, %v1992, %v1958
        %s2012 = scalar_lea.vmem %s1, 90
        %v2013 = vld [vmem:[%s2012] sm:$0xff]
        %v2014 = vld [vmem:[%s2012 + $0x8] sm:$0xff]
        %v2015 = vld [vmem:[%s2012 + $0x10] sm:$0x3]
        %v2019 = vlaneseq
        %v2020 = vshrl.u32 %v2019, 7
        %v2021 = vsub.s32 0, %v2020
        %v2022 = vrot.slane %v2013, %v2021
        %v2023 = vlaneseq
        %v2024 = vshrl.u32 %v2023, 7
        %v2025 = vsub.s32 1, %v2024
        %v2026 = vrot.slane %v2013, %v2025
        %v2027 = vlaneseq
        %v2028 = vshrl.u32 %v2027, 7
        %v2029 = vsub.s32 2, %v2028
        %v2030 = vrot.slane %v2013, %v2029
        %v2031 = vlaneseq
        %v2032 = vshrl.u32 %v2031, 7
        %v2033 = vsub.s32 3, %v2032
        %v2034 = vrot.slane %v2013, %v2033
        %v2035 = vlaneseq
        %v2036 = vshrl.u32 %v2035, 7
        %v2037 = vsub.s32 4, %v2036
        %v2038 = vrot.slane %v2013, %v2037
        %v2039 = vlaneseq
        %v2040 = vshrl.u32 %v2039, 7
        %v2041 = vsub.s32 5, %v2040
        %v2042 = vrot.slane %v2013, %v2041
        %v2043 = vlaneseq
        %v2044 = vshrl.u32 %v2043, 7
        %v2045 = vsub.s32 6, %v2044
        %v2046 = vrot.slane %v2013, %v2045
        %v2047 = vlaneseq
        %v2048 = vshrl.u32 %v2047, 7
        %v2049 = vsub.s32 7, %v2048
        %v2050 = vrot.slane %v2013, %v2049
        %v2051 = vlaneseq
        %v2052 = vshrl.u32 %v2051, 7
        %v2053 = vsub.s32 0, %v2052
        %v2054 = vrot.slane %v2014, %v2053
        %v2055 = vlaneseq
        %v2056 = vshrl.u32 %v2055, 7
        %v2057 = vsub.s32 1, %v2056
        %v2058 = vrot.slane %v2014, %v2057
        %v2059 = vlaneseq
        %v2060 = vshrl.u32 %v2059, 7
        %v2061 = vsub.s32 2, %v2060
        %v2062 = vrot.slane %v2014, %v2061
        %v2063 = vlaneseq
        %v2064 = vshrl.u32 %v2063, 7
        %v2065 = vsub.s32 3, %v2064
        %v2066 = vrot.slane %v2014, %v2065
        %v2067 = vlaneseq
        %v2068 = vshrl.u32 %v2067, 7
        %v2069 = vsub.s32 4, %v2068
        %v2070 = vrot.slane %v2014, %v2069
        %v2071 = vlaneseq
        %v2072 = vshrl.u32 %v2071, 7
        %v2073 = vsub.s32 5, %v2072
        %v2074 = vrot.slane %v2014, %v2073
        %v2075 = vlaneseq
        %v2076 = vshrl.u32 %v2075, 7
        %v2077 = vsub.s32 6, %v2076
        %v2078 = vrot.slane %v2014, %v2077
        %v2079 = vlaneseq
        %v2080 = vshrl.u32 %v2079, 7
        %v2081 = vsub.s32 7, %v2080
        %v2082 = vrot.slane %v2014, %v2081
        %v2083 = vlaneseq
        %v2084 = vshrl.u32 %v2083, 7
        %v2085 = vsub.s32 0, %v2084
        %v2086 = vrot.slane %v2015, %v2085
        %v2087 = vlaneseq
        %v2088 = vshrl.u32 %v2087, 7
        %v2089 = vsub.s32 1, %v2088
        %v2090 = vrot.slane %v2015, %v2089
        %v2109 = vmul.f32 %v2010, %v2022
        %v2110 = vmul.f32 %v2009, %v2026
        %v2111 = vmul.f32 %v2008, %v2030
        %v2112 = vmul.f32 %v2007, %v2034
        %v2113 = vmul.f32 %v2006, %v2038
        %v2114 = vmul.f32 %v2005, %v2042
        %v2115 = vmul.f32 %v2004, %v2046
        %v2116 = vmul.f32 %v2003, %v2050
        %v2117 = vmul.f32 %v2002, %v2054
        %v2118 = vmul.f32 %v2001, %v2058
        %v2119 = vmul.f32 %v2000, %v2062
        %v2120 = vmul.f32 %v1999, %v2066
        %v2121 = vmul.f32 %v1998, %v2070
        %v2122 = vmul.f32 %v1997, %v2074
        %v2123 = vmul.f32 %v1996, %v2078
        %v2124 = vmul.f32 %v1995, %v2082
        %v2125 = vmul.f32 %v1994, %v2086
        %v2126 = vmul.f32 %v2011, %v2090
        %v2127 = vpack.c.bf16 %v2109, %v2109
        %v2128 = vpack.c.bf16 %v2110, %v2110
        %v2129 = vpack.c.bf16 %v2111, %v2111
        %v2130 = vpack.c.bf16 %v2112, %v2112
        %v2131 = vpack.c.bf16 %v2113, %v2113
        %v2132 = vpack.c.bf16 %v2114, %v2114
        %v2133 = vpack.c.bf16 %v2115, %v2115
        %v2134 = vpack.c.bf16 %v2116, %v2116
        %v2135 = vpack.c.bf16 %v2117, %v2117
        %v2136 = vpack.c.bf16 %v2118, %v2118
        %v2137 = vpack.c.bf16 %v2119, %v2119
        %v2138 = vpack.c.bf16 %v2120, %v2120
        %v2139 = vpack.c.bf16 %v2121, %v2121
        %v2140 = vpack.c.bf16 %v2122, %v2122
        %v2141 = vpack.c.bf16 %v2123, %v2123
        %v2142 = vpack.c.bf16 %v2124, %v2124
        %v2143 = vpack.c.bf16 %v2125, %v2125
        %v2144 = vpack.c.bf16 %v2126, %v2126
        %v2163 = vunpack.c.l.b16 %v2127
        %v2164 = vunpack.c.l.b16 %v2128
        %v2165 = vunpack.c.l.b16 %v2129
        %v2166 = vunpack.c.l.b16 %v2130
        %v2167 = vunpack.c.l.b16 %v2131
        %v2168 = vunpack.c.l.b16 %v2132
        %v2169 = vunpack.c.l.b16 %v2133
        %v2170 = vunpack.c.l.b16 %v2134
        %v2171 = vunpack.c.l.b16 %v2135
        %v2172 = vunpack.c.l.b16 %v2136
        %v2173 = vunpack.c.l.b16 %v2137
        %v2174 = vunpack.c.l.b16 %v2138
        %v2175 = vunpack.c.l.b16 %v2139
        %v2176 = vunpack.c.l.b16 %v2140
        %v2177 = vunpack.c.l.b16 %v2141
        %v2178 = vunpack.c.l.b16 %v2142
        %v2179 = vunpack.c.l.b16 %v2143
        %v2180 = vunpack.c.l.b16 %v2144
        %v2181 = vpack.c.b16 %v2164, %v2163
        %v2182 = vpack.c.b16 %v2166, %v2165
        %v2183 = vpack.c.b16 %v2168, %v2167
        %v2184 = vpack.c.b16 %v2170, %v2169
        %v2185 = vpack.c.b16 %v2172, %v2171
        %v2186 = vpack.c.b16 %v2174, %v2173
        %v2187 = vpack.c.b16 %v2176, %v2175
        %v2188 = vpack.c.b16 %v2178, %v2177
        %v2189 = vpack.c.b16 %v2180, %v2179
        %v2190 = vrot.slane %v2181, 6
        %v2191 = vrot.slane %v2182, 6
        %v2192 = vrot.slane %v2183, 6
        %v2193 = vrot.slane %v2184, 6
        %v2194 = vrot.slane %v2185, 6
        %v2195 = vrot.slane %v2186, 6
        %v2196 = vrot.slane %v2187, 6
        %v2197 = vrot.slane %v2188, 6
        %v2198 = vrot.slane %v2189, 6
        %2208 = vst [vmem:[#allocation2 + $0xd8] sm:$0xcc] %v2190
        %2209 = vst [vmem:[#allocation2 + $0xe0] sm:$0xcc] %v2191
        %2210 = vst [vmem:[#allocation2 + $0xe8] sm:$0xcc] %v2192
        %2211 = vst [vmem:[#allocation2 + $0xf0] sm:$0xcc] %v2193
        %2212 = vst [vmem:[#allocation2 + $0xf8] sm:$0xcc] %v2194
        %2213 = vst [vmem:[#allocation2 + $0x100] sm:$0xcc] %v2195
        %2214 = vst [vmem:[#allocation2 + $0x108] sm:$0xcc] %v2196
        %2215 = vst [vmem:[#allocation2 + $0x110] sm:$0xcc] %v2197
        %2216 = vst [vmem:[#allocation2 + $0x118] sm:$0xcc] %v2198
        %v2217 = vld [vmem:[%s223] sm:$0xff]
        %v2218 = vld [vmem:[%s223 + $0x8] sm:$0xff]
        %v2219 = vld [vmem:[%s223 + $0x10] sm:$0xff]
        %v2220 = vld [vmem:[%s223 + $0x18] sm:$0xff]
        %v2221 = vld [vmem:[%s223 + $0x20] sm:$0xff]
        %v2222 = vld [vmem:[%s223 + $0x28] sm:$0xff]
        %v2223 = vld [vmem:[%s223 + $0x30] sm:$0xff]
        %v2224 = vld [vmem:[%s223 + $0x38] sm:$0xff]
        %v2225 = vld [vmem:[%s223 + $0x40] sm:$0xff]
        %v2235 = vcombine.high %v2217, %v2217
        %v2236 = vcombine.high %v2218, %v2218
        %v2237 = vcombine.high %v2219, %v2219
        %v2238 = vcombine.high %v2220, %v2220
        %v2239 = vcombine.high %v2221, %v2221
        %v2240 = vcombine.high %v2222, %v2222
        %v2241 = vcombine.high %v2223, %v2223
        %v2242 = vcombine.high %v2224, %v2224
        %v2243 = vcombine.high %v2225, %v2225
        %2253 = vrot.lane.b32.xlu0 %v2217, 1
        %v2254 = vpop.permute.xlu0 %2253
        %2255 = vrot.lane.b32.xlu0 %v2235, 1
        %v2256 = vpop.permute.xlu0 %2255
        %2257 = vrot.lane.b32.xlu0 %v2218, 1
        %v2258 = vpop.permute.xlu0 %2257
        %2259 = vrot.lane.b32.xlu0 %v2236, 1
        %v2260 = vpop.permute.xlu0 %2259
        %2261 = vrot.lane.b32.xlu0 %v2219, 1
        %v2262 = vpop.permute.xlu0 %2261
        %2263 = vrot.lane.b32.xlu0 %v2237, 1
        %v2264 = vpop.permute.xlu0 %2263
        %2265 = vrot.lane.b32.xlu0 %v2220, 1
        %v2266 = vpop.permute.xlu0 %2265
        %2267 = vrot.lane.b32.xlu0 %v2238, 1
        %v2268 = vpop.permute.xlu0 %2267
        %2269 = vrot.lane.b32.xlu0 %v2221, 1
        %v2270 = vpop.permute.xlu0 %2269
        %2271 = vrot.lane.b32.xlu0 %v2239, 1
        %v2272 = vpop.permute.xlu0 %2271
        %2273 = vrot.lane.b32.xlu0 %v2222, 1
        %v2274 = vpop.permute.xlu0 %2273
        %2275 = vrot.lane.b32.xlu0 %v2240, 1
        %v2276 = vpop.permute.xlu0 %2275
        %2277 = vrot.lane.b32.xlu0 %v2223, 1
        %v2278 = vpop.permute.xlu0 %2277
        %2279 = vrot.lane.b32.xlu0 %v2241, 1
        %v2280 = vpop.permute.xlu0 %2279
        %2281 = vrot.lane.b32.xlu0 %v2224, 1
        %v2282 = vpop.permute.xlu0 %2281
        %2283 = vrot.lane.b32.xlu0 %v2242, 1
        %v2284 = vpop.permute.xlu0 %2283
        %2285 = vrot.lane.b32.xlu0 %v2225, 1
        %v2286 = vpop.permute.xlu0 %2285
        %2287 = vrot.lane.b32.xlu0 %v2243, 1
        %v2288 = vpop.permute.xlu0 %2287
        %v2289 = vsel %vm1463, %v2286, %v2288
        %v2290 = vsel %vm1463, %v2284, %v2286
        %v2291 = vsel %vm1463, %v2282, %v2284
        %v2292 = vsel %vm1463, %v2280, %v2282
        %v2293 = vsel %vm1463, %v2278, %v2280
        %v2294 = vsel %vm1463, %v2276, %v2278
        %v2295 = vsel %vm1463, %v2274, %v2276
        %v2296 = vsel %vm1463, %v2272, %v2274
        %v2297 = vsel %vm1463, %v2270, %v2272
        %v2298 = vsel %vm1463, %v2268, %v2270
        %v2299 = vsel %vm1463, %v2266, %v2268
        %v2300 = vsel %vm1463, %v2264, %v2266
        %v2301 = vsel %vm1463, %v2262, %v2264
        %v2302 = vsel %vm1463, %v2260, %v2262
        %v2303 = vsel %vm1463, %v2258, %v2260
        %v2304 = vsel %vm1463, %v2256, %v2258
        %v2305 = vsel %vm1463, %v2254, %v2256
        %v2306 = vsel %vm1463, %v2288, %v2254
        %v2307 = vld [vmem:[%s1482] sm:$0xff]
        %v2308 = vld [vmem:[%s1482 + $0x8] sm:$0xff]
        %v2309 = vld [vmem:[%s1482 + $0x10] sm:$0x3]
        %v2313 = vlaneseq
        %v2314 = vshrl.u32 %v2313, 7
        %v2315 = vsub.s32 0, %v2314
        %v2316 = vrot.slane %v2307, %v2315
        %v2317 = vlaneseq
        %v2318 = vshrl.u32 %v2317, 7
        %v2319 = vsub.s32 1, %v2318
        %v2320 = vrot.slane %v2307, %v2319
        %v2321 = vlaneseq
        %v2322 = vshrl.u32 %v2321, 7
        %v2323 = vsub.s32 2, %v2322
        %v2324 = vrot.slane %v2307, %v2323
        %v2325 = vlaneseq
        %v2326 = vshrl.u32 %v2325, 7
        %v2327 = vsub.s32 3, %v2326
        %v2328 = vrot.slane %v2307, %v2327
        %v2329 = vlaneseq
        %v2330 = vshrl.u32 %v2329, 7
        %v2331 = vsub.s32 4, %v2330
        %v2332 = vrot.slane %v2307, %v2331
        %v2333 = vlaneseq
        %v2334 = vshrl.u32 %v2333, 7
        %v2335 = vsub.s32 5, %v2334
        %v2336 = vrot.slane %v2307, %v2335
        %v2337 = vlaneseq
        %v2338 = vshrl.u32 %v2337, 7
        %v2339 = vsub.s32 6, %v2338
        %v2340 = vrot.slane %v2307, %v2339
        %v2341 = vlaneseq
        %v2342 = vshrl.u32 %v2341, 7
        %v2343 = vsub.s32 7, %v2342
        %v2344 = vrot.slane %v2307, %v2343
        %v2345 = vlaneseq
        %v2346 = vshrl.u32 %v2345, 7
        %v2347 = vsub.s32 0, %v2346
        %v2348 = vrot.slane %v2308, %v2347
        %v2349 = vlaneseq
        %v2350 = vshrl.u32 %v2349, 7
        %v2351 = vsub.s32 1, %v2350
        %v2352 = vrot.slane %v2308, %v2351
        %v2353 = vlaneseq
        %v2354 = vshrl.u32 %v2353, 7
        %v2355 = vsub.s32 2, %v2354
        %v2356 = vrot.slane %v2308, %v2355
        %v2357 = vlaneseq
        %v2358 = vshrl.u32 %v2357, 7
        %v2359 = vsub.s32 3, %v2358
        %v2360 = vrot.slane %v2308, %v2359
        %v2361 = vlaneseq
        %v2362 = vshrl.u32 %v2361, 7
        %v2363 = vsub.s32 4, %v2362
        %v2364 = vrot.slane %v2308, %v2363
        %v2365 = vlaneseq
        %v2366 = vshrl.u32 %v2365, 7
        %v2367 = vsub.s32 5, %v2366
        %v2368 = vrot.slane %v2308, %v2367
        %v2369 = vlaneseq
        %v2370 = vshrl.u32 %v2369, 7
        %v2371 = vsub.s32 6, %v2370
        %v2372 = vrot.slane %v2308, %v2371
        %v2373 = vlaneseq
        %v2374 = vshrl.u32 %v2373, 7
        %v2375 = vsub.s32 7, %v2374
        %v2376 = vrot.slane %v2308, %v2375
        %v2377 = vlaneseq
        %v2378 = vshrl.u32 %v2377, 7
        %v2379 = vsub.s32 0, %v2378
        %v2380 = vrot.slane %v2309, %v2379
        %v2381 = vlaneseq
        %v2382 = vshrl.u32 %v2381, 7
        %v2383 = vsub.s32 1, %v2382
        %v2384 = vrot.slane %v2309, %v2383
        %v2403 = vmul.f32 %v2306, %v2316
        %v2404 = vmul.f32 %v2305, %v2320
        %v2405 = vmul.f32 %v2304, %v2324
        %v2406 = vmul.f32 %v2303, %v2328
        %v2407 = vmul.f32 %v2302, %v2332
        %v2408 = vmul.f32 %v2301, %v2336
        %v2409 = vmul.f32 %v2300, %v2340
        %v2410 = vmul.f32 %v2299, %v2344
        %v2411 = vmul.f32 %v2298, %v2348
        %v2412 = vmul.f32 %v2297, %v2352
        %v2413 = vmul.f32 %v2296, %v2356
        %v2414 = vmul.f32 %v2295, %v2360
        %v2415 = vmul.f32 %v2294, %v2364
        %v2416 = vmul.f32 %v2293, %v2368
        %v2417 = vmul.f32 %v2292, %v2372
        %v2418 = vmul.f32 %v2291, %v2376
        %v2419 = vmul.f32 %v2290, %v2380
        %v2420 = vmul.f32 %v2289, %v2384
        %v2421 = vpack.c.bf16 %v2403, %v2403
        %v2422 = vpack.c.bf16 %v2404, %v2404
        %v2423 = vpack.c.bf16 %v2405, %v2405
        %v2424 = vpack.c.bf16 %v2406, %v2406
        %v2425 = vpack.c.bf16 %v2407, %v2407
        %v2426 = vpack.c.bf16 %v2408, %v2408
        %v2427 = vpack.c.bf16 %v2409, %v2409
        %v2428 = vpack.c.bf16 %v2410, %v2410
        %v2429 = vpack.c.bf16 %v2411, %v2411
        %v2430 = vpack.c.bf16 %v2412, %v2412
        %v2431 = vpack.c.bf16 %v2413, %v2413
        %v2432 = vpack.c.bf16 %v2414, %v2414
        %v2433 = vpack.c.bf16 %v2415, %v2415
        %v2434 = vpack.c.bf16 %v2416, %v2416
        %v2435 = vpack.c.bf16 %v2417, %v2417
        %v2436 = vpack.c.bf16 %v2418, %v2418
        %v2437 = vpack.c.bf16 %v2419, %v2419
        %v2438 = vpack.c.bf16 %v2420, %v2420
        %v2457 = vunpack.c.l.b16 %v2421
        %v2458 = vunpack.c.l.b16 %v2422
        %v2459 = vunpack.c.l.b16 %v2423
        %v2460 = vunpack.c.l.b16 %v2424
        %v2461 = vunpack.c.l.b16 %v2425
        %v2462 = vunpack.c.l.b16 %v2426
        %v2463 = vunpack.c.l.b16 %v2427
        %v2464 = vunpack.c.l.b16 %v2428
        %v2465 = vunpack.c.l.b16 %v2429
        %v2466 = vunpack.c.l.b16 %v2430
        %v2467 = vunpack.c.l.b16 %v2431
        %v2468 = vunpack.c.l.b16 %v2432
        %v2469 = vunpack.c.l.b16 %v2433
        %v2470 = vunpack.c.l.b16 %v2434
        %v2471 = vunpack.c.l.b16 %v2435
        %v2472 = vunpack.c.l.b16 %v2436
        %v2473 = vunpack.c.l.b16 %v2437
        %v2474 = vunpack.c.l.b16 %v2438
        %v2475 = vpack.c.b16 %v2458, %v2457
        %v2476 = vpack.c.b16 %v2460, %v2459
        %v2477 = vpack.c.b16 %v2462, %v2461
        %v2478 = vpack.c.b16 %v2464, %v2463
        %v2479 = vpack.c.b16 %v2466, %v2465
        %v2480 = vpack.c.b16 %v2468, %v2467
        %v2481 = vpack.c.b16 %v2470, %v2469
        %v2482 = vpack.c.b16 %v2472, %v2471
        %v2483 = vpack.c.b16 %v2474, %v2473
        %2493 = vst [vmem:[#allocation2 + $0x120] sm:$0x33] %v2475
        %2494 = vst [vmem:[#allocation2 + $0x128] sm:$0x33] %v2476
        %2495 = vst [vmem:[#allocation2 + $0x130] sm:$0x33] %v2477
        %2496 = vst [vmem:[#allocation2 + $0x138] sm:$0x33] %v2478
        %2497 = vst [vmem:[#allocation2 + $0x140] sm:$0x33] %v2479
        %2498 = vst [vmem:[#allocation2 + $0x148] sm:$0x33] %v2480
        %2499 = vst [vmem:[#allocation2 + $0x150] sm:$0x33] %v2481
        %2500 = vst [vmem:[#allocation2 + $0x158] sm:$0x33] %v2482
        %2501 = vst [vmem:[#allocation2 + $0x160] sm:$0x33] %v2483
        %v2502 = vld [vmem:[%s512] sm:$0xff]
        %v2503 = vld [vmem:[%s512 + $0x8] sm:$0xff]
        %v2504 = vld [vmem:[%s512 + $0x10] sm:$0xff]
        %v2505 = vld [vmem:[%s512 + $0x18] sm:$0xff]
        %v2506 = vld [vmem:[%s512 + $0x20] sm:$0xff]
        %v2507 = vld [vmem:[%s512 + $0x28] sm:$0xff]
        %v2508 = vld [vmem:[%s512 + $0x30] sm:$0xff]
        %v2509 = vld [vmem:[%s512 + $0x38] sm:$0xff]
        %v2510 = vld [vmem:[%s512 + $0x40] sm:$0xff]
        %v2520 = vcombine.high %v2502, %v2502
        %v2521 = vcombine.high %v2503, %v2503
        %v2522 = vcombine.high %v2504, %v2504
        %v2523 = vcombine.high %v2505, %v2505
        %v2524 = vcombine.high %v2506, %v2506
        %v2525 = vcombine.high %v2507, %v2507
        %v2526 = vcombine.high %v2508, %v2508
        %v2527 = vcombine.high %v2509, %v2509
        %v2528 = vcombine.high %v2510, %v2510
        %v2538 = vpack.c.bf16 %v2502, %v2502
        %v2539 = vpack.c.bf16 %v2520, %v2520
        %v2540 = vpack.c.bf16 %v2503, %v2503
        %v2541 = vpack.c.bf16 %v2521, %v2521
        %v2542 = vpack.c.bf16 %v2504, %v2504
        %v2543 = vpack.c.bf16 %v2522, %v2522
        %v2544 = vpack.c.bf16 %v2505, %v2505
        %v2545 = vpack.c.bf16 %v2523, %v2523
        %v2546 = vpack.c.bf16 %v2506, %v2506
        %v2547 = vpack.c.bf16 %v2524, %v2524
        %v2548 = vpack.c.bf16 %v2507, %v2507
        %v2549 = vpack.c.bf16 %v2525, %v2525
        %v2550 = vpack.c.bf16 %v2508, %v2508
        %v2551 = vpack.c.bf16 %v2526, %v2526
        %v2552 = vpack.c.bf16 %v2509, %v2509
        %v2553 = vpack.c.bf16 %v2527, %v2527
        %v2554 = vpack.c.bf16 %v2510, %v2510
        %v2555 = vpack.c.bf16 %v2528, %v2528
        %v2574 = vunpack.c.l.b16 %v2538
        %v2575 = vunpack.c.l.b16 %v2539
        %v2576 = vunpack.c.l.b16 %v2540
        %v2577 = vunpack.c.l.b16 %v2541
        %v2578 = vunpack.c.l.b16 %v2542
        %v2579 = vunpack.c.l.b16 %v2543
        %v2580 = vunpack.c.l.b16 %v2544
        %v2581 = vunpack.c.l.b16 %v2545
        %v2582 = vunpack.c.l.b16 %v2546
        %v2583 = vunpack.c.l.b16 %v2547
        %v2584 = vunpack.c.l.b16 %v2548
        %v2585 = vunpack.c.l.b16 %v2549
        %v2586 = vunpack.c.l.b16 %v2550
        %v2587 = vunpack.c.l.b16 %v2551
        %v2588 = vunpack.c.l.b16 %v2552
        %v2589 = vunpack.c.l.b16 %v2553
        %v2590 = vunpack.c.l.b16 %v2554
        %v2591 = vunpack.c.l.b16 %v2555
        %v2592 = vpack.c.b16 %v2575, %v2574
        %v2593 = vpack.c.b16 %v2577, %v2576
        %v2594 = vpack.c.b16 %v2579, %v2578
        %v2595 = vpack.c.b16 %v2581, %v2580
        %v2596 = vpack.c.b16 %v2583, %v2582
        %v2597 = vpack.c.b16 %v2585, %v2584
        %v2598 = vpack.c.b16 %v2587, %v2586
        %v2599 = vpack.c.b16 %v2589, %v2588
        %v2600 = vpack.c.b16 %v2591, %v2590
        %v2601 = vrot.slane %v2592, 6
        %v2602 = vrot.slane %v2593, 6
        %v2603 = vrot.slane %v2594, 6
        %v2604 = vrot.slane %v2595, 6
        %v2605 = vrot.slane %v2596, 6
        %v2606 = vrot.slane %v2597, 6
        %v2607 = vrot.slane %v2598, 6
        %v2608 = vrot.slane %v2599, 6
        %v2609 = vrot.slane %v2600, 6
        %2619 = vst [vmem:[#allocation2 + $0x120] sm:$0xcc] %v2601
        %2620 = vst [vmem:[#allocation2 + $0x128] sm:$0xcc] %v2602
        %2621 = vst [vmem:[#allocation2 + $0x130] sm:$0xcc] %v2603
        %2622 = vst [vmem:[#allocation2 + $0x138] sm:$0xcc] %v2604
        %2623 = vst [vmem:[#allocation2 + $0x140] sm:$0xcc] %v2605
        %2624 = vst [vmem:[#allocation2 + $0x148] sm:$0xcc] %v2606
        %2625 = vst [vmem:[#allocation2 + $0x150] sm:$0xcc] %v2607
        %2626 = vst [vmem:[#allocation2 + $0x158] sm:$0xcc] %v2608
        %2627 = vst [vmem:[#allocation2 + $0x160] sm:$0xcc] %v2609
        %v2628 = vld [vmem:[%s223] sm:$0xff]
        %v2629 = vld [vmem:[%s223 + $0x8] sm:$0xff]
        %v2630 = vld [vmem:[%s223 + $0x10] sm:$0xff]
        %v2631 = vld [vmem:[%s223 + $0x18] sm:$0xff]
        %v2632 = vld [vmem:[%s223 + $0x20] sm:$0xff]
        %v2633 = vld [vmem:[%s223 + $0x28] sm:$0xff]
        %v2634 = vld [vmem:[%s223 + $0x30] sm:$0xff]
        %v2635 = vld [vmem:[%s223 + $0x38] sm:$0xff]
        %v2636 = vld [vmem:[%s223 + $0x40] sm:$0xff]
        %v2646 = vcombine.high %v2628, %v2628
        %v2647 = vcombine.high %v2629, %v2629
        %v2648 = vcombine.high %v2630, %v2630
        %v2649 = vcombine.high %v2631, %v2631
        %v2650 = vcombine.high %v2632, %v2632
        %v2651 = vcombine.high %v2633, %v2633
        %v2652 = vcombine.high %v2634, %v2634
        %v2653 = vcombine.high %v2635, %v2635
        %v2654 = vcombine.high %v2636, %v2636
        %v2664 = vpack.c.bf16 %v2628, %v2628
        %v2665 = vpack.c.bf16 %v2646, %v2646
        %v2666 = vpack.c.bf16 %v2629, %v2629
        %v2667 = vpack.c.bf16 %v2647, %v2647
        %v2668 = vpack.c.bf16 %v2630, %v2630
        %v2669 = vpack.c.bf16 %v2648, %v2648
        %v2670 = vpack.c.bf16 %v2631, %v2631
        %v2671 = vpack.c.bf16 %v2649, %v2649
        %v2672 = vpack.c.bf16 %v2632, %v2632
        %v2673 = vpack.c.bf16 %v2650, %v2650
        %v2674 = vpack.c.bf16 %v2633, %v2633
        %v2675 = vpack.c.bf16 %v2651, %v2651
        %v2676 = vpack.c.bf16 %v2634, %v2634
        %v2677 = vpack.c.bf16 %v2652, %v2652
        %v2678 = vpack.c.bf16 %v2635, %v2635
        %v2679 = vpack.c.bf16 %v2653, %v2653
        %v2680 = vpack.c.bf16 %v2636, %v2636
        %v2681 = vpack.c.bf16 %v2654, %v2654
        %v2700 = vunpack.c.l.b16 %v2664
        %v2701 = vunpack.c.l.b16 %v2665
        %v2702 = vunpack.c.l.b16 %v2666
        %v2703 = vunpack.c.l.b16 %v2667
        %v2704 = vunpack.c.l.b16 %v2668
        %v2705 = vunpack.c.l.b16 %v2669
        %v2706 = vunpack.c.l.b16 %v2670
        %v2707 = vunpack.c.l.b16 %v2671
        %v2708 = vunpack.c.l.b16 %v2672
        %v2709 = vunpack.c.l.b16 %v2673
        %v2710 = vunpack.c.l.b16 %v2674
        %v2711 = vunpack.c.l.b16 %v2675
        %v2712 = vunpack.c.l.b16 %v2676
        %v2713 = vunpack.c.l.b16 %v2677
        %v2714 = vunpack.c.l.b16 %v2678
        %v2715 = vunpack.c.l.b16 %v2679
        %v2716 = vunpack.c.l.b16 %v2680
        %v2717 = vunpack.c.l.b16 %v2681
        %v2718 = vpack.c.b16 %v2701, %v2700
        %v2719 = vpack.c.b16 %v2703, %v2702
        %v2720 = vpack.c.b16 %v2705, %v2704
        %v2721 = vpack.c.b16 %v2707, %v2706
        %v2722 = vpack.c.b16 %v2709, %v2708
        %v2723 = vpack.c.b16 %v2711, %v2710
        %v2724 = vpack.c.b16 %v2713, %v2712
        %v2725 = vpack.c.b16 %v2715, %v2714
        %v2726 = vpack.c.b16 %v2717, %v2716
        %2736 = vst [vmem:[#allocation2 + $0x168] sm:$0x33] %v2718
        %2737 = vst [vmem:[#allocation2 + $0x170] sm:$0x33] %v2719
        %2738 = vst [vmem:[#allocation2 + $0x178] sm:$0x33] %v2720
        %2739 = vst [vmem:[#allocation2 + $0x180] sm:$0x33] %v2721
        %2740 = vst [vmem:[#allocation2 + $0x188] sm:$0x33] %v2722
        %2741 = vst [vmem:[#allocation2 + $0x190] sm:$0x33] %v2723
        %2742 = vst [vmem:[#allocation2 + $0x198] sm:$0x33] %v2724
        %2743 = vst [vmem:[#allocation2 + $0x1a0] sm:$0x33] %v2725
        %2744 = vst [vmem:[#allocation2 + $0x1a8] sm:$0x33] %v2726
        %v2745 = vld [vmem:[%s512] sm:$0xff]
        %v2746 = vld [vmem:[%s512 + $0x8] sm:$0xff]
        %v2747 = vld [vmem:[%s512 + $0x10] sm:$0xff]
        %v2748 = vld [vmem:[%s512 + $0x18] sm:$0xff]
        %v2749 = vld [vmem:[%s512 + $0x20] sm:$0xff]
        %v2750 = vld [vmem:[%s512 + $0x28] sm:$0xff]
        %v2751 = vld [vmem:[%s512 + $0x30] sm:$0xff]
        %v2752 = vld [vmem:[%s512 + $0x38] sm:$0xff]
        %v2753 = vld [vmem:[%s512 + $0x40] sm:$0xff]
        %v2763 = vcombine.high %v2745, %v2745
        %v2764 = vcombine.high %v2746, %v2746
        %v2765 = vcombine.high %v2747, %v2747
        %v2766 = vcombine.high %v2748, %v2748
        %v2767 = vcombine.high %v2749, %v2749
        %v2768 = vcombine.high %v2750, %v2750
        %v2769 = vcombine.high %v2751, %v2751
        %v2770 = vcombine.high %v2752, %v2752
        %v2771 = vcombine.high %v2753, %v2753
        %2781 = vrot.lane.b32.xlu0 %v2745, 127
        %v2782 = vpop.permute.xlu0 %2781
        %2783 = vrot.lane.b32.xlu0 %v2763, 127
        %v2784 = vpop.permute.xlu0 %2783
        %2785 = vrot.lane.b32.xlu0 %v2746, 127
        %v2786 = vpop.permute.xlu0 %2785
        %2787 = vrot.lane.b32.xlu0 %v2764, 127
        %v2788 = vpop.permute.xlu0 %2787
        %2789 = vrot.lane.b32.xlu0 %v2747, 127
        %v2790 = vpop.permute.xlu0 %2789
        %2791 = vrot.lane.b32.xlu0 %v2765, 127
        %v2792 = vpop.permute.xlu0 %2791
        %2793 = vrot.lane.b32.xlu0 %v2748, 127
        %v2794 = vpop.permute.xlu0 %2793
        %2795 = vrot.lane.b32.xlu0 %v2766, 127
        %v2796 = vpop.permute.xlu0 %2795
        %2797 = vrot.lane.b32.xlu0 %v2749, 127
        %v2798 = vpop.permute.xlu0 %2797
        %2799 = vrot.lane.b32.xlu0 %v2767, 127
        %v2800 = vpop.permute.xlu0 %2799
        %2801 = vrot.lane.b32.xlu0 %v2750, 127
        %v2802 = vpop.permute.xlu0 %2801
        %2803 = vrot.lane.b32.xlu0 %v2768, 127
        %v2804 = vpop.permute.xlu0 %2803
        %2805 = vrot.lane.b32.xlu0 %v2751, 127
        %v2806 = vpop.permute.xlu0 %2805
        %2807 = vrot.lane.b32.xlu0 %v2769, 127
        %v2808 = vpop.permute.xlu0 %2807
        %2809 = vrot.lane.b32.xlu0 %v2752, 127
        %v2810 = vpop.permute.xlu0 %2809
        %2811 = vrot.lane.b32.xlu0 %v2770, 127
        %v2812 = vpop.permute.xlu0 %2811
        %2813 = vrot.lane.b32.xlu0 %v2753, 127
        %v2814 = vpop.permute.xlu0 %2813
        %2815 = vrot.lane.b32.xlu0 %v2771, 127
        %v2816 = vpop.permute.xlu0 %2815
        %v2817 = vsel %vm1993, %v2814, %v2816
        %v2818 = vsel %vm1993, %v2812, %v2814
        %v2819 = vsel %vm1993, %v2810, %v2812
        %v2820 = vsel %vm1993, %v2808, %v2810
        %v2821 = vsel %vm1993, %v2806, %v2808
        %v2822 = vsel %vm1993, %v2804, %v2806
        %v2823 = vsel %vm1993, %v2802, %v2804
        %v2824 = vsel %vm1993, %v2800, %v2802
        %v2825 = vsel %vm1993, %v2798, %v2800
        %v2826 = vsel %vm1993, %v2796, %v2798
        %v2827 = vsel %vm1993, %v2794, %v2796
        %v2828 = vsel %vm1993, %v2792, %v2794
        %v2829 = vsel %vm1993, %v2790, %v2792
        %v2830 = vsel %vm1993, %v2788, %v2790
        %v2831 = vsel %vm1993, %v2786, %v2788
        %v2832 = vsel %vm1993, %v2784, %v2786
        %v2833 = vsel %vm1993, %v2782, %v2784
        %v2834 = vsel %vm1993, %v2816, %v2782
        %v2835 = vld [vmem:[%s2012] sm:$0xff]
        %v2836 = vld [vmem:[%s2012 + $0x8] sm:$0xff]
        %v2837 = vld [vmem:[%s2012 + $0x10] sm:$0x3]
        %v2841 = vlaneseq
        %v2842 = vshrl.u32 %v2841, 7
        %v2843 = vsub.s32 0, %v2842
        %v2844 = vrot.slane %v2835, %v2843
        %v2845 = vlaneseq
        %v2846 = vshrl.u32 %v2845, 7
        %v2847 = vsub.s32 1, %v2846
        %v2848 = vrot.slane %v2835, %v2847
        %v2849 = vlaneseq
        %v2850 = vshrl.u32 %v2849, 7
        %v2851 = vsub.s32 2, %v2850
        %v2852 = vrot.slane %v2835, %v2851
        %v2853 = vlaneseq
        %v2854 = vshrl.u32 %v2853, 7
        %v2855 = vsub.s32 3, %v2854
        %v2856 = vrot.slane %v2835, %v2855
        %v2857 = vlaneseq
        %v2858 = vshrl.u32 %v2857, 7
        %v2859 = vsub.s32 4, %v2858
        %v2860 = vrot.slane %v2835, %v2859
        %v2861 = vlaneseq
        %v2862 = vshrl.u32 %v2861, 7
        %v2863 = vsub.s32 5, %v2862
        %v2864 = vrot.slane %v2835, %v2863
        %v2865 = vlaneseq
        %v2866 = vshrl.u32 %v2865, 7
        %v2867 = vsub.s32 6, %v2866
        %v2868 = vrot.slane %v2835, %v2867
        %v2869 = vlaneseq
        %v2870 = vshrl.u32 %v2869, 7
        %v2871 = vsub.s32 7, %v2870
        %v2872 = vrot.slane %v2835, %v2871
        %v2873 = vlaneseq
        %v2874 = vshrl.u32 %v2873, 7
        %v2875 = vsub.s32 0, %v2874
        %v2876 = vrot.slane %v2836, %v2875
        %v2877 = vlaneseq
        %v2878 = vshrl.u32 %v2877, 7
        %v2879 = vsub.s32 1, %v2878
        %v2880 = vrot.slane %v2836, %v2879
        %v2881 = vlaneseq
        %v2882 = vshrl.u32 %v2881, 7
        %v2883 = vsub.s32 2, %v2882
        %v2884 = vrot.slane %v2836, %v2883
        %v2885 = vlaneseq
        %v2886 = vshrl.u32 %v2885, 7
        %v2887 = vsub.s32 3, %v2886
        %v2888 = vrot.slane %v2836, %v2887
        %v2889 = vlaneseq
        %v2890 = vshrl.u32 %v2889, 7
        %v2891 = vsub.s32 4, %v2890
        %v2892 = vrot.slane %v2836, %v2891
        %v2893 = vlaneseq
        %v2894 = vshrl.u32 %v2893, 7
        %v2895 = vsub.s32 5, %v2894
        %v2896 = vrot.slane %v2836, %v2895
        %v2897 = vlaneseq
        %v2898 = vshrl.u32 %v2897, 7
        %v2899 = vsub.s32 6, %v2898
        %v2900 = vrot.slane %v2836, %v2899
        %v2901 = vlaneseq
        %v2902 = vshrl.u32 %v2901, 7
        %v2903 = vsub.s32 7, %v2902
        %v2904 = vrot.slane %v2836, %v2903
        %v2905 = vlaneseq
        %v2906 = vshrl.u32 %v2905, 7
        %v2907 = vsub.s32 0, %v2906
        %v2908 = vrot.slane %v2837, %v2907
        %v2909 = vlaneseq
        %v2910 = vshrl.u32 %v2909, 7
        %v2911 = vsub.s32 1, %v2910
        %v2912 = vrot.slane %v2837, %v2911
        %v2931 = vmul.f32 %v2833, %v2844
        %v2932 = vmul.f32 %v2832, %v2848
        %v2933 = vmul.f32 %v2831, %v2852
        %v2934 = vmul.f32 %v2830, %v2856
        %v2935 = vmul.f32 %v2829, %v2860
        %v2936 = vmul.f32 %v2828, %v2864
        %v2937 = vmul.f32 %v2827, %v2868
        %v2938 = vmul.f32 %v2826, %v2872
        %v2939 = vmul.f32 %v2825, %v2876
        %v2940 = vmul.f32 %v2824, %v2880
        %v2941 = vmul.f32 %v2823, %v2884
        %v2942 = vmul.f32 %v2822, %v2888
        %v2943 = vmul.f32 %v2821, %v2892
        %v2944 = vmul.f32 %v2820, %v2896
        %v2945 = vmul.f32 %v2819, %v2900
        %v2946 = vmul.f32 %v2818, %v2904
        %v2947 = vmul.f32 %v2817, %v2908
        %v2948 = vmul.f32 %v2834, %v2912
        %v2949 = vpack.c.bf16 %v2931, %v2931
        %v2950 = vpack.c.bf16 %v2932, %v2932
        %v2951 = vpack.c.bf16 %v2933, %v2933
        %v2952 = vpack.c.bf16 %v2934, %v2934
        %v2953 = vpack.c.bf16 %v2935, %v2935
        %v2954 = vpack.c.bf16 %v2936, %v2936
        %v2955 = vpack.c.bf16 %v2937, %v2937
        %v2956 = vpack.c.bf16 %v2938, %v2938
        %v2957 = vpack.c.bf16 %v2939, %v2939
        %v2958 = vpack.c.bf16 %v2940, %v2940
        %v2959 = vpack.c.bf16 %v2941, %v2941
        %v2960 = vpack.c.bf16 %v2942, %v2942
        %v2961 = vpack.c.bf16 %v2943, %v2943
        %v2962 = vpack.c.bf16 %v2944, %v2944
        %v2963 = vpack.c.bf16 %v2945, %v2945
        %v2964 = vpack.c.bf16 %v2946, %v2946
        %v2965 = vpack.c.bf16 %v2947, %v2947
        %v2966 = vpack.c.bf16 %v2948, %v2948
        %v2985 = vunpack.c.l.b16 %v2949
        %v2986 = vunpack.c.l.b16 %v2950
        %v2987 = vunpack.c.l.b16 %v2951
        %v2988 = vunpack.c.l.b16 %v2952
        %v2989 = vunpack.c.l.b16 %v2953
        %v2990 = vunpack.c.l.b16 %v2954
        %v2991 = vunpack.c.l.b16 %v2955
        %v2992 = vunpack.c.l.b16 %v2956
        %v2993 = vunpack.c.l.b16 %v2957
        %v2994 = vunpack.c.l.b16 %v2958
        %v2995 = vunpack.c.l.b16 %v2959
        %v2996 = vunpack.c.l.b16 %v2960
        %v2997 = vunpack.c.l.b16 %v2961
        %v2998 = vunpack.c.l.b16 %v2962
        %v2999 = vunpack.c.l.b16 %v2963
        %v3000 = vunpack.c.l.b16 %v2964
        %v3001 = vunpack.c.l.b16 %v2965
        %v3002 = vunpack.c.l.b16 %v2966
        %v3003 = vpack.c.b16 %v2986, %v2985
        %v3004 = vpack.c.b16 %v2988, %v2987
        %v3005 = vpack.c.b16 %v2990, %v2989
        %v3006 = vpack.c.b16 %v2992, %v2991
        %v3007 = vpack.c.b16 %v2994, %v2993
        %v3008 = vpack.c.b16 %v2996, %v2995
        %v3009 = vpack.c.b16 %v2998, %v2997
        %v3010 = vpack.c.b16 %v3000, %v2999
        %v3011 = vpack.c.b16 %v3002, %v3001
        %v3012 = vrot.slane %v3003, 6
        %v3013 = vrot.slane %v3004, 6
        %v3014 = vrot.slane %v3005, 6
        %v3015 = vrot.slane %v3006, 6
        %v3016 = vrot.slane %v3007, 6
        %v3017 = vrot.slane %v3008, 6
        %v3018 = vrot.slane %v3009, 6
        %v3019 = vrot.slane %v3010, 6
        %v3020 = vrot.slane %v3011, 6
        %3030 = vst [vmem:[#allocation2 + $0x168] sm:$0xcc] %v3012
        %3031 = vst [vmem:[#allocation2 + $0x170] sm:$0xcc] %v3013
        %3032 = vst [vmem:[#allocation2 + $0x178] sm:$0xcc] %v3014
        %3033 = vst [vmem:[#allocation2 + $0x180] sm:$0xcc] %v3015
        %3034 = vst [vmem:[#allocation2 + $0x188] sm:$0xcc] %v3016
        %3035 = vst [vmem:[#allocation2 + $0x190] sm:$0xcc] %v3017
        %3036 = vst [vmem:[#allocation2 + $0x198] sm:$0xcc] %v3018
        %3037 = vst [vmem:[#allocation2 + $0x1a0] sm:$0xcc] %v3019
        %3038 = vst [vmem:[#allocation2 + $0x1a8] sm:$0xcc] %v3020
        %v3039 = vld [vmem:[%s1390] sm:$0xff]
        %v3040 = vld [vmem:[%s1390 + $0x8] sm:$0xff]
        %v3041 = vld [vmem:[%s1390 + $0x10] sm:$0xff]
        %v3042 = vld [vmem:[%s1390 + $0x18] sm:$0xff]
        %v3043 = vld [vmem:[%s1390 + $0x20] sm:$0xff]
        %v3044 = vld [vmem:[%s1390 + $0x28] sm:$0xff]
        %v3045 = vld [vmem:[%s1390 + $0x30] sm:$0xff]
        %v3046 = vld [vmem:[%s1390 + $0x38] sm:$0xff]
        %v3047 = vld [vmem:[%s1390 + $0x40] sm:$0xff]
        %v3057 = vcombine.high %v3039, %v3039
        %v3058 = vcombine.high %v3040, %v3040
        %v3059 = vcombine.high %v3041, %v3041
        %v3060 = vcombine.high %v3042, %v3042
        %v3061 = vcombine.high %v3043, %v3043
        %v3062 = vcombine.high %v3044, %v3044
        %v3063 = vcombine.high %v3045, %v3045
        %v3064 = vcombine.high %v3046, %v3046
        %v3065 = vcombine.high %v3047, %v3047
        %3075 = vrot.lane.b32.xlu0 %v3039, 81
        %v3076 = vpop.permute.xlu0 %3075
        %3077 = vrot.lane.b32.xlu0 %v3057, 81
        %v3078 = vpop.permute.xlu0 %3077
        %3079 = vrot.lane.b32.xlu0 %v3040, 81
        %v3080 = vpop.permute.xlu0 %3079
        %3081 = vrot.lane.b32.xlu0 %v3058, 81
        %v3082 = vpop.permute.xlu0 %3081
        %3083 = vrot.lane.b32.xlu0 %v3041, 81
        %v3084 = vpop.permute.xlu0 %3083
        %3085 = vrot.lane.b32.xlu0 %v3059, 81
        %v3086 = vpop.permute.xlu0 %3085
        %3087 = vrot.lane.b32.xlu0 %v3042, 81
        %v3088 = vpop.permute.xlu0 %3087
        %3089 = vrot.lane.b32.xlu0 %v3060, 81
        %v3090 = vpop.permute.xlu0 %3089
        %3091 = vrot.lane.b32.xlu0 %v3043, 81
        %v3092 = vpop.permute.xlu0 %3091
        %3093 = vrot.lane.b32.xlu0 %v3061, 81
        %v3094 = vpop.permute.xlu0 %3093
        %3095 = vrot.lane.b32.xlu0 %v3044, 81
        %v3096 = vpop.permute.xlu0 %3095
        %3097 = vrot.lane.b32.xlu0 %v3062, 81
        %v3098 = vpop.permute.xlu0 %3097
        %3099 = vrot.lane.b32.xlu0 %v3045, 81
        %v3100 = vpop.permute.xlu0 %3099
        %3101 = vrot.lane.b32.xlu0 %v3063, 81
        %v3102 = vpop.permute.xlu0 %3101
        %3103 = vrot.lane.b32.xlu0 %v3046, 81
        %v3104 = vpop.permute.xlu0 %3103
        %3105 = vrot.lane.b32.xlu0 %v3064, 81
        %v3106 = vpop.permute.xlu0 %3105
        %3107 = vrot.lane.b32.xlu0 %v3047, 81
        %v3108 = vpop.permute.xlu0 %3107
        %3109 = vrot.lane.b32.xlu0 %v3065, 81
        %v3110 = vpop.permute.xlu0 %3109
        %vm3111 = vcmp.lt.s32.totalorder %v297, 81
        %v3112 = vsel %vm3111, %v3108, %v3110
        %v3113 = vsel %vm3111, %v3106, %v3108
        %v3114 = vsel %vm3111, %v3104, %v3106
        %v3115 = vsel %vm3111, %v3102, %v3104
        %v3116 = vsel %vm3111, %v3100, %v3102
        %v3117 = vsel %vm3111, %v3098, %v3100
        %v3118 = vsel %vm3111, %v3096, %v3098
        %v3119 = vsel %vm3111, %v3094, %v3096
        %v3120 = vsel %vm3111, %v3092, %v3094
        %v3121 = vsel %vm3111, %v3090, %v3092
        %v3122 = vsel %vm3111, %v3088, %v3090
        %v3123 = vsel %vm3111, %v3086, %v3088
        %v3124 = vsel %vm3111, %v3084, %v3086
        %v3125 = vsel %vm3111, %v3082, %v3084
        %v3126 = vsel %vm3111, %v3080, %v3082
        %v3127 = vsel %vm3111, %v3078, %v3080
        %v3128 = vsel %vm3111, %v3076, %v3078
        %v3129 = vsel %vm3111, %v3110, %v3076
        %s3130 = scalar_lea.vmem %s1, 108
        %v3131 = vld [vmem:[%s3130] sm:$0xff]
        %v3132 = vld [vmem:[%s3130 + $0x8] sm:$0xff]
        %v3133 = vld [vmem:[%s3130 + $0x10] sm:$0x3]
        %v3137 = vlaneseq
        %v3138 = vshrl.u32 %v3137, 7
        %v3139 = vsub.s32 0, %v3138
        %v3140 = vrot.slane %v3131, %v3139
        %v3141 = vlaneseq
        %v3142 = vshrl.u32 %v3141, 7
        %v3143 = vsub.s32 1, %v3142
        %v3144 = vrot.slane %v3131, %v3143
        %v3145 = vlaneseq
        %v3146 = vshrl.u32 %v3145, 7
        %v3147 = vsub.s32 2, %v3146
        %v3148 = vrot.slane %v3131, %v3147
        %v3149 = vlaneseq
        %v3150 = vshrl.u32 %v3149, 7
        %v3151 = vsub.s32 3, %v3150
        %v3152 = vrot.slane %v3131, %v3151
        %v3153 = vlaneseq
        %v3154 = vshrl.u32 %v3153, 7
        %v3155 = vsub.s32 4, %v3154
        %v3156 = vrot.slane %v3131, %v3155
        %v3157 = vlaneseq
        %v3158 = vshrl.u32 %v3157, 7
        %v3159 = vsub.s32 5, %v3158
        %v3160 = vrot.slane %v3131, %v3159
        %v3161 = vlaneseq
        %v3162 = vshrl.u32 %v3161, 7
        %v3163 = vsub.s32 6, %v3162
        %v3164 = vrot.slane %v3131, %v3163
        %v3165 = vlaneseq
        %v3166 = vshrl.u32 %v3165, 7
        %v3167 = vsub.s32 7, %v3166
        %v3168 = vrot.slane %v3131, %v3167
        %v3169 = vlaneseq
        %v3170 = vshrl.u32 %v3169, 7
        %v3171 = vsub.s32 0, %v3170
        %v3172 = vrot.slane %v3132, %v3171
        %v3173 = vlaneseq
        %v3174 = vshrl.u32 %v3173, 7
        %v3175 = vsub.s32 1, %v3174
        %v3176 = vrot.slane %v3132, %v3175
        %v3177 = vlaneseq
        %v3178 = vshrl.u32 %v3177, 7
        %v3179 = vsub.s32 2, %v3178
        %v3180 = vrot.slane %v3132, %v3179
        %v3181 = vlaneseq
        %v3182 = vshrl.u32 %v3181, 7
        %v3183 = vsub.s32 3, %v3182
        %v3184 = vrot.slane %v3132, %v3183
        %v3185 = vlaneseq
        %v3186 = vshrl.u32 %v3185, 7
        %v3187 = vsub.s32 4, %v3186
        %v3188 = vrot.slane %v3132, %v3187
        %v3189 = vlaneseq
        %v3190 = vshrl.u32 %v3189, 7
        %v3191 = vsub.s32 5, %v3190
        %v3192 = vrot.slane %v3132, %v3191
        %v3193 = vlaneseq
        %v3194 = vshrl.u32 %v3193, 7
        %v3195 = vsub.s32 6, %v3194
        %v3196 = vrot.slane %v3132, %v3195
        %v3197 = vlaneseq
        %v3198 = vshrl.u32 %v3197, 7
        %v3199 = vsub.s32 7, %v3198
        %v3200 = vrot.slane %v3132, %v3199
        %v3201 = vlaneseq
        %v3202 = vshrl.u32 %v3201, 7
        %v3203 = vsub.s32 0, %v3202
        %v3204 = vrot.slane %v3133, %v3203
        %v3205 = vlaneseq
        %v3206 = vshrl.u32 %v3205, 7
        %v3207 = vsub.s32 1, %v3206
        %v3208 = vrot.slane %v3133, %v3207
        %v3227 = vmul.f32 %v3128, %v3140
        %v3228 = vmul.f32 %v3127, %v3144
        %v3229 = vmul.f32 %v3126, %v3148
        %v3230 = vmul.f32 %v3125, %v3152
        %v3231 = vmul.f32 %v3124, %v3156
        %v3232 = vmul.f32 %v3123, %v3160
        %v3233 = vmul.f32 %v3122, %v3164
        %v3234 = vmul.f32 %v3121, %v3168
        %v3235 = vmul.f32 %v3120, %v3172
        %v3236 = vmul.f32 %v3119, %v3176
        %v3237 = vmul.f32 %v3118, %v3180
        %v3238 = vmul.f32 %v3117, %v3184
        %v3239 = vmul.f32 %v3116, %v3188
        %v3240 = vmul.f32 %v3115, %v3192
        %v3241 = vmul.f32 %v3114, %v3196
        %v3242 = vmul.f32 %v3113, %v3200
        %v3243 = vmul.f32 %v3112, %v3204
        %v3244 = vmul.f32 %v3129, %v3208
        %v3245 = vpack.c.bf16 %v3227, %v3227
        %v3246 = vpack.c.bf16 %v3228, %v3228
        %v3247 = vpack.c.bf16 %v3229, %v3229
        %v3248 = vpack.c.bf16 %v3230, %v3230
        %v3249 = vpack.c.bf16 %v3231, %v3231
        %v3250 = vpack.c.bf16 %v3232, %v3232
        %v3251 = vpack.c.bf16 %v3233, %v3233
        %v3252 = vpack.c.bf16 %v3234, %v3234
        %v3253 = vpack.c.bf16 %v3235, %v3235
        %v3254 = vpack.c.bf16 %v3236, %v3236
        %v3255 = vpack.c.bf16 %v3237, %v3237
        %v3256 = vpack.c.bf16 %v3238, %v3238
        %v3257 = vpack.c.bf16 %v3239, %v3239
        %v3258 = vpack.c.bf16 %v3240, %v3240
        %v3259 = vpack.c.bf16 %v3241, %v3241
        %v3260 = vpack.c.bf16 %v3242, %v3242
        %v3261 = vpack.c.bf16 %v3243, %v3243
        %v3262 = vpack.c.bf16 %v3244, %v3244
        %v3281 = vunpack.c.l.b16 %v3245
        %v3282 = vunpack.c.l.b16 %v3246
        %v3283 = vunpack.c.l.b16 %v3247
        %v3284 = vunpack.c.l.b16 %v3248
        %v3285 = vunpack.c.l.b16 %v3249
        %v3286 = vunpack.c.l.b16 %v3250
        %v3287 = vunpack.c.l.b16 %v3251
        %v3288 = vunpack.c.l.b16 %v3252
        %v3289 = vunpack.c.l.b16 %v3253
        %v3290 = vunpack.c.l.b16 %v3254
        %v3291 = vunpack.c.l.b16 %v3255
        %v3292 = vunpack.c.l.b16 %v3256
        %v3293 = vunpack.c.l.b16 %v3257
        %v3294 = vunpack.c.l.b16 %v3258
        %v3295 = vunpack.c.l.b16 %v3259
        %v3296 = vunpack.c.l.b16 %v3260
        %v3297 = vunpack.c.l.b16 %v3261
        %v3298 = vunpack.c.l.b16 %v3262
        %v3299 = vpack.c.b16 %v3282, %v3281
        %v3300 = vpack.c.b16 %v3284, %v3283
        %v3301 = vpack.c.b16 %v3286, %v3285
        %v3302 = vpack.c.b16 %v3288, %v3287
        %v3303 = vpack.c.b16 %v3290, %v3289
        %v3304 = vpack.c.b16 %v3292, %v3291
        %v3305 = vpack.c.b16 %v3294, %v3293
        %v3306 = vpack.c.b16 %v3296, %v3295
        %v3307 = vpack.c.b16 %v3298, %v3297
        %3317 = vst [vmem:[#allocation2 + $0x1b0] sm:$0x33] %v3299
        %3318 = vst [vmem:[#allocation2 + $0x1b8] sm:$0x33] %v3300
        %3319 = vst [vmem:[#allocation2 + $0x1c0] sm:$0x33] %v3301
        %3320 = vst [vmem:[#allocation2 + $0x1c8] sm:$0x33] %v3302
        %3321 = vst [vmem:[#allocation2 + $0x1d0] sm:$0x33] %v3303
        %3322 = vst [vmem:[#allocation2 + $0x1d8] sm:$0x33] %v3304
        %3323 = vst [vmem:[#allocation2 + $0x1e0] sm:$0x33] %v3305
        %3324 = vst [vmem:[#allocation2 + $0x1e8] sm:$0x33] %v3306
        %3325 = vst [vmem:[#allocation2 + $0x1f0] sm:$0x33] %v3307
        %v3326 = vld [vmem:[%s221] sm:$0xff]
        %v3327 = vld [vmem:[%s221 + $0x8] sm:$0xff]
        %v3328 = vld [vmem:[%s221 + $0x10] sm:$0xff]
        %v3329 = vld [vmem:[%s221 + $0x18] sm:$0xff]
        %v3330 = vld [vmem:[%s221 + $0x20] sm:$0xff]
        %v3331 = vld [vmem:[%s221 + $0x28] sm:$0xff]
        %v3332 = vld [vmem:[%s221 + $0x30] sm:$0xff]
        %v3333 = vld [vmem:[%s221 + $0x38] sm:$0xff]
        %v3334 = vld [vmem:[%s221 + $0x40] sm:$0xff]
        %v3344 = vcombine.high %v3326, %v3326
        %v3345 = vcombine.high %v3327, %v3327
        %v3346 = vcombine.high %v3328, %v3328
        %v3347 = vcombine.high %v3329, %v3329
        %v3348 = vcombine.high %v3330, %v3330
        %v3349 = vcombine.high %v3331, %v3331
        %v3350 = vcombine.high %v3332, %v3332
        %v3351 = vcombine.high %v3333, %v3333
        %v3352 = vcombine.high %v3334, %v3334
        %3362 = vrot.lane.b32.xlu0 %v3326, 80
        %v3363 = vpop.permute.xlu0 %3362
        %3364 = vrot.lane.b32.xlu0 %v3344, 80
        %v3365 = vpop.permute.xlu0 %3364
        %3366 = vrot.lane.b32.xlu0 %v3327, 80
        %v3367 = vpop.permute.xlu0 %3366
        %3368 = vrot.lane.b32.xlu0 %v3345, 80
        %v3369 = vpop.permute.xlu0 %3368
        %3370 = vrot.lane.b32.xlu0 %v3328, 80
        %v3371 = vpop.permute.xlu0 %3370
        %3372 = vrot.lane.b32.xlu0 %v3346, 80
        %v3373 = vpop.permute.xlu0 %3372
        %3374 = vrot.lane.b32.xlu0 %v3329, 80
        %v3375 = vpop.permute.xlu0 %3374
        %3376 = vrot.lane.b32.xlu0 %v3347, 80
        %v3377 = vpop.permute.xlu0 %3376
        %3378 = vrot.lane.b32.xlu0 %v3330, 80
        %v3379 = vpop.permute.xlu0 %3378
        %3380 = vrot.lane.b32.xlu0 %v3348, 80
        %v3381 = vpop.permute.xlu0 %3380
        %3382 = vrot.lane.b32.xlu0 %v3331, 80
        %v3383 = vpop.permute.xlu0 %3382
        %3384 = vrot.lane.b32.xlu0 %v3349, 80
        %v3385 = vpop.permute.xlu0 %3384
        %3386 = vrot.lane.b32.xlu0 %v3332, 80
        %v3387 = vpop.permute.xlu0 %3386
        %3388 = vrot.lane.b32.xlu0 %v3350, 80
        %v3389 = vpop.permute.xlu0 %3388
        %3390 = vrot.lane.b32.xlu0 %v3333, 80
        %v3391 = vpop.permute.xlu0 %3390
        %3392 = vrot.lane.b32.xlu0 %v3351, 80
        %v3393 = vpop.permute.xlu0 %3392
        %3394 = vrot.lane.b32.xlu0 %v3334, 80
        %v3395 = vpop.permute.xlu0 %3394
        %3396 = vrot.lane.b32.xlu0 %v3352, 80
        %v3397 = vpop.permute.xlu0 %3396
        %vm3398 = vcmp.lt.s32.totalorder %v297, 80
        %v3399 = vsel %vm3398, %v3395, %v3397
        %v3400 = vsel %vm3398, %v3393, %v3395
        %v3401 = vsel %vm3398, %v3391, %v3393
        %v3402 = vsel %vm3398, %v3389, %v3391
        %v3403 = vsel %vm3398, %v3387, %v3389
        %v3404 = vsel %vm3398, %v3385, %v3387
        %v3405 = vsel %vm3398, %v3383, %v3385
        %v3406 = vsel %vm3398, %v3381, %v3383
        %v3407 = vsel %vm3398, %v3379, %v3381
        %v3408 = vsel %vm3398, %v3377, %v3379
        %v3409 = vsel %vm3398, %v3375, %v3377
        %v3410 = vsel %vm3398, %v3373, %v3375
        %v3411 = vsel %vm3398, %v3371, %v3373
        %v3412 = vsel %vm3398, %v3369, %v3371
        %v3413 = vsel %vm3398, %v3367, %v3369
        %v3414 = vsel %vm3398, %v3365, %v3367
        %v3415 = vsel %vm3398, %v3363, %v3365
        %v3416 = vsel %vm3398, %v3397, %v3363
        %s3417 = scalar_lea.vmem %s1, 126
        %v3418 = vld [vmem:[%s3417] sm:$0xff]
        %v3419 = vld [vmem:[%s3417 + $0x8] sm:$0xff]
        %v3420 = vld [vmem:[%s3417 + $0x10] sm:$0x3]
        %v3424 = vlaneseq
        %v3425 = vshrl.u32 %v3424, 7
        %v3426 = vsub.s32 0, %v3425
        %v3427 = vrot.slane %v3418, %v3426
        %v3428 = vlaneseq
        %v3429 = vshrl.u32 %v3428, 7
        %v3430 = vsub.s32 1, %v3429
        %v3431 = vrot.slane %v3418, %v3430
        %v3432 = vlaneseq
        %v3433 = vshrl.u32 %v3432, 7
        %v3434 = vsub.s32 2, %v3433
        %v3435 = vrot.slane %v3418, %v3434
        %v3436 = vlaneseq
        %v3437 = vshrl.u32 %v3436, 7
        %v3438 = vsub.s32 3, %v3437
        %v3439 = vrot.slane %v3418, %v3438
        %v3440 = vlaneseq
        %v3441 = vshrl.u32 %v3440, 7
        %v3442 = vsub.s32 4, %v3441
        %v3443 = vrot.slane %v3418, %v3442
        %v3444 = vlaneseq
        %v3445 = vshrl.u32 %v3444, 7
        %v3446 = vsub.s32 5, %v3445
        %v3447 = vrot.slane %v3418, %v3446
        %v3448 = vlaneseq
        %v3449 = vshrl.u32 %v3448, 7
        %v3450 = vsub.s32 6, %v3449
        %v3451 = vrot.slane %v3418, %v3450
        %v3452 = vlaneseq
        %v3453 = vshrl.u32 %v3452, 7
        %v3454 = vsub.s32 7, %v3453
        %v3455 = vrot.slane %v3418, %v3454
        %v3456 = vlaneseq
        %v3457 = vshrl.u32 %v3456, 7
        %v3458 = vsub.s32 0, %v3457
        %v3459 = vrot.slane %v3419, %v3458
        %v3460 = vlaneseq
        %v3461 = vshrl.u32 %v3460, 7
        %v3462 = vsub.s32 1, %v3461
        %v3463 = vrot.slane %v3419, %v3462
        %v3464 = vlaneseq
        %v3465 = vshrl.u32 %v3464, 7
        %v3466 = vsub.s32 2, %v3465
        %v3467 = vrot.slane %v3419, %v3466
        %v3468 = vlaneseq
        %v3469 = vshrl.u32 %v3468, 7
        %v3470 = vsub.s32 3, %v3469
        %v3471 = vrot.slane %v3419, %v3470
        %v3472 = vlaneseq
        %v3473 = vshrl.u32 %v3472, 7
        %v3474 = vsub.s32 4, %v3473
        %v3475 = vrot.slane %v3419, %v3474
        %v3476 = vlaneseq
        %v3477 = vshrl.u32 %v3476, 7
        %v3478 = vsub.s32 5, %v3477
        %v3479 = vrot.slane %v3419, %v3478
        %v3480 = vlaneseq
        %v3481 = vshrl.u32 %v3480, 7
        %v3482 = vsub.s32 6, %v3481
        %v3483 = vrot.slane %v3419, %v3482
        %v3484 = vlaneseq
        %v3485 = vshrl.u32 %v3484, 7
        %v3486 = vsub.s32 7, %v3485
        %v3487 = vrot.slane %v3419, %v3486
        %v3488 = vlaneseq
        %v3489 = vshrl.u32 %v3488, 7
        %v3490 = vsub.s32 0, %v3489
        %v3491 = vrot.slane %v3420, %v3490
        %v3492 = vlaneseq
        %v3493 = vshrl.u32 %v3492, 7
        %v3494 = vsub.s32 1, %v3493
        %v3495 = vrot.slane %v3420, %v3494
        %v3514 = vmul.f32 %v3415, %v3427
        %v3515 = vmul.f32 %v3414, %v3431
        %v3516 = vmul.f32 %v3413, %v3435
        %v3517 = vmul.f32 %v3412, %v3439
        %v3518 = vmul.f32 %v3411, %v3443
        %v3519 = vmul.f32 %v3410, %v3447
        %v3520 = vmul.f32 %v3409, %v3451
        %v3521 = vmul.f32 %v3408, %v3455
        %v3522 = vmul.f32 %v3407, %v3459
        %v3523 = vmul.f32 %v3406, %v3463
        %v3524 = vmul.f32 %v3405, %v3467
        %v3525 = vmul.f32 %v3404, %v3471
        %v3526 = vmul.f32 %v3403, %v3475
        %v3527 = vmul.f32 %v3402, %v3479
        %v3528 = vmul.f32 %v3401, %v3483
        %v3529 = vmul.f32 %v3400, %v3487
        %v3530 = vmul.f32 %v3399, %v3491
        %v3531 = vmul.f32 %v3416, %v3495
        %v3532 = vpack.c.bf16 %v3514, %v3514
        %v3533 = vpack.c.bf16 %v3515, %v3515
        %v3534 = vpack.c.bf16 %v3516, %v3516
        %v3535 = vpack.c.bf16 %v3517, %v3517
        %v3536 = vpack.c.bf16 %v3518, %v3518
        %v3537 = vpack.c.bf16 %v3519, %v3519
        %v3538 = vpack.c.bf16 %v3520, %v3520
        %v3539 = vpack.c.bf16 %v3521, %v3521
        %v3540 = vpack.c.bf16 %v3522, %v3522
        %v3541 = vpack.c.bf16 %v3523, %v3523
        %v3542 = vpack.c.bf16 %v3524, %v3524
        %v3543 = vpack.c.bf16 %v3525, %v3525
        %v3544 = vpack.c.bf16 %v3526, %v3526
        %v3545 = vpack.c.bf16 %v3527, %v3527
        %v3546 = vpack.c.bf16 %v3528, %v3528
        %v3547 = vpack.c.bf16 %v3529, %v3529
        %v3548 = vpack.c.bf16 %v3530, %v3530
        %v3549 = vpack.c.bf16 %v3531, %v3531
        %v3568 = vunpack.c.l.b16 %v3532
        %v3569 = vunpack.c.l.b16 %v3533
        %v3570 = vunpack.c.l.b16 %v3534
        %v3571 = vunpack.c.l.b16 %v3535
        %v3572 = vunpack.c.l.b16 %v3536
        %v3573 = vunpack.c.l.b16 %v3537
        %v3574 = vunpack.c.l.b16 %v3538
        %v3575 = vunpack.c.l.b16 %v3539
        %v3576 = vunpack.c.l.b16 %v3540
        %v3577 = vunpack.c.l.b16 %v3541
        %v3578 = vunpack.c.l.b16 %v3542
        %v3579 = vunpack.c.l.b16 %v3543
        %v3580 = vunpack.c.l.b16 %v3544
        %v3581 = vunpack.c.l.b16 %v3545
        %v3582 = vunpack.c.l.b16 %v3546
        %v3583 = vunpack.c.l.b16 %v3547
        %v3584 = vunpack.c.l.b16 %v3548
        %v3585 = vunpack.c.l.b16 %v3549
        %v3586 = vpack.c.b16 %v3569, %v3568
        %v3587 = vpack.c.b16 %v3571, %v3570
        %v3588 = vpack.c.b16 %v3573, %v3572
        %v3589 = vpack.c.b16 %v3575, %v3574
        %v3590 = vpack.c.b16 %v3577, %v3576
        %v3591 = vpack.c.b16 %v3579, %v3578
        %v3592 = vpack.c.b16 %v3581, %v3580
        %v3593 = vpack.c.b16 %v3583, %v3582
        %v3594 = vpack.c.b16 %v3585, %v3584
        %v3595 = vrot.slane %v3586, 6
        %v3596 = vrot.slane %v3587, 6
        %v3597 = vrot.slane %v3588, 6
        %v3598 = vrot.slane %v3589, 6
        %v3599 = vrot.slane %v3590, 6
        %v3600 = vrot.slane %v3591, 6
        %v3601 = vrot.slane %v3592, 6
        %v3602 = vrot.slane %v3593, 6
        %v3603 = vrot.slane %v3594, 6
        %3613 = vst [vmem:[#allocation2 + $0x1b0] sm:$0xcc] %v3595
        %3614 = vst [vmem:[#allocation2 + $0x1b8] sm:$0xcc] %v3596
        %3615 = vst [vmem:[#allocation2 + $0x1c0] sm:$0xcc] %v3597
        %3616 = vst [vmem:[#allocation2 + $0x1c8] sm:$0xcc] %v3598
        %3617 = vst [vmem:[#allocation2 + $0x1d0] sm:$0xcc] %v3599
        %3618 = vst [vmem:[#allocation2 + $0x1d8] sm:$0xcc] %v3600
        %3619 = vst [vmem:[#allocation2 + $0x1e0] sm:$0xcc] %v3601
        %3620 = vst [vmem:[#allocation2 + $0x1e8] sm:$0xcc] %v3602
        %3621 = vst [vmem:[#allocation2 + $0x1f0] sm:$0xcc] %v3603
        %v3622 = vld [vmem:[%s1390] sm:$0xff]
        %v3623 = vld [vmem:[%s1390 + $0x8] sm:$0xff]
        %v3624 = vld [vmem:[%s1390 + $0x10] sm:$0xff]
        %v3625 = vld [vmem:[%s1390 + $0x18] sm:$0xff]
        %v3626 = vld [vmem:[%s1390 + $0x20] sm:$0xff]
        %v3627 = vld [vmem:[%s1390 + $0x28] sm:$0xff]
        %v3628 = vld [vmem:[%s1390 + $0x30] sm:$0xff]
        %v3629 = vld [vmem:[%s1390 + $0x38] sm:$0xff]
        %v3630 = vld [vmem:[%s1390 + $0x40] sm:$0xff]
        %v3640 = vcombine.high %v3622, %v3622
        %v3641 = vcombine.high %v3623, %v3623
        %v3642 = vcombine.high %v3624, %v3624
        %v3643 = vcombine.high %v3625, %v3625
        %v3644 = vcombine.high %v3626, %v3626
        %v3645 = vcombine.high %v3627, %v3627
        %v3646 = vcombine.high %v3628, %v3628
        %v3647 = vcombine.high %v3629, %v3629
        %v3648 = vcombine.high %v3630, %v3630
        %3658 = vrot.lane.b32.xlu0 %v3622, 80
        %v3659 = vpop.permute.xlu0 %3658
        %3660 = vrot.lane.b32.xlu0 %v3640, 80
        %v3661 = vpop.permute.xlu0 %3660
        %3662 = vrot.lane.b32.xlu0 %v3623, 80
        %v3663 = vpop.permute.xlu0 %3662
        %3664 = vrot.lane.b32.xlu0 %v3641, 80
        %v3665 = vpop.permute.xlu0 %3664
        %3666 = vrot.lane.b32.xlu0 %v3624, 80
        %v3667 = vpop.permute.xlu0 %3666
        %3668 = vrot.lane.b32.xlu0 %v3642, 80
        %v3669 = vpop.permute.xlu0 %3668
        %3670 = vrot.lane.b32.xlu0 %v3625, 80
        %v3671 = vpop.permute.xlu0 %3670
        %3672 = vrot.lane.b32.xlu0 %v3643, 80
        %v3673 = vpop.permute.xlu0 %3672
        %3674 = vrot.lane.b32.xlu0 %v3626, 80
        %v3675 = vpop.permute.xlu0 %3674
        %3676 = vrot.lane.b32.xlu0 %v3644, 80
        %v3677 = vpop.permute.xlu0 %3676
        %3678 = vrot.lane.b32.xlu0 %v3627, 80
        %v3679 = vpop.permute.xlu0 %3678
        %3680 = vrot.lane.b32.xlu0 %v3645, 80
        %v3681 = vpop.permute.xlu0 %3680
        %3682 = vrot.lane.b32.xlu0 %v3628, 80
        %v3683 = vpop.permute.xlu0 %3682
        %3684 = vrot.lane.b32.xlu0 %v3646, 80
        %v3685 = vpop.permute.xlu0 %3684
        %3686 = vrot.lane.b32.xlu0 %v3629, 80
        %v3687 = vpop.permute.xlu0 %3686
        %3688 = vrot.lane.b32.xlu0 %v3647, 80
        %v3689 = vpop.permute.xlu0 %3688
        %3690 = vrot.lane.b32.xlu0 %v3630, 80
        %v3691 = vpop.permute.xlu0 %3690
        %3692 = vrot.lane.b32.xlu0 %v3648, 80
        %v3693 = vpop.permute.xlu0 %3692
        %v3694 = vsel %vm3398, %v3691, %v3693
        %v3695 = vsel %vm3398, %v3689, %v3691
        %v3696 = vsel %vm3398, %v3687, %v3689
        %v3697 = vsel %vm3398, %v3685, %v3687
        %v3698 = vsel %vm3398, %v3683, %v3685
        %v3699 = vsel %vm3398, %v3681, %v3683
        %v3700 = vsel %vm3398, %v3679, %v3681
        %v3701 = vsel %vm3398, %v3677, %v3679
        %v3702 = vsel %vm3398, %v3675, %v3677
        %v3703 = vsel %vm3398, %v3673, %v3675
        %v3704 = vsel %vm3398, %v3671, %v3673
        %v3705 = vsel %vm3398, %v3669, %v3671
        %v3706 = vsel %vm3398, %v3667, %v3669
        %v3707 = vsel %vm3398, %v3665, %v3667
        %v3708 = vsel %vm3398, %v3663, %v3665
        %v3709 = vsel %vm3398, %v3661, %v3663
        %v3710 = vsel %vm3398, %v3659, %v3661
        %v3711 = vsel %vm3398, %v3693, %v3659
        %v3712 = vld [vmem:[%s3417] sm:$0xff]
        %v3713 = vld [vmem:[%s3417 + $0x8] sm:$0xff]
        %v3714 = vld [vmem:[%s3417 + $0x10] sm:$0x3]
        %v3718 = vlaneseq
        %v3719 = vshrl.u32 %v3718, 7
        %v3720 = vsub.s32 0, %v3719
        %v3721 = vrot.slane %v3712, %v3720
        %v3722 = vlaneseq
        %v3723 = vshrl.u32 %v3722, 7
        %v3724 = vsub.s32 1, %v3723
        %v3725 = vrot.slane %v3712, %v3724
        %v3726 = vlaneseq
        %v3727 = vshrl.u32 %v3726, 7
        %v3728 = vsub.s32 2, %v3727
        %v3729 = vrot.slane %v3712, %v3728
        %v3730 = vlaneseq
        %v3731 = vshrl.u32 %v3730, 7
        %v3732 = vsub.s32 3, %v3731
        %v3733 = vrot.slane %v3712, %v3732
        %v3734 = vlaneseq
        %v3735 = vshrl.u32 %v3734, 7
        %v3736 = vsub.s32 4, %v3735
        %v3737 = vrot.slane %v3712, %v3736
        %v3738 = vlaneseq
        %v3739 = vshrl.u32 %v3738, 7
        %v3740 = vsub.s32 5, %v3739
        %v3741 = vrot.slane %v3712, %v3740
        %v3742 = vlaneseq
        %v3743 = vshrl.u32 %v3742, 7
        %v3744 = vsub.s32 6, %v3743
        %v3745 = vrot.slane %v3712, %v3744
        %v3746 = vlaneseq
        %v3747 = vshrl.u32 %v3746, 7
        %v3748 = vsub.s32 7, %v3747
        %v3749 = vrot.slane %v3712, %v3748
        %v3750 = vlaneseq
        %v3751 = vshrl.u32 %v3750, 7
        %v3752 = vsub.s32 0, %v3751
        %v3753 = vrot.slane %v3713, %v3752
        %v3754 = vlaneseq
        %v3755 = vshrl.u32 %v3754, 7
        %v3756 = vsub.s32 1, %v3755
        %v3757 = vrot.slane %v3713, %v3756
        %v3758 = vlaneseq
        %v3759 = vshrl.u32 %v3758, 7
        %v3760 = vsub.s32 2, %v3759
        %v3761 = vrot.slane %v3713, %v3760
        %v3762 = vlaneseq
        %v3763 = vshrl.u32 %v3762, 7
        %v3764 = vsub.s32 3, %v3763
        %v3765 = vrot.slane %v3713, %v3764
        %v3766 = vlaneseq
        %v3767 = vshrl.u32 %v3766, 7
        %v3768 = vsub.s32 4, %v3767
        %v3769 = vrot.slane %v3713, %v3768
        %v3770 = vlaneseq
        %v3771 = vshrl.u32 %v3770, 7
        %v3772 = vsub.s32 5, %v3771
        %v3773 = vrot.slane %v3713, %v3772
        %v3774 = vlaneseq
        %v3775 = vshrl.u32 %v3774, 7
        %v3776 = vsub.s32 6, %v3775
        %v3777 = vrot.slane %v3713, %v3776
        %v3778 = vlaneseq
        %v3779 = vshrl.u32 %v3778, 7
        %v3780 = vsub.s32 7, %v3779
        %v3781 = vrot.slane %v3713, %v3780
        %v3782 = vlaneseq
        %v3783 = vshrl.u32 %v3782, 7
        %v3784 = vsub.s32 0, %v3783
        %v3785 = vrot.slane %v3714, %v3784
        %v3786 = vlaneseq
        %v3787 = vshrl.u32 %v3786, 7
        %v3788 = vsub.s32 1, %v3787
        %v3789 = vrot.slane %v3714, %v3788
        %v3808 = vmul.f32 %v3710, %v3721
        %v3809 = vmul.f32 %v3709, %v3725
        %v3810 = vmul.f32 %v3708, %v3729
        %v3811 = vmul.f32 %v3707, %v3733
        %v3812 = vmul.f32 %v3706, %v3737
        %v3813 = vmul.f32 %v3705, %v3741
        %v3814 = vmul.f32 %v3704, %v3745
        %v3815 = vmul.f32 %v3703, %v3749
        %v3816 = vmul.f32 %v3702, %v3753
        %v3817 = vmul.f32 %v3701, %v3757
        %v3818 = vmul.f32 %v3700, %v3761
        %v3819 = vmul.f32 %v3699, %v3765
        %v3820 = vmul.f32 %v3698, %v3769
        %v3821 = vmul.f32 %v3697, %v3773
        %v3822 = vmul.f32 %v3696, %v3777
        %v3823 = vmul.f32 %v3695, %v3781
        %v3824 = vmul.f32 %v3694, %v3785
        %v3825 = vmul.f32 %v3711, %v3789
        %v3826 = vpack.c.bf16 %v3808, %v3808
        %v3827 = vpack.c.bf16 %v3809, %v3809
        %v3828 = vpack.c.bf16 %v3810, %v3810
        %v3829 = vpack.c.bf16 %v3811, %v3811
        %v3830 = vpack.c.bf16 %v3812, %v3812
        %v3831 = vpack.c.bf16 %v3813, %v3813
        %v3832 = vpack.c.bf16 %v3814, %v3814
        %v3833 = vpack.c.bf16 %v3815, %v3815
        %v3834 = vpack.c.bf16 %v3816, %v3816
        %v3835 = vpack.c.bf16 %v3817, %v3817
        %v3836 = vpack.c.bf16 %v3818, %v3818
        %v3837 = vpack.c.bf16 %v3819, %v3819
        %v3838 = vpack.c.bf16 %v3820, %v3820
        %v3839 = vpack.c.bf16 %v3821, %v3821
        %v3840 = vpack.c.bf16 %v3822, %v3822
        %v3841 = vpack.c.bf16 %v3823, %v3823
        %v3842 = vpack.c.bf16 %v3824, %v3824
        %v3843 = vpack.c.bf16 %v3825, %v3825
        %v3862 = vunpack.c.l.b16 %v3826
        %v3863 = vunpack.c.l.b16 %v3827
        %v3864 = vunpack.c.l.b16 %v3828
        %v3865 = vunpack.c.l.b16 %v3829
        %v3866 = vunpack.c.l.b16 %v3830
        %v3867 = vunpack.c.l.b16 %v3831
        %v3868 = vunpack.c.l.b16 %v3832
        %v3869 = vunpack.c.l.b16 %v3833
        %v3870 = vunpack.c.l.b16 %v3834
        %v3871 = vunpack.c.l.b16 %v3835
        %v3872 = vunpack.c.l.b16 %v3836
        %v3873 = vunpack.c.l.b16 %v3837
        %v3874 = vunpack.c.l.b16 %v3838
        %v3875 = vunpack.c.l.b16 %v3839
        %v3876 = vunpack.c.l.b16 %v3840
        %v3877 = vunpack.c.l.b16 %v3841
        %v3878 = vunpack.c.l.b16 %v3842
        %v3879 = vunpack.c.l.b16 %v3843
        %v3880 = vpack.c.b16 %v3863, %v3862
        %v3881 = vpack.c.b16 %v3865, %v3864
        %v3882 = vpack.c.b16 %v3867, %v3866
        %v3883 = vpack.c.b16 %v3869, %v3868
        %v3884 = vpack.c.b16 %v3871, %v3870
        %v3885 = vpack.c.b16 %v3873, %v3872
        %v3886 = vpack.c.b16 %v3875, %v3874
        %v3887 = vpack.c.b16 %v3877, %v3876
        %v3888 = vpack.c.b16 %v3879, %v3878
        %3898 = vst [vmem:[#allocation2 + $0x1f8] sm:$0x33] %v3880
        %3899 = vst [vmem:[#allocation2 + $0x200] sm:$0x33] %v3881
        %3900 = vst [vmem:[#allocation2 + $0x208] sm:$0x33] %v3882
        %3901 = vst [vmem:[#allocation2 + $0x210] sm:$0x33] %v3883
        %3902 = vst [vmem:[#allocation2 + $0x218] sm:$0x33] %v3884
        %3903 = vst [vmem:[#allocation2 + $0x220] sm:$0x33] %v3885
        %3904 = vst [vmem:[#allocation2 + $0x228] sm:$0x33] %v3886
        %3905 = vst [vmem:[#allocation2 + $0x230] sm:$0x33] %v3887
        %3906 = vst [vmem:[#allocation2 + $0x238] sm:$0x33] %v3888
        %v3907 = vld [vmem:[%s221] sm:$0xff]
        %v3908 = vld [vmem:[%s221 + $0x8] sm:$0xff]
        %v3909 = vld [vmem:[%s221 + $0x10] sm:$0xff]
        %v3910 = vld [vmem:[%s221 + $0x18] sm:$0xff]
        %v3911 = vld [vmem:[%s221 + $0x20] sm:$0xff]
        %v3912 = vld [vmem:[%s221 + $0x28] sm:$0xff]
        %v3913 = vld [vmem:[%s221 + $0x30] sm:$0xff]
        %v3914 = vld [vmem:[%s221 + $0x38] sm:$0xff]
        %v3915 = vld [vmem:[%s221 + $0x40] sm:$0xff]
        %v3925 = vcombine.high %v3907, %v3907
        %v3926 = vcombine.high %v3908, %v3908
        %v3927 = vcombine.high %v3909, %v3909
        %v3928 = vcombine.high %v3910, %v3910
        %v3929 = vcombine.high %v3911, %v3911
        %v3930 = vcombine.high %v3912, %v3912
        %v3931 = vcombine.high %v3913, %v3913
        %v3932 = vcombine.high %v3914, %v3914
        %v3933 = vcombine.high %v3915, %v3915
        %3943 = vrot.lane.b32.xlu0 %v3907, 79
        %v3944 = vpop.permute.xlu0 %3943
        %3945 = vrot.lane.b32.xlu0 %v3925, 79
        %v3946 = vpop.permute.xlu0 %3945
        %3947 = vrot.lane.b32.xlu0 %v3908, 79
        %v3948 = vpop.permute.xlu0 %3947
        %3949 = vrot.lane.b32.xlu0 %v3926, 79
        %v3950 = vpop.permute.xlu0 %3949
        %3951 = vrot.lane.b32.xlu0 %v3909, 79
        %v3952 = vpop.permute.xlu0 %3951
        %3953 = vrot.lane.b32.xlu0 %v3927, 79
        %v3954 = vpop.permute.xlu0 %3953
        %3955 = vrot.lane.b32.xlu0 %v3910, 79
        %v3956 = vpop.permute.xlu0 %3955
        %3957 = vrot.lane.b32.xlu0 %v3928, 79
        %v3958 = vpop.permute.xlu0 %3957
        %3959 = vrot.lane.b32.xlu0 %v3911, 79
        %v3960 = vpop.permute.xlu0 %3959
        %3961 = vrot.lane.b32.xlu0 %v3929, 79
        %v3962 = vpop.permute.xlu0 %3961
        %3963 = vrot.lane.b32.xlu0 %v3912, 79
        %v3964 = vpop.permute.xlu0 %3963
        %3965 = vrot.lane.b32.xlu0 %v3930, 79
        %v3966 = vpop.permute.xlu0 %3965
        %3967 = vrot.lane.b32.xlu0 %v3913, 79
        %v3968 = vpop.permute.xlu0 %3967
        %3969 = vrot.lane.b32.xlu0 %v3931, 79
        %v3970 = vpop.permute.xlu0 %3969
        %3971 = vrot.lane.b32.xlu0 %v3914, 79
        %v3972 = vpop.permute.xlu0 %3971
        %3973 = vrot.lane.b32.xlu0 %v3932, 79
        %v3974 = vpop.permute.xlu0 %3973
        %3975 = vrot.lane.b32.xlu0 %v3915, 79
        %v3976 = vpop.permute.xlu0 %3975
        %3977 = vrot.lane.b32.xlu0 %v3933, 79
        %v3978 = vpop.permute.xlu0 %3977
        %vm3979 = vcmp.lt.s32.totalorder %v297, 79
        %v3980 = vsel %vm3979, %v3976, %v3978
        %v3981 = vsel %vm3979, %v3974, %v3976
        %v3982 = vsel %vm3979, %v3972, %v3974
        %v3983 = vsel %vm3979, %v3970, %v3972
        %v3984 = vsel %vm3979, %v3968, %v3970
        %v3985 = vsel %vm3979, %v3966, %v3968
        %v3986 = vsel %vm3979, %v3964, %v3966
        %v3987 = vsel %vm3979, %v3962, %v3964
        %v3988 = vsel %vm3979, %v3960, %v3962
        %v3989 = vsel %vm3979, %v3958, %v3960
        %v3990 = vsel %vm3979, %v3956, %v3958
        %v3991 = vsel %vm3979, %v3954, %v3956
        %v3992 = vsel %vm3979, %v3952, %v3954
        %v3993 = vsel %vm3979, %v3950, %v3952
        %v3994 = vsel %vm3979, %v3948, %v3950
        %v3995 = vsel %vm3979, %v3946, %v3948
        %v3996 = vsel %vm3979, %v3944, %v3946
        %v3997 = vsel %vm3979, %v3978, %v3944
        %s3998 = scalar_lea.vmem %s1, 144
        %v3999 = vld [vmem:[%s3998] sm:$0xff]
        %v4000 = vld [vmem:[%s3998 + $0x8] sm:$0xff]
        %v4001 = vld [vmem:[%s3998 + $0x10] sm:$0x3]
        %v4005 = vlaneseq
        %v4006 = vshrl.u32 %v4005, 7
        %v4007 = vsub.s32 0, %v4006
        %v4008 = vrot.slane %v3999, %v4007
        %v4009 = vlaneseq
        %v4010 = vshrl.u32 %v4009, 7
        %v4011 = vsub.s32 1, %v4010
        %v4012 = vrot.slane %v3999, %v4011
        %v4013 = vlaneseq
        %v4014 = vshrl.u32 %v4013, 7
        %v4015 = vsub.s32 2, %v4014
        %v4016 = vrot.slane %v3999, %v4015
        %v4017 = vlaneseq
        %v4018 = vshrl.u32 %v4017, 7
        %v4019 = vsub.s32 3, %v4018
        %v4020 = vrot.slane %v3999, %v4019
        %v4021 = vlaneseq
        %v4022 = vshrl.u32 %v4021, 7
        %v4023 = vsub.s32 4, %v4022
        %v4024 = vrot.slane %v3999, %v4023
        %v4025 = vlaneseq
        %v4026 = vshrl.u32 %v4025, 7
        %v4027 = vsub.s32 5, %v4026
        %v4028 = vrot.slane %v3999, %v4027
        %v4029 = vlaneseq
        %v4030 = vshrl.u32 %v4029, 7
        %v4031 = vsub.s32 6, %v4030
        %v4032 = vrot.slane %v3999, %v4031
        %v4033 = vlaneseq
        %v4034 = vshrl.u32 %v4033, 7
        %v4035 = vsub.s32 7, %v4034
        %v4036 = vrot.slane %v3999, %v4035
        %v4037 = vlaneseq
        %v4038 = vshrl.u32 %v4037, 7
        %v4039 = vsub.s32 0, %v4038
        %v4040 = vrot.slane %v4000, %v4039
        %v4041 = vlaneseq
        %v4042 = vshrl.u32 %v4041, 7
        %v4043 = vsub.s32 1, %v4042
        %v4044 = vrot.slane %v4000, %v4043
        %v4045 = vlaneseq
        %v4046 = vshrl.u32 %v4045, 7
        %v4047 = vsub.s32 2, %v4046
        %v4048 = vrot.slane %v4000, %v4047
        %v4049 = vlaneseq
        %v4050 = vshrl.u32 %v4049, 7
        %v4051 = vsub.s32 3, %v4050
        %v4052 = vrot.slane %v4000, %v4051
        %v4053 = vlaneseq
        %v4054 = vshrl.u32 %v4053, 7
        %v4055 = vsub.s32 4, %v4054
        %v4056 = vrot.slane %v4000, %v4055
        %v4057 = vlaneseq
        %v4058 = vshrl.u32 %v4057, 7
        %v4059 = vsub.s32 5, %v4058
        %v4060 = vrot.slane %v4000, %v4059
        %v4061 = vlaneseq
        %v4062 = vshrl.u32 %v4061, 7
        %v4063 = vsub.s32 6, %v4062
        %v4064 = vrot.slane %v4000, %v4063
        %v4065 = vlaneseq
        %v4066 = vshrl.u32 %v4065, 7
        %v4067 = vsub.s32 7, %v4066
        %v4068 = vrot.slane %v4000, %v4067
        %v4069 = vlaneseq
        %v4070 = vshrl.u32 %v4069, 7
        %v4071 = vsub.s32 0, %v4070
        %v4072 = vrot.slane %v4001, %v4071
        %v4073 = vlaneseq
        %v4074 = vshrl.u32 %v4073, 7
        %v4075 = vsub.s32 1, %v4074
        %v4076 = vrot.slane %v4001, %v4075
        %v4095 = vmul.f32 %v3996, %v4008
        %v4096 = vmul.f32 %v3995, %v4012
        %v4097 = vmul.f32 %v3994, %v4016
        %v4098 = vmul.f32 %v3993, %v4020
        %v4099 = vmul.f32 %v3992, %v4024
        %v4100 = vmul.f32 %v3991, %v4028
        %v4101 = vmul.f32 %v3990, %v4032
        %v4102 = vmul.f32 %v3989, %v4036
        %v4103 = vmul.f32 %v3988, %v4040
        %v4104 = vmul.f32 %v3987, %v4044
        %v4105 = vmul.f32 %v3986, %v4048
        %v4106 = vmul.f32 %v3985, %v4052
        %v4107 = vmul.f32 %v3984, %v4056
        %v4108 = vmul.f32 %v3983, %v4060
        %v4109 = vmul.f32 %v3982, %v4064
        %v4110 = vmul.f32 %v3981, %v4068
        %v4111 = vmul.f32 %v3980, %v4072
        %v4112 = vmul.f32 %v3997, %v4076
        %v4113 = vpack.c.bf16 %v4095, %v4095
        %v4114 = vpack.c.bf16 %v4096, %v4096
        %v4115 = vpack.c.bf16 %v4097, %v4097
        %v4116 = vpack.c.bf16 %v4098, %v4098
        %v4117 = vpack.c.bf16 %v4099, %v4099
        %v4118 = vpack.c.bf16 %v4100, %v4100
        %v4119 = vpack.c.bf16 %v4101, %v4101
        %v4120 = vpack.c.bf16 %v4102, %v4102
        %v4121 = vpack.c.bf16 %v4103, %v4103
        %v4122 = vpack.c.bf16 %v4104, %v4104
        %v4123 = vpack.c.bf16 %v4105, %v4105
        %v4124 = vpack.c.bf16 %v4106, %v4106
        %v4125 = vpack.c.bf16 %v4107, %v4107
        %v4126 = vpack.c.bf16 %v4108, %v4108
        %v4127 = vpack.c.bf16 %v4109, %v4109
        %v4128 = vpack.c.bf16 %v4110, %v4110
        %v4129 = vpack.c.bf16 %v4111, %v4111
        %v4130 = vpack.c.bf16 %v4112, %v4112
        %v4149 = vunpack.c.l.b16 %v4113
        %v4150 = vunpack.c.l.b16 %v4114
        %v4151 = vunpack.c.l.b16 %v4115
        %v4152 = vunpack.c.l.b16 %v4116
        %v4153 = vunpack.c.l.b16 %v4117
        %v4154 = vunpack.c.l.b16 %v4118
        %v4155 = vunpack.c.l.b16 %v4119
        %v4156 = vunpack.c.l.b16 %v4120
        %v4157 = vunpack.c.l.b16 %v4121
        %v4158 = vunpack.c.l.b16 %v4122
        %v4159 = vunpack.c.l.b16 %v4123
        %v4160 = vunpack.c.l.b16 %v4124
        %v4161 = vunpack.c.l.b16 %v4125
        %v4162 = vunpack.c.l.b16 %v4126
        %v4163 = vunpack.c.l.b16 %v4127
        %v4164 = vunpack.c.l.b16 %v4128
        %v4165 = vunpack.c.l.b16 %v4129
        %v4166 = vunpack.c.l.b16 %v4130
        %v4167 = vpack.c.b16 %v4150, %v4149
        %v4168 = vpack.c.b16 %v4152, %v4151
        %v4169 = vpack.c.b16 %v4154, %v4153
        %v4170 = vpack.c.b16 %v4156, %v4155
        %v4171 = vpack.c.b16 %v4158, %v4157
        %v4172 = vpack.c.b16 %v4160, %v4159
        %v4173 = vpack.c.b16 %v4162, %v4161
        %v4174 = vpack.c.b16 %v4164, %v4163
        %v4175 = vpack.c.b16 %v4166, %v4165
        %v4176 = vrot.slane %v4167, 6
        %v4177 = vrot.slane %v4168, 6
        %v4178 = vrot.slane %v4169, 6
        %v4179 = vrot.slane %v4170, 6
        %v4180 = vrot.slane %v4171, 6
        %v4181 = vrot.slane %v4172, 6
        %v4182 = vrot.slane %v4173, 6
        %v4183 = vrot.slane %v4174, 6
        %v4184 = vrot.slane %v4175, 6
        %4194 = vst [vmem:[#allocation2 + $0x1f8] sm:$0xcc] %v4176
        %4195 = vst [vmem:[#allocation2 + $0x200] sm:$0xcc] %v4177
        %4196 = vst [vmem:[#allocation2 + $0x208] sm:$0xcc] %v4178
        %4197 = vst [vmem:[#allocation2 + $0x210] sm:$0xcc] %v4179
        %4198 = vst [vmem:[#allocation2 + $0x218] sm:$0xcc] %v4180
        %4199 = vst [vmem:[#allocation2 + $0x220] sm:$0xcc] %v4181
        %4200 = vst [vmem:[#allocation2 + $0x228] sm:$0xcc] %v4182
        %4201 = vst [vmem:[#allocation2 + $0x230] sm:$0xcc] %v4183
        %4202 = vst [vmem:[#allocation2 + $0x238] sm:$0xcc] %v4184
        %v4203 = vld [vmem:[%s2] sm:$0xf]
        %v4204 = vld [vmem:[%s2 + $0x4] sm:$0xf]
        %v4205 = vld [vmem:[%s2 + $0x8] sm:$0xf]
        %v4206 = vld [vmem:[%s2 + $0xc] sm:$0xf]
        %v4207 = vld [vmem:[#allocation2] sm:$0xff]
        %v4208 = vld [vmem:[#allocation2 + $0x8] sm:$0xff]
        %v4209 = vld [vmem:[#allocation2 + $0x10] sm:$0xff]
        %v4210 = vld [vmem:[#allocation2 + $0x18] sm:$0xff]
        %v4211 = vld [vmem:[#allocation2 + $0x20] sm:$0xff]
        %v4212 = vld [vmem:[#allocation2 + $0x28] sm:$0xff]
        %v4213 = vld [vmem:[#allocation2 + $0x30] sm:$0xff]
        %v4214 = vld [vmem:[#allocation2 + $0x38] sm:$0xff]
        %v4215 = vld [vmem:[#allocation2 + $0x40] sm:$0xff]
        %v4216 = vld [vmem:[#allocation2 + $0x48] sm:$0xff]
        %v4217 = vld [vmem:[#allocation2 + $0x50] sm:$0xff]
        %v4218 = vld [vmem:[#allocation2 + $0x58] sm:$0xff]
        %v4219 = vld [vmem:[#allocation2 + $0x60] sm:$0xff]
        %v4220 = vld [vmem:[#allocation2 + $0x68] sm:$0xff]
        %v4221 = vld [vmem:[#allocation2 + $0x70] sm:$0xff]
        %v4222 = vld [vmem:[#allocation2 + $0x78] sm:$0xff]
        %v4223 = vld [vmem:[#allocation2 + $0x80] sm:$0xff]
        %v4224 = vld [vmem:[#allocation2 + $0x88] sm:$0xff]
        %v4225 = vld [vmem:[#allocation2 + $0x90] sm:$0xff]
        %v4226 = vld [vmem:[#allocation2 + $0x98] sm:$0xff]
        %v4227 = vld [vmem:[#allocation2 + $0xa0] sm:$0xff]
        %v4228 = vld [vmem:[#allocation2 + $0xa8] sm:$0xff]
        %v4229 = vld [vmem:[#allocation2 + $0xb0] sm:$0xff]
        %v4230 = vld [vmem:[#allocation2 + $0xb8] sm:$0xff]
        %v4231 = vld [vmem:[#allocation2 + $0xc0] sm:$0xff]
        %v4232 = vld [vmem:[#allocation2 + $0xc8] sm:$0xff]
        %v4233 = vld [vmem:[#allocation2 + $0xd0] sm:$0xff]
        %v4234 = vld [vmem:[#allocation2 + $0xd8] sm:$0xff]
        %v4235 = vld [vmem:[#allocation2 + $0xe0] sm:$0xff]
        %v4236 = vld [vmem:[#allocation2 + $0xe8] sm:$0xff]
        %v4237 = vld [vmem:[#allocation2 + $0xf0] sm:$0xff]
        %v4238 = vld [vmem:[#allocation2 + $0xf8] sm:$0xff]
        %v4239 = vld [vmem:[#allocation2 + $0x100] sm:$0xff]
        %v4240 = vld [vmem:[#allocation2 + $0x108] sm:$0xff]
        %v4241 = vld [vmem:[#allocation2 + $0x110] sm:$0xff]
        %v4242 = vld [vmem:[#allocation2 + $0x118] sm:$0xff]
        %v4243 = vld [vmem:[#allocation2 + $0x120] sm:$0xff]
        %v4244 = vld [vmem:[#allocation2 + $0x128] sm:$0xff]
        %v4245 = vld [vmem:[#allocation2 + $0x130] sm:$0xff]
        %v4246 = vld [vmem:[#allocation2 + $0x138] sm:$0xff]
        %v4247 = vld [vmem:[#allocation2 + $0x140] sm:$0xff]
        %v4248 = vld [vmem:[#allocation2 + $0x148] sm:$0xff]
        %v4249 = vld [vmem:[#allocation2 + $0x150] sm:$0xff]
        %v4250 = vld [vmem:[#allocation2 + $0x158] sm:$0xff]
        %v4251 = vld [vmem:[#allocation2 + $0x160] sm:$0xff]
        %v4252 = vld [vmem:[#allocation2 + $0x168] sm:$0xff]
        %v4253 = vld [vmem:[#allocation2 + $0x170] sm:$0xff]
        %v4254 = vld [vmem:[#allocation2 + $0x178] sm:$0xff]
        %v4255 = vld [vmem:[#allocation2 + $0x180] sm:$0xff]
        %v4256 = vld [vmem:[#allocation2 + $0x188] sm:$0xff]
        %v4257 = vld [vmem:[#allocation2 + $0x190] sm:$0xff]
        %v4258 = vld [vmem:[#allocation2 + $0x198] sm:$0xff]
        %v4259 = vld [vmem:[#allocation2 + $0x1a0] sm:$0xff]
        %v4260 = vld [vmem:[#allocation2 + $0x1a8] sm:$0xff]
        %v4261 = vld [vmem:[#allocation2 + $0x1b0] sm:$0xff]
        %v4262 = vld [vmem:[#allocation2 + $0x1b8] sm:$0xff]
        %v4263 = vld [vmem:[#allocation2 + $0x1c0] sm:$0xff]
        %v4264 = vld [vmem:[#allocation2 + $0x1c8] sm:$0xff]
        %v4265 = vld [vmem:[#allocation2 + $0x1d0] sm:$0xff]
        %v4266 = vld [vmem:[#allocation2 + $0x1d8] sm:$0xff]
        %v4267 = vld [vmem:[#allocation2 + $0x1e0] sm:$0xff]
        %v4268 = vld [vmem:[#allocation2 + $0x1e8] sm:$0xff]
        %v4269 = vld [vmem:[#allocation2 + $0x1f0] sm:$0xff]
        %v4270 = vld [vmem:[#allocation2 + $0x1f8] sm:$0xff]
        %v4271 = vld [vmem:[#allocation2 + $0x200] sm:$0xff]
        %v4272 = vld [vmem:[#allocation2 + $0x208] sm:$0xff]
        %v4273 = vld [vmem:[#allocation2 + $0x210] sm:$0xff]
        %v4274 = vld [vmem:[#allocation2 + $0x218] sm:$0xff]
        %v4275 = vld [vmem:[#allocation2 + $0x220] sm:$0xff]
        %v4276 = vld [vmem:[#allocation2 + $0x228] sm:$0xff]
        %v4277 = vld [vmem:[#allocation2 + $0x230] sm:$0xff]
        %v4278 = vld [vmem:[#allocation2 + $0x238] sm:$0xff]
        %v4283 = vunpack.c.l.b16 %v4203
        %v4284 = vunpack.c.l.b16 %v4204
        %v4285 = vunpack.c.l.b16 %v4205
        %v4286 = vunpack.c.l.b16 %v4206
        %v4287 = vpack.c.b16 %v4284, %v4283
        %v4288 = vpack.c.b16 %v4286, %v4285
        %v4361 = vunpack.c.l.b16 %v4207
        %v4362 = vunpack.c.h.b16 %v4207
        %v4363 = vunpack.c.l.b16 %v4208
        %v4364 = vunpack.c.h.b16 %v4208
        %v4365 = vunpack.c.l.b16 %v4209
        %v4366 = vunpack.c.h.b16 %v4209
        %v4367 = vunpack.c.l.b16 %v4210
        %v4368 = vunpack.c.h.b16 %v4210
        %v4369 = vunpack.c.l.b16 %v4211
        %v4370 = vunpack.c.h.b16 %v4211
        %v4371 = vunpack.c.l.b16 %v4212
        %v4372 = vunpack.c.h.b16 %v4212
        %v4373 = vunpack.c.l.b16 %v4213
        %v4374 = vunpack.c.h.b16 %v4213
        %v4375 = vunpack.c.l.b16 %v4214
        %v4376 = vunpack.c.h.b16 %v4214
        %v4377 = vunpack.c.l.b16 %v4215
        %v4378 = vunpack.c.h.b16 %v4215
        %v4379 = vunpack.c.l.b16 %v4216
        %v4380 = vunpack.c.h.b16 %v4216
        %v4381 = vunpack.c.l.b16 %v4217
        %v4382 = vunpack.c.h.b16 %v4217
        %v4383 = vunpack.c.l.b16 %v4218
        %v4384 = vunpack.c.h.b16 %v4218
        %v4385 = vunpack.c.l.b16 %v4219
        %v4386 = vunpack.c.h.b16 %v4219
        %v4387 = vunpack.c.l.b16 %v4220
        %v4388 = vunpack.c.h.b16 %v4220
        %v4389 = vunpack.c.l.b16 %v4221
        %v4390 = vunpack.c.h.b16 %v4221
        %v4391 = vunpack.c.l.b16 %v4222
        %v4392 = vunpack.c.h.b16 %v4222
        %v4393 = vunpack.c.l.b16 %v4223
        %v4394 = vunpack.c.h.b16 %v4223
        %v4395 = vunpack.c.l.b16 %v4224
        %v4396 = vunpack.c.h.b16 %v4224
        %v4397 = vunpack.c.l.b16 %v4225
        %v4398 = vunpack.c.h.b16 %v4225
        %v4399 = vunpack.c.l.b16 %v4226
        %v4400 = vunpack.c.h.b16 %v4226
        %v4401 = vunpack.c.l.b16 %v4227
        %v4402 = vunpack.c.h.b16 %v4227
        %v4403 = vunpack.c.l.b16 %v4228
        %v4404 = vunpack.c.h.b16 %v4228
        %v4405 = vunpack.c.l.b16 %v4229
        %v4406 = vunpack.c.h.b16 %v4229
        %v4407 = vunpack.c.l.b16 %v4230
        %v4408 = vunpack.c.h.b16 %v4230
        %v4409 = vunpack.c.l.b16 %v4231
        %v4410 = vunpack.c.h.b16 %v4231
        %v4411 = vunpack.c.l.b16 %v4232
        %v4412 = vunpack.c.h.b16 %v4232
        %v4413 = vunpack.c.l.b16 %v4233
        %v4414 = vunpack.c.h.b16 %v4233
        %v4415 = vunpack.c.l.b16 %v4234
        %v4416 = vunpack.c.h.b16 %v4234
        %v4417 = vunpack.c.l.b16 %v4235
        %v4418 = vunpack.c.h.b16 %v4235
        %v4419 = vunpack.c.l.b16 %v4236
        %v4420 = vunpack.c.h.b16 %v4236
        %v4421 = vunpack.c.l.b16 %v4237
        %v4422 = vunpack.c.h.b16 %v4237
        %v4423 = vunpack.c.l.b16 %v4238
        %v4424 = vunpack.c.h.b16 %v4238
        %v4425 = vunpack.c.l.b16 %v4239
        %v4426 = vunpack.c.h.b16 %v4239
        %v4427 = vunpack.c.l.b16 %v4240
        %v4428 = vunpack.c.h.b16 %v4240
        %v4429 = vunpack.c.l.b16 %v4241
        %v4430 = vunpack.c.h.b16 %v4241
        %v4431 = vunpack.c.l.b16 %v4242
        %v4432 = vunpack.c.h.b16 %v4242
        %v4433 = vunpack.c.l.b16 %v4243
        %v4434 = vunpack.c.h.b16 %v4243
        %v4435 = vunpack.c.l.b16 %v4244
        %v4436 = vunpack.c.h.b16 %v4244
        %v4437 = vunpack.c.l.b16 %v4245
        %v4438 = vunpack.c.h.b16 %v4245
        %v4439 = vunpack.c.l.b16 %v4246
        %v4440 = vunpack.c.h.b16 %v4246
        %v4441 = vunpack.c.l.b16 %v4247
        %v4442 = vunpack.c.h.b16 %v4247
        %v4443 = vunpack.c.l.b16 %v4248
        %v4444 = vunpack.c.h.b16 %v4248
        %v4445 = vunpack.c.l.b16 %v4249
        %v4446 = vunpack.c.h.b16 %v4249
        %v4447 = vunpack.c.l.b16 %v4250
        %v4448 = vunpack.c.h.b16 %v4250
        %v4449 = vunpack.c.l.b16 %v4251
        %v4450 = vunpack.c.h.b16 %v4251
        %v4451 = vunpack.c.l.b16 %v4252
        %v4452 = vunpack.c.h.b16 %v4252
        %v4453 = vunpack.c.l.b16 %v4253
        %v4454 = vunpack.c.h.b16 %v4253
        %v4455 = vunpack.c.l.b16 %v4254
        %v4456 = vunpack.c.h.b16 %v4254
        %v4457 = vunpack.c.l.b16 %v4255
        %v4458 = vunpack.c.h.b16 %v4255
        %v4459 = vunpack.c.l.b16 %v4256
        %v4460 = vunpack.c.h.b16 %v4256
        %v4461 = vunpack.c.l.b16 %v4257
        %v4462 = vunpack.c.h.b16 %v4257
        %v4463 = vunpack.c.l.b16 %v4258
        %v4464 = vunpack.c.h.b16 %v4258
        %v4465 = vunpack.c.l.b16 %v4259
        %v4466 = vunpack.c.h.b16 %v4259
        %v4467 = vunpack.c.l.b16 %v4260
        %v4468 = vunpack.c.h.b16 %v4260
        %v4469 = vunpack.c.l.b16 %v4261
        %v4470 = vunpack.c.h.b16 %v4261
        %v4471 = vunpack.c.l.b16 %v4262
        %v4472 = vunpack.c.h.b16 %v4262
        %v4473 = vunpack.c.l.b16 %v4263
        %v4474 = vunpack.c.h.b16 %v4263
        %v4475 = vunpack.c.l.b16 %v4264
        %v4476 = vunpack.c.h.b16 %v4264
        %v4477 = vunpack.c.l.b16 %v4265
        %v4478 = vunpack.c.h.b16 %v4265
        %v4479 = vunpack.c.l.b16 %v4266
        %v4480 = vunpack.c.h.b16 %v4266
        %v4481 = vunpack.c.l.b16 %v4267
        %v4482 = vunpack.c.h.b16 %v4267
        %v4483 = vunpack.c.l.b16 %v4268
        %v4484 = vunpack.c.h.b16 %v4268
        %v4485 = vunpack.c.l.b16 %v4269
        %v4486 = vunpack.c.h.b16 %v4269
        %v4487 = vunpack.c.l.b16 %v4270
        %v4488 = vunpack.c.h.b16 %v4270
        %v4489 = vunpack.c.l.b16 %v4271
        %v4490 = vunpack.c.h.b16 %v4271
        %v4491 = vunpack.c.l.b16 %v4272
        %v4492 = vunpack.c.h.b16 %v4272
        %v4493 = vunpack.c.l.b16 %v4273
        %v4494 = vunpack.c.h.b16 %v4273
        %v4495 = vunpack.c.l.b16 %v4274
        %v4496 = vunpack.c.h.b16 %v4274
        %v4497 = vunpack.c.l.b16 %v4275
        %v4498 = vunpack.c.h.b16 %v4275
        %v4499 = vunpack.c.l.b16 %v4276
        %v4500 = vunpack.c.h.b16 %v4276
        %v4501 = vunpack.c.l.b16 %v4277
        %v4502 = vunpack.c.h.b16 %v4277
        %v4503 = vunpack.c.l.b16 %v4278
        %v4504 = vunpack.c.h.b16 %v4278
        %v4505 = vpack.c.b16 %v4379, %v4361
        %v4506 = vpack.c.b16 %v4380, %v4362
        %v4507 = vpack.c.b16 %v4381, %v4363
        %v4508 = vpack.c.b16 %v4382, %v4364
        %v4509 = vpack.c.b16 %v4383, %v4365
        %v4510 = vpack.c.b16 %v4384, %v4366
        %v4511 = vpack.c.b16 %v4385, %v4367
        %v4512 = vpack.c.b16 %v4386, %v4368
        %v4513 = vpack.c.b16 %v4387, %v4369
        %v4514 = vpack.c.b16 %v4388, %v4370
        %v4515 = vpack.c.b16 %v4389, %v4371
        %v4516 = vpack.c.b16 %v4390, %v4372
        %v4517 = vpack.c.b16 %v4391, %v4373
        %v4518 = vpack.c.b16 %v4392, %v4374
        %v4519 = vpack.c.b16 %v4393, %v4375
        %v4520 = vpack.c.b16 %v4394, %v4376
        %v4521 = vpack.c.b16 %v4395, %v4377
        %v4522 = vpack.c.b16 %v4396, %v4378
        %v4523 = vpack.c.b16 %v4415, %v4397
        %v4524 = vpack.c.b16 %v4416, %v4398
        %v4525 = vpack.c.b16 %v4417, %v4399
        %v4526 = vpack.c.b16 %v4418, %v4400
        %v4527 = vpack.c.b16 %v4419, %v4401
        %v4528 = vpack.c.b16 %v4420, %v4402
        %v4529 = vpack.c.b16 %v4421, %v4403
        %v4530 = vpack.c.b16 %v4422, %v4404
        %v4531 = vpack.c.b16 %v4423, %v4405
        %v4532 = vpack.c.b16 %v4424, %v4406
        %v4533 = vpack.c.b16 %v4425, %v4407
        %v4534 = vpack.c.b16 %v4426, %v4408
        %v4535 = vpack.c.b16 %v4427, %v4409
        %v4536 = vpack.c.b16 %v4428, %v4410
        %v4537 = vpack.c.b16 %v4429, %v4411
        %v4538 = vpack.c.b16 %v4430, %v4412
        %v4539 = vpack.c.b16 %v4431, %v4413
        %v4540 = vpack.c.b16 %v4432, %v4414
        %v4541 = vpack.c.b16 %v4451, %v4433
        %v4542 = vpack.c.b16 %v4452, %v4434
        %v4543 = vpack.c.b16 %v4453, %v4435
        %v4544 = vpack.c.b16 %v4454, %v4436
        %v4545 = vpack.c.b16 %v4455, %v4437
        %v4546 = vpack.c.b16 %v4456, %v4438
        %v4547 = vpack.c.b16 %v4457, %v4439
        %v4548 = vpack.c.b16 %v4458, %v4440
        %v4549 = vpack.c.b16 %v4459, %v4441
        %v4550 = vpack.c.b16 %v4460, %v4442
        %v4551 = vpack.c.b16 %v4461, %v4443
        %v4552 = vpack.c.b16 %v4462, %v4444
        %v4553 = vpack.c.b16 %v4463, %v4445
        %v4554 = vpack.c.b16 %v4464, %v4446
        %v4555 = vpack.c.b16 %v4465, %v4447
        %v4556 = vpack.c.b16 %v4466, %v4448
        %v4557 = vpack.c.b16 %v4467, %v4449
        %v4558 = vpack.c.b16 %v4468, %v4450
        %v4559 = vpack.c.b16 %v4487, %v4469
        %v4560 = vpack.c.b16 %v4488, %v4470
        %v4561 = vpack.c.b16 %v4489, %v4471
        %v4562 = vpack.c.b16 %v4490, %v4472
        %v4563 = vpack.c.b16 %v4491, %v4473
        %v4564 = vpack.c.b16 %v4492, %v4474
        %v4565 = vpack.c.b16 %v4493, %v4475
        %v4566 = vpack.c.b16 %v4494, %v4476
        %v4567 = vpack.c.b16 %v4495, %v4477
        %v4568 = vpack.c.b16 %v4496, %v4478
        %v4569 = vpack.c.b16 %v4497, %v4479
        %v4570 = vpack.c.b16 %v4498, %v4480
        %v4571 = vpack.c.b16 %v4499, %v4481
        %v4572 = vpack.c.b16 %v4500, %v4482
        %v4573 = vpack.c.b16 %v4501, %v4483
        %v4574 = vpack.c.b16 %v4502, %v4484
        %v4575 = vpack.c.b16 %v4503, %v4485
        %v4576 = vpack.c.b16 %v4504, %v4486
        %vm4649 = vcmask 523264
        %v4651 = vsel %vm4649, %v4287, 0
        %v4654 = vsel %vm4649, %v4288, 0
        %4656 = vmatprep.subr.bf16.mxu0 0
        %4657 = vmatpush1.bf16.msra.mxu0 0
        %4658 = vmatprep.subr.bf16.mxu0 0
        %4659 = vmatpush1.bf16.msra.mxu0 0
        %4660 = vmatprep.subr.bf16.mxu0 0
        %4661 = vmatpush1.bf16.msra.mxu0 0
        %4662 = vmatprep.subr.bf16.mxu0 0
        %4663 = vmatpush1.bf16.msra.mxu0 0
        %4664 = vmatprep.subr.bf16.mxu0 %v4560
        %4665 = vmatpush1.bf16.msra.mxu0 %v4559
        %4666 = vmatprep.subr.bf16.mxu0 %v4542
        %4667 = vmatpush1.bf16.msra.mxu0 %v4541
        %4668 = vmatprep.subr.bf16.mxu0 %v4524
        %4669 = vmatpush1.bf16.msra.mxu0 %v4523
        %4670 = vmatprep.subr.bf16.mxu0 %v4506
        %4671 = vmatpush1.bf16.msra.mxu0 %v4505
        %4672 = vmatprep.subr.bf16.mxu0 0
        %4673 = vmatpush2.bf16.msra.mxu0 0
        %4674 = vmatprep.subr.bf16.mxu0 0
        %4675 = vmatpush2.bf16.msra.mxu0 0
        %4676 = vmatprep.subr.bf16.mxu0 0
        %4677 = vmatpush2.bf16.msra.mxu0 0
        %4678 = vmatprep.subr.bf16.mxu0 0
        %4679 = vmatpush2.bf16.msra.mxu0 0
        %4680 = vmatprep.subr.bf16.mxu0 0
        %4681 = vmatpush2.bf16.msra.mxu0 0
        %4682 = vmatprep.subr.bf16.mxu0 0
        %4683 = vmatpush2.bf16.msra.mxu0 0
        %4684 = vmatprep.subr.bf16.mxu0 0
        %4685 = vmatpush2.bf16.msra.mxu0 0
        %4686 = vmatprep.subr.bf16.mxu0 0
        %4687 = vmatpush2.bf16.msra.mxu0 0
        %4688 = vmatprep.mubr.bf16.mxu0 0
        %4689 = vmatmul.mubr.bf16.gmra.mxu0 %v4651
        %v4690 = vpop.f32.mrf.mxu0
        %v4691 = vadd.f32 0.0, %v4690
        %v4692 = vpop.f32.mrf.mxu0
        %v4693 = vadd.f32 0.0, %v4692
        %v4694 = vpop.f32.mrf.mxu0
        %v4695 = vadd.f32 0.0, %v4694
        %v4696 = vpop.f32.mrf.mxu0
        %v4697 = vadd.f32 0.0, %v4696
        %4698 = vmatprep.mubr.bf16.mxu0 0
        %4699 = vmatmul.mubr.bf16.gmra.mxu0 %v4654
        %v4700 = vpop.f32.mrf.mxu0
        %v4701 = vadd.f32 0.0, %v4700
        %v4702 = vpop.f32.mrf.mxu0
        %v4703 = vadd.f32 0.0, %v4702
        %v4704 = vpop.f32.mrf.mxu0
        %v4705 = vadd.f32 0.0, %v4704
        %v4706 = vpop.f32.mrf.mxu0
        %v4707 = vadd.f32 0.0, %v4706
        %4708 = vdwg.mxu0
        %4709 = vmatprep.subr.bf16.mxu0 0
        %4710 = vmatpush1.bf16.msra.mxu0 0
        %4711 = vmatprep.subr.bf16.mxu0 0
        %4712 = vmatpush1.bf16.msra.mxu0 0
        %4713 = vmatprep.subr.bf16.mxu0 0
        %4714 = vmatpush1.bf16.msra.mxu0 0
        %4715 = vmatprep.subr.bf16.mxu0 0
        %4716 = vmatpush1.bf16.msra.mxu0 0
        %4717 = vmatprep.subr.bf16.mxu0 %v4562
        %4718 = vmatpush1.bf16.msra.mxu0 %v4561
        %4719 = vmatprep.subr.bf16.mxu0 %v4544
        %4720 = vmatpush1.bf16.msra.mxu0 %v4543
        %4721 = vmatprep.subr.bf16.mxu0 %v4526
        %4722 = vmatpush1.bf16.msra.mxu0 %v4525
        %4723 = vmatprep.subr.bf16.mxu0 %v4508
        %4724 = vmatpush1.bf16.msra.mxu0 %v4507
        %4725 = vmatprep.subr.bf16.mxu0 0
        %4726 = vmatpush2.bf16.msra.mxu0 0
        %4727 = vmatprep.subr.bf16.mxu0 0
        %4728 = vmatpush2.bf16.msra.mxu0 0
        %4729 = vmatprep.subr.bf16.mxu0 0
        %4730 = vmatpush2.bf16.msra.mxu0 0
        %4731 = vmatprep.subr.bf16.mxu0 0
        %4732 = vmatpush2.bf16.msra.mxu0 0
        %4733 = vmatprep.subr.bf16.mxu0 0
        %4734 = vmatpush2.bf16.msra.mxu0 0
        %4735 = vmatprep.subr.bf16.mxu0 0
        %4736 = vmatpush2.bf16.msra.mxu0 0
        %4737 = vmatprep.subr.bf16.mxu0 0
        %4738 = vmatpush2.bf16.msra.mxu0 0
        %4739 = vmatprep.subr.bf16.mxu0 0
        %4740 = vmatpush2.bf16.msra.mxu0 0
        %4741 = vmatprep.mubr.bf16.mxu0 0
        %4742 = vmatmul.mubr.bf16.gmra.mxu0 %v4651
        %v4743 = vpop.f32.mrf.mxu0
        %v4744 = vadd.f32 0.0, %v4743
        %v4745 = vpop.f32.mrf.mxu0
        %v4746 = vadd.f32 0.0, %v4745
        %v4747 = vpop.f32.mrf.mxu0
        %v4748 = vadd.f32 0.0, %v4747
        %v4749 = vpop.f32.mrf.mxu0
        %v4750 = vadd.f32 0.0, %v4749
        %4751 = vmatprep.mubr.bf16.mxu0 0
        %4752 = vmatmul.mubr.bf16.gmra.mxu0 %v4654
        %v4753 = vpop.f32.mrf.mxu0
        %v4754 = vadd.f32 0.0, %v4753
        %v4755 = vpop.f32.mrf.mxu0
        %v4756 = vadd.f32 0.0, %v4755
        %v4757 = vpop.f32.mrf.mxu0
        %v4758 = vadd.f32 0.0, %v4757
        %v4759 = vpop.f32.mrf.mxu0
        %v4760 = vadd.f32 0.0, %v4759
        %4761 = vdwg.mxu0
        %4762 = vmatprep.subr.bf16.mxu0 0
        %4763 = vmatpush1.bf16.msra.mxu0 0
        %4764 = vmatprep.subr.bf16.mxu0 0
        %4765 = vmatpush1.bf16.msra.mxu0 0
        %4766 = vmatprep.subr.bf16.mxu0 0
        %4767 = vmatpush1.bf16.msra.mxu0 0
        %4768 = vmatprep.subr.bf16.mxu0 0
        %4769 = vmatpush1.bf16.msra.mxu0 0
        %4770 = vmatprep.subr.bf16.mxu0 %v4564
        %4771 = vmatpush1.bf16.msra.mxu0 %v4563
        %4772 = vmatprep.subr.bf16.mxu0 %v4546
        %4773 = vmatpush1.bf16.msra.mxu0 %v4545
        %4774 = vmatprep.subr.bf16.mxu0 %v4528
        %4775 = vmatpush1.bf16.msra.mxu0 %v4527
        %4776 = vmatprep.subr.bf16.mxu0 %v4510
        %4777 = vmatpush1.bf16.msra.mxu0 %v4509
        %4778 = vmatprep.subr.bf16.mxu0 0
        %4779 = vmatpush2.bf16.msra.mxu0 0
        %4780 = vmatprep.subr.bf16.mxu0 0
        %4781 = vmatpush2.bf16.msra.mxu0 0
        %4782 = vmatprep.subr.bf16.mxu0 0
        %4783 = vmatpush2.bf16.msra.mxu0 0
        %4784 = vmatprep.subr.bf16.mxu0 0
        %4785 = vmatpush2.bf16.msra.mxu0 0
        %4786 = vmatprep.subr.bf16.mxu0 0
        %4787 = vmatpush2.bf16.msra.mxu0 0
        %4788 = vmatprep.subr.bf16.mxu0 0
        %4789 = vmatpush2.bf16.msra.mxu0 0
        %4790 = vmatprep.subr.bf16.mxu0 0
        %4791 = vmatpush2.bf16.msra.mxu0 0
        %4792 = vmatprep.subr.bf16.mxu0 0
        %4793 = vmatpush2.bf16.msra.mxu0 0
        %4794 = vmatprep.mubr.bf16.mxu0 0
        %4795 = vmatmul.mubr.bf16.gmra.mxu0 %v4651
        %v4796 = vpop.f32.mrf.mxu0
        %v4797 = vadd.f32 0.0, %v4796
        %v4798 = vpop.f32.mrf.mxu0
        %v4799 = vadd.f32 0.0, %v4798
        %v4800 = vpop.f32.mrf.mxu0
        %v4801 = vadd.f32 0.0, %v4800
        %v4802 = vpop.f32.mrf.mxu0
        %v4803 = vadd.f32 0.0, %v4802
        %4804 = vmatprep.mubr.bf16.mxu0 0
        %4805 = vmatmul.mubr.bf16.gmra.mxu0 %v4654
        %v4806 = vpop.f32.mrf.mxu0
        %v4807 = vadd.f32 0.0, %v4806
        %v4808 = vpop.f32.mrf.mxu0
        %v4809 = vadd.f32 0.0, %v4808
        %v4810 = vpop.f32.mrf.mxu0
        %v4811 = vadd.f32 0.0, %v4810
        %v4812 = vpop.f32.mrf.mxu0
        %v4813 = vadd.f32 0.0, %v4812
        %4814 = vdwg.mxu0
        %4815 = vmatprep.subr.bf16.mxu0 0
        %4816 = vmatpush1.bf16.msra.mxu0 0
        %4817 = vmatprep.subr.bf16.mxu0 0
        %4818 = vmatpush1.bf16.msra.mxu0 0
        %4819 = vmatprep.subr.bf16.mxu0 0
        %4820 = vmatpush1.bf16.msra.mxu0 0
        %4821 = vmatprep.subr.bf16.mxu0 0
        %4822 = vmatpush1.bf16.msra.mxu0 0
        %4823 = vmatprep.subr.bf16.mxu0 %v4566
        %4824 = vmatpush1.bf16.msra.mxu0 %v4565
        %4825 = vmatprep.subr.bf16.mxu0 %v4548
        %4826 = vmatpush1.bf16.msra.mxu0 %v4547
        %4827 = vmatprep.subr.bf16.mxu0 %v4530
        %4828 = vmatpush1.bf16.msra.mxu0 %v4529
        %4829 = vmatprep.subr.bf16.mxu0 %v4512
        %4830 = vmatpush1.bf16.msra.mxu0 %v4511
        %4831 = vmatprep.subr.bf16.mxu0 0
        %4832 = vmatpush2.bf16.msra.mxu0 0
        %4833 = vmatprep.subr.bf16.mxu0 0
        %4834 = vmatpush2.bf16.msra.mxu0 0
        %4835 = vmatprep.subr.bf16.mxu0 0
        %4836 = vmatpush2.bf16.msra.mxu0 0
        %4837 = vmatprep.subr.bf16.mxu0 0
        %4838 = vmatpush2.bf16.msra.mxu0 0
        %4839 = vmatprep.subr.bf16.mxu0 0
        %4840 = vmatpush2.bf16.msra.mxu0 0
        %4841 = vmatprep.subr.bf16.mxu0 0
        %4842 = vmatpush2.bf16.msra.mxu0 0
        %4843 = vmatprep.subr.bf16.mxu0 0
        %4844 = vmatpush2.bf16.msra.mxu0 0
        %4845 = vmatprep.subr.bf16.mxu0 0
        %4846 = vmatpush2.bf16.msra.mxu0 0
        %4847 = vmatprep.mubr.bf16.mxu0 0
        %4848 = vmatmul.mubr.bf16.gmra.mxu0 %v4651
        %v4849 = vpop.f32.mrf.mxu0
        %v4850 = vadd.f32 0.0, %v4849
        %v4851 = vpop.f32.mrf.mxu0
        %v4852 = vadd.f32 0.0, %v4851
        %v4853 = vpop.f32.mrf.mxu0
        %v4854 = vadd.f32 0.0, %v4853
        %v4855 = vpop.f32.mrf.mxu0
        %v4856 = vadd.f32 0.0, %v4855
        %4857 = vmatprep.mubr.bf16.mxu0 0
        %4858 = vmatmul.mubr.bf16.gmra.mxu0 %v4654
        %v4859 = vpop.f32.mrf.mxu0
        %v4860 = vadd.f32 0.0, %v4859
        %v4861 = vpop.f32.mrf.mxu0
        %v4862 = vadd.f32 0.0, %v4861
        %v4863 = vpop.f32.mrf.mxu0
        %v4864 = vadd.f32 0.0, %v4863
        %v4865 = vpop.f32.mrf.mxu0
        %v4866 = vadd.f32 0.0, %v4865
        %4867 = vdwg.mxu0
        %4868 = vmatprep.subr.bf16.mxu0 0
        %4869 = vmatpush1.bf16.msra.mxu0 0
        %4870 = vmatprep.subr.bf16.mxu0 0
        %4871 = vmatpush1.bf16.msra.mxu0 0
        %4872 = vmatprep.subr.bf16.mxu0 0
        %4873 = vmatpush1.bf16.msra.mxu0 0
        %4874 = vmatprep.subr.bf16.mxu0 0
        %4875 = vmatpush1.bf16.msra.mxu0 0
        %4876 = vmatprep.subr.bf16.mxu0 %v4568
        %4877 = vmatpush1.bf16.msra.mxu0 %v4567
        %4878 = vmatprep.subr.bf16.mxu0 %v4550
        %4879 = vmatpush1.bf16.msra.mxu0 %v4549
        %4880 = vmatprep.subr.bf16.mxu0 %v4532
        %4881 = vmatpush1.bf16.msra.mxu0 %v4531
        %4882 = vmatprep.subr.bf16.mxu0 %v4514
        %4883 = vmatpush1.bf16.msra.mxu0 %v4513
        %4884 = vmatprep.subr.bf16.mxu0 0
        %4885 = vmatpush2.bf16.msra.mxu0 0
        %4886 = vmatprep.subr.bf16.mxu0 0
        %4887 = vmatpush2.bf16.msra.mxu0 0
        %4888 = vmatprep.subr.bf16.mxu0 0
        %4889 = vmatpush2.bf16.msra.mxu0 0
        %4890 = vmatprep.subr.bf16.mxu0 0
        %4891 = vmatpush2.bf16.msra.mxu0 0
        %4892 = vmatprep.subr.bf16.mxu0 0
        %4893 = vmatpush2.bf16.msra.mxu0 0
        %4894 = vmatprep.subr.bf16.mxu0 0
        %4895 = vmatpush2.bf16.msra.mxu0 0
        %4896 = vmatprep.subr.bf16.mxu0 0
        %4897 = vmatpush2.bf16.msra.mxu0 0
        %4898 = vmatprep.subr.bf16.mxu0 0
        %4899 = vmatpush2.bf16.msra.mxu0 0
        %4900 = vmatprep.mubr.bf16.mxu0 0
        %4901 = vmatmul.mubr.bf16.gmra.mxu0 %v4651
        %v4902 = vpop.f32.mrf.mxu0
        %v4903 = vadd.f32 0.0, %v4902
        %v4904 = vpop.f32.mrf.mxu0
        %v4905 = vadd.f32 0.0, %v4904
        %v4906 = vpop.f32.mrf.mxu0
        %v4907 = vadd.f32 0.0, %v4906
        %v4908 = vpop.f32.mrf.mxu0
        %v4909 = vadd.f32 0.0, %v4908
        %4910 = vmatprep.mubr.bf16.mxu0 0
        %4911 = vmatmul.mubr.bf16.gmra.mxu0 %v4654
        %v4912 = vpop.f32.mrf.mxu0
        %v4913 = vadd.f32 0.0, %v4912
        %v4914 = vpop.f32.mrf.mxu0
        %v4915 = vadd.f32 0.0, %v4914
        %v4916 = vpop.f32.mrf.mxu0
        %v4917 = vadd.f32 0.0, %v4916
        %v4918 = vpop.f32.mrf.mxu0
        %v4919 = vadd.f32 0.0, %v4918
        %4920 = vdwg.mxu0
        %4921 = vmatprep.subr.bf16.mxu0 0
        %4922 = vmatpush1.bf16.msra.mxu0 0
        %4923 = vmatprep.subr.bf16.mxu0 0
        %4924 = vmatpush1.bf16.msra.mxu0 0
        %4925 = vmatprep.subr.bf16.mxu0 0
        %4926 = vmatpush1.bf16.msra.mxu0 0
        %4927 = vmatprep.subr.bf16.mxu0 0
        %4928 = vmatpush1.bf16.msra.mxu0 0
        %4929 = vmatprep.subr.bf16.mxu0 %v4570
        %4930 = vmatpush1.bf16.msra.mxu0 %v4569
        %4931 = vmatprep.subr.bf16.mxu0 %v4552
        %4932 = vmatpush1.bf16.msra.mxu0 %v4551
        %4933 = vmatprep.subr.bf16.mxu0 %v4534
        %4934 = vmatpush1.bf16.msra.mxu0 %v4533
        %4935 = vmatprep.subr.bf16.mxu0 %v4516
        %4936 = vmatpush1.bf16.msra.mxu0 %v4515
        %4937 = vmatprep.subr.bf16.mxu0 0
        %4938 = vmatpush2.bf16.msra.mxu0 0
        %4939 = vmatprep.subr.bf16.mxu0 0
        %4940 = vmatpush2.bf16.msra.mxu0 0
        %4941 = vmatprep.subr.bf16.mxu0 0
        %4942 = vmatpush2.bf16.msra.mxu0 0
        %4943 = vmatprep.subr.bf16.mxu0 0
        %4944 = vmatpush2.bf16.msra.mxu0 0
        %4945 = vmatprep.subr.bf16.mxu0 0
        %4946 = vmatpush2.bf16.msra.mxu0 0
        %4947 = vmatprep.subr.bf16.mxu0 0
        %4948 = vmatpush2.bf16.msra.mxu0 0
        %4949 = vmatprep.subr.bf16.mxu0 0
        %4950 = vmatpush2.bf16.msra.mxu0 0
        %4951 = vmatprep.subr.bf16.mxu0 0
        %4952 = vmatpush2.bf16.msra.mxu0 0
        %4953 = vmatprep.mubr.bf16.mxu0 0
        %4954 = vmatmul.mubr.bf16.gmra.mxu0 %v4651
        %v4955 = vpop.f32.mrf.mxu0
        %v4956 = vadd.f32 0.0, %v4955
        %v4957 = vpop.f32.mrf.mxu0
        %v4958 = vadd.f32 0.0, %v4957
        %v4959 = vpop.f32.mrf.mxu0
        %v4960 = vadd.f32 0.0, %v4959
        %v4961 = vpop.f32.mrf.mxu0
        %v4962 = vadd.f32 0.0, %v4961
        %4963 = vmatprep.mubr.bf16.mxu0 0
        %4964 = vmatmul.mubr.bf16.gmra.mxu0 %v4654
        %v4965 = vpop.f32.mrf.mxu0
        %v4966 = vadd.f32 0.0, %v4965
        %v4967 = vpop.f32.mrf.mxu0
        %v4968 = vadd.f32 0.0, %v4967
        %v4969 = vpop.f32.mrf.mxu0
        %v4970 = vadd.f32 0.0, %v4969
        %v4971 = vpop.f32.mrf.mxu0
        %v4972 = vadd.f32 0.0, %v4971
        %4973 = vdwg.mxu0
        %4974 = vmatprep.subr.bf16.mxu0 0
        %4975 = vmatpush1.bf16.msra.mxu0 0
        %4976 = vmatprep.subr.bf16.mxu0 0
        %4977 = vmatpush1.bf16.msra.mxu0 0
        %4978 = vmatprep.subr.bf16.mxu0 0
        %4979 = vmatpush1.bf16.msra.mxu0 0
        %4980 = vmatprep.subr.bf16.mxu0 0
        %4981 = vmatpush1.bf16.msra.mxu0 0
        %4982 = vmatprep.subr.bf16.mxu0 %v4572
        %4983 = vmatpush1.bf16.msra.mxu0 %v4571
        %4984 = vmatprep.subr.bf16.mxu0 %v4554
        %4985 = vmatpush1.bf16.msra.mxu0 %v4553
        %4986 = vmatprep.subr.bf16.mxu0 %v4536
        %4987 = vmatpush1.bf16.msra.mxu0 %v4535
        %4988 = vmatprep.subr.bf16.mxu0 %v4518
        %4989 = vmatpush1.bf16.msra.mxu0 %v4517
        %4990 = vmatprep.subr.bf16.mxu0 0
        %4991 = vmatpush2.bf16.msra.mxu0 0
        %4992 = vmatprep.subr.bf16.mxu0 0
        %4993 = vmatpush2.bf16.msra.mxu0 0
        %4994 = vmatprep.subr.bf16.mxu0 0
        %4995 = vmatpush2.bf16.msra.mxu0 0
        %4996 = vmatprep.subr.bf16.mxu0 0
        %4997 = vmatpush2.bf16.msra.mxu0 0
        %4998 = vmatprep.subr.bf16.mxu0 0
        %4999 = vmatpush2.bf16.msra.mxu0 0
        %5000 = vmatprep.subr.bf16.mxu0 0
        %5001 = vmatpush2.bf16.msra.mxu0 0
        %5002 = vmatprep.subr.bf16.mxu0 0
        %5003 = vmatpush2.bf16.msra.mxu0 0
        %5004 = vmatprep.subr.bf16.mxu0 0
        %5005 = vmatpush2.bf16.msra.mxu0 0
        %5006 = vmatprep.mubr.bf16.mxu0 0
        %5007 = vmatmul.mubr.bf16.gmra.mxu0 %v4651
        %v5008 = vpop.f32.mrf.mxu0
        %v5009 = vadd.f32 0.0, %v5008
        %v5010 = vpop.f32.mrf.mxu0
        %v5011 = vadd.f32 0.0, %v5010
        %v5012 = vpop.f32.mrf.mxu0
        %v5013 = vadd.f32 0.0, %v5012
        %v5014 = vpop.f32.mrf.mxu0
        %v5015 = vadd.f32 0.0, %v5014
        %5016 = vmatprep.mubr.bf16.mxu0 0
        %5017 = vmatmul.mubr.bf16.gmra.mxu0 %v4654
        %v5018 = vpop.f32.mrf.mxu0
        %v5019 = vadd.f32 0.0, %v5018
        %v5020 = vpop.f32.mrf.mxu0
        %v5021 = vadd.f32 0.0, %v5020
        %v5022 = vpop.f32.mrf.mxu0
        %v5023 = vadd.f32 0.0, %v5022
        %v5024 = vpop.f32.mrf.mxu0
        %v5025 = vadd.f32 0.0, %v5024
        %5026 = vdwg.mxu0
        %5027 = vmatprep.subr.bf16.mxu0 0
        %5028 = vmatpush1.bf16.msra.mxu0 0
        %5029 = vmatprep.subr.bf16.mxu0 0
        %5030 = vmatpush1.bf16.msra.mxu0 0
        %5031 = vmatprep.subr.bf16.mxu0 0
        %5032 = vmatpush1.bf16.msra.mxu0 0
        %5033 = vmatprep.subr.bf16.mxu0 0
        %5034 = vmatpush1.bf16.msra.mxu0 0
        %5035 = vmatprep.subr.bf16.mxu0 %v4574
        %5036 = vmatpush1.bf16.msra.mxu0 %v4573
        %5037 = vmatprep.subr.bf16.mxu0 %v4556
        %5038 = vmatpush1.bf16.msra.mxu0 %v4555
        %5039 = vmatprep.subr.bf16.mxu0 %v4538
        %5040 = vmatpush1.bf16.msra.mxu0 %v4537
        %5041 = vmatprep.subr.bf16.mxu0 %v4520
        %5042 = vmatpush1.bf16.msra.mxu0 %v4519
        %5043 = vmatprep.subr.bf16.mxu0 0
        %5044 = vmatpush2.bf16.msra.mxu0 0
        %5045 = vmatprep.subr.bf16.mxu0 0
        %5046 = vmatpush2.bf16.msra.mxu0 0
        %5047 = vmatprep.subr.bf16.mxu0 0
        %5048 = vmatpush2.bf16.msra.mxu0 0
        %5049 = vmatprep.subr.bf16.mxu0 0
        %5050 = vmatpush2.bf16.msra.mxu0 0
        %5051 = vmatprep.subr.bf16.mxu0 0
        %5052 = vmatpush2.bf16.msra.mxu0 0
        %5053 = vmatprep.subr.bf16.mxu0 0
        %5054 = vmatpush2.bf16.msra.mxu0 0
        %5055 = vmatprep.subr.bf16.mxu0 0
        %5056 = vmatpush2.bf16.msra.mxu0 0
        %5057 = vmatprep.subr.bf16.mxu0 0
        %5058 = vmatpush2.bf16.msra.mxu0 0
        %5059 = vmatprep.mubr.bf16.mxu0 0
        %5060 = vmatmul.mubr.bf16.gmra.mxu0 %v4651
        %v5061 = vpop.f32.mrf.mxu0
        %v5062 = vadd.f32 0.0, %v5061
        %v5063 = vpop.f32.mrf.mxu0
        %v5064 = vadd.f32 0.0, %v5063
        %v5065 = vpop.f32.mrf.mxu0
        %v5066 = vadd.f32 0.0, %v5065
        %v5067 = vpop.f32.mrf.mxu0
        %v5068 = vadd.f32 0.0, %v5067
        %5069 = vmatprep.mubr.bf16.mxu0 0
        %5070 = vmatmul.mubr.bf16.gmra.mxu0 %v4654
        %v5071 = vpop.f32.mrf.mxu0
        %v5072 = vadd.f32 0.0, %v5071
        %v5073 = vpop.f32.mrf.mxu0
        %v5074 = vadd.f32 0.0, %v5073
        %v5075 = vpop.f32.mrf.mxu0
        %v5076 = vadd.f32 0.0, %v5075
        %v5077 = vpop.f32.mrf.mxu0
        %v5078 = vadd.f32 0.0, %v5077
        %5079 = vdwg.mxu0
        %5080 = vmatprep.subr.bf16.mxu0 0
        %5081 = vmatpush1.bf16.msra.mxu0 0
        %5082 = vmatprep.subr.bf16.mxu0 0
        %5083 = vmatpush1.bf16.msra.mxu0 0
        %5084 = vmatprep.subr.bf16.mxu0 0
        %5085 = vmatpush1.bf16.msra.mxu0 0
        %5086 = vmatprep.subr.bf16.mxu0 0
        %5087 = vmatpush1.bf16.msra.mxu0 0
        %5088 = vmatprep.subr.bf16.mxu0 %v4576
        %5089 = vmatpush1.bf16.msra.mxu0 %v4575
        %5090 = vmatprep.subr.bf16.mxu0 %v4558
        %5091 = vmatpush1.bf16.msra.mxu0 %v4557
        %5092 = vmatprep.subr.bf16.mxu0 %v4540
        %5093 = vmatpush1.bf16.msra.mxu0 %v4539
        %5094 = vmatprep.subr.bf16.mxu0 %v4522
        %5095 = vmatpush1.bf16.msra.mxu0 %v4521
        %5096 = vmatprep.subr.bf16.mxu0 0
        %5097 = vmatpush2.bf16.msra.mxu0 0
        %5098 = vmatprep.subr.bf16.mxu0 0
        %5099 = vmatpush2.bf16.msra.mxu0 0
        %5100 = vmatprep.subr.bf16.mxu0 0
        %5101 = vmatpush2.bf16.msra.mxu0 0
        %5102 = vmatprep.subr.bf16.mxu0 0
        %5103 = vmatpush2.bf16.msra.mxu0 0
        %5104 = vmatprep.subr.bf16.mxu0 0
        %5105 = vmatpush2.bf16.msra.mxu0 0
        %5106 = vmatprep.subr.bf16.mxu0 0
        %5107 = vmatpush2.bf16.msra.mxu0 0
        %5108 = vmatprep.subr.bf16.mxu0 0
        %5109 = vmatpush2.bf16.msra.mxu0 0
        %5110 = vmatprep.subr.bf16.mxu0 0
        %5111 = vmatpush2.bf16.msra.mxu0 0
        %5112 = vmatprep.mubr.bf16.mxu0 0
        %5113 = vmatmul.mubr.bf16.gmra.mxu0 %v4651
        %v5114 = vpop.f32.mrf.mxu0
        %v5115 = vadd.f32 0.0, %v5114
        %v5116 = vpop.f32.mrf.mxu0
        %v5117 = vadd.f32 0.0, %v5116
        %v5118 = vpop.f32.mrf.mxu0
        %v5119 = vadd.f32 0.0, %v5118
        %v5120 = vpop.f32.mrf.mxu0
        %v5121 = vadd.f32 0.0, %v5120
        %5122 = vmatprep.mubr.bf16.mxu0 0
        %5123 = vmatmul.mubr.bf16.gmra.mxu0 %v4654
        %v5124 = vpop.f32.mrf.mxu0
        %v5125 = vadd.f32 0.0, %v5124
        %v5126 = vpop.f32.mrf.mxu0
        %v5127 = vadd.f32 0.0, %v5126
        %v5128 = vpop.f32.mrf.mxu0
        %v5129 = vadd.f32 0.0, %v5128
        %v5130 = vpop.f32.mrf.mxu0
        %v5131 = vadd.f32 0.0, %v5130
        %5132 = vdwg.mxu0
        %v5133 = vmax.f32 %v4691, 0.0
        %v5134 = vmax.f32 %v4693, 0.0
        %v5135 = vmax.f32 %v4744, 0.0
        %v5136 = vmax.f32 %v4746, 0.0
        %v5137 = vmax.f32 %v4797, 0.0
        %v5138 = vmax.f32 %v4799, 0.0
        %v5139 = vmax.f32 %v4850, 0.0
        %v5140 = vmax.f32 %v4852, 0.0
        %v5141 = vmax.f32 %v4903, 0.0
        %v5142 = vmax.f32 %v4905, 0.0
        %v5143 = vmax.f32 %v4956, 0.0
        %v5144 = vmax.f32 %v4958, 0.0
        %v5145 = vmax.f32 %v5009, 0.0
        %v5146 = vmax.f32 %v5011, 0.0
        %v5147 = vmax.f32 %v5062, 0.0
        %v5148 = vmax.f32 %v5064, 0.0
        %v5149 = vmax.f32 %v5115, 0.0
        %v5150 = vmax.f32 %v5117, 0.0
        %v5151 = vmax.f32 %v4695, 0.0
        %v5152 = vmax.f32 %v4697, 0.0
        %v5153 = vmax.f32 %v4748, 0.0
        %v5154 = vmax.f32 %v4750, 0.0
        %v5155 = vmax.f32 %v4801, 0.0
        %v5156 = vmax.f32 %v4803, 0.0
        %v5157 = vmax.f32 %v4854, 0.0
        %v5158 = vmax.f32 %v4856, 0.0
        %v5159 = vmax.f32 %v4907, 0.0
        %v5160 = vmax.f32 %v4909, 0.0
        %v5161 = vmax.f32 %v4960, 0.0
        %v5162 = vmax.f32 %v4962, 0.0
        %v5163 = vmax.f32 %v5013, 0.0
        %v5164 = vmax.f32 %v5015, 0.0
        %v5165 = vmax.f32 %v5066, 0.0
        %v5166 = vmax.f32 %v5068, 0.0
        %v5167 = vmax.f32 %v5119, 0.0
        %v5168 = vmax.f32 %v5121, 0.0
        %v5169 = vmax.f32 %v4701, 0.0
        %v5170 = vmax.f32 %v4703, 0.0
        %v5171 = vmax.f32 %v4754, 0.0
        %v5172 = vmax.f32 %v4756, 0.0
        %v5173 = vmax.f32 %v4807, 0.0
        %v5174 = vmax.f32 %v4809, 0.0
        %v5175 = vmax.f32 %v4860, 0.0
        %v5176 = vmax.f32 %v4862, 0.0
        %v5177 = vmax.f32 %v4913, 0.0
        %v5178 = vmax.f32 %v4915, 0.0
        %v5179 = vmax.f32 %v4966, 0.0
        %v5180 = vmax.f32 %v4968, 0.0
        %v5181 = vmax.f32 %v5019, 0.0
        %v5182 = vmax.f32 %v5021, 0.0
        %v5183 = vmax.f32 %v5072, 0.0
        %v5184 = vmax.f32 %v5074, 0.0
        %v5185 = vmax.f32 %v5125, 0.0
        %v5186 = vmax.f32 %v5127, 0.0
        %v5187 = vmax.f32 %v4705, 0.0
        %v5188 = vmax.f32 %v4707, 0.0
        %v5189 = vmax.f32 %v4758, 0.0
        %v5190 = vmax.f32 %v4760, 0.0
        %v5191 = vmax.f32 %v4811, 0.0
        %v5192 = vmax.f32 %v4813, 0.0
        %v5193 = vmax.f32 %v4864, 0.0
        %v5194 = vmax.f32 %v4866, 0.0
        %v5195 = vmax.f32 %v4917, 0.0
        %v5196 = vmax.f32 %v4919, 0.0
        %v5197 = vmax.f32 %v4970, 0.0
        %v5198 = vmax.f32 %v4972, 0.0
        %v5199 = vmax.f32 %v5023, 0.0
        %v5200 = vmax.f32 %v5025, 0.0
        %v5201 = vmax.f32 %v5076, 0.0
        %v5202 = vmax.f32 %v5078, 0.0
        %v5203 = vmax.f32 %v5129, 0.0
        %v5204 = vmax.f32 %v5131, 0.0
        %5205 = vst [vmem:[#allocation3] sm:$0xff] %v5133
        %5206 = vst [vmem:[#allocation3 + $0x8] sm:$0xff] %v5134
        %5207 = vst [vmem:[#allocation3 + $0x10] sm:$0xff] %v5135
        %5208 = vst [vmem:[#allocation3 + $0x18] sm:$0xff] %v5136
        %5209 = vst [vmem:[#allocation3 + $0x20] sm:$0xff] %v5137
        %5210 = vst [vmem:[#allocation3 + $0x28] sm:$0xff] %v5138
        %5211 = vst [vmem:[#allocation3 + $0x30] sm:$0xff] %v5139
        %5212 = vst [vmem:[#allocation3 + $0x38] sm:$0xff] %v5140
        %5213 = vst [vmem:[#allocation3 + $0x40] sm:$0xff] %v5141
        %5214 = vst [vmem:[#allocation3 + $0x48] sm:$0xff] %v5142
        %5215 = vst [vmem:[#allocation3 + $0x50] sm:$0xff] %v5143
        %5216 = vst [vmem:[#allocation3 + $0x58] sm:$0xff] %v5144
        %5217 = vst [vmem:[#allocation3 + $0x60] sm:$0xff] %v5145
        %5218 = vst [vmem:[#allocation3 + $0x68] sm:$0xff] %v5146
        %5219 = vst [vmem:[#allocation3 + $0x70] sm:$0xff] %v5147
        %5220 = vst [vmem:[#allocation3 + $0x78] sm:$0xff] %v5148
        %5221 = vst [vmem:[#allocation3 + $0x80] sm:$0xff] %v5149
        %5222 = vst [vmem:[#allocation3 + $0x88] sm:$0xff] %v5150
        %5223 = vst [vmem:[#allocation3 + $0x90] sm:$0xff] %v5151
        %5224 = vst [vmem:[#allocation3 + $0x98] sm:$0xff] %v5152
        %5225 = vst [vmem:[#allocation3 + $0xa0] sm:$0xff] %v5153
        %5226 = vst [vmem:[#allocation3 + $0xa8] sm:$0xff] %v5154
        %5227 = vst [vmem:[#allocation3 + $0xb0] sm:$0xff] %v5155
        %5228 = vst [vmem:[#allocation3 + $0xb8] sm:$0xff] %v5156
        %5229 = vst [vmem:[#allocation3 + $0xc0] sm:$0xff] %v5157
        %5230 = vst [vmem:[#allocation3 + $0xc8] sm:$0xff] %v5158
        %5231 = vst [vmem:[#allocation3 + $0xd0] sm:$0xff] %v5159
        %5232 = vst [vmem:[#allocation3 + $0xd8] sm:$0xff] %v5160
        %5233 = vst [vmem:[#allocation3 + $0xe0] sm:$0xff] %v5161
        %5234 = vst [vmem:[#allocation3 + $0xe8] sm:$0xff] %v5162
        %5235 = vst [vmem:[#allocation3 + $0xf0] sm:$0xff] %v5163
        %5236 = vst [vmem:[#allocation3 + $0xf8] sm:$0xff] %v5164
        %5237 = vst [vmem:[#allocation3 + $0x100] sm:$0xff] %v5165
        %5238 = vst [vmem:[#allocation3 + $0x108] sm:$0xff] %v5166
        %5239 = vst [vmem:[#allocation3 + $0x110] sm:$0xff] %v5167
        %5240 = vst [vmem:[#allocation3 + $0x118] sm:$0xff] %v5168
        %5241 = vst [vmem:[#allocation3 + $0x120] sm:$0xff] %v5169
        %5242 = vst [vmem:[#allocation3 + $0x128] sm:$0xff] %v5170
        %5243 = vst [vmem:[#allocation3 + $0x130] sm:$0xff] %v5171
        %5244 = vst [vmem:[#allocation3 + $0x138] sm:$0xff] %v5172
        %5245 = vst [vmem:[#allocation3 + $0x140] sm:$0xff] %v5173
        %5246 = vst [vmem:[#allocation3 + $0x148] sm:$0xff] %v5174
        %5247 = vst [vmem:[#allocation3 + $0x150] sm:$0xff] %v5175
        %5248 = vst [vmem:[#allocation3 + $0x158] sm:$0xff] %v5176
        %5249 = vst [vmem:[#allocation3 + $0x160] sm:$0xff] %v5177
        %5250 = vst [vmem:[#allocation3 + $0x168] sm:$0xff] %v5178
        %5251 = vst [vmem:[#allocation3 + $0x170] sm:$0xff] %v5179
        %5252 = vst [vmem:[#allocation3 + $0x178] sm:$0xff] %v5180
        %5253 = vst [vmem:[#allocation3 + $0x180] sm:$0xff] %v5181
        %5254 = vst [vmem:[#allocation3 + $0x188] sm:$0xff] %v5182
        %5255 = vst [vmem:[#allocation3 + $0x190] sm:$0xff] %v5183
        %5256 = vst [vmem:[#allocation3 + $0x198] sm:$0xff] %v5184
        %5257 = vst [vmem:[#allocation3 + $0x1a0] sm:$0xff] %v5185
        %5258 = vst [vmem:[#allocation3 + $0x1a8] sm:$0xff] %v5186
        %5259 = vst [vmem:[#allocation3 + $0x1b0] sm:$0xff] %v5187
        %5260 = vst [vmem:[#allocation3 + $0x1b8] sm:$0xff] %v5188
        %5261 = vst [vmem:[#allocation3 + $0x1c0] sm:$0xff] %v5189
        %5262 = vst [vmem:[#allocation3 + $0x1c8] sm:$0xff] %v5190
        %5263 = vst [vmem:[#allocation3 + $0x1d0] sm:$0xff] %v5191
        %5264 = vst [vmem:[#allocation3 + $0x1d8] sm:$0xff] %v5192
        %5265 = vst [vmem:[#allocation3 + $0x1e0] sm:$0xff] %v5193
        %5266 = vst [vmem:[#allocation3 + $0x1e8] sm:$0xff] %v5194
        %5267 = vst [vmem:[#allocation3 + $0x1f0] sm:$0xff] %v5195
        %5268 = vst [vmem:[#allocation3 + $0x1f8] sm:$0xff] %v5196
        %5269 = vst [vmem:[#allocation3 + $0x200] sm:$0xff] %v5197
        %5270 = vst [vmem:[#allocation3 + $0x208] sm:$0xff] %v5198
        %5271 = vst [vmem:[#allocation3 + $0x210] sm:$0xff] %v5199
        %5272 = vst [vmem:[#allocation3 + $0x218] sm:$0xff] %v5200
        %5273 = vst [vmem:[#allocation3 + $0x220] sm:$0xff] %v5201
        %5274 = vst [vmem:[#allocation3 + $0x228] sm:$0xff] %v5202
        %5275 = vst [vmem:[#allocation3 + $0x230] sm:$0xff] %v5203
        %5276 = vst [vmem:[#allocation3 + $0x238] sm:$0xff] %v5204
        %v5277 = vld [vmem:[#allocation3 + $0x1b0] sm:$0xff]
        %v5278 = vld [vmem:[#allocation3 + $0x1b8] sm:$0xff]
        %v5279 = vld [vmem:[#allocation3 + $0x1c0] sm:$0xff]
        %v5280 = vld [vmem:[#allocation3 + $0x1c8] sm:$0xff]
        %v5281 = vld [vmem:[#allocation3 + $0x1d0] sm:$0xff]
        %v5282 = vld [vmem:[#allocation3 + $0x1d8] sm:$0xff]
        %v5283 = vld [vmem:[#allocation3 + $0x1e0] sm:$0xff]
        %v5284 = vld [vmem:[#allocation3 + $0x1e8] sm:$0xff]
        %v5285 = vld [vmem:[#allocation3 + $0x1f0] sm:$0xff]
        %v5286 = vld [vmem:[#allocation3 + $0x1f8] sm:$0xff]
        %v5287 = vld [vmem:[#allocation3 + $0x200] sm:$0xff]
        %v5288 = vld [vmem:[#allocation3 + $0x208] sm:$0xff]
        %v5289 = vld [vmem:[#allocation3 + $0x210] sm:$0xff]
        %v5290 = vld [vmem:[#allocation3 + $0x218] sm:$0xff]
        %v5291 = vld [vmem:[#allocation3 + $0x220] sm:$0xff]
        %v5292 = vld [vmem:[#allocation3 + $0x228] sm:$0xff]
        %v5293 = vld [vmem:[#allocation3 + $0x230] sm:$0xff]
        %v5294 = vld [vmem:[#allocation3 + $0x238] sm:$0xff]
        %5295 = vrot.lane.b32.xlu0 %v5277, 49
        %v5296 = vpop.permute.xlu0 %5295
        %5297 = vrot.lane.b32.xlu0 %v5278, 49
        %v5298 = vpop.permute.xlu0 %5297
        %5299 = vrot.lane.b32.xlu0 %v5279, 49
        %v5300 = vpop.permute.xlu0 %5299
        %5301 = vrot.lane.b32.xlu0 %v5280, 49
        %v5302 = vpop.permute.xlu0 %5301
        %5303 = vrot.lane.b32.xlu0 %v5281, 49
        %v5304 = vpop.permute.xlu0 %5303
        %5305 = vrot.lane.b32.xlu0 %v5282, 49
        %v5306 = vpop.permute.xlu0 %5305
        %5307 = vrot.lane.b32.xlu0 %v5283, 49
        %v5308 = vpop.permute.xlu0 %5307
        %5309 = vrot.lane.b32.xlu0 %v5284, 49
        %v5310 = vpop.permute.xlu0 %5309
        %5311 = vrot.lane.b32.xlu0 %v5285, 49
        %v5312 = vpop.permute.xlu0 %5311
        %5313 = vrot.lane.b32.xlu0 %v5286, 49
        %v5314 = vpop.permute.xlu0 %5313
        %5315 = vrot.lane.b32.xlu0 %v5287, 49
        %v5316 = vpop.permute.xlu0 %5315
        %5317 = vrot.lane.b32.xlu0 %v5288, 49
        %v5318 = vpop.permute.xlu0 %5317
        %5319 = vrot.lane.b32.xlu0 %v5289, 49
        %v5320 = vpop.permute.xlu0 %5319
        %5321 = vrot.lane.b32.xlu0 %v5290, 49
        %v5322 = vpop.permute.xlu0 %5321
        %5323 = vrot.lane.b32.xlu0 %v5291, 49
        %v5324 = vpop.permute.xlu0 %5323
        %5325 = vrot.lane.b32.xlu0 %v5292, 49
        %v5326 = vpop.permute.xlu0 %5325
        %5327 = vrot.lane.b32.xlu0 %v5293, 49
        %v5328 = vpop.permute.xlu0 %5327
        %5329 = vrot.lane.b32.xlu0 %v5294, 49
        %v5330 = vpop.permute.xlu0 %5329
        %v5331 = vsel %vm298, %v5328, %v5330
        %v5332 = vsel %vm298, %v5326, %v5328
        %v5333 = vsel %vm298, %v5324, %v5326
        %v5334 = vsel %vm298, %v5322, %v5324
        %v5335 = vsel %vm298, %v5320, %v5322
        %v5336 = vsel %vm298, %v5318, %v5320
        %v5337 = vsel %vm298, %v5316, %v5318
        %v5338 = vsel %vm298, %v5314, %v5316
        %v5339 = vsel %vm298, %v5312, %v5314
        %v5340 = vsel %vm298, %v5310, %v5312
        %v5341 = vsel %vm298, %v5308, %v5310
        %v5342 = vsel %vm298, %v5306, %v5308
        %v5343 = vsel %vm298, %v5304, %v5306
        %v5344 = vsel %vm298, %v5302, %v5304
        %v5345 = vsel %vm298, %v5300, %v5302
        %v5346 = vsel %vm298, %v5298, %v5300
        %v5347 = vsel %vm298, %v5296, %v5298
        %v5348 = vsel %vm298, %v5330, %v5296
        %v5349 = vld [vmem:[%s1] sm:$0xff]
        %v5350 = vld [vmem:[%s1 + $0x8] sm:$0xff]
        %v5351 = vld [vmem:[%s1 + $0x10] sm:$0x3]
        %v5355 = vlaneseq
        %v5356 = vshrl.u32 %v5355, 7
        %v5357 = vsub.s32 0, %v5356
        %v5358 = vrot.slane %v5349, %v5357
        %v5359 = vlaneseq
        %v5360 = vshrl.u32 %v5359, 7
        %v5361 = vsub.s32 1, %v5360
        %v5362 = vrot.slane %v5349, %v5361
        %v5363 = vlaneseq
        %v5364 = vshrl.u32 %v5363, 7
        %v5365 = vsub.s32 2, %v5364
        %v5366 = vrot.slane %v5349, %v5365
        %v5367 = vlaneseq
        %v5368 = vshrl.u32 %v5367, 7
        %v5369 = vsub.s32 3, %v5368
        %v5370 = vrot.slane %v5349, %v5369
        %v5371 = vlaneseq
        %v5372 = vshrl.u32 %v5371, 7
        %v5373 = vsub.s32 4, %v5372
        %v5374 = vrot.slane %v5349, %v5373
        %v5375 = vlaneseq
        %v5376 = vshrl.u32 %v5375, 7
        %v5377 = vsub.s32 5, %v5376
        %v5378 = vrot.slane %v5349, %v5377
        %v5379 = vlaneseq
        %v5380 = vshrl.u32 %v5379, 7
        %v5381 = vsub.s32 6, %v5380
        %v5382 = vrot.slane %v5349, %v5381
        %v5383 = vlaneseq
        %v5384 = vshrl.u32 %v5383, 7
        %v5385 = vsub.s32 7, %v5384
        %v5386 = vrot.slane %v5349, %v5385
        %v5387 = vlaneseq
        %v5388 = vshrl.u32 %v5387, 7
        %v5389 = vsub.s32 0, %v5388
        %v5390 = vrot.slane %v5350, %v5389
        %v5391 = vlaneseq
        %v5392 = vshrl.u32 %v5391, 7
        %v5393 = vsub.s32 1, %v5392
        %v5394 = vrot.slane %v5350, %v5393
        %v5395 = vlaneseq
        %v5396 = vshrl.u32 %v5395, 7
        %v5397 = vsub.s32 2, %v5396
        %v5398 = vrot.slane %v5350, %v5397
        %v5399 = vlaneseq
        %v5400 = vshrl.u32 %v5399, 7
        %v5401 = vsub.s32 3, %v5400
        %v5402 = vrot.slane %v5350, %v5401
        %v5403 = vlaneseq
        %v5404 = vshrl.u32 %v5403, 7
        %v5405 = vsub.s32 4, %v5404
        %v5406 = vrot.slane %v5350, %v5405
        %v5407 = vlaneseq
        %v5408 = vshrl.u32 %v5407, 7
        %v5409 = vsub.s32 5, %v5408
        %v5410 = vrot.slane %v5350, %v5409
        %v5411 = vlaneseq
        %v5412 = vshrl.u32 %v5411, 7
        %v5413 = vsub.s32 6, %v5412
        %v5414 = vrot.slane %v5350, %v5413
        %v5415 = vlaneseq
        %v5416 = vshrl.u32 %v5415, 7
        %v5417 = vsub.s32 7, %v5416
        %v5418 = vrot.slane %v5350, %v5417
        %v5419 = vlaneseq
        %v5420 = vshrl.u32 %v5419, 7
        %v5421 = vsub.s32 0, %v5420
        %v5422 = vrot.slane %v5351, %v5421
        %v5423 = vlaneseq
        %v5424 = vshrl.u32 %v5423, 7
        %v5425 = vsub.s32 1, %v5424
        %v5426 = vrot.slane %v5351, %v5425
        %v5445 = vmul.f32 %v5348, %v5358
        %v5446 = vmul.f32 %v5347, %v5362
        %v5447 = vmul.f32 %v5346, %v5366
        %v5448 = vmul.f32 %v5345, %v5370
        %v5449 = vmul.f32 %v5344, %v5374
        %v5450 = vmul.f32 %v5343, %v5378
        %v5451 = vmul.f32 %v5342, %v5382
        %v5452 = vmul.f32 %v5341, %v5386
        %v5453 = vmul.f32 %v5340, %v5390
        %v5454 = vmul.f32 %v5339, %v5394
        %v5455 = vmul.f32 %v5338, %v5398
        %v5456 = vmul.f32 %v5337, %v5402
        %v5457 = vmul.f32 %v5336, %v5406
        %v5458 = vmul.f32 %v5335, %v5410
        %v5459 = vmul.f32 %v5334, %v5414
        %v5460 = vmul.f32 %v5333, %v5418
        %v5461 = vmul.f32 %v5332, %v5422
        %v5462 = vmul.f32 %v5331, %v5426
        %v5463 = vpack.c.bf16 %v5445, %v5445
        %v5464 = vpack.c.bf16 %v5446, %v5446
        %v5465 = vpack.c.bf16 %v5447, %v5447
        %v5466 = vpack.c.bf16 %v5448, %v5448
        %v5467 = vpack.c.bf16 %v5449, %v5449
        %v5468 = vpack.c.bf16 %v5450, %v5450
        %v5469 = vpack.c.bf16 %v5451, %v5451
        %v5470 = vpack.c.bf16 %v5452, %v5452
        %v5471 = vpack.c.bf16 %v5453, %v5453
        %v5472 = vpack.c.bf16 %v5454, %v5454
        %v5473 = vpack.c.bf16 %v5455, %v5455
        %v5474 = vpack.c.bf16 %v5456, %v5456
        %v5475 = vpack.c.bf16 %v5457, %v5457
        %v5476 = vpack.c.bf16 %v5458, %v5458
        %v5477 = vpack.c.bf16 %v5459, %v5459
        %v5478 = vpack.c.bf16 %v5460, %v5460
        %v5479 = vpack.c.bf16 %v5461, %v5461
        %v5480 = vpack.c.bf16 %v5462, %v5462
        %v5499 = vunpack.c.l.b16 %v5463
        %v5500 = vunpack.c.l.b16 %v5464
        %v5501 = vunpack.c.l.b16 %v5465
        %v5502 = vunpack.c.l.b16 %v5466
        %v5503 = vunpack.c.l.b16 %v5467
        %v5504 = vunpack.c.l.b16 %v5468
        %v5505 = vunpack.c.l.b16 %v5469
        %v5506 = vunpack.c.l.b16 %v5470
        %v5507 = vunpack.c.l.b16 %v5471
        %v5508 = vunpack.c.l.b16 %v5472
        %v5509 = vunpack.c.l.b16 %v5473
        %v5510 = vunpack.c.l.b16 %v5474
        %v5511 = vunpack.c.l.b16 %v5475
        %v5512 = vunpack.c.l.b16 %v5476
        %v5513 = vunpack.c.l.b16 %v5477
        %v5514 = vunpack.c.l.b16 %v5478
        %v5515 = vunpack.c.l.b16 %v5479
        %v5516 = vunpack.c.l.b16 %v5480
        %v5517 = vpack.c.b16 %v5500, %v5499
        %v5518 = vpack.c.b16 %v5502, %v5501
        %v5519 = vpack.c.b16 %v5504, %v5503
        %v5520 = vpack.c.b16 %v5506, %v5505
        %v5521 = vpack.c.b16 %v5508, %v5507
        %v5522 = vpack.c.b16 %v5510, %v5509
        %v5523 = vpack.c.b16 %v5512, %v5511
        %v5524 = vpack.c.b16 %v5514, %v5513
        %v5525 = vpack.c.b16 %v5516, %v5515
        %5535 = vst [vmem:[#allocation2] sm:$0xff] %v5517
        %5536 = vst [vmem:[#allocation2 + $0x8] sm:$0xff] %v5518
        %5537 = vst [vmem:[#allocation2 + $0x10] sm:$0xff] %v5519
        %5538 = vst [vmem:[#allocation2 + $0x18] sm:$0xff] %v5520
        %5539 = vst [vmem:[#allocation2 + $0x20] sm:$0xff] %v5521
        %5540 = vst [vmem:[#allocation2 + $0x28] sm:$0xff] %v5522
        %5541 = vst [vmem:[#allocation2 + $0x30] sm:$0xff] %v5523
        %5542 = vst [vmem:[#allocation2 + $0x38] sm:$0xff] %v5524
        %5543 = vst [vmem:[#allocation2 + $0x40] sm:$0xff] %v5525
        %v5544 = vld [vmem:[#allocation3 + $0x120] sm:$0xff]
        %v5545 = vld [vmem:[#allocation3 + $0x128] sm:$0xff]
        %v5546 = vld [vmem:[#allocation3 + $0x130] sm:$0xff]
        %v5547 = vld [vmem:[#allocation3 + $0x138] sm:$0xff]
        %v5548 = vld [vmem:[#allocation3 + $0x140] sm:$0xff]
        %v5549 = vld [vmem:[#allocation3 + $0x148] sm:$0xff]
        %v5550 = vld [vmem:[#allocation3 + $0x150] sm:$0xff]
        %v5551 = vld [vmem:[#allocation3 + $0x158] sm:$0xff]
        %v5552 = vld [vmem:[#allocation3 + $0x160] sm:$0xff]
        %v5553 = vld [vmem:[#allocation3 + $0x168] sm:$0xff]
        %v5554 = vld [vmem:[#allocation3 + $0x170] sm:$0xff]
        %v5555 = vld [vmem:[#allocation3 + $0x178] sm:$0xff]
        %v5556 = vld [vmem:[#allocation3 + $0x180] sm:$0xff]
        %v5557 = vld [vmem:[#allocation3 + $0x188] sm:$0xff]
        %v5558 = vld [vmem:[#allocation3 + $0x190] sm:$0xff]
        %v5559 = vld [vmem:[#allocation3 + $0x198] sm:$0xff]
        %v5560 = vld [vmem:[#allocation3 + $0x1a0] sm:$0xff]
        %v5561 = vld [vmem:[#allocation3 + $0x1a8] sm:$0xff]
        %5562 = vrot.lane.b32.xlu0 %v5544, 48
        %v5563 = vpop.permute.xlu0 %5562
        %5564 = vrot.lane.b32.xlu0 %v5545, 48
        %v5565 = vpop.permute.xlu0 %5564
        %5566 = vrot.lane.b32.xlu0 %v5546, 48
        %v5567 = vpop.permute.xlu0 %5566
        %5568 = vrot.lane.b32.xlu0 %v5547, 48
        %v5569 = vpop.permute.xlu0 %5568
        %5570 = vrot.lane.b32.xlu0 %v5548, 48
        %v5571 = vpop.permute.xlu0 %5570
        %5572 = vrot.lane.b32.xlu0 %v5549, 48
        %v5573 = vpop.permute.xlu0 %5572
        %5574 = vrot.lane.b32.xlu0 %v5550, 48
        %v5575 = vpop.permute.xlu0 %5574
        %5576 = vrot.lane.b32.xlu0 %v5551, 48
        %v5577 = vpop.permute.xlu0 %5576
        %5578 = vrot.lane.b32.xlu0 %v5552, 48
        %v5579 = vpop.permute.xlu0 %5578
        %5580 = vrot.lane.b32.xlu0 %v5553, 48
        %v5581 = vpop.permute.xlu0 %5580
        %5582 = vrot.lane.b32.xlu0 %v5554, 48
        %v5583 = vpop.permute.xlu0 %5582
        %5584 = vrot.lane.b32.xlu0 %v5555, 48
        %v5585 = vpop.permute.xlu0 %5584
        %5586 = vrot.lane.b32.xlu0 %v5556, 48
        %v5587 = vpop.permute.xlu0 %5586
        %5588 = vrot.lane.b32.xlu0 %v5557, 48
        %v5589 = vpop.permute.xlu0 %5588
        %5590 = vrot.lane.b32.xlu0 %v5558, 48
        %v5591 = vpop.permute.xlu0 %5590
        %5592 = vrot.lane.b32.xlu0 %v5559, 48
        %v5593 = vpop.permute.xlu0 %5592
        %5594 = vrot.lane.b32.xlu0 %v5560, 48
        %v5595 = vpop.permute.xlu0 %5594
        %5596 = vrot.lane.b32.xlu0 %v5561, 48
        %v5597 = vpop.permute.xlu0 %5596
        %v5598 = vsel %vm585, %v5595, %v5597
        %v5599 = vsel %vm585, %v5593, %v5595
        %v5600 = vsel %vm585, %v5591, %v5593
        %v5601 = vsel %vm585, %v5589, %v5591
        %v5602 = vsel %vm585, %v5587, %v5589
        %v5603 = vsel %vm585, %v5585, %v5587
        %v5604 = vsel %vm585, %v5583, %v5585
        %v5605 = vsel %vm585, %v5581, %v5583
        %v5606 = vsel %vm585, %v5579, %v5581
        %v5607 = vsel %vm585, %v5577, %v5579
        %v5608 = vsel %vm585, %v5575, %v5577
        %v5609 = vsel %vm585, %v5573, %v5575
        %v5610 = vsel %vm585, %v5571, %v5573
        %v5611 = vsel %vm585, %v5569, %v5571
        %v5612 = vsel %vm585, %v5567, %v5569
        %v5613 = vsel %vm585, %v5565, %v5567
        %v5614 = vsel %vm585, %v5563, %v5565
        %v5615 = vsel %vm585, %v5597, %v5563
        %v5616 = vld [vmem:[%s604] sm:$0xff]
        %v5617 = vld [vmem:[%s604 + $0x8] sm:$0xff]
        %v5618 = vld [vmem:[%s604 + $0x10] sm:$0x3]
        %v5622 = vlaneseq
        %v5623 = vshrl.u32 %v5622, 7
        %v5624 = vsub.s32 0, %v5623
        %v5625 = vrot.slane %v5616, %v5624
        %v5626 = vlaneseq
        %v5627 = vshrl.u32 %v5626, 7
        %v5628 = vsub.s32 1, %v5627
        %v5629 = vrot.slane %v5616, %v5628
        %v5630 = vlaneseq
        %v5631 = vshrl.u32 %v5630, 7
        %v5632 = vsub.s32 2, %v5631
        %v5633 = vrot.slane %v5616, %v5632
        %v5634 = vlaneseq
        %v5635 = vshrl.u32 %v5634, 7
        %v5636 = vsub.s32 3, %v5635
        %v5637 = vrot.slane %v5616, %v5636
        %v5638 = vlaneseq
        %v5639 = vshrl.u32 %v5638, 7
        %v5640 = vsub.s32 4, %v5639
        %v5641 = vrot.slane %v5616, %v5640
        %v5642 = vlaneseq
        %v5643 = vshrl.u32 %v5642, 7
        %v5644 = vsub.s32 5, %v5643
        %v5645 = vrot.slane %v5616, %v5644
        %v5646 = vlaneseq
        %v5647 = vshrl.u32 %v5646, 7
        %v5648 = vsub.s32 6, %v5647
        %v5649 = vrot.slane %v5616, %v5648
        %v5650 = vlaneseq
        %v5651 = vshrl.u32 %v5650, 7
        %v5652 = vsub.s32 7, %v5651
        %v5653 = vrot.slane %v5616, %v5652
        %v5654 = vlaneseq
        %v5655 = vshrl.u32 %v5654, 7
        %v5656 = vsub.s32 0, %v5655
        %v5657 = vrot.slane %v5617, %v5656
        %v5658 = vlaneseq
        %v5659 = vshrl.u32 %v5658, 7
        %v5660 = vsub.s32 1, %v5659
        %v5661 = vrot.slane %v5617, %v5660
        %v5662 = vlaneseq
        %v5663 = vshrl.u32 %v5662, 7
        %v5664 = vsub.s32 2, %v5663
        %v5665 = vrot.slane %v5617, %v5664
        %v5666 = vlaneseq
        %v5667 = vshrl.u32 %v5666, 7
        %v5668 = vsub.s32 3, %v5667
        %v5669 = vrot.slane %v5617, %v5668
        %v5670 = vlaneseq
        %v5671 = vshrl.u32 %v5670, 7
        %v5672 = vsub.s32 4, %v5671
        %v5673 = vrot.slane %v5617, %v5672
        %v5674 = vlaneseq
        %v5675 = vshrl.u32 %v5674, 7
        %v5676 = vsub.s32 5, %v5675
        %v5677 = vrot.slane %v5617, %v5676
        %v5678 = vlaneseq
        %v5679 = vshrl.u32 %v5678, 7
        %v5680 = vsub.s32 6, %v5679
        %v5681 = vrot.slane %v5617, %v5680
        %v5682 = vlaneseq
        %v5683 = vshrl.u32 %v5682, 7
        %v5684 = vsub.s32 7, %v5683
        %v5685 = vrot.slane %v5617, %v5684
        %v5686 = vlaneseq
        %v5687 = vshrl.u32 %v5686, 7
        %v5688 = vsub.s32 0, %v5687
        %v5689 = vrot.slane %v5618, %v5688
        %v5690 = vlaneseq
        %v5691 = vshrl.u32 %v5690, 7
        %v5692 = vsub.s32 1, %v5691
        %v5693 = vrot.slane %v5618, %v5692
        %v5712 = vmul.f32 %v5615, %v5625
        %v5713 = vmul.f32 %v5614, %v5629
        %v5714 = vmul.f32 %v5613, %v5633
        %v5715 = vmul.f32 %v5612, %v5637
        %v5716 = vmul.f32 %v5611, %v5641
        %v5717 = vmul.f32 %v5610, %v5645
        %v5718 = vmul.f32 %v5609, %v5649
        %v5719 = vmul.f32 %v5608, %v5653
        %v5720 = vmul.f32 %v5607, %v5657
        %v5721 = vmul.f32 %v5606, %v5661
        %v5722 = vmul.f32 %v5605, %v5665
        %v5723 = vmul.f32 %v5604, %v5669
        %v5724 = vmul.f32 %v5603, %v5673
        %v5725 = vmul.f32 %v5602, %v5677
        %v5726 = vmul.f32 %v5601, %v5681
        %v5727 = vmul.f32 %v5600, %v5685
        %v5728 = vmul.f32 %v5599, %v5689
        %v5729 = vmul.f32 %v5598, %v5693
        %v5730 = vpack.c.bf16 %v5712, %v5712
        %v5731 = vpack.c.bf16 %v5713, %v5713
        %v5732 = vpack.c.bf16 %v5714, %v5714
        %v5733 = vpack.c.bf16 %v5715, %v5715
        %v5734 = vpack.c.bf16 %v5716, %v5716
        %v5735 = vpack.c.bf16 %v5717, %v5717
        %v5736 = vpack.c.bf16 %v5718, %v5718
        %v5737 = vpack.c.bf16 %v5719, %v5719
        %v5738 = vpack.c.bf16 %v5720, %v5720
        %v5739 = vpack.c.bf16 %v5721, %v5721
        %v5740 = vpack.c.bf16 %v5722, %v5722
        %v5741 = vpack.c.bf16 %v5723, %v5723
        %v5742 = vpack.c.bf16 %v5724, %v5724
        %v5743 = vpack.c.bf16 %v5725, %v5725
        %v5744 = vpack.c.bf16 %v5726, %v5726
        %v5745 = vpack.c.bf16 %v5727, %v5727
        %v5746 = vpack.c.bf16 %v5728, %v5728
        %v5747 = vpack.c.bf16 %v5729, %v5729
        %v5766 = vunpack.c.l.b16 %v5730
        %v5767 = vunpack.c.l.b16 %v5731
        %v5768 = vunpack.c.l.b16 %v5732
        %v5769 = vunpack.c.l.b16 %v5733
        %v5770 = vunpack.c.l.b16 %v5734
        %v5771 = vunpack.c.l.b16 %v5735
        %v5772 = vunpack.c.l.b16 %v5736
        %v5773 = vunpack.c.l.b16 %v5737
        %v5774 = vunpack.c.l.b16 %v5738
        %v5775 = vunpack.c.l.b16 %v5739
        %v5776 = vunpack.c.l.b16 %v5740
        %v5777 = vunpack.c.l.b16 %v5741
        %v5778 = vunpack.c.l.b16 %v5742
        %v5779 = vunpack.c.l.b16 %v5743
        %v5780 = vunpack.c.l.b16 %v5744
        %v5781 = vunpack.c.l.b16 %v5745
        %v5782 = vunpack.c.l.b16 %v5746
        %v5783 = vunpack.c.l.b16 %v5747
        %v5784 = vpack.c.b16 %v5767, %v5766
        %v5785 = vpack.c.b16 %v5769, %v5768
        %v5786 = vpack.c.b16 %v5771, %v5770
        %v5787 = vpack.c.b16 %v5773, %v5772
        %v5788 = vpack.c.b16 %v5775, %v5774
        %v5789 = vpack.c.b16 %v5777, %v5776
        %v5790 = vpack.c.b16 %v5779, %v5778
        %v5791 = vpack.c.b16 %v5781, %v5780
        %v5792 = vpack.c.b16 %v5783, %v5782
        %5802 = vst [vmem:[#allocation2 + $0x48] sm:$0xff] %v5784
        %5803 = vst [vmem:[#allocation2 + $0x50] sm:$0xff] %v5785
        %5804 = vst [vmem:[#allocation2 + $0x58] sm:$0xff] %v5786
        %5805 = vst [vmem:[#allocation2 + $0x60] sm:$0xff] %v5787
        %5806 = vst [vmem:[#allocation2 + $0x68] sm:$0xff] %v5788
        %5807 = vst [vmem:[#allocation2 + $0x70] sm:$0xff] %v5789
        %5808 = vst [vmem:[#allocation2 + $0x78] sm:$0xff] %v5790
        %5809 = vst [vmem:[#allocation2 + $0x80] sm:$0xff] %v5791
        %5810 = vst [vmem:[#allocation2 + $0x88] sm:$0xff] %v5792
        %v5811 = vld [vmem:[#allocation3 + $0x1b0] sm:$0xff]
        %v5812 = vld [vmem:[#allocation3 + $0x1b8] sm:$0xff]
        %v5813 = vld [vmem:[#allocation3 + $0x1c0] sm:$0xff]
        %v5814 = vld [vmem:[#allocation3 + $0x1c8] sm:$0xff]
        %v5815 = vld [vmem:[#allocation3 + $0x1d0] sm:$0xff]
        %v5816 = vld [vmem:[#allocation3 + $0x1d8] sm:$0xff]
        %v5817 = vld [vmem:[#allocation3 + $0x1e0] sm:$0xff]
        %v5818 = vld [vmem:[#allocation3 + $0x1e8] sm:$0xff]
        %v5819 = vld [vmem:[#allocation3 + $0x1f0] sm:$0xff]
        %v5820 = vld [vmem:[#allocation3 + $0x1f8] sm:$0xff]
        %v5821 = vld [vmem:[#allocation3 + $0x200] sm:$0xff]
        %v5822 = vld [vmem:[#allocation3 + $0x208] sm:$0xff]
        %v5823 = vld [vmem:[#allocation3 + $0x210] sm:$0xff]
        %v5824 = vld [vmem:[#allocation3 + $0x218] sm:$0xff]
        %v5825 = vld [vmem:[#allocation3 + $0x220] sm:$0xff]
        %v5826 = vld [vmem:[#allocation3 + $0x228] sm:$0xff]
        %v5827 = vld [vmem:[#allocation3 + $0x230] sm:$0xff]
        %v5828 = vld [vmem:[#allocation3 + $0x238] sm:$0xff]
        %5829 = vrot.lane.b32.xlu0 %v5811, 48
        %v5830 = vpop.permute.xlu0 %5829
        %5831 = vrot.lane.b32.xlu0 %v5812, 48
        %v5832 = vpop.permute.xlu0 %5831
        %5833 = vrot.lane.b32.xlu0 %v5813, 48
        %v5834 = vpop.permute.xlu0 %5833
        %5835 = vrot.lane.b32.xlu0 %v5814, 48
        %v5836 = vpop.permute.xlu0 %5835
        %5837 = vrot.lane.b32.xlu0 %v5815, 48
        %v5838 = vpop.permute.xlu0 %5837
        %5839 = vrot.lane.b32.xlu0 %v5816, 48
        %v5840 = vpop.permute.xlu0 %5839
        %5841 = vrot.lane.b32.xlu0 %v5817, 48
        %v5842 = vpop.permute.xlu0 %5841
        %5843 = vrot.lane.b32.xlu0 %v5818, 48
        %v5844 = vpop.permute.xlu0 %5843
        %5845 = vrot.lane.b32.xlu0 %v5819, 48
        %v5846 = vpop.permute.xlu0 %5845
        %5847 = vrot.lane.b32.xlu0 %v5820, 48
        %v5848 = vpop.permute.xlu0 %5847
        %5849 = vrot.lane.b32.xlu0 %v5821, 48
        %v5850 = vpop.permute.xlu0 %5849
        %5851 = vrot.lane.b32.xlu0 %v5822, 48
        %v5852 = vpop.permute.xlu0 %5851
        %5853 = vrot.lane.b32.xlu0 %v5823, 48
        %v5854 = vpop.permute.xlu0 %5853
        %5855 = vrot.lane.b32.xlu0 %v5824, 48
        %v5856 = vpop.permute.xlu0 %5855
        %5857 = vrot.lane.b32.xlu0 %v5825, 48
        %v5858 = vpop.permute.xlu0 %5857
        %5859 = vrot.lane.b32.xlu0 %v5826, 48
        %v5860 = vpop.permute.xlu0 %5859
        %5861 = vrot.lane.b32.xlu0 %v5827, 48
        %v5862 = vpop.permute.xlu0 %5861
        %5863 = vrot.lane.b32.xlu0 %v5828, 48
        %v5864 = vpop.permute.xlu0 %5863
        %v5865 = vsel %vm585, %v5862, %v5864
        %v5866 = vsel %vm585, %v5860, %v5862
        %v5867 = vsel %vm585, %v5858, %v5860
        %v5868 = vsel %vm585, %v5856, %v5858
        %v5869 = vsel %vm585, %v5854, %v5856
        %v5870 = vsel %vm585, %v5852, %v5854
        %v5871 = vsel %vm585, %v5850, %v5852
        %v5872 = vsel %vm585, %v5848, %v5850
        %v5873 = vsel %vm585, %v5846, %v5848
        %v5874 = vsel %vm585, %v5844, %v5846
        %v5875 = vsel %vm585, %v5842, %v5844
        %v5876 = vsel %vm585, %v5840, %v5842
        %v5877 = vsel %vm585, %v5838, %v5840
        %v5878 = vsel %vm585, %v5836, %v5838
        %v5879 = vsel %vm585, %v5834, %v5836
        %v5880 = vsel %vm585, %v5832, %v5834
        %v5881 = vsel %vm585, %v5830, %v5832
        %v5882 = vsel %vm585, %v5864, %v5830
        %v5883 = vld [vmem:[%s604] sm:$0xff]
        %v5884 = vld [vmem:[%s604 + $0x8] sm:$0xff]
        %v5885 = vld [vmem:[%s604 + $0x10] sm:$0x3]
        %v5889 = vlaneseq
        %v5890 = vshrl.u32 %v5889, 7
        %v5891 = vsub.s32 0, %v5890
        %v5892 = vrot.slane %v5883, %v5891
        %v5893 = vlaneseq
        %v5894 = vshrl.u32 %v5893, 7
        %v5895 = vsub.s32 1, %v5894
        %v5896 = vrot.slane %v5883, %v5895
        %v5897 = vlaneseq
        %v5898 = vshrl.u32 %v5897, 7
        %v5899 = vsub.s32 2, %v5898
        %v5900 = vrot.slane %v5883, %v5899
        %v5901 = vlaneseq
        %v5902 = vshrl.u32 %v5901, 7
        %v5903 = vsub.s32 3, %v5902
        %v5904 = vrot.slane %v5883, %v5903
        %v5905 = vlaneseq
        %v5906 = vshrl.u32 %v5905, 7
        %v5907 = vsub.s32 4, %v5906
        %v5908 = vrot.slane %v5883, %v5907
        %v5909 = vlaneseq
        %v5910 = vshrl.u32 %v5909, 7
        %v5911 = vsub.s32 5, %v5910
        %v5912 = vrot.slane %v5883, %v5911
        %v5913 = vlaneseq
        %v5914 = vshrl.u32 %v5913, 7
        %v5915 = vsub.s32 6, %v5914
        %v5916 = vrot.slane %v5883, %v5915
        %v5917 = vlaneseq
        %v5918 = vshrl.u32 %v5917, 7
        %v5919 = vsub.s32 7, %v5918
        %v5920 = vrot.slane %v5883, %v5919
        %v5921 = vlaneseq
        %v5922 = vshrl.u32 %v5921, 7
        %v5923 = vsub.s32 0, %v5922
        %v5924 = vrot.slane %v5884, %v5923
        %v5925 = vlaneseq
        %v5926 = vshrl.u32 %v5925, 7
        %v5927 = vsub.s32 1, %v5926
        %v5928 = vrot.slane %v5884, %v5927
        %v5929 = vlaneseq
        %v5930 = vshrl.u32 %v5929, 7
        %v5931 = vsub.s32 2, %v5930
        %v5932 = vrot.slane %v5884, %v5931
        %v5933 = vlaneseq
        %v5934 = vshrl.u32 %v5933, 7
        %v5935 = vsub.s32 3, %v5934
        %v5936 = vrot.slane %v5884, %v5935
        %v5937 = vlaneseq
        %v5938 = vshrl.u32 %v5937, 7
        %v5939 = vsub.s32 4, %v5938
        %v5940 = vrot.slane %v5884, %v5939
        %v5941 = vlaneseq
        %v5942 = vshrl.u32 %v5941, 7
        %v5943 = vsub.s32 5, %v5942
        %v5944 = vrot.slane %v5884, %v5943
        %v5945 = vlaneseq
        %v5946 = vshrl.u32 %v5945, 7
        %v5947 = vsub.s32 6, %v5946
        %v5948 = vrot.slane %v5884, %v5947
        %v5949 = vlaneseq
        %v5950 = vshrl.u32 %v5949, 7
        %v5951 = vsub.s32 7, %v5950
        %v5952 = vrot.slane %v5884, %v5951
        %v5953 = vlaneseq
        %v5954 = vshrl.u32 %v5953, 7
        %v5955 = vsub.s32 0, %v5954
        %v5956 = vrot.slane %v5885, %v5955
        %v5957 = vlaneseq
        %v5958 = vshrl.u32 %v5957, 7
        %v5959 = vsub.s32 1, %v5958
        %v5960 = vrot.slane %v5885, %v5959
        %v5979 = vmul.f32 %v5882, %v5892
        %v5980 = vmul.f32 %v5881, %v5896
        %v5981 = vmul.f32 %v5880, %v5900
        %v5982 = vmul.f32 %v5879, %v5904
        %v5983 = vmul.f32 %v5878, %v5908
        %v5984 = vmul.f32 %v5877, %v5912
        %v5985 = vmul.f32 %v5876, %v5916
        %v5986 = vmul.f32 %v5875, %v5920
        %v5987 = vmul.f32 %v5874, %v5924
        %v5988 = vmul.f32 %v5873, %v5928
        %v5989 = vmul.f32 %v5872, %v5932
        %v5990 = vmul.f32 %v5871, %v5936
        %v5991 = vmul.f32 %v5870, %v5940
        %v5992 = vmul.f32 %v5869, %v5944
        %v5993 = vmul.f32 %v5868, %v5948
        %v5994 = vmul.f32 %v5867, %v5952
        %v5995 = vmul.f32 %v5866, %v5956
        %v5996 = vmul.f32 %v5865, %v5960
        %v5997 = vpack.c.bf16 %v5979, %v5979
        %v5998 = vpack.c.bf16 %v5980, %v5980
        %v5999 = vpack.c.bf16 %v5981, %v5981
        %v6000 = vpack.c.bf16 %v5982, %v5982
        %v6001 = vpack.c.bf16 %v5983, %v5983
        %v6002 = vpack.c.bf16 %v5984, %v5984
        %v6003 = vpack.c.bf16 %v5985, %v5985
        %v6004 = vpack.c.bf16 %v5986, %v5986
        %v6005 = vpack.c.bf16 %v5987, %v5987
        %v6006 = vpack.c.bf16 %v5988, %v5988
        %v6007 = vpack.c.bf16 %v5989, %v5989
        %v6008 = vpack.c.bf16 %v5990, %v5990
        %v6009 = vpack.c.bf16 %v5991, %v5991
        %v6010 = vpack.c.bf16 %v5992, %v5992
        %v6011 = vpack.c.bf16 %v5993, %v5993
        %v6012 = vpack.c.bf16 %v5994, %v5994
        %v6013 = vpack.c.bf16 %v5995, %v5995
        %v6014 = vpack.c.bf16 %v5996, %v5996
        %v6033 = vunpack.c.l.b16 %v5997
        %v6034 = vunpack.c.l.b16 %v5998
        %v6035 = vunpack.c.l.b16 %v5999
        %v6036 = vunpack.c.l.b16 %v6000
        %v6037 = vunpack.c.l.b16 %v6001
        %v6038 = vunpack.c.l.b16 %v6002
        %v6039 = vunpack.c.l.b16 %v6003
        %v6040 = vunpack.c.l.b16 %v6004
        %v6041 = vunpack.c.l.b16 %v6005
        %v6042 = vunpack.c.l.b16 %v6006
        %v6043 = vunpack.c.l.b16 %v6007
        %v6044 = vunpack.c.l.b16 %v6008
        %v6045 = vunpack.c.l.b16 %v6009
        %v6046 = vunpack.c.l.b16 %v6010
        %v6047 = vunpack.c.l.b16 %v6011
        %v6048 = vunpack.c.l.b16 %v6012
        %v6049 = vunpack.c.l.b16 %v6013
        %v6050 = vunpack.c.l.b16 %v6014
        %v6051 = vpack.c.b16 %v6034, %v6033
        %v6052 = vpack.c.b16 %v6036, %v6035
        %v6053 = vpack.c.b16 %v6038, %v6037
        %v6054 = vpack.c.b16 %v6040, %v6039
        %v6055 = vpack.c.b16 %v6042, %v6041
        %v6056 = vpack.c.b16 %v6044, %v6043
        %v6057 = vpack.c.b16 %v6046, %v6045
        %v6058 = vpack.c.b16 %v6048, %v6047
        %v6059 = vpack.c.b16 %v6050, %v6049
        %6069 = vst [vmem:[#allocation2 + $0x90] sm:$0xff] %v6051
        %6070 = vst [vmem:[#allocation2 + $0x98] sm:$0xff] %v6052
        %6071 = vst [vmem:[#allocation2 + $0xa0] sm:$0xff] %v6053
        %6072 = vst [vmem:[#allocation2 + $0xa8] sm:$0xff] %v6054
        %6073 = vst [vmem:[#allocation2 + $0xb0] sm:$0xff] %v6055
        %6074 = vst [vmem:[#allocation2 + $0xb8] sm:$0xff] %v6056
        %6075 = vst [vmem:[#allocation2 + $0xc0] sm:$0xff] %v6057
        %6076 = vst [vmem:[#allocation2 + $0xc8] sm:$0xff] %v6058
        %6077 = vst [vmem:[#allocation2 + $0xd0] sm:$0xff] %v6059
        %v6078 = vld [vmem:[#allocation3 + $0x90] sm:$0xff]
        %v6079 = vld [vmem:[#allocation3 + $0x98] sm:$0xff]
        %v6080 = vld [vmem:[#allocation3 + $0xa0] sm:$0xff]
        %v6081 = vld [vmem:[#allocation3 + $0xa8] sm:$0xff]
        %v6082 = vld [vmem:[#allocation3 + $0xb0] sm:$0xff]
        %v6083 = vld [vmem:[#allocation3 + $0xb8] sm:$0xff]
        %v6084 = vld [vmem:[#allocation3 + $0xc0] sm:$0xff]
        %v6085 = vld [vmem:[#allocation3 + $0xc8] sm:$0xff]
        %v6086 = vld [vmem:[#allocation3 + $0xd0] sm:$0xff]
        %v6087 = vld [vmem:[#allocation3 + $0xd8] sm:$0xff]
        %v6088 = vld [vmem:[#allocation3 + $0xe0] sm:$0xff]
        %v6089 = vld [vmem:[#allocation3 + $0xe8] sm:$0xff]
        %v6090 = vld [vmem:[#allocation3 + $0xf0] sm:$0xff]
        %v6091 = vld [vmem:[#allocation3 + $0xf8] sm:$0xff]
        %v6092 = vld [vmem:[#allocation3 + $0x100] sm:$0xff]
        %v6093 = vld [vmem:[#allocation3 + $0x108] sm:$0xff]
        %v6094 = vld [vmem:[#allocation3 + $0x110] sm:$0xff]
        %v6095 = vld [vmem:[#allocation3 + $0x118] sm:$0xff]
        %6096 = vrot.lane.b32.xlu0 %v6078, 1
        %v6097 = vpop.permute.xlu0 %6096
        %6098 = vrot.lane.b32.xlu0 %v6079, 1
        %v6099 = vpop.permute.xlu0 %6098
        %6100 = vrot.lane.b32.xlu0 %v6080, 1
        %v6101 = vpop.permute.xlu0 %6100
        %6102 = vrot.lane.b32.xlu0 %v6081, 1
        %v6103 = vpop.permute.xlu0 %6102
        %6104 = vrot.lane.b32.xlu0 %v6082, 1
        %v6105 = vpop.permute.xlu0 %6104
        %6106 = vrot.lane.b32.xlu0 %v6083, 1
        %v6107 = vpop.permute.xlu0 %6106
        %6108 = vrot.lane.b32.xlu0 %v6084, 1
        %v6109 = vpop.permute.xlu0 %6108
        %6110 = vrot.lane.b32.xlu0 %v6085, 1
        %v6111 = vpop.permute.xlu0 %6110
        %6112 = vrot.lane.b32.xlu0 %v6086, 1
        %v6113 = vpop.permute.xlu0 %6112
        %6114 = vrot.lane.b32.xlu0 %v6087, 1
        %v6115 = vpop.permute.xlu0 %6114
        %6116 = vrot.lane.b32.xlu0 %v6088, 1
        %v6117 = vpop.permute.xlu0 %6116
        %6118 = vrot.lane.b32.xlu0 %v6089, 1
        %v6119 = vpop.permute.xlu0 %6118
        %6120 = vrot.lane.b32.xlu0 %v6090, 1
        %v6121 = vpop.permute.xlu0 %6120
        %6122 = vrot.lane.b32.xlu0 %v6091, 1
        %v6123 = vpop.permute.xlu0 %6122
        %6124 = vrot.lane.b32.xlu0 %v6092, 1
        %v6125 = vpop.permute.xlu0 %6124
        %6126 = vrot.lane.b32.xlu0 %v6093, 1
        %v6127 = vpop.permute.xlu0 %6126
        %6128 = vrot.lane.b32.xlu0 %v6094, 1
        %v6129 = vpop.permute.xlu0 %6128
        %6130 = vrot.lane.b32.xlu0 %v6095, 1
        %v6131 = vpop.permute.xlu0 %6130
        %v6132 = vsel %vm1463, %v6129, %v6131
        %v6133 = vsel %vm1463, %v6127, %v6129
        %v6134 = vsel %vm1463, %v6125, %v6127
        %v6135 = vsel %vm1463, %v6123, %v6125
        %v6136 = vsel %vm1463, %v6121, %v6123
        %v6137 = vsel %vm1463, %v6119, %v6121
        %v6138 = vsel %vm1463, %v6117, %v6119
        %v6139 = vsel %vm1463, %v6115, %v6117
        %v6140 = vsel %vm1463, %v6113, %v6115
        %v6141 = vsel %vm1463, %v6111, %v6113
        %v6142 = vsel %vm1463, %v6109, %v6111
        %v6143 = vsel %vm1463, %v6107, %v6109
        %v6144 = vsel %vm1463, %v6105, %v6107
        %v6145 = vsel %vm1463, %v6103, %v6105
        %v6146 = vsel %vm1463, %v6101, %v6103
        %v6147 = vsel %vm1463, %v6099, %v6101
        %v6148 = vsel %vm1463, %v6097, %v6099
        %v6149 = vsel %vm1463, %v6131, %v6097
        %v6150 = vld [vmem:[%s1482] sm:$0xff]
        %v6151 = vld [vmem:[%s1482 + $0x8] sm:$0xff]
        %v6152 = vld [vmem:[%s1482 + $0x10] sm:$0x3]
        %v6156 = vlaneseq
        %v6157 = vshrl.u32 %v6156, 7
        %v6158 = vsub.s32 0, %v6157
        %v6159 = vrot.slane %v6150, %v6158
        %v6160 = vlaneseq
        %v6161 = vshrl.u32 %v6160, 7
        %v6162 = vsub.s32 1, %v6161
        %v6163 = vrot.slane %v6150, %v6162
        %v6164 = vlaneseq
        %v6165 = vshrl.u32 %v6164, 7
        %v6166 = vsub.s32 2, %v6165
        %v6167 = vrot.slane %v6150, %v6166
        %v6168 = vlaneseq
        %v6169 = vshrl.u32 %v6168, 7
        %v6170 = vsub.s32 3, %v6169
        %v6171 = vrot.slane %v6150, %v6170
        %v6172 = vlaneseq
        %v6173 = vshrl.u32 %v6172, 7
        %v6174 = vsub.s32 4, %v6173
        %v6175 = vrot.slane %v6150, %v6174
        %v6176 = vlaneseq
        %v6177 = vshrl.u32 %v6176, 7
        %v6178 = vsub.s32 5, %v6177
        %v6179 = vrot.slane %v6150, %v6178
        %v6180 = vlaneseq
        %v6181 = vshrl.u32 %v6180, 7
        %v6182 = vsub.s32 6, %v6181
        %v6183 = vrot.slane %v6150, %v6182
        %v6184 = vlaneseq
        %v6185 = vshrl.u32 %v6184, 7
        %v6186 = vsub.s32 7, %v6185
        %v6187 = vrot.slane %v6150, %v6186
        %v6188 = vlaneseq
        %v6189 = vshrl.u32 %v6188, 7
        %v6190 = vsub.s32 0, %v6189
        %v6191 = vrot.slane %v6151, %v6190
        %v6192 = vlaneseq
        %v6193 = vshrl.u32 %v6192, 7
        %v6194 = vsub.s32 1, %v6193
        %v6195 = vrot.slane %v6151, %v6194
        %v6196 = vlaneseq
        %v6197 = vshrl.u32 %v6196, 7
        %v6198 = vsub.s32 2, %v6197
        %v6199 = vrot.slane %v6151, %v6198
        %v6200 = vlaneseq
        %v6201 = vshrl.u32 %v6200, 7
        %v6202 = vsub.s32 3, %v6201
        %v6203 = vrot.slane %v6151, %v6202
        %v6204 = vlaneseq
        %v6205 = vshrl.u32 %v6204, 7
        %v6206 = vsub.s32 4, %v6205
        %v6207 = vrot.slane %v6151, %v6206
        %v6208 = vlaneseq
        %v6209 = vshrl.u32 %v6208, 7
        %v6210 = vsub.s32 5, %v6209
        %v6211 = vrot.slane %v6151, %v6210
        %v6212 = vlaneseq
        %v6213 = vshrl.u32 %v6212, 7
        %v6214 = vsub.s32 6, %v6213
        %v6215 = vrot.slane %v6151, %v6214
        %v6216 = vlaneseq
        %v6217 = vshrl.u32 %v6216, 7
        %v6218 = vsub.s32 7, %v6217
        %v6219 = vrot.slane %v6151, %v6218
        %v6220 = vlaneseq
        %v6221 = vshrl.u32 %v6220, 7
        %v6222 = vsub.s32 0, %v6221
        %v6223 = vrot.slane %v6152, %v6222
        %v6224 = vlaneseq
        %v6225 = vshrl.u32 %v6224, 7
        %v6226 = vsub.s32 1, %v6225
        %v6227 = vrot.slane %v6152, %v6226
        %v6246 = vmul.f32 %v6149, %v6159
        %v6247 = vmul.f32 %v6148, %v6163
        %v6248 = vmul.f32 %v6147, %v6167
        %v6249 = vmul.f32 %v6146, %v6171
        %v6250 = vmul.f32 %v6145, %v6175
        %v6251 = vmul.f32 %v6144, %v6179
        %v6252 = vmul.f32 %v6143, %v6183
        %v6253 = vmul.f32 %v6142, %v6187
        %v6254 = vmul.f32 %v6141, %v6191
        %v6255 = vmul.f32 %v6140, %v6195
        %v6256 = vmul.f32 %v6139, %v6199
        %v6257 = vmul.f32 %v6138, %v6203
        %v6258 = vmul.f32 %v6137, %v6207
        %v6259 = vmul.f32 %v6136, %v6211
        %v6260 = vmul.f32 %v6135, %v6215
        %v6261 = vmul.f32 %v6134, %v6219
        %v6262 = vmul.f32 %v6133, %v6223
        %v6263 = vmul.f32 %v6132, %v6227
        %v6264 = vpack.c.bf16 %v6246, %v6246
        %v6265 = vpack.c.bf16 %v6247, %v6247
        %v6266 = vpack.c.bf16 %v6248, %v6248
        %v6267 = vpack.c.bf16 %v6249, %v6249
        %v6268 = vpack.c.bf16 %v6250, %v6250
        %v6269 = vpack.c.bf16 %v6251, %v6251
        %v6270 = vpack.c.bf16 %v6252, %v6252
        %v6271 = vpack.c.bf16 %v6253, %v6253
        %v6272 = vpack.c.bf16 %v6254, %v6254
        %v6273 = vpack.c.bf16 %v6255, %v6255
        %v6274 = vpack.c.bf16 %v6256, %v6256
        %v6275 = vpack.c.bf16 %v6257, %v6257
        %v6276 = vpack.c.bf16 %v6258, %v6258
        %v6277 = vpack.c.bf16 %v6259, %v6259
        %v6278 = vpack.c.bf16 %v6260, %v6260
        %v6279 = vpack.c.bf16 %v6261, %v6261
        %v6280 = vpack.c.bf16 %v6262, %v6262
        %v6281 = vpack.c.bf16 %v6263, %v6263
        %v6300 = vunpack.c.l.b16 %v6264
        %v6301 = vunpack.c.l.b16 %v6265
        %v6302 = vunpack.c.l.b16 %v6266
        %v6303 = vunpack.c.l.b16 %v6267
        %v6304 = vunpack.c.l.b16 %v6268
        %v6305 = vunpack.c.l.b16 %v6269
        %v6306 = vunpack.c.l.b16 %v6270
        %v6307 = vunpack.c.l.b16 %v6271
        %v6308 = vunpack.c.l.b16 %v6272
        %v6309 = vunpack.c.l.b16 %v6273
        %v6310 = vunpack.c.l.b16 %v6274
        %v6311 = vunpack.c.l.b16 %v6275
        %v6312 = vunpack.c.l.b16 %v6276
        %v6313 = vunpack.c.l.b16 %v6277
        %v6314 = vunpack.c.l.b16 %v6278
        %v6315 = vunpack.c.l.b16 %v6279
        %v6316 = vunpack.c.l.b16 %v6280
        %v6317 = vunpack.c.l.b16 %v6281
        %v6318 = vpack.c.b16 %v6301, %v6300
        %v6319 = vpack.c.b16 %v6303, %v6302
        %v6320 = vpack.c.b16 %v6305, %v6304
        %v6321 = vpack.c.b16 %v6307, %v6306
        %v6322 = vpack.c.b16 %v6309, %v6308
        %v6323 = vpack.c.b16 %v6311, %v6310
        %v6324 = vpack.c.b16 %v6313, %v6312
        %v6325 = vpack.c.b16 %v6315, %v6314
        %v6326 = vpack.c.b16 %v6317, %v6316
        %6336 = vst [vmem:[#allocation2 + $0xd8] sm:$0xff] %v6318
        %6337 = vst [vmem:[#allocation2 + $0xe0] sm:$0xff] %v6319
        %6338 = vst [vmem:[#allocation2 + $0xe8] sm:$0xff] %v6320
        %6339 = vst [vmem:[#allocation2 + $0xf0] sm:$0xff] %v6321
        %6340 = vst [vmem:[#allocation2 + $0xf8] sm:$0xff] %v6322
        %6341 = vst [vmem:[#allocation2 + $0x100] sm:$0xff] %v6323
        %6342 = vst [vmem:[#allocation2 + $0x108] sm:$0xff] %v6324
        %6343 = vst [vmem:[#allocation2 + $0x110] sm:$0xff] %v6325
        %6344 = vst [vmem:[#allocation2 + $0x118] sm:$0xff] %v6326
        %v6345 = vld [vmem:[#allocation3] sm:$0xff]
        %v6346 = vld [vmem:[#allocation3 + $0x8] sm:$0xff]
        %v6347 = vld [vmem:[#allocation3 + $0x10] sm:$0xff]
        %v6348 = vld [vmem:[#allocation3 + $0x18] sm:$0xff]
        %v6349 = vld [vmem:[#allocation3 + $0x20] sm:$0xff]
        %v6350 = vld [vmem:[#allocation3 + $0x28] sm:$0xff]
        %v6351 = vld [vmem:[#allocation3 + $0x30] sm:$0xff]
        %v6352 = vld [vmem:[#allocation3 + $0x38] sm:$0xff]
        %v6353 = vld [vmem:[#allocation3 + $0x40] sm:$0xff]
        %v6354 = vld [vmem:[#allocation3 + $0x48] sm:$0xff]
        %v6355 = vld [vmem:[#allocation3 + $0x50] sm:$0xff]
        %v6356 = vld [vmem:[#allocation3 + $0x58] sm:$0xff]
        %v6357 = vld [vmem:[#allocation3 + $0x60] sm:$0xff]
        %v6358 = vld [vmem:[#allocation3 + $0x68] sm:$0xff]
        %v6359 = vld [vmem:[#allocation3 + $0x70] sm:$0xff]
        %v6360 = vld [vmem:[#allocation3 + $0x78] sm:$0xff]
        %v6361 = vld [vmem:[#allocation3 + $0x80] sm:$0xff]
        %v6362 = vld [vmem:[#allocation3 + $0x88] sm:$0xff]
        %v6363 = vpack.c.bf16 %v6345, %v6345
        %v6364 = vpack.c.bf16 %v6346, %v6346
        %v6365 = vpack.c.bf16 %v6347, %v6347
        %v6366 = vpack.c.bf16 %v6348, %v6348
        %v6367 = vpack.c.bf16 %v6349, %v6349
        %v6368 = vpack.c.bf16 %v6350, %v6350
        %v6369 = vpack.c.bf16 %v6351, %v6351
        %v6370 = vpack.c.bf16 %v6352, %v6352
        %v6371 = vpack.c.bf16 %v6353, %v6353
        %v6372 = vpack.c.bf16 %v6354, %v6354
        %v6373 = vpack.c.bf16 %v6355, %v6355
        %v6374 = vpack.c.bf16 %v6356, %v6356
        %v6375 = vpack.c.bf16 %v6357, %v6357
        %v6376 = vpack.c.bf16 %v6358, %v6358
        %v6377 = vpack.c.bf16 %v6359, %v6359
        %v6378 = vpack.c.bf16 %v6360, %v6360
        %v6379 = vpack.c.bf16 %v6361, %v6361
        %v6380 = vpack.c.bf16 %v6362, %v6362
        %v6399 = vunpack.c.l.b16 %v6363
        %v6400 = vunpack.c.l.b16 %v6364
        %v6401 = vunpack.c.l.b16 %v6365
        %v6402 = vunpack.c.l.b16 %v6366
        %v6403 = vunpack.c.l.b16 %v6367
        %v6404 = vunpack.c.l.b16 %v6368
        %v6405 = vunpack.c.l.b16 %v6369
        %v6406 = vunpack.c.l.b16 %v6370
        %v6407 = vunpack.c.l.b16 %v6371
        %v6408 = vunpack.c.l.b16 %v6372
        %v6409 = vunpack.c.l.b16 %v6373
        %v6410 = vunpack.c.l.b16 %v6374
        %v6411 = vunpack.c.l.b16 %v6375
        %v6412 = vunpack.c.l.b16 %v6376
        %v6413 = vunpack.c.l.b16 %v6377
        %v6414 = vunpack.c.l.b16 %v6378
        %v6415 = vunpack.c.l.b16 %v6379
        %v6416 = vunpack.c.l.b16 %v6380
        %v6417 = vpack.c.b16 %v6400, %v6399
        %v6418 = vpack.c.b16 %v6402, %v6401
        %v6419 = vpack.c.b16 %v6404, %v6403
        %v6420 = vpack.c.b16 %v6406, %v6405
        %v6421 = vpack.c.b16 %v6408, %v6407
        %v6422 = vpack.c.b16 %v6410, %v6409
        %v6423 = vpack.c.b16 %v6412, %v6411
        %v6424 = vpack.c.b16 %v6414, %v6413
        %v6425 = vpack.c.b16 %v6416, %v6415
        %6435 = vst [vmem:[#allocation2 + $0x120] sm:$0xff] %v6417
        %6436 = vst [vmem:[#allocation2 + $0x128] sm:$0xff] %v6418
        %6437 = vst [vmem:[#allocation2 + $0x130] sm:$0xff] %v6419
        %6438 = vst [vmem:[#allocation2 + $0x138] sm:$0xff] %v6420
        %6439 = vst [vmem:[#allocation2 + $0x140] sm:$0xff] %v6421
        %6440 = vst [vmem:[#allocation2 + $0x148] sm:$0xff] %v6422
        %6441 = vst [vmem:[#allocation2 + $0x150] sm:$0xff] %v6423
        %6442 = vst [vmem:[#allocation2 + $0x158] sm:$0xff] %v6424
        %6443 = vst [vmem:[#allocation2 + $0x160] sm:$0xff] %v6425
        %v6444 = vld [vmem:[#allocation3 + $0x90] sm:$0xff]
        %v6445 = vld [vmem:[#allocation3 + $0x98] sm:$0xff]
        %v6446 = vld [vmem:[#allocation3 + $0xa0] sm:$0xff]
        %v6447 = vld [vmem:[#allocation3 + $0xa8] sm:$0xff]
        %v6448 = vld [vmem:[#allocation3 + $0xb0] sm:$0xff]
        %v6449 = vld [vmem:[#allocation3 + $0xb8] sm:$0xff]
        %v6450 = vld [vmem:[#allocation3 + $0xc0] sm:$0xff]
        %v6451 = vld [vmem:[#allocation3 + $0xc8] sm:$0xff]
        %v6452 = vld [vmem:[#allocation3 + $0xd0] sm:$0xff]
        %v6453 = vld [vmem:[#allocation3 + $0xd8] sm:$0xff]
        %v6454 = vld [vmem:[#allocation3 + $0xe0] sm:$0xff]
        %v6455 = vld [vmem:[#allocation3 + $0xe8] sm:$0xff]
        %v6456 = vld [vmem:[#allocation3 + $0xf0] sm:$0xff]
        %v6457 = vld [vmem:[#allocation3 + $0xf8] sm:$0xff]
        %v6458 = vld [vmem:[#allocation3 + $0x100] sm:$0xff]
        %v6459 = vld [vmem:[#allocation3 + $0x108] sm:$0xff]
        %v6460 = vld [vmem:[#allocation3 + $0x110] sm:$0xff]
        %v6461 = vld [vmem:[#allocation3 + $0x118] sm:$0xff]
        %v6462 = vpack.c.bf16 %v6444, %v6444
        %v6463 = vpack.c.bf16 %v6445, %v6445
        %v6464 = vpack.c.bf16 %v6446, %v6446
        %v6465 = vpack.c.bf16 %v6447, %v6447
        %v6466 = vpack.c.bf16 %v6448, %v6448
        %v6467 = vpack.c.bf16 %v6449, %v6449
        %v6468 = vpack.c.bf16 %v6450, %v6450
        %v6469 = vpack.c.bf16 %v6451, %v6451
        %v6470 = vpack.c.bf16 %v6452, %v6452
        %v6471 = vpack.c.bf16 %v6453, %v6453
        %v6472 = vpack.c.bf16 %v6454, %v6454
        %v6473 = vpack.c.bf16 %v6455, %v6455
        %v6474 = vpack.c.bf16 %v6456, %v6456
        %v6475 = vpack.c.bf16 %v6457, %v6457
        %v6476 = vpack.c.bf16 %v6458, %v6458
        %v6477 = vpack.c.bf16 %v6459, %v6459
        %v6478 = vpack.c.bf16 %v6460, %v6460
        %v6479 = vpack.c.bf16 %v6461, %v6461
        %v6498 = vunpack.c.l.b16 %v6462
        %v6499 = vunpack.c.l.b16 %v6463
        %v6500 = vunpack.c.l.b16 %v6464
        %v6501 = vunpack.c.l.b16 %v6465
        %v6502 = vunpack.c.l.b16 %v6466
        %v6503 = vunpack.c.l.b16 %v6467
        %v6504 = vunpack.c.l.b16 %v6468
        %v6505 = vunpack.c.l.b16 %v6469
        %v6506 = vunpack.c.l.b16 %v6470
        %v6507 = vunpack.c.l.b16 %v6471
        %v6508 = vunpack.c.l.b16 %v6472
        %v6509 = vunpack.c.l.b16 %v6473
        %v6510 = vunpack.c.l.b16 %v6474
        %v6511 = vunpack.c.l.b16 %v6475
        %v6512 = vunpack.c.l.b16 %v6476
        %v6513 = vunpack.c.l.b16 %v6477
        %v6514 = vunpack.c.l.b16 %v6478
        %v6515 = vunpack.c.l.b16 %v6479
        %v6516 = vpack.c.b16 %v6499, %v6498
        %v6517 = vpack.c.b16 %v6501, %v6500
        %v6518 = vpack.c.b16 %v6503, %v6502
        %v6519 = vpack.c.b16 %v6505, %v6504
        %v6520 = vpack.c.b16 %v6507, %v6506
        %v6521 = vpack.c.b16 %v6509, %v6508
        %v6522 = vpack.c.b16 %v6511, %v6510
        %v6523 = vpack.c.b16 %v6513, %v6512
        %v6524 = vpack.c.b16 %v6515, %v6514
        %6534 = vst [vmem:[#allocation2 + $0x168] sm:$0xff] %v6516
        %6535 = vst [vmem:[#allocation2 + $0x170] sm:$0xff] %v6517
        %6536 = vst [vmem:[#allocation2 + $0x178] sm:$0xff] %v6518
        %6537 = vst [vmem:[#allocation2 + $0x180] sm:$0xff] %v6519
        %6538 = vst [vmem:[#allocation2 + $0x188] sm:$0xff] %v6520
        %6539 = vst [vmem:[#allocation2 + $0x190] sm:$0xff] %v6521
        %6540 = vst [vmem:[#allocation2 + $0x198] sm:$0xff] %v6522
        %6541 = vst [vmem:[#allocation2 + $0x1a0] sm:$0xff] %v6523
        %6542 = vst [vmem:[#allocation2 + $0x1a8] sm:$0xff] %v6524
        %v6543 = vld [vmem:[#allocation3 + $0x1b0] sm:$0xff]
        %v6544 = vld [vmem:[#allocation3 + $0x1b8] sm:$0xff]
        %v6545 = vld [vmem:[#allocation3 + $0x1c0] sm:$0xff]
        %v6546 = vld [vmem:[#allocation3 + $0x1c8] sm:$0xff]
        %v6547 = vld [vmem:[#allocation3 + $0x1d0] sm:$0xff]
        %v6548 = vld [vmem:[#allocation3 + $0x1d8] sm:$0xff]
        %v6549 = vld [vmem:[#allocation3 + $0x1e0] sm:$0xff]
        %v6550 = vld [vmem:[#allocation3 + $0x1e8] sm:$0xff]
        %v6551 = vld [vmem:[#allocation3 + $0x1f0] sm:$0xff]
        %v6552 = vld [vmem:[#allocation3 + $0x1f8] sm:$0xff]
        %v6553 = vld [vmem:[#allocation3 + $0x200] sm:$0xff]
        %v6554 = vld [vmem:[#allocation3 + $0x208] sm:$0xff]
        %v6555 = vld [vmem:[#allocation3 + $0x210] sm:$0xff]
        %v6556 = vld [vmem:[#allocation3 + $0x218] sm:$0xff]
        %v6557 = vld [vmem:[#allocation3 + $0x220] sm:$0xff]
        %v6558 = vld [vmem:[#allocation3 + $0x228] sm:$0xff]
        %v6559 = vld [vmem:[#allocation3 + $0x230] sm:$0xff]
        %v6560 = vld [vmem:[#allocation3 + $0x238] sm:$0xff]
        %6561 = vrot.lane.b32.xlu0 %v6543, 1
        %v6562 = vpop.permute.xlu0 %6561
        %6563 = vrot.lane.b32.xlu0 %v6544, 1
        %v6564 = vpop.permute.xlu0 %6563
        %6565 = vrot.lane.b32.xlu0 %v6545, 1
        %v6566 = vpop.permute.xlu0 %6565
        %6567 = vrot.lane.b32.xlu0 %v6546, 1
        %v6568 = vpop.permute.xlu0 %6567
        %6569 = vrot.lane.b32.xlu0 %v6547, 1
        %v6570 = vpop.permute.xlu0 %6569
        %6571 = vrot.lane.b32.xlu0 %v6548, 1
        %v6572 = vpop.permute.xlu0 %6571
        %6573 = vrot.lane.b32.xlu0 %v6549, 1
        %v6574 = vpop.permute.xlu0 %6573
        %6575 = vrot.lane.b32.xlu0 %v6550, 1
        %v6576 = vpop.permute.xlu0 %6575
        %6577 = vrot.lane.b32.xlu0 %v6551, 1
        %v6578 = vpop.permute.xlu0 %6577
        %6579 = vrot.lane.b32.xlu0 %v6552, 1
        %v6580 = vpop.permute.xlu0 %6579
        %6581 = vrot.lane.b32.xlu0 %v6553, 1
        %v6582 = vpop.permute.xlu0 %6581
        %6583 = vrot.lane.b32.xlu0 %v6554, 1
        %v6584 = vpop.permute.xlu0 %6583
        %6585 = vrot.lane.b32.xlu0 %v6555, 1
        %v6586 = vpop.permute.xlu0 %6585
        %6587 = vrot.lane.b32.xlu0 %v6556, 1
        %v6588 = vpop.permute.xlu0 %6587
        %6589 = vrot.lane.b32.xlu0 %v6557, 1
        %v6590 = vpop.permute.xlu0 %6589
        %6591 = vrot.lane.b32.xlu0 %v6558, 1
        %v6592 = vpop.permute.xlu0 %6591
        %6593 = vrot.lane.b32.xlu0 %v6559, 1
        %v6594 = vpop.permute.xlu0 %6593
        %6595 = vrot.lane.b32.xlu0 %v6560, 1
        %v6596 = vpop.permute.xlu0 %6595
        %v6597 = vsel %vm1463, %v6594, %v6596
        %v6598 = vsel %vm1463, %v6592, %v6594
        %v6599 = vsel %vm1463, %v6590, %v6592
        %v6600 = vsel %vm1463, %v6588, %v6590
        %v6601 = vsel %vm1463, %v6586, %v6588
        %v6602 = vsel %vm1463, %v6584, %v6586
        %v6603 = vsel %vm1463, %v6582, %v6584
        %v6604 = vsel %vm1463, %v6580, %v6582
        %v6605 = vsel %vm1463, %v6578, %v6580
        %v6606 = vsel %vm1463, %v6576, %v6578
        %v6607 = vsel %vm1463, %v6574, %v6576
        %v6608 = vsel %vm1463, %v6572, %v6574
        %v6609 = vsel %vm1463, %v6570, %v6572
        %v6610 = vsel %vm1463, %v6568, %v6570
        %v6611 = vsel %vm1463, %v6566, %v6568
        %v6612 = vsel %vm1463, %v6564, %v6566
        %v6613 = vsel %vm1463, %v6562, %v6564
        %v6614 = vsel %vm1463, %v6596, %v6562
        %v6615 = vld [vmem:[%s1482] sm:$0xff]
        %v6616 = vld [vmem:[%s1482 + $0x8] sm:$0xff]
        %v6617 = vld [vmem:[%s1482 + $0x10] sm:$0x3]
        %v6621 = vlaneseq
        %v6622 = vshrl.u32 %v6621, 7
        %v6623 = vsub.s32 0, %v6622
        %v6624 = vrot.slane %v6615, %v6623
        %v6625 = vlaneseq
        %v6626 = vshrl.u32 %v6625, 7
        %v6627 = vsub.s32 1, %v6626
        %v6628 = vrot.slane %v6615, %v6627
        %v6629 = vlaneseq
        %v6630 = vshrl.u32 %v6629, 7
        %v6631 = vsub.s32 2, %v6630
        %v6632 = vrot.slane %v6615, %v6631
        %v6633 = vlaneseq
        %v6634 = vshrl.u32 %v6633, 7
        %v6635 = vsub.s32 3, %v6634
        %v6636 = vrot.slane %v6615, %v6635
        %v6637 = vlaneseq
        %v6638 = vshrl.u32 %v6637, 7
        %v6639 = vsub.s32 4, %v6638
        %v6640 = vrot.slane %v6615, %v6639
        %v6641 = vlaneseq
        %v6642 = vshrl.u32 %v6641, 7
        %v6643 = vsub.s32 5, %v6642
        %v6644 = vrot.slane %v6615, %v6643
        %v6645 = vlaneseq
        %v6646 = vshrl.u32 %v6645, 7
        %v6647 = vsub.s32 6, %v6646
        %v6648 = vrot.slane %v6615, %v6647
        %v6649 = vlaneseq
        %v6650 = vshrl.u32 %v6649, 7
        %v6651 = vsub.s32 7, %v6650
        %v6652 = vrot.slane %v6615, %v6651
        %v6653 = vlaneseq
        %v6654 = vshrl.u32 %v6653, 7
        %v6655 = vsub.s32 0, %v6654
        %v6656 = vrot.slane %v6616, %v6655
        %v6657 = vlaneseq
        %v6658 = vshrl.u32 %v6657, 7
        %v6659 = vsub.s32 1, %v6658
        %v6660 = vrot.slane %v6616, %v6659
        %v6661 = vlaneseq
        %v6662 = vshrl.u32 %v6661, 7
        %v6663 = vsub.s32 2, %v6662
        %v6664 = vrot.slane %v6616, %v6663
        %v6665 = vlaneseq
        %v6666 = vshrl.u32 %v6665, 7
        %v6667 = vsub.s32 3, %v6666
        %v6668 = vrot.slane %v6616, %v6667
        %v6669 = vlaneseq
        %v6670 = vshrl.u32 %v6669, 7
        %v6671 = vsub.s32 4, %v6670
        %v6672 = vrot.slane %v6616, %v6671
        %v6673 = vlaneseq
        %v6674 = vshrl.u32 %v6673, 7
        %v6675 = vsub.s32 5, %v6674
        %v6676 = vrot.slane %v6616, %v6675
        %v6677 = vlaneseq
        %v6678 = vshrl.u32 %v6677, 7
        %v6679 = vsub.s32 6, %v6678
        %v6680 = vrot.slane %v6616, %v6679
        %v6681 = vlaneseq
        %v6682 = vshrl.u32 %v6681, 7
        %v6683 = vsub.s32 7, %v6682
        %v6684 = vrot.slane %v6616, %v6683
        %v6685 = vlaneseq
        %v6686 = vshrl.u32 %v6685, 7
        %v6687 = vsub.s32 0, %v6686
        %v6688 = vrot.slane %v6617, %v6687
        %v6689 = vlaneseq
        %v6690 = vshrl.u32 %v6689, 7
        %v6691 = vsub.s32 1, %v6690
        %v6692 = vrot.slane %v6617, %v6691
        %v6711 = vmul.f32 %v6614, %v6624
        %v6712 = vmul.f32 %v6613, %v6628
        %v6713 = vmul.f32 %v6612, %v6632
        %v6714 = vmul.f32 %v6611, %v6636
        %v6715 = vmul.f32 %v6610, %v6640
        %v6716 = vmul.f32 %v6609, %v6644
        %v6717 = vmul.f32 %v6608, %v6648
        %v6718 = vmul.f32 %v6607, %v6652
        %v6719 = vmul.f32 %v6606, %v6656
        %v6720 = vmul.f32 %v6605, %v6660
        %v6721 = vmul.f32 %v6604, %v6664
        %v6722 = vmul.f32 %v6603, %v6668
        %v6723 = vmul.f32 %v6602, %v6672
        %v6724 = vmul.f32 %v6601, %v6676
        %v6725 = vmul.f32 %v6600, %v6680
        %v6726 = vmul.f32 %v6599, %v6684
        %v6727 = vmul.f32 %v6598, %v6688
        %v6728 = vmul.f32 %v6597, %v6692
        %v6729 = vpack.c.bf16 %v6711, %v6711
        %v6730 = vpack.c.bf16 %v6712, %v6712
        %v6731 = vpack.c.bf16 %v6713, %v6713
        %v6732 = vpack.c.bf16 %v6714, %v6714
        %v6733 = vpack.c.bf16 %v6715, %v6715
        %v6734 = vpack.c.bf16 %v6716, %v6716
        %v6735 = vpack.c.bf16 %v6717, %v6717
        %v6736 = vpack.c.bf16 %v6718, %v6718
        %v6737 = vpack.c.bf16 %v6719, %v6719
        %v6738 = vpack.c.bf16 %v6720, %v6720
        %v6739 = vpack.c.bf16 %v6721, %v6721
        %v6740 = vpack.c.bf16 %v6722, %v6722
        %v6741 = vpack.c.bf16 %v6723, %v6723
        %v6742 = vpack.c.bf16 %v6724, %v6724
        %v6743 = vpack.c.bf16 %v6725, %v6725
        %v6744 = vpack.c.bf16 %v6726, %v6726
        %v6745 = vpack.c.bf16 %v6727, %v6727
        %v6746 = vpack.c.bf16 %v6728, %v6728
        %v6765 = vunpack.c.l.b16 %v6729
        %v6766 = vunpack.c.l.b16 %v6730
        %v6767 = vunpack.c.l.b16 %v6731
        %v6768 = vunpack.c.l.b16 %v6732
        %v6769 = vunpack.c.l.b16 %v6733
        %v6770 = vunpack.c.l.b16 %v6734
        %v6771 = vunpack.c.l.b16 %v6735
        %v6772 = vunpack.c.l.b16 %v6736
        %v6773 = vunpack.c.l.b16 %v6737
        %v6774 = vunpack.c.l.b16 %v6738
        %v6775 = vunpack.c.l.b16 %v6739
        %v6776 = vunpack.c.l.b16 %v6740
        %v6777 = vunpack.c.l.b16 %v6741
        %v6778 = vunpack.c.l.b16 %v6742
        %v6779 = vunpack.c.l.b16 %v6743
        %v6780 = vunpack.c.l.b16 %v6744
        %v6781 = vunpack.c.l.b16 %v6745
        %v6782 = vunpack.c.l.b16 %v6746
        %v6783 = vpack.c.b16 %v6766, %v6765
        %v6784 = vpack.c.b16 %v6768, %v6767
        %v6785 = vpack.c.b16 %v6770, %v6769
        %v6786 = vpack.c.b16 %v6772, %v6771
        %v6787 = vpack.c.b16 %v6774, %v6773
        %v6788 = vpack.c.b16 %v6776, %v6775
        %v6789 = vpack.c.b16 %v6778, %v6777
        %v6790 = vpack.c.b16 %v6780, %v6779
        %v6791 = vpack.c.b16 %v6782, %v6781
        %6801 = vst [vmem:[#allocation2 + $0x1b0] sm:$0xff] %v6783
        %6802 = vst [vmem:[#allocation2 + $0x1b8] sm:$0xff] %v6784
        %6803 = vst [vmem:[#allocation2 + $0x1c0] sm:$0xff] %v6785
        %6804 = vst [vmem:[#allocation2 + $0x1c8] sm:$0xff] %v6786
        %6805 = vst [vmem:[#allocation2 + $0x1d0] sm:$0xff] %v6787
        %6806 = vst [vmem:[#allocation2 + $0x1d8] sm:$0xff] %v6788
        %6807 = vst [vmem:[#allocation2 + $0x1e0] sm:$0xff] %v6789
        %6808 = vst [vmem:[#allocation2 + $0x1e8] sm:$0xff] %v6790
        %6809 = vst [vmem:[#allocation2 + $0x1f0] sm:$0xff] %v6791
        %v6810 = vld [vmem:[#allocation3 + $0x120] sm:$0xff]
        %v6811 = vld [vmem:[#allocation3 + $0x128] sm:$0xff]
        %v6812 = vld [vmem:[#allocation3 + $0x130] sm:$0xff]
        %v6813 = vld [vmem:[#allocation3 + $0x138] sm:$0xff]
        %v6814 = vld [vmem:[#allocation3 + $0x140] sm:$0xff]
        %v6815 = vld [vmem:[#allocation3 + $0x148] sm:$0xff]
        %v6816 = vld [vmem:[#allocation3 + $0x150] sm:$0xff]
        %v6817 = vld [vmem:[#allocation3 + $0x158] sm:$0xff]
        %v6818 = vld [vmem:[#allocation3 + $0x160] sm:$0xff]
        %v6819 = vld [vmem:[#allocation3 + $0x168] sm:$0xff]
        %v6820 = vld [vmem:[#allocation3 + $0x170] sm:$0xff]
        %v6821 = vld [vmem:[#allocation3 + $0x178] sm:$0xff]
        %v6822 = vld [vmem:[#allocation3 + $0x180] sm:$0xff]
        %v6823 = vld [vmem:[#allocation3 + $0x188] sm:$0xff]
        %v6824 = vld [vmem:[#allocation3 + $0x190] sm:$0xff]
        %v6825 = vld [vmem:[#allocation3 + $0x198] sm:$0xff]
        %v6826 = vld [vmem:[#allocation3 + $0x1a0] sm:$0xff]
        %v6827 = vld [vmem:[#allocation3 + $0x1a8] sm:$0xff]
        %v6828 = vpack.c.bf16 %v6810, %v6810
        %v6829 = vpack.c.bf16 %v6811, %v6811
        %v6830 = vpack.c.bf16 %v6812, %v6812
        %v6831 = vpack.c.bf16 %v6813, %v6813
        %v6832 = vpack.c.bf16 %v6814, %v6814
        %v6833 = vpack.c.bf16 %v6815, %v6815
        %v6834 = vpack.c.bf16 %v6816, %v6816
        %v6835 = vpack.c.bf16 %v6817, %v6817
        %v6836 = vpack.c.bf16 %v6818, %v6818
        %v6837 = vpack.c.bf16 %v6819, %v6819
        %v6838 = vpack.c.bf16 %v6820, %v6820
        %v6839 = vpack.c.bf16 %v6821, %v6821
        %v6840 = vpack.c.bf16 %v6822, %v6822
        %v6841 = vpack.c.bf16 %v6823, %v6823
        %v6842 = vpack.c.bf16 %v6824, %v6824
        %v6843 = vpack.c.bf16 %v6825, %v6825
        %v6844 = vpack.c.bf16 %v6826, %v6826
        %v6845 = vpack.c.bf16 %v6827, %v6827
        %v6864 = vunpack.c.l.b16 %v6828
        %v6865 = vunpack.c.l.b16 %v6829
        %v6866 = vunpack.c.l.b16 %v6830
        %v6867 = vunpack.c.l.b16 %v6831
        %v6868 = vunpack.c.l.b16 %v6832
        %v6869 = vunpack.c.l.b16 %v6833
        %v6870 = vunpack.c.l.b16 %v6834
        %v6871 = vunpack.c.l.b16 %v6835
        %v6872 = vunpack.c.l.b16 %v6836
        %v6873 = vunpack.c.l.b16 %v6837
        %v6874 = vunpack.c.l.b16 %v6838
        %v6875 = vunpack.c.l.b16 %v6839
        %v6876 = vunpack.c.l.b16 %v6840
        %v6877 = vunpack.c.l.b16 %v6841
        %v6878 = vunpack.c.l.b16 %v6842
        %v6879 = vunpack.c.l.b16 %v6843
        %v6880 = vunpack.c.l.b16 %v6844
        %v6881 = vunpack.c.l.b16 %v6845
        %v6882 = vpack.c.b16 %v6865, %v6864
        %v6883 = vpack.c.b16 %v6867, %v6866
        %v6884 = vpack.c.b16 %v6869, %v6868
        %v6885 = vpack.c.b16 %v6871, %v6870
        %v6886 = vpack.c.b16 %v6873, %v6872
        %v6887 = vpack.c.b16 %v6875, %v6874
        %v6888 = vpack.c.b16 %v6877, %v6876
        %v6889 = vpack.c.b16 %v6879, %v6878
        %v6890 = vpack.c.b16 %v6881, %v6880
        %6900 = vst [vmem:[#allocation2 + $0x1f8] sm:$0xff] %v6882
        %6901 = vst [vmem:[#allocation2 + $0x200] sm:$0xff] %v6883
        %6902 = vst [vmem:[#allocation2 + $0x208] sm:$0xff] %v6884
        %6903 = vst [vmem:[#allocation2 + $0x210] sm:$0xff] %v6885
        %6904 = vst [vmem:[#allocation2 + $0x218] sm:$0xff] %v6886
        %6905 = vst [vmem:[#allocation2 + $0x220] sm:$0xff] %v6887
        %6906 = vst [vmem:[#allocation2 + $0x228] sm:$0xff] %v6888
        %6907 = vst [vmem:[#allocation2 + $0x230] sm:$0xff] %v6889
        %6908 = vst [vmem:[#allocation2 + $0x238] sm:$0xff] %v6890
        %v6909 = vld [vmem:[#allocation3 + $0x1b0] sm:$0xff]
        %v6910 = vld [vmem:[#allocation3 + $0x1b8] sm:$0xff]
        %v6911 = vld [vmem:[#allocation3 + $0x1c0] sm:$0xff]
        %v6912 = vld [vmem:[#allocation3 + $0x1c8] sm:$0xff]
        %v6913 = vld [vmem:[#allocation3 + $0x1d0] sm:$0xff]
        %v6914 = vld [vmem:[#allocation3 + $0x1d8] sm:$0xff]
        %v6915 = vld [vmem:[#allocation3 + $0x1e0] sm:$0xff]
        %v6916 = vld [vmem:[#allocation3 + $0x1e8] sm:$0xff]
        %v6917 = vld [vmem:[#allocation3 + $0x1f0] sm:$0xff]
        %v6918 = vld [vmem:[#allocation3 + $0x1f8] sm:$0xff]
        %v6919 = vld [vmem:[#allocation3 + $0x200] sm:$0xff]
        %v6920 = vld [vmem:[#allocation3 + $0x208] sm:$0xff]
        %v6921 = vld [vmem:[#allocation3 + $0x210] sm:$0xff]
        %v6922 = vld [vmem:[#allocation3 + $0x218] sm:$0xff]
        %v6923 = vld [vmem:[#allocation3 + $0x220] sm:$0xff]
        %v6924 = vld [vmem:[#allocation3 + $0x228] sm:$0xff]
        %v6925 = vld [vmem:[#allocation3 + $0x230] sm:$0xff]
        %v6926 = vld [vmem:[#allocation3 + $0x238] sm:$0xff]
        %v6927 = vpack.c.bf16 %v6909, %v6909
        %v6928 = vpack.c.bf16 %v6910, %v6910
        %v6929 = vpack.c.bf16 %v6911, %v6911
        %v6930 = vpack.c.bf16 %v6912, %v6912
        %v6931 = vpack.c.bf16 %v6913, %v6913
        %v6932 = vpack.c.bf16 %v6914, %v6914
        %v6933 = vpack.c.bf16 %v6915, %v6915
        %v6934 = vpack.c.bf16 %v6916, %v6916
        %v6935 = vpack.c.bf16 %v6917, %v6917
        %v6936 = vpack.c.bf16 %v6918, %v6918
        %v6937 = vpack.c.bf16 %v6919, %v6919
        %v6938 = vpack.c.bf16 %v6920, %v6920
        %v6939 = vpack.c.bf16 %v6921, %v6921
        %v6940 = vpack.c.bf16 %v6922, %v6922
        %v6941 = vpack.c.bf16 %v6923, %v6923
        %v6942 = vpack.c.bf16 %v6924, %v6924
        %v6943 = vpack.c.bf16 %v6925, %v6925
        %v6944 = vpack.c.bf16 %v6926, %v6926
        %v6963 = vunpack.c.l.b16 %v6927
        %v6964 = vunpack.c.l.b16 %v6928
        %v6965 = vunpack.c.l.b16 %v6929
        %v6966 = vunpack.c.l.b16 %v6930
        %v6967 = vunpack.c.l.b16 %v6931
        %v6968 = vunpack.c.l.b16 %v6932
        %v6969 = vunpack.c.l.b16 %v6933
        %v6970 = vunpack.c.l.b16 %v6934
        %v6971 = vunpack.c.l.b16 %v6935
        %v6972 = vunpack.c.l.b16 %v6936
        %v6973 = vunpack.c.l.b16 %v6937
        %v6974 = vunpack.c.l.b16 %v6938
        %v6975 = vunpack.c.l.b16 %v6939
        %v6976 = vunpack.c.l.b16 %v6940
        %v6977 = vunpack.c.l.b16 %v6941
        %v6978 = vunpack.c.l.b16 %v6942
        %v6979 = vunpack.c.l.b16 %v6943
        %v6980 = vunpack.c.l.b16 %v6944
        %v6981 = vpack.c.b16 %v6964, %v6963
        %v6982 = vpack.c.b16 %v6966, %v6965
        %v6983 = vpack.c.b16 %v6968, %v6967
        %v6984 = vpack.c.b16 %v6970, %v6969
        %v6985 = vpack.c.b16 %v6972, %v6971
        %v6986 = vpack.c.b16 %v6974, %v6973
        %v6987 = vpack.c.b16 %v6976, %v6975
        %v6988 = vpack.c.b16 %v6978, %v6977
        %v6989 = vpack.c.b16 %v6980, %v6979
        %6999 = vst [vmem:[#allocation2 + $0x240] sm:$0xff] %v6981
        %7000 = vst [vmem:[#allocation2 + $0x248] sm:$0xff] %v6982
        %7001 = vst [vmem:[#allocation2 + $0x250] sm:$0xff] %v6983
        %7002 = vst [vmem:[#allocation2 + $0x258] sm:$0xff] %v6984
        %7003 = vst [vmem:[#allocation2 + $0x260] sm:$0xff] %v6985
        %7004 = vst [vmem:[#allocation2 + $0x268] sm:$0xff] %v6986
        %7005 = vst [vmem:[#allocation2 + $0x270] sm:$0xff] %v6987
        %7006 = vst [vmem:[#allocation2 + $0x278] sm:$0xff] %v6988
        %7007 = vst [vmem:[#allocation2 + $0x280] sm:$0xff] %v6989
        %v7008 = vld [vmem:[%s3] sm:$0xf]
        %v7009 = vld [vmem:[#allocation2] sm:$0xff]
        %v7010 = vld [vmem:[#allocation2 + $0x8] sm:$0xff]
        %v7011 = vld [vmem:[#allocation2 + $0x10] sm:$0xff]
        %v7012 = vld [vmem:[#allocation2 + $0x18] sm:$0xff]
        %v7013 = vld [vmem:[#allocation2 + $0x20] sm:$0xff]
        %v7014 = vld [vmem:[#allocation2 + $0x28] sm:$0xff]
        %v7015 = vld [vmem:[#allocation2 + $0x30] sm:$0xff]
        %v7016 = vld [vmem:[#allocation2 + $0x38] sm:$0xff]
        %v7017 = vld [vmem:[#allocation2 + $0x40] sm:$0xff]
        %v7018 = vld [vmem:[#allocation2 + $0x48] sm:$0xff]
        %v7019 = vld [vmem:[#allocation2 + $0x50] sm:$0xff]
        %v7020 = vld [vmem:[#allocation2 + $0x58] sm:$0xff]
        %v7021 = vld [vmem:[#allocation2 + $0x60] sm:$0xff]
        %v7022 = vld [vmem:[#allocation2 + $0x68] sm:$0xff]
        %v7023 = vld [vmem:[#allocation2 + $0x70] sm:$0xff]
        %v7024 = vld [vmem:[#allocation2 + $0x78] sm:$0xff]
        %v7025 = vld [vmem:[#allocation2 + $0x80] sm:$0xff]
        %v7026 = vld [vmem:[#allocation2 + $0x88] sm:$0xff]
        %v7027 = vld [vmem:[#allocation2 + $0x90] sm:$0xff]
        %v7028 = vld [vmem:[#allocation2 + $0x98] sm:$0xff]
        %v7029 = vld [vmem:[#allocation2 + $0xa0] sm:$0xff]
        %v7030 = vld [vmem:[#allocation2 + $0xa8] sm:$0xff]
        %v7031 = vld [vmem:[#allocation2 + $0xb0] sm:$0xff]
        %v7032 = vld [vmem:[#allocation2 + $0xb8] sm:$0xff]
        %v7033 = vld [vmem:[#allocation2 + $0xc0] sm:$0xff]
        %v7034 = vld [vmem:[#allocation2 + $0xc8] sm:$0xff]
        %v7035 = vld [vmem:[#allocation2 + $0xd0] sm:$0xff]
        %v7036 = vld [vmem:[#allocation2 + $0xd8] sm:$0xff]
        %v7037 = vld [vmem:[#allocation2 + $0xe0] sm:$0xff]
        %v7038 = vld [vmem:[#allocation2 + $0xe8] sm:$0xff]
        %v7039 = vld [vmem:[#allocation2 + $0xf0] sm:$0xff]
        %v7040 = vld [vmem:[#allocation2 + $0xf8] sm:$0xff]
        %v7041 = vld [vmem:[#allocation2 + $0x100] sm:$0xff]
        %v7042 = vld [vmem:[#allocation2 + $0x108] sm:$0xff]
        %v7043 = vld [vmem:[#allocation2 + $0x110] sm:$0xff]
        %v7044 = vld [vmem:[#allocation2 + $0x118] sm:$0xff]
        %v7045 = vld [vmem:[#allocation2 + $0x120] sm:$0xff]
        %v7046 = vld [vmem:[#allocation2 + $0x128] sm:$0xff]
        %v7047 = vld [vmem:[#allocation2 + $0x130] sm:$0xff]
        %v7048 = vld [vmem:[#allocation2 + $0x138] sm:$0xff]
        %v7049 = vld [vmem:[#allocation2 + $0x140] sm:$0xff]
        %v7050 = vld [vmem:[#allocation2 + $0x148] sm:$0xff]
        %v7051 = vld [vmem:[#allocation2 + $0x150] sm:$0xff]
        %v7052 = vld [vmem:[#allocation2 + $0x158] sm:$0xff]
        %v7053 = vld [vmem:[#allocation2 + $0x160] sm:$0xff]
        %v7054 = vld [vmem:[#allocation2 + $0x168] sm:$0xff]
        %v7055 = vld [vmem:[#allocation2 + $0x170] sm:$0xff]
        %v7056 = vld [vmem:[#allocation2 + $0x178] sm:$0xff]
        %v7057 = vld [vmem:[#allocation2 + $0x180] sm:$0xff]
        %v7058 = vld [vmem:[#allocation2 + $0x188] sm:$0xff]
        %v7059 = vld [vmem:[#allocation2 + $0x190] sm:$0xff]
        %v7060 = vld [vmem:[#allocation2 + $0x198] sm:$0xff]
        %v7061 = vld [vmem:[#allocation2 + $0x1a0] sm:$0xff]
        %v7062 = vld [vmem:[#allocation2 + $0x1a8] sm:$0xff]
        %v7063 = vld [vmem:[#allocation2 + $0x1b0] sm:$0xff]
        %v7064 = vld [vmem:[#allocation2 + $0x1b8] sm:$0xff]
        %v7065 = vld [vmem:[#allocation2 + $0x1c0] sm:$0xff]
        %v7066 = vld [vmem:[#allocation2 + $0x1c8] sm:$0xff]
        %v7067 = vld [vmem:[#allocation2 + $0x1d0] sm:$0xff]
        %v7068 = vld [vmem:[#allocation2 + $0x1d8] sm:$0xff]
        %v7069 = vld [vmem:[#allocation2 + $0x1e0] sm:$0xff]
        %v7070 = vld [vmem:[#allocation2 + $0x1e8] sm:$0xff]
        %v7071 = vld [vmem:[#allocation2 + $0x1f0] sm:$0xff]
        %v7072 = vld [vmem:[#allocation2 + $0x1f8] sm:$0xff]
        %v7073 = vld [vmem:[#allocation2 + $0x200] sm:$0xff]
        %v7074 = vld [vmem:[#allocation2 + $0x208] sm:$0xff]
        %v7075 = vld [vmem:[#allocation2 + $0x210] sm:$0xff]
        %v7076 = vld [vmem:[#allocation2 + $0x218] sm:$0xff]
        %v7077 = vld [vmem:[#allocation2 + $0x220] sm:$0xff]
        %v7078 = vld [vmem:[#allocation2 + $0x228] sm:$0xff]
        %v7079 = vld [vmem:[#allocation2 + $0x230] sm:$0xff]
        %v7080 = vld [vmem:[#allocation2 + $0x238] sm:$0xff]
        %v7081 = vld [vmem:[#allocation2 + $0x240] sm:$0xff]
        %v7082 = vld [vmem:[#allocation2 + $0x248] sm:$0xff]
        %v7083 = vld [vmem:[#allocation2 + $0x250] sm:$0xff]
        %v7084 = vld [vmem:[#allocation2 + $0x258] sm:$0xff]
        %v7085 = vld [vmem:[#allocation2 + $0x260] sm:$0xff]
        %v7086 = vld [vmem:[#allocation2 + $0x268] sm:$0xff]
        %v7087 = vld [vmem:[#allocation2 + $0x270] sm:$0xff]
        %v7088 = vld [vmem:[#allocation2 + $0x278] sm:$0xff]
        %v7089 = vld [vmem:[#allocation2 + $0x280] sm:$0xff]
        %v7171 = vunpack.c.l.b16 %v7009
        %v7172 = vunpack.c.h.b16 %v7009
        %v7173 = vunpack.c.l.b16 %v7010
        %v7174 = vunpack.c.h.b16 %v7010
        %v7175 = vunpack.c.l.b16 %v7011
        %v7176 = vunpack.c.h.b16 %v7011
        %v7177 = vunpack.c.l.b16 %v7012
        %v7178 = vunpack.c.h.b16 %v7012
        %v7179 = vunpack.c.l.b16 %v7013
        %v7180 = vunpack.c.h.b16 %v7013
        %v7181 = vunpack.c.l.b16 %v7014
        %v7182 = vunpack.c.h.b16 %v7014
        %v7183 = vunpack.c.l.b16 %v7015
        %v7184 = vunpack.c.h.b16 %v7015
        %v7185 = vunpack.c.l.b16 %v7016
        %v7186 = vunpack.c.h.b16 %v7016
        %v7187 = vunpack.c.l.b16 %v7017
        %v7188 = vunpack.c.h.b16 %v7017
        %v7189 = vunpack.c.l.b16 %v7018
        %v7190 = vunpack.c.h.b16 %v7018
        %v7191 = vunpack.c.l.b16 %v7019
        %v7192 = vunpack.c.h.b16 %v7019
        %v7193 = vunpack.c.l.b16 %v7020
        %v7194 = vunpack.c.h.b16 %v7020
        %v7195 = vunpack.c.l.b16 %v7021
        %v7196 = vunpack.c.h.b16 %v7021
        %v7197 = vunpack.c.l.b16 %v7022
        %v7198 = vunpack.c.h.b16 %v7022
        %v7199 = vunpack.c.l.b16 %v7023
        %v7200 = vunpack.c.h.b16 %v7023
        %v7201 = vunpack.c.l.b16 %v7024
        %v7202 = vunpack.c.h.b16 %v7024
        %v7203 = vunpack.c.l.b16 %v7025
        %v7204 = vunpack.c.h.b16 %v7025
        %v7205 = vunpack.c.l.b16 %v7026
        %v7206 = vunpack.c.h.b16 %v7026
        %v7207 = vunpack.c.l.b16 %v7027
        %v7208 = vunpack.c.h.b16 %v7027
        %v7209 = vunpack.c.l.b16 %v7028
        %v7210 = vunpack.c.h.b16 %v7028
        %v7211 = vunpack.c.l.b16 %v7029
        %v7212 = vunpack.c.h.b16 %v7029
        %v7213 = vunpack.c.l.b16 %v7030
        %v7214 = vunpack.c.h.b16 %v7030
        %v7215 = vunpack.c.l.b16 %v7031
        %v7216 = vunpack.c.h.b16 %v7031
        %v7217 = vunpack.c.l.b16 %v7032
        %v7218 = vunpack.c.h.b16 %v7032
        %v7219 = vunpack.c.l.b16 %v7033
        %v7220 = vunpack.c.h.b16 %v7033
        %v7221 = vunpack.c.l.b16 %v7034
        %v7222 = vunpack.c.h.b16 %v7034
        %v7223 = vunpack.c.l.b16 %v7035
        %v7224 = vunpack.c.h.b16 %v7035
        %v7225 = vunpack.c.l.b16 %v7036
        %v7226 = vunpack.c.h.b16 %v7036
        %v7227 = vunpack.c.l.b16 %v7037
        %v7228 = vunpack.c.h.b16 %v7037
        %v7229 = vunpack.c.l.b16 %v7038
        %v7230 = vunpack.c.h.b16 %v7038
        %v7231 = vunpack.c.l.b16 %v7039
        %v7232 = vunpack.c.h.b16 %v7039
        %v7233 = vunpack.c.l.b16 %v7040
        %v7234 = vunpack.c.h.b16 %v7040
        %v7235 = vunpack.c.l.b16 %v7041
        %v7236 = vunpack.c.h.b16 %v7041
        %v7237 = vunpack.c.l.b16 %v7042
        %v7238 = vunpack.c.h.b16 %v7042
        %v7239 = vunpack.c.l.b16 %v7043
        %v7240 = vunpack.c.h.b16 %v7043
        %v7241 = vunpack.c.l.b16 %v7044
        %v7242 = vunpack.c.h.b16 %v7044
        %v7243 = vunpack.c.l.b16 %v7045
        %v7244 = vunpack.c.h.b16 %v7045
        %v7245 = vunpack.c.l.b16 %v7046
        %v7246 = vunpack.c.h.b16 %v7046
        %v7247 = vunpack.c.l.b16 %v7047
        %v7248 = vunpack.c.h.b16 %v7047
        %v7249 = vunpack.c.l.b16 %v7048
        %v7250 = vunpack.c.h.b16 %v7048
        %v7251 = vunpack.c.l.b16 %v7049
        %v7252 = vunpack.c.h.b16 %v7049
        %v7253 = vunpack.c.l.b16 %v7050
        %v7254 = vunpack.c.h.b16 %v7050
        %v7255 = vunpack.c.l.b16 %v7051
        %v7256 = vunpack.c.h.b16 %v7051
        %v7257 = vunpack.c.l.b16 %v7052
        %v7258 = vunpack.c.h.b16 %v7052
        %v7259 = vunpack.c.l.b16 %v7053
        %v7260 = vunpack.c.h.b16 %v7053
        %v7261 = vunpack.c.l.b16 %v7054
        %v7262 = vunpack.c.h.b16 %v7054
        %v7263 = vunpack.c.l.b16 %v7055
        %v7264 = vunpack.c.h.b16 %v7055
        %v7265 = vunpack.c.l.b16 %v7056
        %v7266 = vunpack.c.h.b16 %v7056
        %v7267 = vunpack.c.l.b16 %v7057
        %v7268 = vunpack.c.h.b16 %v7057
        %v7269 = vunpack.c.l.b16 %v7058
        %v7270 = vunpack.c.h.b16 %v7058
        %v7271 = vunpack.c.l.b16 %v7059
        %v7272 = vunpack.c.h.b16 %v7059
        %v7273 = vunpack.c.l.b16 %v7060
        %v7274 = vunpack.c.h.b16 %v7060
        %v7275 = vunpack.c.l.b16 %v7061
        %v7276 = vunpack.c.h.b16 %v7061
        %v7277 = vunpack.c.l.b16 %v7062
        %v7278 = vunpack.c.h.b16 %v7062
        %v7279 = vunpack.c.l.b16 %v7063
        %v7280 = vunpack.c.h.b16 %v7063
        %v7281 = vunpack.c.l.b16 %v7064
        %v7282 = vunpack.c.h.b16 %v7064
        %v7283 = vunpack.c.l.b16 %v7065
        %v7284 = vunpack.c.h.b16 %v7065
        %v7285 = vunpack.c.l.b16 %v7066
        %v7286 = vunpack.c.h.b16 %v7066
        %v7287 = vunpack.c.l.b16 %v7067
        %v7288 = vunpack.c.h.b16 %v7067
        %v7289 = vunpack.c.l.b16 %v7068
        %v7290 = vunpack.c.h.b16 %v7068
        %v7291 = vunpack.c.l.b16 %v7069
        %v7292 = vunpack.c.h.b16 %v7069
        %v7293 = vunpack.c.l.b16 %v7070
        %v7294 = vunpack.c.h.b16 %v7070
        %v7295 = vunpack.c.l.b16 %v7071
        %v7296 = vunpack.c.h.b16 %v7071
        %v7297 = vunpack.c.l.b16 %v7072
        %v7298 = vunpack.c.h.b16 %v7072
        %v7299 = vunpack.c.l.b16 %v7073
        %v7300 = vunpack.c.h.b16 %v7073
        %v7301 = vunpack.c.l.b16 %v7074
        %v7302 = vunpack.c.h.b16 %v7074
        %v7303 = vunpack.c.l.b16 %v7075
        %v7304 = vunpack.c.h.b16 %v7075
        %v7305 = vunpack.c.l.b16 %v7076
        %v7306 = vunpack.c.h.b16 %v7076
        %v7307 = vunpack.c.l.b16 %v7077
        %v7308 = vunpack.c.h.b16 %v7077
        %v7309 = vunpack.c.l.b16 %v7078
        %v7310 = vunpack.c.h.b16 %v7078
        %v7311 = vunpack.c.l.b16 %v7079
        %v7312 = vunpack.c.h.b16 %v7079
        %v7313 = vunpack.c.l.b16 %v7080
        %v7314 = vunpack.c.h.b16 %v7080
        %v7315 = vunpack.c.l.b16 %v7081
        %v7316 = vunpack.c.h.b16 %v7081
        %v7317 = vunpack.c.l.b16 %v7082
        %v7318 = vunpack.c.h.b16 %v7082
        %v7319 = vunpack.c.l.b16 %v7083
        %v7320 = vunpack.c.h.b16 %v7083
        %v7321 = vunpack.c.l.b16 %v7084
        %v7322 = vunpack.c.h.b16 %v7084
        %v7323 = vunpack.c.l.b16 %v7085
        %v7324 = vunpack.c.h.b16 %v7085
        %v7325 = vunpack.c.l.b16 %v7086
        %v7326 = vunpack.c.h.b16 %v7086
        %v7327 = vunpack.c.l.b16 %v7087
        %v7328 = vunpack.c.h.b16 %v7087
        %v7329 = vunpack.c.l.b16 %v7088
        %v7330 = vunpack.c.h.b16 %v7088
        %v7331 = vunpack.c.l.b16 %v7089
        %v7332 = vunpack.c.h.b16 %v7089
        %v7333 = vpack.c.b16 %v7189, %v7171
        %v7334 = vpack.c.b16 %v7190, %v7172
        %v7335 = vpack.c.b16 %v7191, %v7173
        %v7336 = vpack.c.b16 %v7192, %v7174
        %v7337 = vpack.c.b16 %v7193, %v7175
        %v7338 = vpack.c.b16 %v7194, %v7176
        %v7339 = vpack.c.b16 %v7195, %v7177
        %v7340 = vpack.c.b16 %v7196, %v7178
        %v7341 = vpack.c.b16 %v7197, %v7179
        %v7342 = vpack.c.b16 %v7198, %v7180
        %v7343 = vpack.c.b16 %v7199, %v7181
        %v7344 = vpack.c.b16 %v7200, %v7182
        %v7345 = vpack.c.b16 %v7201, %v7183
        %v7346 = vpack.c.b16 %v7202, %v7184
        %v7347 = vpack.c.b16 %v7203, %v7185
        %v7348 = vpack.c.b16 %v7204, %v7186
        %v7349 = vpack.c.b16 %v7205, %v7187
        %v7350 = vpack.c.b16 %v7206, %v7188
        %v7351 = vpack.c.b16 %v7225, %v7207
        %v7352 = vpack.c.b16 %v7226, %v7208
        %v7353 = vpack.c.b16 %v7227, %v7209
        %v7354 = vpack.c.b16 %v7228, %v7210
        %v7355 = vpack.c.b16 %v7229, %v7211
        %v7356 = vpack.c.b16 %v7230, %v7212
        %v7357 = vpack.c.b16 %v7231, %v7213
        %v7358 = vpack.c.b16 %v7232, %v7214
        %v7359 = vpack.c.b16 %v7233, %v7215
        %v7360 = vpack.c.b16 %v7234, %v7216
        %v7361 = vpack.c.b16 %v7235, %v7217
        %v7362 = vpack.c.b16 %v7236, %v7218
        %v7363 = vpack.c.b16 %v7237, %v7219
        %v7364 = vpack.c.b16 %v7238, %v7220
        %v7365 = vpack.c.b16 %v7239, %v7221
        %v7366 = vpack.c.b16 %v7240, %v7222
        %v7367 = vpack.c.b16 %v7241, %v7223
        %v7368 = vpack.c.b16 %v7242, %v7224
        %v7369 = vpack.c.b16 %v7261, %v7243
        %v7370 = vpack.c.b16 %v7262, %v7244
        %v7371 = vpack.c.b16 %v7263, %v7245
        %v7372 = vpack.c.b16 %v7264, %v7246
        %v7373 = vpack.c.b16 %v7265, %v7247
        %v7374 = vpack.c.b16 %v7266, %v7248
        %v7375 = vpack.c.b16 %v7267, %v7249
        %v7376 = vpack.c.b16 %v7268, %v7250
        %v7377 = vpack.c.b16 %v7269, %v7251
        %v7378 = vpack.c.b16 %v7270, %v7252
        %v7379 = vpack.c.b16 %v7271, %v7253
        %v7380 = vpack.c.b16 %v7272, %v7254
        %v7381 = vpack.c.b16 %v7273, %v7255
        %v7382 = vpack.c.b16 %v7274, %v7256
        %v7383 = vpack.c.b16 %v7275, %v7257
        %v7384 = vpack.c.b16 %v7276, %v7258
        %v7385 = vpack.c.b16 %v7277, %v7259
        %v7386 = vpack.c.b16 %v7278, %v7260
        %v7387 = vpack.c.b16 %v7297, %v7279
        %v7388 = vpack.c.b16 %v7298, %v7280
        %v7389 = vpack.c.b16 %v7299, %v7281
        %v7390 = vpack.c.b16 %v7300, %v7282
        %v7391 = vpack.c.b16 %v7301, %v7283
        %v7392 = vpack.c.b16 %v7302, %v7284
        %v7393 = vpack.c.b16 %v7303, %v7285
        %v7394 = vpack.c.b16 %v7304, %v7286
        %v7395 = vpack.c.b16 %v7305, %v7287
        %v7396 = vpack.c.b16 %v7306, %v7288
        %v7397 = vpack.c.b16 %v7307, %v7289
        %v7398 = vpack.c.b16 %v7308, %v7290
        %v7399 = vpack.c.b16 %v7309, %v7291
        %v7400 = vpack.c.b16 %v7310, %v7292
        %v7401 = vpack.c.b16 %v7311, %v7293
        %v7402 = vpack.c.b16 %v7312, %v7294
        %v7403 = vpack.c.b16 %v7313, %v7295
        %v7404 = vpack.c.b16 %v7314, %v7296
        %v7405 = vpack.c.b16 %v7315, %v7315
        %v7406 = vpack.c.b16 %v7316, %v7316
        %v7407 = vpack.c.b16 %v7317, %v7317
        %v7408 = vpack.c.b16 %v7318, %v7318
        %v7409 = vpack.c.b16 %v7319, %v7319
        %v7410 = vpack.c.b16 %v7320, %v7320
        %v7411 = vpack.c.b16 %v7321, %v7321
        %v7412 = vpack.c.b16 %v7322, %v7322
        %v7413 = vpack.c.b16 %v7323, %v7323
        %v7414 = vpack.c.b16 %v7324, %v7324
        %v7415 = vpack.c.b16 %v7325, %v7325
        %v7416 = vpack.c.b16 %v7326, %v7326
        %v7417 = vpack.c.b16 %v7327, %v7327
        %v7418 = vpack.c.b16 %v7328, %v7328
        %v7419 = vpack.c.b16 %v7329, %v7329
        %v7420 = vpack.c.b16 %v7330, %v7330
        %v7421 = vpack.c.b16 %v7331, %v7331
        %v7422 = vpack.c.b16 %v7332, %v7332
        %vm7495 = vcmask 588800
        %v7497 = vsel %vm7495, %v7008, 0
        %vm7499 = vcmask 1043456
        %v7501 = vsel %vm7499, %v7405, 0
        %v7504 = vsel %vm7499, %v7406, 0
        %v7507 = vsel %vm7499, %v7407, 0
        %v7510 = vsel %vm7499, %v7408, 0
        %v7513 = vsel %vm7499, %v7409, 0
        %v7516 = vsel %vm7499, %v7410, 0
        %v7519 = vsel %vm7499, %v7411, 0
        %v7522 = vsel %vm7499, %v7412, 0
        %v7525 = vsel %vm7499, %v7413, 0
        %v7528 = vsel %vm7499, %v7414, 0
        %v7531 = vsel %vm7499, %v7415, 0
        %v7534 = vsel %vm7499, %v7416, 0
        %v7537 = vsel %vm7499, %v7417, 0
        %v7540 = vsel %vm7499, %v7418, 0
        %v7543 = vsel %vm7499, %v7419, 0
        %v7546 = vsel %vm7499, %v7420, 0
        %v7549 = vsel %vm7499, %v7421, 0
        %v7552 = vsel %vm7499, %v7422, 0
        %7554 = vmatprep.subr.bf16.mxu0 0
        %7555 = vmatpush1.bf16.msra.mxu0 0
        %7556 = vmatprep.subr.bf16.mxu0 0
        %7557 = vmatpush1.bf16.msra.mxu0 0
        %7558 = vmatprep.subr.bf16.mxu0 0
        %7559 = vmatpush1.bf16.msra.mxu0 0
        %7560 = vmatprep.subr.bf16.mxu0 %v7504
        %7561 = vmatpush1.bf16.msra.mxu0 %v7501
        %7562 = vmatprep.subr.bf16.mxu0 %v7388
        %7563 = vmatpush1.bf16.msra.mxu0 %v7387
        %7564 = vmatprep.subr.bf16.mxu0 %v7370
        %7565 = vmatpush1.bf16.msra.mxu0 %v7369
        %7566 = vmatprep.subr.bf16.mxu0 %v7352
        %7567 = vmatpush1.bf16.msra.mxu0 %v7351
        %7568 = vmatprep.subr.bf16.mxu0 %v7334
        %7569 = vmatpush1.bf16.msra.mxu0 %v7333
        %7570 = vmatprep.subr.bf16.mxu0 0
        %7571 = vmatpush2.bf16.msra.mxu0 0
        %7572 = vmatprep.subr.bf16.mxu0 0
        %7573 = vmatpush2.bf16.msra.mxu0 0
        %7574 = vmatprep.subr.bf16.mxu0 0
        %7575 = vmatpush2.bf16.msra.mxu0 0
        %7576 = vmatprep.subr.bf16.mxu0 0
        %7577 = vmatpush2.bf16.msra.mxu0 0
        %7578 = vmatprep.subr.bf16.mxu0 0
        %7579 = vmatpush2.bf16.msra.mxu0 0
        %7580 = vmatprep.subr.bf16.mxu0 0
        %7581 = vmatpush2.bf16.msra.mxu0 0
        %7582 = vmatprep.subr.bf16.mxu0 0
        %7583 = vmatpush2.bf16.msra.mxu0 0
        %7584 = vmatprep.subr.bf16.mxu0 0
        %7585 = vmatpush2.bf16.msra.mxu0 0
        %7586 = vmatprep.mubr.bf16.mxu0 0
        %7587 = vmatmul.mubr.bf16.gmra.mxu0 %v7497
        %v7588 = vpop.f32.mrf.mxu0
        %v7589 = vadd.f32 0.0, %v7588
        %v7590 = vpop.f32.mrf.mxu0
        %v7591 = vadd.f32 0.0, %v7590
        %v7592 = vpop.f32.mrf.mxu0
        %v7593 = vpop.f32.mrf.mxu0
        %7594 = vdwg.mxu0
        %7595 = vmatprep.subr.bf16.mxu0 0
        %7596 = vmatpush1.bf16.msra.mxu0 0
        %7597 = vmatprep.subr.bf16.mxu0 0
        %7598 = vmatpush1.bf16.msra.mxu0 0
        %7599 = vmatprep.subr.bf16.mxu0 0
        %7600 = vmatpush1.bf16.msra.mxu0 0
        %7601 = vmatprep.subr.bf16.mxu0 %v7510
        %7602 = vmatpush1.bf16.msra.mxu0 %v7507
        %7603 = vmatprep.subr.bf16.mxu0 %v7390
        %7604 = vmatpush1.bf16.msra.mxu0 %v7389
        %7605 = vmatprep.subr.bf16.mxu0 %v7372
        %7606 = vmatpush1.bf16.msra.mxu0 %v7371
        %7607 = vmatprep.subr.bf16.mxu0 %v7354
        %7608 = vmatpush1.bf16.msra.mxu0 %v7353
        %7609 = vmatprep.subr.bf16.mxu0 %v7336
        %7610 = vmatpush1.bf16.msra.mxu0 %v7335
        %7611 = vmatprep.subr.bf16.mxu0 0
        %7612 = vmatpush2.bf16.msra.mxu0 0
        %7613 = vmatprep.subr.bf16.mxu0 0
        %7614 = vmatpush2.bf16.msra.mxu0 0
        %7615 = vmatprep.subr.bf16.mxu0 0
        %7616 = vmatpush2.bf16.msra.mxu0 0
        %7617 = vmatprep.subr.bf16.mxu0 0
        %7618 = vmatpush2.bf16.msra.mxu0 0
        %7619 = vmatprep.subr.bf16.mxu0 0
        %7620 = vmatpush2.bf16.msra.mxu0 0
        %7621 = vmatprep.subr.bf16.mxu0 0
        %7622 = vmatpush2.bf16.msra.mxu0 0
        %7623 = vmatprep.subr.bf16.mxu0 0
        %7624 = vmatpush2.bf16.msra.mxu0 0
        %7625 = vmatprep.subr.bf16.mxu0 0
        %7626 = vmatpush2.bf16.msra.mxu0 0
        %7627 = vmatprep.mubr.bf16.mxu0 0
        %7628 = vmatmul.mubr.bf16.gmra.mxu0 %v7497
        %v7629 = vpop.f32.mrf.mxu0
        %v7630 = vadd.f32 0.0, %v7629
        %v7631 = vpop.f32.mrf.mxu0
        %v7632 = vadd.f32 0.0, %v7631
        %v7633 = vpop.f32.mrf.mxu0
        %v7634 = vpop.f32.mrf.mxu0
        %7635 = vdwg.mxu0
        %7636 = vmatprep.subr.bf16.mxu0 0
        %7637 = vmatpush1.bf16.msra.mxu0 0
        %7638 = vmatprep.subr.bf16.mxu0 0
        %7639 = vmatpush1.bf16.msra.mxu0 0
        %7640 = vmatprep.subr.bf16.mxu0 0
        %7641 = vmatpush1.bf16.msra.mxu0 0
        %7642 = vmatprep.subr.bf16.mxu0 %v7516
        %7643 = vmatpush1.bf16.msra.mxu0 %v7513
        %7644 = vmatprep.subr.bf16.mxu0 %v7392
        %7645 = vmatpush1.bf16.msra.mxu0 %v7391
        %7646 = vmatprep.subr.bf16.mxu0 %v7374
        %7647 = vmatpush1.bf16.msra.mxu0 %v7373
        %7648 = vmatprep.subr.bf16.mxu0 %v7356
        %7649 = vmatpush1.bf16.msra.mxu0 %v7355
        %7650 = vmatprep.subr.bf16.mxu0 %v7338
        %7651 = vmatpush1.bf16.msra.mxu0 %v7337
        %7652 = vmatprep.subr.bf16.mxu0 0
        %7653 = vmatpush2.bf16.msra.mxu0 0
        %7654 = vmatprep.subr.bf16.mxu0 0
        %7655 = vmatpush2.bf16.msra.mxu0 0
        %7656 = vmatprep.subr.bf16.mxu0 0
        %7657 = vmatpush2.bf16.msra.mxu0 0
        %7658 = vmatprep.subr.bf16.mxu0 0
        %7659 = vmatpush2.bf16.msra.mxu0 0
        %7660 = vmatprep.subr.bf16.mxu0 0
        %7661 = vmatpush2.bf16.msra.mxu0 0
        %7662 = vmatprep.subr.bf16.mxu0 0
        %7663 = vmatpush2.bf16.msra.mxu0 0
        %7664 = vmatprep.subr.bf16.mxu0 0
        %7665 = vmatpush2.bf16.msra.mxu0 0
        %7666 = vmatprep.subr.bf16.mxu0 0
        %7667 = vmatpush2.bf16.msra.mxu0 0
        %7668 = vmatprep.mubr.bf16.mxu0 0
        %7669 = vmatmul.mubr.bf16.gmra.mxu0 %v7497
        %v7670 = vpop.f32.mrf.mxu0
        %v7671 = vadd.f32 0.0, %v7670
        %v7672 = vpop.f32.mrf.mxu0
        %v7673 = vadd.f32 0.0, %v7672
        %v7674 = vpop.f32.mrf.mxu0
        %v7675 = vpop.f32.mrf.mxu0
        %7676 = vdwg.mxu0
        %7677 = vmatprep.subr.bf16.mxu0 0
        %7678 = vmatpush1.bf16.msra.mxu0 0
        %7679 = vmatprep.subr.bf16.mxu0 0
        %7680 = vmatpush1.bf16.msra.mxu0 0
        %7681 = vmatprep.subr.bf16.mxu0 0
        %7682 = vmatpush1.bf16.msra.mxu0 0
        %7683 = vmatprep.subr.bf16.mxu0 %v7522
        %7684 = vmatpush1.bf16.msra.mxu0 %v7519
        %7685 = vmatprep.subr.bf16.mxu0 %v7394
        %7686 = vmatpush1.bf16.msra.mxu0 %v7393
        %7687 = vmatprep.subr.bf16.mxu0 %v7376
        %7688 = vmatpush1.bf16.msra.mxu0 %v7375
        %7689 = vmatprep.subr.bf16.mxu0 %v7358
        %7690 = vmatpush1.bf16.msra.mxu0 %v7357
        %7691 = vmatprep.subr.bf16.mxu0 %v7340
        %7692 = vmatpush1.bf16.msra.mxu0 %v7339
        %7693 = vmatprep.subr.bf16.mxu0 0
        %7694 = vmatpush2.bf16.msra.mxu0 0
        %7695 = vmatprep.subr.bf16.mxu0 0
        %7696 = vmatpush2.bf16.msra.mxu0 0
        %7697 = vmatprep.subr.bf16.mxu0 0
        %7698 = vmatpush2.bf16.msra.mxu0 0
        %7699 = vmatprep.subr.bf16.mxu0 0
        %7700 = vmatpush2.bf16.msra.mxu0 0
        %7701 = vmatprep.subr.bf16.mxu0 0
        %7702 = vmatpush2.bf16.msra.mxu0 0
        %7703 = vmatprep.subr.bf16.mxu0 0
        %7704 = vmatpush2.bf16.msra.mxu0 0
        %7705 = vmatprep.subr.bf16.mxu0 0
        %7706 = vmatpush2.bf16.msra.mxu0 0
        %7707 = vmatprep.subr.bf16.mxu0 0
        %7708 = vmatpush2.bf16.msra.mxu0 0
        %7709 = vmatprep.mubr.bf16.mxu0 0
        %7710 = vmatmul.mubr.bf16.gmra.mxu0 %v7497
        %v7711 = vpop.f32.mrf.mxu0
        %v7712 = vadd.f32 0.0, %v7711
        %v7713 = vpop.f32.mrf.mxu0
        %v7714 = vadd.f32 0.0, %v7713
        %v7715 = vpop.f32.mrf.mxu0
        %v7716 = vpop.f32.mrf.mxu0
        %7717 = vdwg.mxu0
        %7718 = vmatprep.subr.bf16.mxu0 0
        %7719 = vmatpush1.bf16.msra.mxu0 0
        %7720 = vmatprep.subr.bf16.mxu0 0
        %7721 = vmatpush1.bf16.msra.mxu0 0
        %7722 = vmatprep.subr.bf16.mxu0 0
        %7723 = vmatpush1.bf16.msra.mxu0 0
        %7724 = vmatprep.subr.bf16.mxu0 %v7528
        %7725 = vmatpush1.bf16.msra.mxu0 %v7525
        %7726 = vmatprep.subr.bf16.mxu0 %v7396
        %7727 = vmatpush1.bf16.msra.mxu0 %v7395
        %7728 = vmatprep.subr.bf16.mxu0 %v7378
        %7729 = vmatpush1.bf16.msra.mxu0 %v7377
        %7730 = vmatprep.subr.bf16.mxu0 %v7360
        %7731 = vmatpush1.bf16.msra.mxu0 %v7359
        %7732 = vmatprep.subr.bf16.mxu0 %v7342
        %7733 = vmatpush1.bf16.msra.mxu0 %v7341
        %7734 = vmatprep.subr.bf16.mxu0 0
        %7735 = vmatpush2.bf16.msra.mxu0 0
        %7736 = vmatprep.subr.bf16.mxu0 0
        %7737 = vmatpush2.bf16.msra.mxu0 0
        %7738 = vmatprep.subr.bf16.mxu0 0
        %7739 = vmatpush2.bf16.msra.mxu0 0
        %7740 = vmatprep.subr.bf16.mxu0 0
        %7741 = vmatpush2.bf16.msra.mxu0 0
        %7742 = vmatprep.subr.bf16.mxu0 0
        %7743 = vmatpush2.bf16.msra.mxu0 0
        %7744 = vmatprep.subr.bf16.mxu0 0
        %7745 = vmatpush2.bf16.msra.mxu0 0
        %7746 = vmatprep.subr.bf16.mxu0 0
        %7747 = vmatpush2.bf16.msra.mxu0 0
        %7748 = vmatprep.subr.bf16.mxu0 0
        %7749 = vmatpush2.bf16.msra.mxu0 0
        %7750 = vmatprep.mubr.bf16.mxu0 0
        %7751 = vmatmul.mubr.bf16.gmra.mxu0 %v7497
        %v7752 = vpop.f32.mrf.mxu0
        %v7753 = vadd.f32 0.0, %v7752
        %v7754 = vpop.f32.mrf.mxu0
        %v7755 = vadd.f32 0.0, %v7754
        %v7756 = vpop.f32.mrf.mxu0
        %v7757 = vpop.f32.mrf.mxu0
        %7758 = vdwg.mxu0
        %7759 = vmatprep.subr.bf16.mxu0 0
        %7760 = vmatpush1.bf16.msra.mxu0 0
        %7761 = vmatprep.subr.bf16.mxu0 0
        %7762 = vmatpush1.bf16.msra.mxu0 0
        %7763 = vmatprep.subr.bf16.mxu0 0
        %7764 = vmatpush1.bf16.msra.mxu0 0
        %7765 = vmatprep.subr.bf16.mxu0 %v7534
        %7766 = vmatpush1.bf16.msra.mxu0 %v7531
        %7767 = vmatprep.subr.bf16.mxu0 %v7398
        %7768 = vmatpush1.bf16.msra.mxu0 %v7397
        %7769 = vmatprep.subr.bf16.mxu0 %v7380
        %7770 = vmatpush1.bf16.msra.mxu0 %v7379
        %7771 = vmatprep.subr.bf16.mxu0 %v7362
        %7772 = vmatpush1.bf16.msra.mxu0 %v7361
        %7773 = vmatprep.subr.bf16.mxu0 %v7344
        %7774 = vmatpush1.bf16.msra.mxu0 %v7343
        %7775 = vmatprep.subr.bf16.mxu0 0
        %7776 = vmatpush2.bf16.msra.mxu0 0
        %7777 = vmatprep.subr.bf16.mxu0 0
        %7778 = vmatpush2.bf16.msra.mxu0 0
        %7779 = vmatprep.subr.bf16.mxu0 0
        %7780 = vmatpush2.bf16.msra.mxu0 0
        %7781 = vmatprep.subr.bf16.mxu0 0
        %7782 = vmatpush2.bf16.msra.mxu0 0
        %7783 = vmatprep.subr.bf16.mxu0 0
        %7784 = vmatpush2.bf16.msra.mxu0 0
        %7785 = vmatprep.subr.bf16.mxu0 0
        %7786 = vmatpush2.bf16.msra.mxu0 0
        %7787 = vmatprep.subr.bf16.mxu0 0
        %7788 = vmatpush2.bf16.msra.mxu0 0
        %7789 = vmatprep.subr.bf16.mxu0 0
        %7790 = vmatpush2.bf16.msra.mxu0 0
        %7791 = vmatprep.mubr.bf16.mxu0 0
        %7792 = vmatmul.mubr.bf16.gmra.mxu0 %v7497
        %v7793 = vpop.f32.mrf.mxu0
        %v7794 = vadd.f32 0.0, %v7793
        %v7795 = vpop.f32.mrf.mxu0
        %v7796 = vadd.f32 0.0, %v7795
        %v7797 = vpop.f32.mrf.mxu0
        %v7798 = vpop.f32.mrf.mxu0
        %7799 = vdwg.mxu0
        %7800 = vmatprep.subr.bf16.mxu0 0
        %7801 = vmatpush1.bf16.msra.mxu0 0
        %7802 = vmatprep.subr.bf16.mxu0 0
        %7803 = vmatpush1.bf16.msra.mxu0 0
        %7804 = vmatprep.subr.bf16.mxu0 0
        %7805 = vmatpush1.bf16.msra.mxu0 0
        %7806 = vmatprep.subr.bf16.mxu0 %v7540
        %7807 = vmatpush1.bf16.msra.mxu0 %v7537
        %7808 = vmatprep.subr.bf16.mxu0 %v7400
        %7809 = vmatpush1.bf16.msra.mxu0 %v7399
        %7810 = vmatprep.subr.bf16.mxu0 %v7382
        %7811 = vmatpush1.bf16.msra.mxu0 %v7381
        %7812 = vmatprep.subr.bf16.mxu0 %v7364
        %7813 = vmatpush1.bf16.msra.mxu0 %v7363
        %7814 = vmatprep.subr.bf16.mxu0 %v7346
        %7815 = vmatpush1.bf16.msra.mxu0 %v7345
        %7816 = vmatprep.subr.bf16.mxu0 0
        %7817 = vmatpush2.bf16.msra.mxu0 0
        %7818 = vmatprep.subr.bf16.mxu0 0
        %7819 = vmatpush2.bf16.msra.mxu0 0
        %7820 = vmatprep.subr.bf16.mxu0 0
        %7821 = vmatpush2.bf16.msra.mxu0 0
        %7822 = vmatprep.subr.bf16.mxu0 0
        %7823 = vmatpush2.bf16.msra.mxu0 0
        %7824 = vmatprep.subr.bf16.mxu0 0
        %7825 = vmatpush2.bf16.msra.mxu0 0
        %7826 = vmatprep.subr.bf16.mxu0 0
        %7827 = vmatpush2.bf16.msra.mxu0 0
        %7828 = vmatprep.subr.bf16.mxu0 0
        %7829 = vmatpush2.bf16.msra.mxu0 0
        %7830 = vmatprep.subr.bf16.mxu0 0
        %7831 = vmatpush2.bf16.msra.mxu0 0
        %7832 = vmatprep.mubr.bf16.mxu0 0
        %7833 = vmatmul.mubr.bf16.gmra.mxu0 %v7497
        %v7834 = vpop.f32.mrf.mxu0
        %v7835 = vadd.f32 0.0, %v7834
        %v7836 = vpop.f32.mrf.mxu0
        %v7837 = vadd.f32 0.0, %v7836
        %v7838 = vpop.f32.mrf.mxu0
        %v7839 = vpop.f32.mrf.mxu0
        %7840 = vdwg.mxu0
        %7841 = vmatprep.subr.bf16.mxu0 0
        %7842 = vmatpush1.bf16.msra.mxu0 0
        %7843 = vmatprep.subr.bf16.mxu0 0
        %7844 = vmatpush1.bf16.msra.mxu0 0
        %7845 = vmatprep.subr.bf16.mxu0 0
        %7846 = vmatpush1.bf16.msra.mxu0 0
        %7847 = vmatprep.subr.bf16.mxu0 %v7546
        %7848 = vmatpush1.bf16.msra.mxu0 %v7543
        %7849 = vmatprep.subr.bf16.mxu0 %v7402
        %7850 = vmatpush1.bf16.msra.mxu0 %v7401
        %7851 = vmatprep.subr.bf16.mxu0 %v7384
        %7852 = vmatpush1.bf16.msra.mxu0 %v7383
        %7853 = vmatprep.subr.bf16.mxu0 %v7366
        %7854 = vmatpush1.bf16.msra.mxu0 %v7365
        %7855 = vmatprep.subr.bf16.mxu0 %v7348
        %7856 = vmatpush1.bf16.msra.mxu0 %v7347
        %7857 = vmatprep.subr.bf16.mxu0 0
        %7858 = vmatpush2.bf16.msra.mxu0 0
        %7859 = vmatprep.subr.bf16.mxu0 0
        %7860 = vmatpush2.bf16.msra.mxu0 0
        %7861 = vmatprep.subr.bf16.mxu0 0
        %7862 = vmatpush2.bf16.msra.mxu0 0
        %7863 = vmatprep.subr.bf16.mxu0 0
        %7864 = vmatpush2.bf16.msra.mxu0 0
        %7865 = vmatprep.subr.bf16.mxu0 0
        %7866 = vmatpush2.bf16.msra.mxu0 0
        %7867 = vmatprep.subr.bf16.mxu0 0
        %7868 = vmatpush2.bf16.msra.mxu0 0
        %7869 = vmatprep.subr.bf16.mxu0 0
        %7870 = vmatpush2.bf16.msra.mxu0 0
        %7871 = vmatprep.subr.bf16.mxu0 0
        %7872 = vmatpush2.bf16.msra.mxu0 0
        %7873 = vmatprep.mubr.bf16.mxu0 0
        %7874 = vmatmul.mubr.bf16.gmra.mxu0 %v7497
        %v7875 = vpop.f32.mrf.mxu0
        %v7876 = vadd.f32 0.0, %v7875
        %v7877 = vpop.f32.mrf.mxu0
        %v7878 = vadd.f32 0.0, %v7877
        %v7879 = vpop.f32.mrf.mxu0
        %v7880 = vpop.f32.mrf.mxu0
        %7881 = vdwg.mxu0
        %7882 = vmatprep.subr.bf16.mxu0 0
        %7883 = vmatpush1.bf16.msra.mxu0 0
        %7884 = vmatprep.subr.bf16.mxu0 0
        %7885 = vmatpush1.bf16.msra.mxu0 0
        %7886 = vmatprep.subr.bf16.mxu0 0
        %7887 = vmatpush1.bf16.msra.mxu0 0
        %7888 = vmatprep.subr.bf16.mxu0 %v7552
        %7889 = vmatpush1.bf16.msra.mxu0 %v7549
        %7890 = vmatprep.subr.bf16.mxu0 %v7404
        %7891 = vmatpush1.bf16.msra.mxu0 %v7403
        %7892 = vmatprep.subr.bf16.mxu0 %v7386
        %7893 = vmatpush1.bf16.msra.mxu0 %v7385
        %7894 = vmatprep.subr.bf16.mxu0 %v7368
        %7895 = vmatpush1.bf16.msra.mxu0 %v7367
        %7896 = vmatprep.subr.bf16.mxu0 %v7350
        %7897 = vmatpush1.bf16.msra.mxu0 %v7349
        %7898 = vmatprep.subr.bf16.mxu0 0
        %7899 = vmatpush2.bf16.msra.mxu0 0
        %7900 = vmatprep.subr.bf16.mxu0 0
        %7901 = vmatpush2.bf16.msra.mxu0 0
        %7902 = vmatprep.subr.bf16.mxu0 0
        %7903 = vmatpush2.bf16.msra.mxu0 0
        %7904 = vmatprep.subr.bf16.mxu0 0
        %7905 = vmatpush2.bf16.msra.mxu0 0
        %7906 = vmatprep.subr.bf16.mxu0 0
        %7907 = vmatpush2.bf16.msra.mxu0 0
        %7908 = vmatprep.subr.bf16.mxu0 0
        %7909 = vmatpush2.bf16.msra.mxu0 0
        %7910 = vmatprep.subr.bf16.mxu0 0
        %7911 = vmatpush2.bf16.msra.mxu0 0
        %7912 = vmatprep.subr.bf16.mxu0 0
        %7913 = vmatpush2.bf16.msra.mxu0 0
        %7914 = vmatprep.mubr.bf16.mxu0 0
        %7915 = vmatmul.mubr.bf16.gmra.mxu0 %v7497
        %v7916 = vpop.f32.mrf.mxu0
        %v7917 = vadd.f32 0.0, %v7916
        %v7918 = vpop.f32.mrf.mxu0
        %v7919 = vadd.f32 0.0, %v7918
        %v7920 = vpop.f32.mrf.mxu0
        %v7921 = vpop.f32.mrf.mxu0
        %7922 = vdwg.mxu0
        %vm7923 = vcmp.gt.f32.partialorder %v7589, 0.0
        %vm7924 = vcmp.gt.f32.partialorder %v7591, 0.0
        %vm7925 = vcmp.gt.f32.partialorder %v7630, 0.0
        %vm7926 = vcmp.gt.f32.partialorder %v7632, 0.0
        %vm7927 = vcmp.gt.f32.partialorder %v7671, 0.0
        %vm7928 = vcmp.gt.f32.partialorder %v7673, 0.0
        %vm7929 = vcmp.gt.f32.partialorder %v7712, 0.0
        %vm7930 = vcmp.gt.f32.partialorder %v7714, 0.0
        %vm7931 = vcmp.gt.f32.partialorder %v7753, 0.0
        %vm7932 = vcmp.gt.f32.partialorder %v7755, 0.0
        %vm7933 = vcmp.gt.f32.partialorder %v7794, 0.0
        %vm7934 = vcmp.gt.f32.partialorder %v7796, 0.0
        %vm7935 = vcmp.gt.f32.partialorder %v7835, 0.0
        %vm7936 = vcmp.gt.f32.partialorder %v7837, 0.0
        %vm7937 = vcmp.gt.f32.partialorder %v7876, 0.0
        %vm7938 = vcmp.gt.f32.partialorder %v7878, 0.0
        %vm7939 = vcmp.gt.f32.partialorder %v7917, 0.0
        %vm7940 = vcmp.gt.f32.partialorder %v7919, 0.0
        %v7941 = vmul.f32 %v7589, 0.2
        %v7942 = vmul.f32 %v7591, 0.2
        %v7943 = vmul.f32 %v7630, 0.2
        %v7944 = vmul.f32 %v7632, 0.2
        %v7945 = vmul.f32 %v7671, 0.2
        %v7946 = vmul.f32 %v7673, 0.2
        %v7947 = vmul.f32 %v7712, 0.2
        %v7948 = vmul.f32 %v7714, 0.2
        %v7949 = vmul.f32 %v7753, 0.2
        %v7950 = vmul.f32 %v7755, 0.2
        %v7951 = vmul.f32 %v7794, 0.2
        %v7952 = vmul.f32 %v7796, 0.2
        %v7953 = vmul.f32 %v7835, 0.2
        %v7954 = vmul.f32 %v7837, 0.2
        %v7955 = vmul.f32 %v7876, 0.2
        %v7956 = vmul.f32 %v7878, 0.2
        %v7957 = vmul.f32 %v7917, 0.2
        %v7958 = vmul.f32 %v7919, 0.2
        %v7959 = vsel %vm7923, %v7589, %v7941
        %v7960 = vsel %vm7924, %v7591, %v7942
        %v7961 = vsel %vm7925, %v7630, %v7943
        %v7962 = vsel %vm7926, %v7632, %v7944
        %v7963 = vsel %vm7927, %v7671, %v7945
        %v7964 = vsel %vm7928, %v7673, %v7946
        %v7965 = vsel %vm7929, %v7712, %v7947
        %v7966 = vsel %vm7930, %v7714, %v7948
        %v7967 = vsel %vm7931, %v7753, %v7949
        %v7968 = vsel %vm7932, %v7755, %v7950
        %v7969 = vsel %vm7933, %v7794, %v7951
        %v7970 = vsel %vm7934, %v7796, %v7952
        %v7971 = vsel %vm7935, %v7835, %v7953
        %v7972 = vsel %vm7936, %v7837, %v7954
        %v7973 = vsel %vm7937, %v7876, %v7955
        %v7974 = vsel %vm7938, %v7878, %v7956
        %v7975 = vsel %vm7939, %v7917, %v7957
        %v7976 = vsel %vm7940, %v7919, %v7958
        %v7977 = vpack.c.bf16 %v7959, %v7959
        %v7978 = vpack.c.bf16 %v7960, %v7960
        %v7979 = vpack.c.bf16 %v7961, %v7961
        %v7980 = vpack.c.bf16 %v7962, %v7962
        %v7981 = vpack.c.bf16 %v7963, %v7963
        %v7982 = vpack.c.bf16 %v7964, %v7964
        %v7983 = vpack.c.bf16 %v7965, %v7965
        %v7984 = vpack.c.bf16 %v7966, %v7966
        %v7985 = vpack.c.bf16 %v7967, %v7967
        %v7986 = vpack.c.bf16 %v7968, %v7968
        %v7987 = vpack.c.bf16 %v7969, %v7969
        %v7988 = vpack.c.bf16 %v7970, %v7970
        %v7989 = vpack.c.bf16 %v7971, %v7971
        %v7990 = vpack.c.bf16 %v7972, %v7972
        %v7991 = vpack.c.bf16 %v7973, %v7973
        %v7992 = vpack.c.bf16 %v7974, %v7974
        %v7993 = vpack.c.bf16 %v7975, %v7975
        %v7994 = vpack.c.bf16 %v7976, %v7976
        %v7995 = vld [vmem:[%s4] sm:$0xff]
        %v7996 = vld [vmem:[%s4 + $0x8] sm:$0xff]
        %v7997 = vld [vmem:[%s4 + $0x10] sm:$0xff]
        %v7998 = vld [vmem:[%s4 + $0x18] sm:$0xff]
        %v7999 = vld [vmem:[%s4 + $0x20] sm:$0xff]
        %v8000 = vld [vmem:[%s4 + $0x28] sm:$0xff]
        %v8001 = vld [vmem:[%s4 + $0x30] sm:$0xff]
        %v8002 = vld [vmem:[%s4 + $0x38] sm:$0xff]
        %v8003 = vld [vmem:[%s4 + $0x40] sm:$0xff]
        %v8004 = vld [vmem:[%s4 + $0x48] sm:$0xff]
        %v8005 = vld [vmem:[%s4 + $0x50] sm:$0xff]
        %v8006 = vld [vmem:[%s4 + $0x58] sm:$0xff]
        %v8007 = vld [vmem:[%s4 + $0x60] sm:$0xff]
        %v8008 = vld [vmem:[%s4 + $0x68] sm:$0xff]
        %v8009 = vld [vmem:[%s4 + $0x70] sm:$0xff]
        %v8010 = vld [vmem:[%s4 + $0x78] sm:$0xff]
        %v8011 = vld [vmem:[%s4 + $0x80] sm:$0xff]
        %v8012 = vld [vmem:[%s4 + $0x88] sm:$0xff]
        %v8013 = vld [vmem:[%s4 + $0x90] sm:$0xff]
        %v8014 = vld [vmem:[%s4 + $0x98] sm:$0xff]
        %v8015 = vld [vmem:[%s4 + $0xa0] sm:$0xff]
        %v8016 = vld [vmem:[%s4 + $0xa8] sm:$0xff]
        %v8017 = vld [vmem:[%s4 + $0xb0] sm:$0xff]
        %v8018 = vld [vmem:[%s4 + $0xb8] sm:$0xff]
        %v8019 = vld [vmem:[%s4 + $0xc0] sm:$0xff]
        %v8020 = vld [vmem:[%s4 + $0xc8] sm:$0xff]
        %v8021 = vld [vmem:[%s4 + $0xd0] sm:$0xff]
        %v8022 = vld [vmem:[%s4 + $0xd8] sm:$0xff]
        %v8023 = vld [vmem:[%s4 + $0xe0] sm:$0xff]
        %v8024 = vld [vmem:[%s4 + $0xe8] sm:$0xff]
        %v8025 = vld [vmem:[%s4 + $0xf0] sm:$0xff]
        %v8026 = vld [vmem:[%s4 + $0xf8] sm:$0xff]
        %v8027 = vld [vmem:[%s4 + $0x100] sm:$0xff]
        %v8028 = vld [vmem:[%s4 + $0x108] sm:$0xff]
        %v8029 = vld [vmem:[%s4 + $0x110] sm:$0xff]
        %v8030 = vld [vmem:[%s4 + $0x118] sm:$0xff]
        %v8031 = vld [vmem:[%s4 + $0x120] sm:$0xff]
        %v8032 = vld [vmem:[%s4 + $0x128] sm:$0xff]
        %v8033 = vld [vmem:[%s4 + $0x130] sm:$0xff]
        %v8034 = vld [vmem:[%s4 + $0x138] sm:$0xff]
        %v8035 = vld [vmem:[%s4 + $0x140] sm:$0xff]
        %v8036 = vld [vmem:[%s4 + $0x148] sm:$0xff]
        %v8037 = vld [vmem:[%s4 + $0x150] sm:$0xff]
        %v8038 = vld [vmem:[%s4 + $0x158] sm:$0xff]
        %v8039 = vld [vmem:[%s4 + $0x160] sm:$0xff]
        %v8040 = vld [vmem:[%s4 + $0x168] sm:$0xff]
        %v8041 = vld [vmem:[%s4 + $0x170] sm:$0xff]
        %v8042 = vld [vmem:[%s4 + $0x178] sm:$0xff]
        %v8043 = vld [vmem:[%s4 + $0x180] sm:$0xff]
        %v8044 = vld [vmem:[%s4 + $0x188] sm:$0xff]
        %v8045 = vld [vmem:[%s4 + $0x190] sm:$0xff]
        %v8046 = vld [vmem:[%s4 + $0x198] sm:$0xff]
        %v8047 = vld [vmem:[%s4 + $0x1a0] sm:$0xff]
        %v8048 = vld [vmem:[%s4 + $0x1a8] sm:$0xff]
        %v8049 = vld [vmem:[%s4 + $0x1b0] sm:$0xff]
        %v8050 = vld [vmem:[%s4 + $0x1b8] sm:$0xff]
        %v8051 = vld [vmem:[%s4 + $0x1c0] sm:$0xff]
        %v8052 = vld [vmem:[%s4 + $0x1c8] sm:$0xff]
        %v8053 = vld [vmem:[%s4 + $0x1d0] sm:$0xff]
        %v8054 = vld [vmem:[%s4 + $0x1d8] sm:$0xff]
        %v8055 = vld [vmem:[%s4 + $0x1e0] sm:$0xff]
        %v8056 = vld [vmem:[%s4 + $0x1e8] sm:$0xff]
        %v8057 = vld [vmem:[%s4 + $0x1f0] sm:$0xff]
        %v8058 = vld [vmem:[%s4 + $0x1f8] sm:$0xff]
        %v8059 = vld [vmem:[%s4 + $0x200] sm:$0xff]
        %v8060 = vld [vmem:[%s4 + $0x208] sm:$0xff]
        %v8061 = vld [vmem:[%s4 + $0x210] sm:$0xff]
        %v8062 = vld [vmem:[%s4 + $0x218] sm:$0xff]
        %v8063 = vld [vmem:[%s4 + $0x220] sm:$0xff]
        %v8064 = vld [vmem:[%s4 + $0x228] sm:$0xff]
        %v8065 = vld [vmem:[%s4 + $0x230] sm:$0xff]
        %v8066 = vld [vmem:[%s4 + $0x238] sm:$0xff]
        %v8067 = vld [vmem:[%s4 + $0x240] sm:$0xff]
        %v8068 = vld [vmem:[%s4 + $0x248] sm:$0xff]
        %v8069 = vld [vmem:[%s4 + $0x250] sm:$0xff]
        %v8070 = vld [vmem:[%s4 + $0x258] sm:$0xff]
        %v8071 = vld [vmem:[%s4 + $0x260] sm:$0xff]
        %v8072 = vld [vmem:[%s4 + $0x268] sm:$0xff]
        %v8073 = vld [vmem:[%s4 + $0x270] sm:$0xff]
        %v8074 = vld [vmem:[%s4 + $0x278] sm:$0xff]
        %v8075 = vld [vmem:[%s4 + $0x280] sm:$0xff]
        %v8076 = vld [vmem:[%s4 + $0x288] sm:$0xff]
        %v8077 = vld [vmem:[%s4 + $0x290] sm:$0xff]
        %v8078 = vld [vmem:[%s4 + $0x298] sm:$0xff]
        %v8079 = vld [vmem:[%s4 + $0x2a0] sm:$0xff]
        %v8080 = vld [vmem:[%s4 + $0x2a8] sm:$0xff]
        %v8081 = vld [vmem:[%s4 + $0x2b0] sm:$0xff]
        %v8082 = vld [vmem:[%s4 + $0x2b8] sm:$0xff]
        %v8083 = vld [vmem:[%s4 + $0x2c0] sm:$0xff]
        %v8084 = vld [vmem:[%s4 + $0x2c8] sm:$0xff]
        %v8085 = vld [vmem:[%s4 + $0x2d0] sm:$0xff]
        %v8086 = vld [vmem:[%s4 + $0x2d8] sm:$0xff]
        %v8087 = vld [vmem:[%s4 + $0x2e0] sm:$0xff]
        %v8088 = vld [vmem:[%s4 + $0x2e8] sm:$0xff]
        %v8089 = vld [vmem:[%s4 + $0x2f0] sm:$0xff]
        %v8090 = vld [vmem:[%s4 + $0x2f8] sm:$0xff]
        %v8091 = vld [vmem:[%s4 + $0x300] sm:$0xff]
        %v8092 = vld [vmem:[%s4 + $0x308] sm:$0xff]
        %v8093 = vld [vmem:[%s4 + $0x310] sm:$0xff]
        %v8094 = vld [vmem:[%s4 + $0x318] sm:$0xff]
        %v8095 = vld [vmem:[%s4 + $0x320] sm:$0xff]
        %v8096 = vld [vmem:[%s4 + $0x328] sm:$0xff]
        %v8097 = vld [vmem:[%s4 + $0x330] sm:$0xff]
        %v8098 = vld [vmem:[%s4 + $0x338] sm:$0xff]
        %v8099 = vld [vmem:[%s4 + $0x340] sm:$0xff]
        %v8100 = vld [vmem:[%s4 + $0x348] sm:$0xff]
        %v8101 = vld [vmem:[%s4 + $0x350] sm:$0xff]
        %v8102 = vld [vmem:[%s4 + $0x358] sm:$0xff]
        %v8103 = vld [vmem:[%s4 + $0x360] sm:$0xff]
        %v8104 = vld [vmem:[%s4 + $0x368] sm:$0xff]
        %v8105 = vld [vmem:[%s4 + $0x370] sm:$0xff]
        %v8106 = vld [vmem:[%s4 + $0x378] sm:$0xff]
        %v8107 = vld [vmem:[%s4 + $0x380] sm:$0xff]
        %v8108 = vld [vmem:[%s4 + $0x388] sm:$0xff]
        %v8109 = vld [vmem:[%s4 + $0x390] sm:$0xff]
        %v8110 = vld [vmem:[%s4 + $0x398] sm:$0xff]
        %v8111 = vld [vmem:[%s4 + $0x3a0] sm:$0xff]
        %v8112 = vld [vmem:[%s4 + $0x3a8] sm:$0xff]
        %v8113 = vld [vmem:[%s4 + $0x3b0] sm:$0xff]
        %v8114 = vld [vmem:[%s4 + $0x3b8] sm:$0xff]
        %v8115 = vld [vmem:[%s4 + $0x3c0] sm:$0xff]
        %v8116 = vld [vmem:[%s4 + $0x3c8] sm:$0xff]
        %v8117 = vld [vmem:[%s4 + $0x3d0] sm:$0xff]
        %v8118 = vld [vmem:[%s4 + $0x3d8] sm:$0xff]
        %v8119 = vld [vmem:[%s4 + $0x3e0] sm:$0xff]
        %v8120 = vld [vmem:[%s4 + $0x3e8] sm:$0xff]
        %v8121 = vld [vmem:[%s4 + $0x3f0] sm:$0xff]
        %v8122 = vld [vmem:[%s4 + $0x3f8] sm:$0xff]
        %v8123 = vld [vmem:[%s4 + $0x400] sm:$0xff]
        %v8124 = vld [vmem:[%s4 + $0x408] sm:$0xff]
        %v8125 = vld [vmem:[%s4 + $0x410] sm:$0xff]
        %v8126 = vld [vmem:[%s4 + $0x418] sm:$0xff]
        %v8127 = vld [vmem:[%s4 + $0x420] sm:$0xff]
        %v8128 = vld [vmem:[%s4 + $0x428] sm:$0xff]
        %v8129 = vld [vmem:[%s4 + $0x430] sm:$0xff]
        %v8130 = vld [vmem:[%s4 + $0x438] sm:$0xff]
        %v8131 = vld [vmem:[%s4 + $0x440] sm:$0xff]
        %v8132 = vld [vmem:[%s4 + $0x448] sm:$0xff]
        %v8133 = vld [vmem:[%s4 + $0x450] sm:$0xff]
        %v8134 = vld [vmem:[%s4 + $0x458] sm:$0xff]
        %v8135 = vld [vmem:[%s4 + $0x460] sm:$0xff]
        %v8136 = vld [vmem:[%s4 + $0x468] sm:$0xff]
        %v8137 = vld [vmem:[%s4 + $0x470] sm:$0xff]
        %v8138 = vld [vmem:[%s4 + $0x478] sm:$0xff]
        %v8139 = vld [vmem:[%s4 + $0x480] sm:$0xff]
        %v8140 = vld [vmem:[%s4 + $0x488] sm:$0xff]
        %v8141 = vld [vmem:[%s4 + $0x490] sm:$0xff]
        %v8142 = vld [vmem:[%s4 + $0x498] sm:$0xff]
        %v8143 = vld [vmem:[%s4 + $0x4a0] sm:$0xff]
        %v8144 = vld [vmem:[%s4 + $0x4a8] sm:$0xff]
        %v8145 = vld [vmem:[%s4 + $0x4b0] sm:$0xff]
        %v8146 = vld [vmem:[%s4 + $0x4b8] sm:$0xff]
        %v8147 = vld [vmem:[%s4 + $0x4c0] sm:$0xff]
        %v8148 = vld [vmem:[%s4 + $0x4c8] sm:$0xff]
        %v8149 = vld [vmem:[%s4 + $0x4d0] sm:$0xff]
        %v8150 = vld [vmem:[%s4 + $0x4d8] sm:$0xff]
        %v8151 = vld [vmem:[%s4 + $0x4e0] sm:$0xff]
        %v8152 = vld [vmem:[%s4 + $0x4e8] sm:$0xff]
        %v8153 = vld [vmem:[%s4 + $0x4f0] sm:$0xff]
        %v8154 = vld [vmem:[%s4 + $0x4f8] sm:$0xff]
        %v8155 = vld [vmem:[%s4 + $0x500] sm:$0xff]
        %v8156 = vld [vmem:[%s4 + $0x508] sm:$0xff]
        %v8157 = vld [vmem:[%s4 + $0x510] sm:$0xff]
        %v8158 = vld [vmem:[%s4 + $0x518] sm:$0xff]
        %v8159 = vld [vmem:[%s4 + $0x520] sm:$0xff]
        %v8160 = vld [vmem:[%s4 + $0x528] sm:$0xff]
        %v8161 = vld [vmem:[%s4 + $0x530] sm:$0xff]
        %v8162 = vld [vmem:[%s4 + $0x538] sm:$0xff]
        %v8163 = vld [vmem:[%s4 + $0x540] sm:$0xff]
        %v8164 = vld [vmem:[%s4 + $0x548] sm:$0xff]
        %v8165 = vld [vmem:[%s4 + $0x550] sm:$0xff]
        %v8166 = vld [vmem:[%s4 + $0x558] sm:$0xff]
        %v8167 = vld [vmem:[%s4 + $0x560] sm:$0xff]
        %v8168 = vld [vmem:[%s4 + $0x568] sm:$0xff]
        %v8169 = vld [vmem:[%s4 + $0x570] sm:$0xff]
        %v8170 = vld [vmem:[%s4 + $0x578] sm:$0xff]
        %v8171 = vld [vmem:[%s4 + $0x580] sm:$0xff]
        %v8172 = vld [vmem:[%s4 + $0x588] sm:$0xff]
        %v8173 = vld [vmem:[%s4 + $0x590] sm:$0xff]
        %v8174 = vld [vmem:[%s4 + $0x598] sm:$0xff]
        %v8175 = vld [vmem:[%s4 + $0x5a0] sm:$0xff]
        %v8176 = vld [vmem:[%s4 + $0x5a8] sm:$0xff]
        %v8177 = vld [vmem:[%s4 + $0x5b0] sm:$0xff]
        %v8178 = vld [vmem:[%s4 + $0x5b8] sm:$0xff]
        %v8179 = vld [vmem:[%s4 + $0x5c0] sm:$0xff]
        %v8180 = vld [vmem:[%s4 + $0x5c8] sm:$0xff]
        %v8181 = vld [vmem:[%s4 + $0x5d0] sm:$0xff]
        %v8182 = vld [vmem:[%s4 + $0x5d8] sm:$0xff]
        %v8183 = vld [vmem:[%s4 + $0x5e0] sm:$0xff]
        %v8184 = vld [vmem:[%s4 + $0x5e8] sm:$0xff]
        %v8185 = vld [vmem:[%s4 + $0x5f0] sm:$0xff]
        %v8186 = vld [vmem:[%s4 + $0x5f8] sm:$0xff]
        %v8187 = vld [vmem:[%s4 + $0x600] sm:$0xff]
        %v8188 = vld [vmem:[%s4 + $0x608] sm:$0xff]
        %v8189 = vld [vmem:[%s4 + $0x610] sm:$0xff]
        %v8190 = vld [vmem:[%s4 + $0x618] sm:$0xff]
        %v8191 = vld [vmem:[%s4 + $0x620] sm:$0xff]
        %v8192 = vld [vmem:[%s4 + $0x628] sm:$0xff]
        %v8193 = vld [vmem:[%s4 + $0x630] sm:$0xff]
        %v8194 = vld [vmem:[%s4 + $0x638] sm:$0xff]
        %v8195 = vld [vmem:[%s4 + $0x640] sm:$0xff]
        %v8196 = vld [vmem:[%s4 + $0x648] sm:$0xff]
        %v8197 = vld [vmem:[%s4 + $0x650] sm:$0xff]
        %v8198 = vld [vmem:[%s4 + $0x658] sm:$0xff]
        %v8199 = vld [vmem:[%s4 + $0x660] sm:$0xff]
        %v8200 = vld [vmem:[%s4 + $0x668] sm:$0xff]
        %v8201 = vld [vmem:[%s4 + $0x670] sm:$0xff]
        %v8202 = vld [vmem:[%s4 + $0x678] sm:$0xff]
        %v8203 = vld [vmem:[%s4 + $0x680] sm:$0xff]
        %v8204 = vld [vmem:[%s4 + $0x688] sm:$0xff]
        %v8205 = vld [vmem:[%s4 + $0x690] sm:$0xff]
        %v8206 = vld [vmem:[%s4 + $0x698] sm:$0xff]
        %v8207 = vld [vmem:[%s4 + $0x6a0] sm:$0xff]
        %v8208 = vld [vmem:[%s4 + $0x6a8] sm:$0xff]
        %v8209 = vld [vmem:[%s4 + $0x6b0] sm:$0xff]
        %v8210 = vld [vmem:[%s4 + $0x6b8] sm:$0xff]
        %v8211 = vld [vmem:[%s4 + $0x6c0] sm:$0xff]
        %v8212 = vld [vmem:[%s4 + $0x6c8] sm:$0xff]
        %v8213 = vld [vmem:[%s4 + $0x6d0] sm:$0xff]
        %v8214 = vld [vmem:[%s4 + $0x6d8] sm:$0xff]
        %v8215 = vld [vmem:[%s4 + $0x6e0] sm:$0xff]
        %v8216 = vld [vmem:[%s4 + $0x6e8] sm:$0xff]
        %v8217 = vld [vmem:[%s4 + $0x6f0] sm:$0xff]
        %v8218 = vld [vmem:[%s4 + $0x6f8] sm:$0xff]
        %v8219 = vld [vmem:[%s4 + $0x700] sm:$0xff]
        %v8220 = vld [vmem:[%s4 + $0x708] sm:$0xff]
        %v8221 = vld [vmem:[%s4 + $0x710] sm:$0xff]
        %v8222 = vld [vmem:[%s4 + $0x718] sm:$0xff]
        %v8223 = vld [vmem:[%s4 + $0x720] sm:$0xff]
        %v8224 = vld [vmem:[%s4 + $0x728] sm:$0xff]
        %v8225 = vld [vmem:[%s4 + $0x730] sm:$0xff]
        %v8226 = vld [vmem:[%s4 + $0x738] sm:$0xff]
        %v8227 = vld [vmem:[%s4 + $0x740] sm:$0xff]
        %v8228 = vld [vmem:[%s4 + $0x748] sm:$0xff]
        %v8229 = vld [vmem:[%s4 + $0x750] sm:$0xff]
        %v8230 = vld [vmem:[%s4 + $0x758] sm:$0xff]
        %v8231 = vld [vmem:[%s4 + $0x760] sm:$0xff]
        %v8232 = vld [vmem:[%s4 + $0x768] sm:$0xff]
        %v8233 = vld [vmem:[%s4 + $0x770] sm:$0xff]
        %v8234 = vld [vmem:[%s4 + $0x778] sm:$0xff]
        %v8235 = vld [vmem:[%s4 + $0x780] sm:$0xff]
        %v8236 = vld [vmem:[%s4 + $0x788] sm:$0xff]
        %v8237 = vld [vmem:[%s4 + $0x790] sm:$0xff]
        %v8238 = vld [vmem:[%s4 + $0x798] sm:$0xff]
        %v8239 = vld [vmem:[%s4 + $0x7a0] sm:$0xff]
        %v8240 = vld [vmem:[%s4 + $0x7a8] sm:$0xff]
        %v8241 = vld [vmem:[%s4 + $0x7b0] sm:$0xff]
        %v8242 = vld [vmem:[%s4 + $0x7b8] sm:$0xff]
        %v8243 = vld [vmem:[%s4 + $0x7c0] sm:$0xff]
        %v8244 = vld [vmem:[%s4 + $0x7c8] sm:$0xff]
        %v8245 = vld [vmem:[%s4 + $0x7d0] sm:$0xff]
        %v8246 = vld [vmem:[%s4 + $0x7d8] sm:$0xff]
        %v8247 = vld [vmem:[%s4 + $0x7e0] sm:$0xff]
        %v8248 = vld [vmem:[%s4 + $0x7e8] sm:$0xff]
        %v8249 = vld [vmem:[%s4 + $0x7f0] sm:$0xff]
        %v8250 = vld [vmem:[%s4 + $0x7f8] sm:$0xff]
        %v8251 = vld [vmem:[%s4 + $0x800] sm:$0xff]
        %v8252 = vld [vmem:[%s4 + $0x808] sm:$0xff]
        %v8253 = vld [vmem:[%s4 + $0x810] sm:$0xff]
        %v8254 = vld [vmem:[%s4 + $0x818] sm:$0xff]
        %v8255 = vld [vmem:[%s4 + $0x820] sm:$0xff]
        %v8256 = vld [vmem:[%s4 + $0x828] sm:$0xff]
        %v8257 = vld [vmem:[%s4 + $0x830] sm:$0xff]
        %v8258 = vld [vmem:[%s4 + $0x838] sm:$0xff]
        %v8259 = vld [vmem:[%s4 + $0x840] sm:$0xff]
        %v8260 = vld [vmem:[%s4 + $0x848] sm:$0xff]
        %v8261 = vld [vmem:[%s4 + $0x850] sm:$0xff]
        %v8262 = vld [vmem:[%s4 + $0x858] sm:$0xff]
        %v8263 = vld [vmem:[%s4 + $0x860] sm:$0xff]
        %v8264 = vld [vmem:[%s4 + $0x868] sm:$0xff]
        %v8265 = vld [vmem:[%s4 + $0x870] sm:$0xff]
        %v8266 = vld [vmem:[%s4 + $0x878] sm:$0xff]
        %v8267 = vld [vmem:[%s4 + $0x880] sm:$0xff]
        %v8268 = vld [vmem:[%s4 + $0x888] sm:$0xff]
        %v8269 = vld [vmem:[%s4 + $0x890] sm:$0xff]
        %v8270 = vld [vmem:[%s4 + $0x898] sm:$0xff]
        %v8271 = vld [vmem:[%s4 + $0x8a0] sm:$0xff]
        %v8272 = vld [vmem:[%s4 + $0x8a8] sm:$0xff]
        %v8273 = vld [vmem:[%s4 + $0x8b0] sm:$0xff]
        %v8274 = vld [vmem:[%s4 + $0x8b8] sm:$0xff]
        %v8275 = vld [vmem:[%s4 + $0x8c0] sm:$0xff]
        %v8276 = vld [vmem:[%s4 + $0x8c8] sm:$0xff]
        %v8277 = vld [vmem:[%s4 + $0x8d0] sm:$0xff]
        %v8278 = vld [vmem:[%s4 + $0x8d8] sm:$0xff]
        %v8279 = vld [vmem:[%s4 + $0x8e0] sm:$0xff]
        %v8280 = vld [vmem:[%s4 + $0x8e8] sm:$0xff]
        %v8281 = vld [vmem:[%s4 + $0x8f0] sm:$0xff]
        %v8282 = vld [vmem:[%s4 + $0x8f8] sm:$0xff]
        %v8571 = vunpack.c.l.b16 %v7995
        %v8572 = vunpack.c.h.b16 %v7995
        %v8573 = vunpack.c.l.b16 %v7996
        %v8574 = vunpack.c.h.b16 %v7996
        %v8575 = vunpack.c.l.b16 %v7997
        %v8576 = vunpack.c.h.b16 %v7997
        %v8577 = vunpack.c.l.b16 %v7998
        %v8578 = vunpack.c.h.b16 %v7998
        %v8579 = vunpack.c.l.b16 %v7999
        %v8580 = vunpack.c.h.b16 %v7999
        %v8581 = vunpack.c.l.b16 %v8000
        %v8582 = vunpack.c.h.b16 %v8000
        %v8583 = vunpack.c.l.b16 %v8001
        %v8584 = vunpack.c.h.b16 %v8001
        %v8585 = vunpack.c.l.b16 %v8002
        %v8586 = vunpack.c.h.b16 %v8002
        %v8587 = vunpack.c.l.b16 %v8003
        %v8588 = vunpack.c.h.b16 %v8003
        %v8589 = vunpack.c.l.b16 %v8004
        %v8590 = vunpack.c.h.b16 %v8004
        %v8591 = vunpack.c.l.b16 %v8005
        %v8592 = vunpack.c.h.b16 %v8005
        %v8593 = vunpack.c.l.b16 %v8006
        %v8594 = vunpack.c.h.b16 %v8006
        %v8595 = vunpack.c.l.b16 %v8007
        %v8596 = vunpack.c.h.b16 %v8007
        %v8597 = vunpack.c.l.b16 %v8008
        %v8598 = vunpack.c.h.b16 %v8008
        %v8599 = vunpack.c.l.b16 %v8009
        %v8600 = vunpack.c.h.b16 %v8009
        %v8601 = vunpack.c.l.b16 %v8010
        %v8602 = vunpack.c.h.b16 %v8010
        %v8603 = vunpack.c.l.b16 %v8011
        %v8604 = vunpack.c.h.b16 %v8011
        %v8605 = vunpack.c.l.b16 %v8012
        %v8606 = vunpack.c.h.b16 %v8012
        %v8607 = vunpack.c.l.b16 %v8013
        %v8608 = vunpack.c.h.b16 %v8013
        %v8609 = vunpack.c.l.b16 %v8014
        %v8610 = vunpack.c.h.b16 %v8014
        %v8611 = vunpack.c.l.b16 %v8015
        %v8612 = vunpack.c.h.b16 %v8015
        %v8613 = vunpack.c.l.b16 %v8016
        %v8614 = vunpack.c.h.b16 %v8016
        %v8615 = vunpack.c.l.b16 %v8017
        %v8616 = vunpack.c.h.b16 %v8017
        %v8617 = vunpack.c.l.b16 %v8018
        %v8618 = vunpack.c.h.b16 %v8018
        %v8619 = vunpack.c.l.b16 %v8019
        %v8620 = vunpack.c.h.b16 %v8019
        %v8621 = vunpack.c.l.b16 %v8020
        %v8622 = vunpack.c.h.b16 %v8020
        %v8623 = vunpack.c.l.b16 %v8021
        %v8624 = vunpack.c.h.b16 %v8021
        %v8625 = vunpack.c.l.b16 %v8022
        %v8626 = vunpack.c.h.b16 %v8022
        %v8627 = vunpack.c.l.b16 %v8023
        %v8628 = vunpack.c.h.b16 %v8023
        %v8629 = vunpack.c.l.b16 %v8024
        %v8630 = vunpack.c.h.b16 %v8024
        %v8631 = vunpack.c.l.b16 %v8025
        %v8632 = vunpack.c.h.b16 %v8025
        %v8633 = vunpack.c.l.b16 %v8026
        %v8634 = vunpack.c.h.b16 %v8026
        %v8635 = vunpack.c.l.b16 %v8027
        %v8636 = vunpack.c.h.b16 %v8027
        %v8637 = vunpack.c.l.b16 %v8028
        %v8638 = vunpack.c.h.b16 %v8028
        %v8639 = vunpack.c.l.b16 %v8029
        %v8640 = vunpack.c.h.b16 %v8029
        %v8641 = vunpack.c.l.b16 %v8030
        %v8642 = vunpack.c.h.b16 %v8030
        %v8643 = vunpack.c.l.b16 %v8031
        %v8644 = vunpack.c.h.b16 %v8031
        %v8645 = vunpack.c.l.b16 %v8032
        %v8646 = vunpack.c.h.b16 %v8032
        %v8647 = vunpack.c.l.b16 %v8033
        %v8648 = vunpack.c.h.b16 %v8033
        %v8649 = vunpack.c.l.b16 %v8034
        %v8650 = vunpack.c.h.b16 %v8034
        %v8651 = vunpack.c.l.b16 %v8035
        %v8652 = vunpack.c.h.b16 %v8035
        %v8653 = vunpack.c.l.b16 %v8036
        %v8654 = vunpack.c.h.b16 %v8036
        %v8655 = vunpack.c.l.b16 %v8037
        %v8656 = vunpack.c.h.b16 %v8037
        %v8657 = vunpack.c.l.b16 %v8038
        %v8658 = vunpack.c.h.b16 %v8038
        %v8659 = vunpack.c.l.b16 %v8039
        %v8660 = vunpack.c.h.b16 %v8039
        %v8661 = vunpack.c.l.b16 %v8040
        %v8662 = vunpack.c.h.b16 %v8040
        %v8663 = vunpack.c.l.b16 %v8041
        %v8664 = vunpack.c.h.b16 %v8041
        %v8665 = vunpack.c.l.b16 %v8042
        %v8666 = vunpack.c.h.b16 %v8042
        %v8667 = vunpack.c.l.b16 %v8043
        %v8668 = vunpack.c.h.b16 %v8043
        %v8669 = vunpack.c.l.b16 %v8044
        %v8670 = vunpack.c.h.b16 %v8044
        %v8671 = vunpack.c.l.b16 %v8045
        %v8672 = vunpack.c.h.b16 %v8045
        %v8673 = vunpack.c.l.b16 %v8046
        %v8674 = vunpack.c.h.b16 %v8046
        %v8675 = vunpack.c.l.b16 %v8047
        %v8676 = vunpack.c.h.b16 %v8047
        %v8677 = vunpack.c.l.b16 %v8048
        %v8678 = vunpack.c.h.b16 %v8048
        %v8679 = vunpack.c.l.b16 %v8049
        %v8680 = vunpack.c.h.b16 %v8049
        %v8681 = vunpack.c.l.b16 %v8050
        %v8682 = vunpack.c.h.b16 %v8050
        %v8683 = vunpack.c.l.b16 %v8051
        %v8684 = vunpack.c.h.b16 %v8051
        %v8685 = vunpack.c.l.b16 %v8052
        %v8686 = vunpack.c.h.b16 %v8052
        %v8687 = vunpack.c.l.b16 %v8053
        %v8688 = vunpack.c.h.b16 %v8053
        %v8689 = vunpack.c.l.b16 %v8054
        %v8690 = vunpack.c.h.b16 %v8054
        %v8691 = vunpack.c.l.b16 %v8055
        %v8692 = vunpack.c.h.b16 %v8055
        %v8693 = vunpack.c.l.b16 %v8056
        %v8694 = vunpack.c.h.b16 %v8056
        %v8695 = vunpack.c.l.b16 %v8057
        %v8696 = vunpack.c.h.b16 %v8057
        %v8697 = vunpack.c.l.b16 %v8058
        %v8698 = vunpack.c.h.b16 %v8058
        %v8699 = vunpack.c.l.b16 %v8059
        %v8700 = vunpack.c.h.b16 %v8059
        %v8701 = vunpack.c.l.b16 %v8060
        %v8702 = vunpack.c.h.b16 %v8060
        %v8703 = vunpack.c.l.b16 %v8061
        %v8704 = vunpack.c.h.b16 %v8061
        %v8705 = vunpack.c.l.b16 %v8062
        %v8706 = vunpack.c.h.b16 %v8062
        %v8707 = vunpack.c.l.b16 %v8063
        %v8708 = vunpack.c.h.b16 %v8063
        %v8709 = vunpack.c.l.b16 %v8064
        %v8710 = vunpack.c.h.b16 %v8064
        %v8711 = vunpack.c.l.b16 %v8065
        %v8712 = vunpack.c.h.b16 %v8065
        %v8713 = vunpack.c.l.b16 %v8066
        %v8714 = vunpack.c.h.b16 %v8066
        %v8715 = vunpack.c.l.b16 %v8067
        %v8716 = vunpack.c.h.b16 %v8067
        %v8717 = vunpack.c.l.b16 %v8068
        %v8718 = vunpack.c.h.b16 %v8068
        %v8719 = vunpack.c.l.b16 %v8069
        %v8720 = vunpack.c.h.b16 %v8069
        %v8721 = vunpack.c.l.b16 %v8070
        %v8722 = vunpack.c.h.b16 %v8070
        %v8723 = vunpack.c.l.b16 %v8071
        %v8724 = vunpack.c.h.b16 %v8071
        %v8725 = vunpack.c.l.b16 %v8072
        %v8726 = vunpack.c.h.b16 %v8072
        %v8727 = vunpack.c.l.b16 %v8073
        %v8728 = vunpack.c.h.b16 %v8073
        %v8729 = vunpack.c.l.b16 %v8074
        %v8730 = vunpack.c.h.b16 %v8074
        %v8731 = vunpack.c.l.b16 %v8075
        %v8732 = vunpack.c.h.b16 %v8075
        %v8733 = vunpack.c.l.b16 %v8076
        %v8734 = vunpack.c.h.b16 %v8076
        %v8735 = vunpack.c.l.b16 %v8077
        %v8736 = vunpack.c.h.b16 %v8077
        %v8737 = vunpack.c.l.b16 %v8078
        %v8738 = vunpack.c.h.b16 %v8078
        %v8739 = vunpack.c.l.b16 %v8079
        %v8740 = vunpack.c.h.b16 %v8079
        %v8741 = vunpack.c.l.b16 %v8080
        %v8742 = vunpack.c.h.b16 %v8080
        %v8743 = vunpack.c.l.b16 %v8081
        %v8744 = vunpack.c.h.b16 %v8081
        %v8745 = vunpack.c.l.b16 %v8082
        %v8746 = vunpack.c.h.b16 %v8082
        %v8747 = vunpack.c.l.b16 %v8083
        %v8748 = vunpack.c.h.b16 %v8083
        %v8749 = vunpack.c.l.b16 %v8084
        %v8750 = vunpack.c.h.b16 %v8084
        %v8751 = vunpack.c.l.b16 %v8085
        %v8752 = vunpack.c.h.b16 %v8085
        %v8753 = vunpack.c.l.b16 %v8086
        %v8754 = vunpack.c.h.b16 %v8086
        %v8755 = vunpack.c.l.b16 %v8087
        %v8756 = vunpack.c.h.b16 %v8087
        %v8757 = vunpack.c.l.b16 %v8088
        %v8758 = vunpack.c.h.b16 %v8088
        %v8759 = vunpack.c.l.b16 %v8089
        %v8760 = vunpack.c.h.b16 %v8089
        %v8761 = vunpack.c.l.b16 %v8090
        %v8762 = vunpack.c.h.b16 %v8090
        %v8763 = vunpack.c.l.b16 %v8091
        %v8764 = vunpack.c.h.b16 %v8091
        %v8765 = vunpack.c.l.b16 %v8092
        %v8766 = vunpack.c.h.b16 %v8092
        %v8767 = vunpack.c.l.b16 %v8093
        %v8768 = vunpack.c.h.b16 %v8093
        %v8769 = vunpack.c.l.b16 %v8094
        %v8770 = vunpack.c.h.b16 %v8094
        %v8771 = vunpack.c.l.b16 %v8095
        %v8772 = vunpack.c.h.b16 %v8095
        %v8773 = vunpack.c.l.b16 %v8096
        %v8774 = vunpack.c.h.b16 %v8096
        %v8775 = vunpack.c.l.b16 %v8097
        %v8776 = vunpack.c.h.b16 %v8097
        %v8777 = vunpack.c.l.b16 %v8098
        %v8778 = vunpack.c.h.b16 %v8098
        %v8779 = vunpack.c.l.b16 %v8099
        %v8780 = vunpack.c.h.b16 %v8099
        %v8781 = vunpack.c.l.b16 %v8100
        %v8782 = vunpack.c.h.b16 %v8100
        %v8783 = vunpack.c.l.b16 %v8101
        %v8784 = vunpack.c.h.b16 %v8101
        %v8785 = vunpack.c.l.b16 %v8102
        %v8786 = vunpack.c.h.b16 %v8102
        %v8787 = vunpack.c.l.b16 %v8103
        %v8788 = vunpack.c.h.b16 %v8103
        %v8789 = vunpack.c.l.b16 %v8104
        %v8790 = vunpack.c.h.b16 %v8104
        %v8791 = vunpack.c.l.b16 %v8105
        %v8792 = vunpack.c.h.b16 %v8105
        %v8793 = vunpack.c.l.b16 %v8106
        %v8794 = vunpack.c.h.b16 %v8106
        %v8795 = vunpack.c.l.b16 %v8107
        %v8796 = vunpack.c.h.b16 %v8107
        %v8797 = vunpack.c.l.b16 %v8108
        %v8798 = vunpack.c.h.b16 %v8108
        %v8799 = vunpack.c.l.b16 %v8109
        %v8800 = vunpack.c.h.b16 %v8109
        %v8801 = vunpack.c.l.b16 %v8110
        %v8802 = vunpack.c.h.b16 %v8110
        %v8803 = vunpack.c.l.b16 %v8111
        %v8804 = vunpack.c.h.b16 %v8111
        %v8805 = vunpack.c.l.b16 %v8112
        %v8806 = vunpack.c.h.b16 %v8112
        %v8807 = vunpack.c.l.b16 %v8113
        %v8808 = vunpack.c.h.b16 %v8113
        %v8809 = vunpack.c.l.b16 %v8114
        %v8810 = vunpack.c.h.b16 %v8114
        %v8811 = vunpack.c.l.b16 %v8115
        %v8812 = vunpack.c.h.b16 %v8115
        %v8813 = vunpack.c.l.b16 %v8116
        %v8814 = vunpack.c.h.b16 %v8116
        %v8815 = vunpack.c.l.b16 %v8117
        %v8816 = vunpack.c.h.b16 %v8117
        %v8817 = vunpack.c.l.b16 %v8118
        %v8818 = vunpack.c.h.b16 %v8118
        %v8819 = vunpack.c.l.b16 %v8119
        %v8820 = vunpack.c.h.b16 %v8119
        %v8821 = vunpack.c.l.b16 %v8120
        %v8822 = vunpack.c.h.b16 %v8120
        %v8823 = vunpack.c.l.b16 %v8121
        %v8824 = vunpack.c.h.b16 %v8121
        %v8825 = vunpack.c.l.b16 %v8122
        %v8826 = vunpack.c.h.b16 %v8122
        %v8827 = vunpack.c.l.b16 %v8123
        %v8828 = vunpack.c.h.b16 %v8123
        %v8829 = vunpack.c.l.b16 %v8124
        %v8830 = vunpack.c.h.b16 %v8124
        %v8831 = vunpack.c.l.b16 %v8125
        %v8832 = vunpack.c.h.b16 %v8125
        %v8833 = vunpack.c.l.b16 %v8126
        %v8834 = vunpack.c.h.b16 %v8126
        %v8835 = vunpack.c.l.b16 %v8127
        %v8836 = vunpack.c.h.b16 %v8127
        %v8837 = vunpack.c.l.b16 %v8128
        %v8838 = vunpack.c.h.b16 %v8128
        %v8839 = vunpack.c.l.b16 %v8129
        %v8840 = vunpack.c.h.b16 %v8129
        %v8841 = vunpack.c.l.b16 %v8130
        %v8842 = vunpack.c.h.b16 %v8130
        %v8843 = vunpack.c.l.b16 %v8131
        %v8844 = vunpack.c.h.b16 %v8131
        %v8845 = vunpack.c.l.b16 %v8132
        %v8846 = vunpack.c.h.b16 %v8132
        %v8847 = vunpack.c.l.b16 %v8133
        %v8848 = vunpack.c.h.b16 %v8133
        %v8849 = vunpack.c.l.b16 %v8134
        %v8850 = vunpack.c.h.b16 %v8134
        %v8851 = vunpack.c.l.b16 %v8135
        %v8852 = vunpack.c.h.b16 %v8135
        %v8853 = vunpack.c.l.b16 %v8136
        %v8854 = vunpack.c.h.b16 %v8136
        %v8855 = vunpack.c.l.b16 %v8137
        %v8856 = vunpack.c.h.b16 %v8137
        %v8857 = vunpack.c.l.b16 %v8138
        %v8858 = vunpack.c.h.b16 %v8138
        %v8859 = vunpack.c.l.b16 %v8139
        %v8860 = vunpack.c.h.b16 %v8139
        %v8861 = vunpack.c.l.b16 %v8140
        %v8862 = vunpack.c.h.b16 %v8140
        %v8863 = vunpack.c.l.b16 %v8141
        %v8864 = vunpack.c.h.b16 %v8141
        %v8865 = vunpack.c.l.b16 %v8142
        %v8866 = vunpack.c.h.b16 %v8142
        %v8867 = vunpack.c.l.b16 %v8143
        %v8868 = vunpack.c.h.b16 %v8143
        %v8869 = vunpack.c.l.b16 %v8144
        %v8870 = vunpack.c.h.b16 %v8144
        %v8871 = vunpack.c.l.b16 %v8145
        %v8872 = vunpack.c.h.b16 %v8145
        %v8873 = vunpack.c.l.b16 %v8146
        %v8874 = vunpack.c.h.b16 %v8146
        %v8875 = vunpack.c.l.b16 %v8147
        %v8876 = vunpack.c.h.b16 %v8147
        %v8877 = vunpack.c.l.b16 %v8148
        %v8878 = vunpack.c.h.b16 %v8148
        %v8879 = vunpack.c.l.b16 %v8149
        %v8880 = vunpack.c.h.b16 %v8149
        %v8881 = vunpack.c.l.b16 %v8150
        %v8882 = vunpack.c.h.b16 %v8150
        %v8883 = vunpack.c.l.b16 %v8151
        %v8884 = vunpack.c.h.b16 %v8151
        %v8885 = vunpack.c.l.b16 %v8152
        %v8886 = vunpack.c.h.b16 %v8152
        %v8887 = vunpack.c.l.b16 %v8153
        %v8888 = vunpack.c.h.b16 %v8153
        %v8889 = vunpack.c.l.b16 %v8154
        %v8890 = vunpack.c.h.b16 %v8154
        %v8891 = vunpack.c.l.b16 %v8155
        %v8892 = vunpack.c.h.b16 %v8155
        %v8893 = vunpack.c.l.b16 %v8156
        %v8894 = vunpack.c.h.b16 %v8156
        %v8895 = vunpack.c.l.b16 %v8157
        %v8896 = vunpack.c.h.b16 %v8157
        %v8897 = vunpack.c.l.b16 %v8158
        %v8898 = vunpack.c.h.b16 %v8158
        %v8899 = vunpack.c.l.b16 %v8159
        %v8900 = vunpack.c.h.b16 %v8159
        %v8901 = vunpack.c.l.b16 %v8160
        %v8902 = vunpack.c.h.b16 %v8160
        %v8903 = vunpack.c.l.b16 %v8161
        %v8904 = vunpack.c.h.b16 %v8161
        %v8905 = vunpack.c.l.b16 %v8162
        %v8906 = vunpack.c.h.b16 %v8162
        %v8907 = vunpack.c.l.b16 %v8163
        %v8908 = vunpack.c.h.b16 %v8163
        %v8909 = vunpack.c.l.b16 %v8164
        %v8910 = vunpack.c.h.b16 %v8164
        %v8911 = vunpack.c.l.b16 %v8165
        %v8912 = vunpack.c.h.b16 %v8165
        %v8913 = vunpack.c.l.b16 %v8166
        %v8914 = vunpack.c.h.b16 %v8166
        %v8915 = vunpack.c.l.b16 %v8167
        %v8916 = vunpack.c.h.b16 %v8167
        %v8917 = vunpack.c.l.b16 %v8168
        %v8918 = vunpack.c.h.b16 %v8168
        %v8919 = vunpack.c.l.b16 %v8169
        %v8920 = vunpack.c.h.b16 %v8169
        %v8921 = vunpack.c.l.b16 %v8170
        %v8922 = vunpack.c.h.b16 %v8170
        %v8923 = vunpack.c.l.b16 %v8171
        %v8924 = vunpack.c.h.b16 %v8171
        %v8925 = vunpack.c.l.b16 %v8172
        %v8926 = vunpack.c.h.b16 %v8172
        %v8927 = vunpack.c.l.b16 %v8173
        %v8928 = vunpack.c.h.b16 %v8173
        %v8929 = vunpack.c.l.b16 %v8174
        %v8930 = vunpack.c.h.b16 %v8174
        %v8931 = vunpack.c.l.b16 %v8175
        %v8932 = vunpack.c.h.b16 %v8175
        %v8933 = vunpack.c.l.b16 %v8176
        %v8934 = vunpack.c.h.b16 %v8176
        %v8935 = vunpack.c.l.b16 %v8177
        %v8936 = vunpack.c.h.b16 %v8177
        %v8937 = vunpack.c.l.b16 %v8178
        %v8938 = vunpack.c.h.b16 %v8178
        %v8939 = vunpack.c.l.b16 %v8179
        %v8940 = vunpack.c.h.b16 %v8179
        %v8941 = vunpack.c.l.b16 %v8180
        %v8942 = vunpack.c.h.b16 %v8180
        %v8943 = vunpack.c.l.b16 %v8181
        %v8944 = vunpack.c.h.b16 %v8181
        %v8945 = vunpack.c.l.b16 %v8182
        %v8946 = vunpack.c.h.b16 %v8182
        %v8947 = vunpack.c.l.b16 %v8183
        %v8948 = vunpack.c.h.b16 %v8183
        %v8949 = vunpack.c.l.b16 %v8184
        %v8950 = vunpack.c.h.b16 %v8184
        %v8951 = vunpack.c.l.b16 %v8185
        %v8952 = vunpack.c.h.b16 %v8185
        %v8953 = vunpack.c.l.b16 %v8186
        %v8954 = vunpack.c.h.b16 %v8186
        %v8955 = vunpack.c.l.b16 %v8187
        %v8956 = vunpack.c.h.b16 %v8187
        %v8957 = vunpack.c.l.b16 %v8188
        %v8958 = vunpack.c.h.b16 %v8188
        %v8959 = vunpack.c.l.b16 %v8189
        %v8960 = vunpack.c.h.b16 %v8189
        %v8961 = vunpack.c.l.b16 %v8190
        %v8962 = vunpack.c.h.b16 %v8190
        %v8963 = vunpack.c.l.b16 %v8191
        %v8964 = vunpack.c.h.b16 %v8191
        %v8965 = vunpack.c.l.b16 %v8192
        %v8966 = vunpack.c.h.b16 %v8192
        %v8967 = vunpack.c.l.b16 %v8193
        %v8968 = vunpack.c.h.b16 %v8193
        %v8969 = vunpack.c.l.b16 %v8194
        %v8970 = vunpack.c.h.b16 %v8194
        %v8971 = vunpack.c.l.b16 %v8195
        %v8972 = vunpack.c.h.b16 %v8195
        %v8973 = vunpack.c.l.b16 %v8196
        %v8974 = vunpack.c.h.b16 %v8196
        %v8975 = vunpack.c.l.b16 %v8197
        %v8976 = vunpack.c.h.b16 %v8197
        %v8977 = vunpack.c.l.b16 %v8198
        %v8978 = vunpack.c.h.b16 %v8198
        %v8979 = vunpack.c.l.b16 %v8199
        %v8980 = vunpack.c.h.b16 %v8199
        %v8981 = vunpack.c.l.b16 %v8200
        %v8982 = vunpack.c.h.b16 %v8200
        %v8983 = vunpack.c.l.b16 %v8201
        %v8984 = vunpack.c.h.b16 %v8201
        %v8985 = vunpack.c.l.b16 %v8202
        %v8986 = vunpack.c.h.b16 %v8202
        %v8987 = vunpack.c.l.b16 %v8203
        %v8988 = vunpack.c.h.b16 %v8203
        %v8989 = vunpack.c.l.b16 %v8204
        %v8990 = vunpack.c.h.b16 %v8204
        %v8991 = vunpack.c.l.b16 %v8205
        %v8992 = vunpack.c.h.b16 %v8205
        %v8993 = vunpack.c.l.b16 %v8206
        %v8994 = vunpack.c.h.b16 %v8206
        %v8995 = vunpack.c.l.b16 %v8207
        %v8996 = vunpack.c.h.b16 %v8207
        %v8997 = vunpack.c.l.b16 %v8208
        %v8998 = vunpack.c.h.b16 %v8208
        %v8999 = vunpack.c.l.b16 %v8209
        %v9000 = vunpack.c.h.b16 %v8209
        %v9001 = vunpack.c.l.b16 %v8210
        %v9002 = vunpack.c.h.b16 %v8210
        %v9003 = vunpack.c.l.b16 %v8211
        %v9004 = vunpack.c.h.b16 %v8211
        %v9005 = vunpack.c.l.b16 %v8212
        %v9006 = vunpack.c.h.b16 %v8212
        %v9007 = vunpack.c.l.b16 %v8213
        %v9008 = vunpack.c.h.b16 %v8213
        %v9009 = vunpack.c.l.b16 %v8214
        %v9010 = vunpack.c.h.b16 %v8214
        %v9011 = vunpack.c.l.b16 %v8215
        %v9012 = vunpack.c.h.b16 %v8215
        %v9013 = vunpack.c.l.b16 %v8216
        %v9014 = vunpack.c.h.b16 %v8216
        %v9015 = vunpack.c.l.b16 %v8217
        %v9016 = vunpack.c.h.b16 %v8217
        %v9017 = vunpack.c.l.b16 %v8218
        %v9018 = vunpack.c.h.b16 %v8218
        %v9019 = vunpack.c.l.b16 %v8219
        %v9020 = vunpack.c.h.b16 %v8219
        %v9021 = vunpack.c.l.b16 %v8220
        %v9022 = vunpack.c.h.b16 %v8220
        %v9023 = vunpack.c.l.b16 %v8221
        %v9024 = vunpack.c.h.b16 %v8221
        %v9025 = vunpack.c.l.b16 %v8222
        %v9026 = vunpack.c.h.b16 %v8222
        %v9027 = vunpack.c.l.b16 %v8223
        %v9028 = vunpack.c.h.b16 %v8223
        %v9029 = vunpack.c.l.b16 %v8224
        %v9030 = vunpack.c.h.b16 %v8224
        %v9031 = vunpack.c.l.b16 %v8225
        %v9032 = vunpack.c.h.b16 %v8225
        %v9033 = vunpack.c.l.b16 %v8226
        %v9034 = vunpack.c.h.b16 %v8226
        %v9035 = vunpack.c.l.b16 %v8227
        %v9036 = vunpack.c.h.b16 %v8227
        %v9037 = vunpack.c.l.b16 %v8228
        %v9038 = vunpack.c.h.b16 %v8228
        %v9039 = vunpack.c.l.b16 %v8229
        %v9040 = vunpack.c.h.b16 %v8229
        %v9041 = vunpack.c.l.b16 %v8230
        %v9042 = vunpack.c.h.b16 %v8230
        %v9043 = vunpack.c.l.b16 %v8231
        %v9044 = vunpack.c.h.b16 %v8231
        %v9045 = vunpack.c.l.b16 %v8232
        %v9046 = vunpack.c.h.b16 %v8232
        %v9047 = vunpack.c.l.b16 %v8233
        %v9048 = vunpack.c.h.b16 %v8233
        %v9049 = vunpack.c.l.b16 %v8234
        %v9050 = vunpack.c.h.b16 %v8234
        %v9051 = vunpack.c.l.b16 %v8235
        %v9052 = vunpack.c.h.b16 %v8235
        %v9053 = vunpack.c.l.b16 %v8236
        %v9054 = vunpack.c.h.b16 %v8236
        %v9055 = vunpack.c.l.b16 %v8237
        %v9056 = vunpack.c.h.b16 %v8237
        %v9057 = vunpack.c.l.b16 %v8238
        %v9058 = vunpack.c.h.b16 %v8238
        %v9059 = vunpack.c.l.b16 %v8239
        %v9060 = vunpack.c.h.b16 %v8239
        %v9061 = vunpack.c.l.b16 %v8240
        %v9062 = vunpack.c.h.b16 %v8240
        %v9063 = vunpack.c.l.b16 %v8241
        %v9064 = vunpack.c.h.b16 %v8241
        %v9065 = vunpack.c.l.b16 %v8242
        %v9066 = vunpack.c.h.b16 %v8242
        %v9067 = vunpack.c.l.b16 %v8243
        %v9068 = vunpack.c.h.b16 %v8243
        %v9069 = vunpack.c.l.b16 %v8244
        %v9070 = vunpack.c.h.b16 %v8244
        %v9071 = vunpack.c.l.b16 %v8245
        %v9072 = vunpack.c.h.b16 %v8245
        %v9073 = vunpack.c.l.b16 %v8246
        %v9074 = vunpack.c.h.b16 %v8246
        %v9075 = vunpack.c.l.b16 %v8247
        %v9076 = vunpack.c.h.b16 %v8247
        %v9077 = vunpack.c.l.b16 %v8248
        %v9078 = vunpack.c.h.b16 %v8248
        %v9079 = vunpack.c.l.b16 %v8249
        %v9080 = vunpack.c.h.b16 %v8249
        %v9081 = vunpack.c.l.b16 %v8250
        %v9082 = vunpack.c.h.b16 %v8250
        %v9083 = vunpack.c.l.b16 %v8251
        %v9084 = vunpack.c.h.b16 %v8251
        %v9085 = vunpack.c.l.b16 %v8252
        %v9086 = vunpack.c.h.b16 %v8252
        %v9087 = vunpack.c.l.b16 %v8253
        %v9088 = vunpack.c.h.b16 %v8253
        %v9089 = vunpack.c.l.b16 %v8254
        %v9090 = vunpack.c.h.b16 %v8254
        %v9091 = vunpack.c.l.b16 %v8255
        %v9092 = vunpack.c.h.b16 %v8255
        %v9093 = vunpack.c.l.b16 %v8256
        %v9094 = vunpack.c.h.b16 %v8256
        %v9095 = vunpack.c.l.b16 %v8257
        %v9096 = vunpack.c.h.b16 %v8257
        %v9097 = vunpack.c.l.b16 %v8258
        %v9098 = vunpack.c.h.b16 %v8258
        %v9099 = vunpack.c.l.b16 %v8259
        %v9100 = vunpack.c.h.b16 %v8259
        %v9101 = vunpack.c.l.b16 %v8260
        %v9102 = vunpack.c.h.b16 %v8260
        %v9103 = vunpack.c.l.b16 %v8261
        %v9104 = vunpack.c.h.b16 %v8261
        %v9105 = vunpack.c.l.b16 %v8262
        %v9106 = vunpack.c.h.b16 %v8262
        %v9107 = vunpack.c.l.b16 %v8263
        %v9108 = vunpack.c.h.b16 %v8263
        %v9109 = vunpack.c.l.b16 %v8264
        %v9110 = vunpack.c.h.b16 %v8264
        %v9111 = vunpack.c.l.b16 %v8265
        %v9112 = vunpack.c.h.b16 %v8265
        %v9113 = vunpack.c.l.b16 %v8266
        %v9114 = vunpack.c.h.b16 %v8266
        %v9115 = vunpack.c.l.b16 %v8267
        %v9116 = vunpack.c.h.b16 %v8267
        %v9117 = vunpack.c.l.b16 %v8268
        %v9118 = vunpack.c.h.b16 %v8268
        %v9119 = vunpack.c.l.b16 %v8269
        %v9120 = vunpack.c.h.b16 %v8269
        %v9121 = vunpack.c.l.b16 %v8270
        %v9122 = vunpack.c.h.b16 %v8270
        %v9123 = vunpack.c.l.b16 %v8271
        %v9124 = vunpack.c.h.b16 %v8271
        %v9125 = vunpack.c.l.b16 %v8272
        %v9126 = vunpack.c.h.b16 %v8272
        %v9127 = vunpack.c.l.b16 %v8273
        %v9128 = vunpack.c.h.b16 %v8273
        %v9129 = vunpack.c.l.b16 %v8274
        %v9130 = vunpack.c.h.b16 %v8274
        %v9131 = vunpack.c.l.b16 %v8275
        %v9132 = vunpack.c.h.b16 %v8275
        %v9133 = vunpack.c.l.b16 %v8276
        %v9134 = vunpack.c.h.b16 %v8276
        %v9135 = vunpack.c.l.b16 %v8277
        %v9136 = vunpack.c.h.b16 %v8277
        %v9137 = vunpack.c.l.b16 %v8278
        %v9138 = vunpack.c.h.b16 %v8278
        %v9139 = vunpack.c.l.b16 %v8279
        %v9140 = vunpack.c.h.b16 %v8279
        %v9141 = vunpack.c.l.b16 %v8280
        %v9142 = vunpack.c.h.b16 %v8280
        %v9143 = vunpack.c.l.b16 %v8281
        %v9144 = vunpack.c.h.b16 %v8281
        %v9145 = vunpack.c.l.b16 %v8282
        %v9146 = vunpack.c.h.b16 %v8282
        %v9147 = vpack.c.b16 %v8573, %v8571
        %v9148 = vpack.c.b16 %v8574, %v8572
        %v9149 = vpack.c.b16 %v8577, %v8575
        %v9150 = vpack.c.b16 %v8578, %v8576
        %v9151 = vpack.c.b16 %v8581, %v8579
        %v9152 = vpack.c.b16 %v8582, %v8580
        %v9153 = vpack.c.b16 %v8585, %v8583
        %v9154 = vpack.c.b16 %v8586, %v8584
        %v9155 = vpack.c.b16 %v8589, %v8587
        %v9156 = vpack.c.b16 %v8590, %v8588
        %v9157 = vpack.c.b16 %v8593, %v8591
        %v9158 = vpack.c.b16 %v8594, %v8592
        %v9159 = vpack.c.b16 %v8597, %v8595
        %v9160 = vpack.c.b16 %v8598, %v8596
        %v9161 = vpack.c.b16 %v8601, %v8599
        %v9162 = vpack.c.b16 %v8602, %v8600
        %v9163 = vpack.c.b16 %v8605, %v8603
        %v9164 = vpack.c.b16 %v8606, %v8604
        %v9165 = vpack.c.b16 %v8609, %v8607
        %v9166 = vpack.c.b16 %v8610, %v8608
        %v9167 = vpack.c.b16 %v8613, %v8611
        %v9168 = vpack.c.b16 %v8614, %v8612
        %v9169 = vpack.c.b16 %v8617, %v8615
        %v9170 = vpack.c.b16 %v8618, %v8616
        %v9171 = vpack.c.b16 %v8621, %v8619
        %v9172 = vpack.c.b16 %v8622, %v8620
        %v9173 = vpack.c.b16 %v8625, %v8623
        %v9174 = vpack.c.b16 %v8626, %v8624
        %v9175 = vpack.c.b16 %v8629, %v8627
        %v9176 = vpack.c.b16 %v8630, %v8628
        %v9177 = vpack.c.b16 %v8633, %v8631
        %v9178 = vpack.c.b16 %v8634, %v8632
        %v9179 = vpack.c.b16 %v8637, %v8635
        %v9180 = vpack.c.b16 %v8638, %v8636
        %v9181 = vpack.c.b16 %v8641, %v8639
        %v9182 = vpack.c.b16 %v8642, %v8640
        %v9183 = vpack.c.b16 %v8645, %v8643
        %v9184 = vpack.c.b16 %v8646, %v8644
        %v9185 = vpack.c.b16 %v8649, %v8647
        %v9186 = vpack.c.b16 %v8650, %v8648
        %v9187 = vpack.c.b16 %v8653, %v8651
        %v9188 = vpack.c.b16 %v8654, %v8652
        %v9189 = vpack.c.b16 %v8657, %v8655
        %v9190 = vpack.c.b16 %v8658, %v8656
        %v9191 = vpack.c.b16 %v8661, %v8659
        %v9192 = vpack.c.b16 %v8662, %v8660
        %v9193 = vpack.c.b16 %v8665, %v8663
        %v9194 = vpack.c.b16 %v8666, %v8664
        %v9195 = vpack.c.b16 %v8669, %v8667
        %v9196 = vpack.c.b16 %v8670, %v8668
        %v9197 = vpack.c.b16 %v8673, %v8671
        %v9198 = vpack.c.b16 %v8674, %v8672
        %v9199 = vpack.c.b16 %v8677, %v8675
        %v9200 = vpack.c.b16 %v8678, %v8676
        %v9201 = vpack.c.b16 %v8681, %v8679
        %v9202 = vpack.c.b16 %v8682, %v8680
        %v9203 = vpack.c.b16 %v8685, %v8683
        %v9204 = vpack.c.b16 %v8686, %v8684
        %v9205 = vpack.c.b16 %v8689, %v8687
        %v9206 = vpack.c.b16 %v8690, %v8688
        %v9207 = vpack.c.b16 %v8693, %v8691
        %v9208 = vpack.c.b16 %v8694, %v8692
        %v9209 = vpack.c.b16 %v8697, %v8695
        %v9210 = vpack.c.b16 %v8698, %v8696
        %v9211 = vpack.c.b16 %v8701, %v8699
        %v9212 = vpack.c.b16 %v8702, %v8700
        %v9213 = vpack.c.b16 %v8705, %v8703
        %v9214 = vpack.c.b16 %v8706, %v8704
        %v9215 = vpack.c.b16 %v8709, %v8707
        %v9216 = vpack.c.b16 %v8710, %v8708
        %v9217 = vpack.c.b16 %v8713, %v8711
        %v9218 = vpack.c.b16 %v8714, %v8712
        %v9219 = vpack.c.b16 %v8717, %v8715
        %v9220 = vpack.c.b16 %v8718, %v8716
        %v9221 = vpack.c.b16 %v8721, %v8719
        %v9222 = vpack.c.b16 %v8722, %v8720
        %v9223 = vpack.c.b16 %v8725, %v8723
        %v9224 = vpack.c.b16 %v8726, %v8724
        %v9225 = vpack.c.b16 %v8729, %v8727
        %v9226 = vpack.c.b16 %v8730, %v8728
        %v9227 = vpack.c.b16 %v8733, %v8731
        %v9228 = vpack.c.b16 %v8734, %v8732
        %v9229 = vpack.c.b16 %v8737, %v8735
        %v9230 = vpack.c.b16 %v8738, %v8736
        %v9231 = vpack.c.b16 %v8741, %v8739
        %v9232 = vpack.c.b16 %v8742, %v8740
        %v9233 = vpack.c.b16 %v8745, %v8743
        %v9234 = vpack.c.b16 %v8746, %v8744
        %v9235 = vpack.c.b16 %v8749, %v8747
        %v9236 = vpack.c.b16 %v8750, %v8748
        %v9237 = vpack.c.b16 %v8753, %v8751
        %v9238 = vpack.c.b16 %v8754, %v8752
        %v9239 = vpack.c.b16 %v8757, %v8755
        %v9240 = vpack.c.b16 %v8758, %v8756
        %v9241 = vpack.c.b16 %v8761, %v8759
        %v9242 = vpack.c.b16 %v8762, %v8760
        %v9243 = vpack.c.b16 %v8765, %v8763
        %v9244 = vpack.c.b16 %v8766, %v8764
        %v9245 = vpack.c.b16 %v8769, %v8767
        %v9246 = vpack.c.b16 %v8770, %v8768
        %v9247 = vpack.c.b16 %v8773, %v8771
        %v9248 = vpack.c.b16 %v8774, %v8772
        %v9249 = vpack.c.b16 %v8777, %v8775
        %v9250 = vpack.c.b16 %v8778, %v8776
        %v9251 = vpack.c.b16 %v8781, %v8779
        %v9252 = vpack.c.b16 %v8782, %v8780
        %v9253 = vpack.c.b16 %v8785, %v8783
        %v9254 = vpack.c.b16 %v8786, %v8784
        %v9255 = vpack.c.b16 %v8789, %v8787
        %v9256 = vpack.c.b16 %v8790, %v8788
        %v9257 = vpack.c.b16 %v8793, %v8791
        %v9258 = vpack.c.b16 %v8794, %v8792
        %v9259 = vpack.c.b16 %v8797, %v8795
        %v9260 = vpack.c.b16 %v8798, %v8796
        %v9261 = vpack.c.b16 %v8801, %v8799
        %v9262 = vpack.c.b16 %v8802, %v8800
        %v9263 = vpack.c.b16 %v8805, %v8803
        %v9264 = vpack.c.b16 %v8806, %v8804
        %v9265 = vpack.c.b16 %v8809, %v8807
        %v9266 = vpack.c.b16 %v8810, %v8808
        %v9267 = vpack.c.b16 %v8813, %v8811
        %v9268 = vpack.c.b16 %v8814, %v8812
        %v9269 = vpack.c.b16 %v8817, %v8815
        %v9270 = vpack.c.b16 %v8818, %v8816
        %v9271 = vpack.c.b16 %v8821, %v8819
        %v9272 = vpack.c.b16 %v8822, %v8820
        %v9273 = vpack.c.b16 %v8825, %v8823
        %v9274 = vpack.c.b16 %v8826, %v8824
        %v9275 = vpack.c.b16 %v8829, %v8827
        %v9276 = vpack.c.b16 %v8830, %v8828
        %v9277 = vpack.c.b16 %v8833, %v8831
        %v9278 = vpack.c.b16 %v8834, %v8832
        %v9279 = vpack.c.b16 %v8837, %v8835
        %v9280 = vpack.c.b16 %v8838, %v8836
        %v9281 = vpack.c.b16 %v8841, %v8839
        %v9282 = vpack.c.b16 %v8842, %v8840
        %v9283 = vpack.c.b16 %v8845, %v8843
        %v9284 = vpack.c.b16 %v8846, %v8844
        %v9285 = vpack.c.b16 %v8849, %v8847
        %v9286 = vpack.c.b16 %v8850, %v8848
        %v9287 = vpack.c.b16 %v8853, %v8851
        %v9288 = vpack.c.b16 %v8854, %v8852
        %v9289 = vpack.c.b16 %v8857, %v8855
        %v9290 = vpack.c.b16 %v8858, %v8856
        %v9291 = vpack.c.b16 %v8861, %v8859
        %v9292 = vpack.c.b16 %v8862, %v8860
        %v9293 = vpack.c.b16 %v8865, %v8863
        %v9294 = vpack.c.b16 %v8866, %v8864
        %v9295 = vpack.c.b16 %v8869, %v8867
        %v9296 = vpack.c.b16 %v8870, %v8868
        %v9297 = vpack.c.b16 %v8873, %v8871
        %v9298 = vpack.c.b16 %v8874, %v8872
        %v9299 = vpack.c.b16 %v8877, %v8875
        %v9300 = vpack.c.b16 %v8878, %v8876
        %v9301 = vpack.c.b16 %v8881, %v8879
        %v9302 = vpack.c.b16 %v8882, %v8880
        %v9303 = vpack.c.b16 %v8885, %v8883
        %v9304 = vpack.c.b16 %v8886, %v8884
        %v9305 = vpack.c.b16 %v8889, %v8887
        %v9306 = vpack.c.b16 %v8890, %v8888
        %v9307 = vpack.c.b16 %v8893, %v8891
        %v9308 = vpack.c.b16 %v8894, %v8892
        %v9309 = vpack.c.b16 %v8897, %v8895
        %v9310 = vpack.c.b16 %v8898, %v8896
        %v9311 = vpack.c.b16 %v8901, %v8899
        %v9312 = vpack.c.b16 %v8902, %v8900
        %v9313 = vpack.c.b16 %v8905, %v8903
        %v9314 = vpack.c.b16 %v8906, %v8904
        %v9315 = vpack.c.b16 %v8909, %v8907
        %v9316 = vpack.c.b16 %v8910, %v8908
        %v9317 = vpack.c.b16 %v8913, %v8911
        %v9318 = vpack.c.b16 %v8914, %v8912
        %v9319 = vpack.c.b16 %v8917, %v8915
        %v9320 = vpack.c.b16 %v8918, %v8916
        %v9321 = vpack.c.b16 %v8921, %v8919
        %v9322 = vpack.c.b16 %v8922, %v8920
        %v9323 = vpack.c.b16 %v8925, %v8923
        %v9324 = vpack.c.b16 %v8926, %v8924
        %v9325 = vpack.c.b16 %v8929, %v8927
        %v9326 = vpack.c.b16 %v8930, %v8928
        %v9327 = vpack.c.b16 %v8933, %v8931
        %v9328 = vpack.c.b16 %v8934, %v8932
        %v9329 = vpack.c.b16 %v8937, %v8935
        %v9330 = vpack.c.b16 %v8938, %v8936
        %v9331 = vpack.c.b16 %v8941, %v8939
        %v9332 = vpack.c.b16 %v8942, %v8940
        %v9333 = vpack.c.b16 %v8945, %v8943
        %v9334 = vpack.c.b16 %v8946, %v8944
        %v9335 = vpack.c.b16 %v8949, %v8947
        %v9336 = vpack.c.b16 %v8950, %v8948
        %v9337 = vpack.c.b16 %v8953, %v8951
        %v9338 = vpack.c.b16 %v8954, %v8952
        %v9339 = vpack.c.b16 %v8957, %v8955
        %v9340 = vpack.c.b16 %v8958, %v8956
        %v9341 = vpack.c.b16 %v8961, %v8959
        %v9342 = vpack.c.b16 %v8962, %v8960
        %v9343 = vpack.c.b16 %v8965, %v8963
        %v9344 = vpack.c.b16 %v8966, %v8964
        %v9345 = vpack.c.b16 %v8969, %v8967
        %v9346 = vpack.c.b16 %v8970, %v8968
        %v9347 = vpack.c.b16 %v8973, %v8971
        %v9348 = vpack.c.b16 %v8974, %v8972
        %v9349 = vpack.c.b16 %v8977, %v8975
        %v9350 = vpack.c.b16 %v8978, %v8976
        %v9351 = vpack.c.b16 %v8981, %v8979
        %v9352 = vpack.c.b16 %v8982, %v8980
        %v9353 = vpack.c.b16 %v8985, %v8983
        %v9354 = vpack.c.b16 %v8986, %v8984
        %v9355 = vpack.c.b16 %v8989, %v8987
        %v9356 = vpack.c.b16 %v8990, %v8988
        %v9357 = vpack.c.b16 %v8993, %v8991
        %v9358 = vpack.c.b16 %v8994, %v8992
        %v9359 = vpack.c.b16 %v8997, %v8995
        %v9360 = vpack.c.b16 %v8998, %v8996
        %v9361 = vpack.c.b16 %v9001, %v8999
        %v9362 = vpack.c.b16 %v9002, %v9000
        %v9363 = vpack.c.b16 %v9005, %v9003
        %v9364 = vpack.c.b16 %v9006, %v9004
        %v9365 = vpack.c.b16 %v9009, %v9007
        %v9366 = vpack.c.b16 %v9010, %v9008
        %v9367 = vpack.c.b16 %v9013, %v9011
        %v9368 = vpack.c.b16 %v9014, %v9012
        %v9369 = vpack.c.b16 %v9017, %v9015
        %v9370 = vpack.c.b16 %v9018, %v9016
        %v9371 = vpack.c.b16 %v9021, %v9019
        %v9372 = vpack.c.b16 %v9022, %v9020
        %v9373 = vpack.c.b16 %v9025, %v9023
        %v9374 = vpack.c.b16 %v9026, %v9024
        %v9375 = vpack.c.b16 %v9029, %v9027
        %v9376 = vpack.c.b16 %v9030, %v9028
        %v9377 = vpack.c.b16 %v9033, %v9031
        %v9378 = vpack.c.b16 %v9034, %v9032
        %v9379 = vpack.c.b16 %v9037, %v9035
        %v9380 = vpack.c.b16 %v9038, %v9036
        %v9381 = vpack.c.b16 %v9041, %v9039
        %v9382 = vpack.c.b16 %v9042, %v9040
        %v9383 = vpack.c.b16 %v9045, %v9043
        %v9384 = vpack.c.b16 %v9046, %v9044
        %v9385 = vpack.c.b16 %v9049, %v9047
        %v9386 = vpack.c.b16 %v9050, %v9048
        %v9387 = vpack.c.b16 %v9053, %v9051
        %v9388 = vpack.c.b16 %v9054, %v9052
        %v9389 = vpack.c.b16 %v9057, %v9055
        %v9390 = vpack.c.b16 %v9058, %v9056
        %v9391 = vpack.c.b16 %v9061, %v9059
        %v9392 = vpack.c.b16 %v9062, %v9060
        %v9393 = vpack.c.b16 %v9065, %v9063
        %v9394 = vpack.c.b16 %v9066, %v9064
        %v9395 = vpack.c.b16 %v9069, %v9067
        %v9396 = vpack.c.b16 %v9070, %v9068
        %v9397 = vpack.c.b16 %v9073, %v9071
        %v9398 = vpack.c.b16 %v9074, %v9072
        %v9399 = vpack.c.b16 %v9077, %v9075
        %v9400 = vpack.c.b16 %v9078, %v9076
        %v9401 = vpack.c.b16 %v9081, %v9079
        %v9402 = vpack.c.b16 %v9082, %v9080
        %v9403 = vpack.c.b16 %v9085, %v9083
        %v9404 = vpack.c.b16 %v9086, %v9084
        %v9405 = vpack.c.b16 %v9089, %v9087
        %v9406 = vpack.c.b16 %v9090, %v9088
        %v9407 = vpack.c.b16 %v9093, %v9091
        %v9408 = vpack.c.b16 %v9094, %v9092
        %v9409 = vpack.c.b16 %v9097, %v9095
        %v9410 = vpack.c.b16 %v9098, %v9096
        %v9411 = vpack.c.b16 %v9101, %v9099
        %v9412 = vpack.c.b16 %v9102, %v9100
        %v9413 = vpack.c.b16 %v9105, %v9103
        %v9414 = vpack.c.b16 %v9106, %v9104
        %v9415 = vpack.c.b16 %v9109, %v9107
        %v9416 = vpack.c.b16 %v9110, %v9108
        %v9417 = vpack.c.b16 %v9113, %v9111
        %v9418 = vpack.c.b16 %v9114, %v9112
        %v9419 = vpack.c.b16 %v9117, %v9115
        %v9420 = vpack.c.b16 %v9118, %v9116
        %v9421 = vpack.c.b16 %v9121, %v9119
        %v9422 = vpack.c.b16 %v9122, %v9120
        %v9423 = vpack.c.b16 %v9125, %v9123
        %v9424 = vpack.c.b16 %v9126, %v9124
        %v9425 = vpack.c.b16 %v9129, %v9127
        %v9426 = vpack.c.b16 %v9130, %v9128
        %v9427 = vpack.c.b16 %v9133, %v9131
        %v9428 = vpack.c.b16 %v9134, %v9132
        %v9429 = vpack.c.b16 %v9137, %v9135
        %v9430 = vpack.c.b16 %v9138, %v9136
        %v9431 = vpack.c.b16 %v9141, %v9139
        %v9432 = vpack.c.b16 %v9142, %v9140
        %v9433 = vpack.c.b16 %v9145, %v9143
        %v9434 = vpack.c.b16 %v9146, %v9144
        %9723 = vmatprep.subr.bf16.mxu0 %v9162
        %9724 = vmatpush1.bf16.msra.mxu0 %v9161
        %9725 = vmatprep.subr.bf16.mxu0 %v9160
        %9726 = vmatpush1.bf16.msra.mxu0 %v9159
        %9727 = vmatprep.subr.bf16.mxu0 %v9158
        %9728 = vmatpush1.bf16.msra.mxu0 %v9157
        %9729 = vmatprep.subr.bf16.mxu0 %v9156
        %9730 = vmatpush1.bf16.msra.mxu0 %v9155
        %9731 = vmatprep.subr.bf16.mxu0 %v9154
        %9732 = vmatpush1.bf16.msra.mxu0 %v9153
        %9733 = vmatprep.subr.bf16.mxu0 %v9152
        %9734 = vmatpush1.bf16.msra.mxu0 %v9151
        %9735 = vmatprep.subr.bf16.mxu0 %v9150
        %9736 = vmatpush1.bf16.msra.mxu0 %v9149
        %9737 = vmatprep.subr.bf16.mxu0 %v9148
        %9738 = vmatpush1.bf16.msra.mxu0 %v9147
        %9739 = vmatprep.subr.bf16.mxu0 %v9178
        %9740 = vmatpush2.bf16.msra.mxu0 %v9177
        %9741 = vmatprep.subr.bf16.mxu0 %v9176
        %9742 = vmatpush2.bf16.msra.mxu0 %v9175
        %9743 = vmatprep.subr.bf16.mxu0 %v9174
        %9744 = vmatpush2.bf16.msra.mxu0 %v9173
        %9745 = vmatprep.subr.bf16.mxu0 %v9172
        %9746 = vmatpush2.bf16.msra.mxu0 %v9171
        %9747 = vmatprep.subr.bf16.mxu0 %v9170
        %9748 = vmatpush2.bf16.msra.mxu0 %v9169
        %9749 = vmatprep.subr.bf16.mxu0 %v9168
        %9750 = vmatpush2.bf16.msra.mxu0 %v9167
        %9751 = vmatprep.subr.bf16.mxu0 %v9166
        %9752 = vmatpush2.bf16.msra.mxu0 %v9165
        %9753 = vmatprep.subr.bf16.mxu0 %v9164
        %9754 = vmatpush2.bf16.msra.mxu0 %v9163
        %9755 = vmatprep.mubr.bf16.mxu0 %v7978
        %9756 = vmatmul.mubr.bf16.gmra.mxu0 %v7977
        %v9757 = vpop.f32.mrf.mxu0
        %v9758 = vadd.f32 0.0, %v9757
        %v9759 = vpop.f32.mrf.mxu0
        %v9760 = vadd.f32 0.0, %v9759
        %v9761 = vpop.f32.mrf.mxu0
        %v9762 = vpop.f32.mrf.mxu0
        %9763 = vdwg.mxu0
        %9764 = vmatprep.subr.bf16.mxu0 %v9194
        %9765 = vmatpush1.bf16.msra.mxu0 %v9193
        %9766 = vmatprep.subr.bf16.mxu0 %v9192
        %9767 = vmatpush1.bf16.msra.mxu0 %v9191
        %9768 = vmatprep.subr.bf16.mxu0 %v9190
        %9769 = vmatpush1.bf16.msra.mxu0 %v9189
        %9770 = vmatprep.subr.bf16.mxu0 %v9188
        %9771 = vmatpush1.bf16.msra.mxu0 %v9187
        %9772 = vmatprep.subr.bf16.mxu0 %v9186
        %9773 = vmatpush1.bf16.msra.mxu0 %v9185
        %9774 = vmatprep.subr.bf16.mxu0 %v9184
        %9775 = vmatpush1.bf16.msra.mxu0 %v9183
        %9776 = vmatprep.subr.bf16.mxu0 %v9182
        %9777 = vmatpush1.bf16.msra.mxu0 %v9181
        %9778 = vmatprep.subr.bf16.mxu0 %v9180
        %9779 = vmatpush1.bf16.msra.mxu0 %v9179
        %9780 = vmatprep.subr.bf16.mxu0 %v9210
        %9781 = vmatpush2.bf16.msra.mxu0 %v9209
        %9782 = vmatprep.subr.bf16.mxu0 %v9208
        %9783 = vmatpush2.bf16.msra.mxu0 %v9207
        %9784 = vmatprep.subr.bf16.mxu0 %v9206
        %9785 = vmatpush2.bf16.msra.mxu0 %v9205
        %9786 = vmatprep.subr.bf16.mxu0 %v9204
        %9787 = vmatpush2.bf16.msra.mxu0 %v9203
        %9788 = vmatprep.subr.bf16.mxu0 %v9202
        %9789 = vmatpush2.bf16.msra.mxu0 %v9201
        %9790 = vmatprep.subr.bf16.mxu0 %v9200
        %9791 = vmatpush2.bf16.msra.mxu0 %v9199
        %9792 = vmatprep.subr.bf16.mxu0 %v9198
        %9793 = vmatpush2.bf16.msra.mxu0 %v9197
        %9794 = vmatprep.subr.bf16.mxu0 %v9196
        %9795 = vmatpush2.bf16.msra.mxu0 %v9195
        %9796 = vmatprep.mubr.bf16.mxu0 %v7980
        %9797 = vmatmul.mubr.bf16.gmra.mxu0 %v7979
        %v9798 = vpop.f32.mrf.mxu0
        %v9799 = vadd.f32 %v9758, %v9798
        %v9800 = vpop.f32.mrf.mxu0
        %v9801 = vadd.f32 %v9760, %v9800
        %v9802 = vpop.f32.mrf.mxu0
        %v9803 = vpop.f32.mrf.mxu0
        %9804 = vdwg.mxu0
        %9805 = vmatprep.subr.bf16.mxu0 %v9226
        %9806 = vmatpush1.bf16.msra.mxu0 %v9225
        %9807 = vmatprep.subr.bf16.mxu0 %v9224
        %9808 = vmatpush1.bf16.msra.mxu0 %v9223
        %9809 = vmatprep.subr.bf16.mxu0 %v9222
        %9810 = vmatpush1.bf16.msra.mxu0 %v9221
        %9811 = vmatprep.subr.bf16.mxu0 %v9220
        %9812 = vmatpush1.bf16.msra.mxu0 %v9219
        %9813 = vmatprep.subr.bf16.mxu0 %v9218
        %9814 = vmatpush1.bf16.msra.mxu0 %v9217
        %9815 = vmatprep.subr.bf16.mxu0 %v9216
        %9816 = vmatpush1.bf16.msra.mxu0 %v9215
        %9817 = vmatprep.subr.bf16.mxu0 %v9214
        %9818 = vmatpush1.bf16.msra.mxu0 %v9213
        %9819 = vmatprep.subr.bf16.mxu0 %v9212
        %9820 = vmatpush1.bf16.msra.mxu0 %v9211
        %9821 = vmatprep.subr.bf16.mxu0 %v9242
        %9822 = vmatpush2.bf16.msra.mxu0 %v9241
        %9823 = vmatprep.subr.bf16.mxu0 %v9240
        %9824 = vmatpush2.bf16.msra.mxu0 %v9239
        %9825 = vmatprep.subr.bf16.mxu0 %v9238
        %9826 = vmatpush2.bf16.msra.mxu0 %v9237
        %9827 = vmatprep.subr.bf16.mxu0 %v9236
        %9828 = vmatpush2.bf16.msra.mxu0 %v9235
        %9829 = vmatprep.subr.bf16.mxu0 %v9234
        %9830 = vmatpush2.bf16.msra.mxu0 %v9233
        %9831 = vmatprep.subr.bf16.mxu0 %v9232
        %9832 = vmatpush2.bf16.msra.mxu0 %v9231
        %9833 = vmatprep.subr.bf16.mxu0 %v9230
        %9834 = vmatpush2.bf16.msra.mxu0 %v9229
        %9835 = vmatprep.subr.bf16.mxu0 %v9228
        %9836 = vmatpush2.bf16.msra.mxu0 %v9227
        %9837 = vmatprep.mubr.bf16.mxu0 %v7982
        %9838 = vmatmul.mubr.bf16.gmra.mxu0 %v7981
        %v9839 = vpop.f32.mrf.mxu0
        %v9840 = vadd.f32 %v9799, %v9839
        %v9841 = vpop.f32.mrf.mxu0
        %v9842 = vadd.f32 %v9801, %v9841
        %v9843 = vpop.f32.mrf.mxu0
        %v9844 = vpop.f32.mrf.mxu0
        %9845 = vdwg.mxu0
        %9846 = vmatprep.subr.bf16.mxu0 %v9258
        %9847 = vmatpush1.bf16.msra.mxu0 %v9257
        %9848 = vmatprep.subr.bf16.mxu0 %v9256
        %9849 = vmatpush1.bf16.msra.mxu0 %v9255
        %9850 = vmatprep.subr.bf16.mxu0 %v9254
        %9851 = vmatpush1.bf16.msra.mxu0 %v9253
        %9852 = vmatprep.subr.bf16.mxu0 %v9252
        %9853 = vmatpush1.bf16.msra.mxu0 %v9251
        %9854 = vmatprep.subr.bf16.mxu0 %v9250
        %9855 = vmatpush1.bf16.msra.mxu0 %v9249
        %9856 = vmatprep.subr.bf16.mxu0 %v9248
        %9857 = vmatpush1.bf16.msra.mxu0 %v9247
        %9858 = vmatprep.subr.bf16.mxu0 %v9246
        %9859 = vmatpush1.bf16.msra.mxu0 %v9245
        %9860 = vmatprep.subr.bf16.mxu0 %v9244
        %9861 = vmatpush1.bf16.msra.mxu0 %v9243
        %9862 = vmatprep.subr.bf16.mxu0 %v9274
        %9863 = vmatpush2.bf16.msra.mxu0 %v9273
        %9864 = vmatprep.subr.bf16.mxu0 %v9272
        %9865 = vmatpush2.bf16.msra.mxu0 %v9271
        %9866 = vmatprep.subr.bf16.mxu0 %v9270
        %9867 = vmatpush2.bf16.msra.mxu0 %v9269
        %9868 = vmatprep.subr.bf16.mxu0 %v9268
        %9869 = vmatpush2.bf16.msra.mxu0 %v9267
        %9870 = vmatprep.subr.bf16.mxu0 %v9266
        %9871 = vmatpush2.bf16.msra.mxu0 %v9265
        %9872 = vmatprep.subr.bf16.mxu0 %v9264
        %9873 = vmatpush2.bf16.msra.mxu0 %v9263
        %9874 = vmatprep.subr.bf16.mxu0 %v9262
        %9875 = vmatpush2.bf16.msra.mxu0 %v9261
        %9876 = vmatprep.subr.bf16.mxu0 %v9260
        %9877 = vmatpush2.bf16.msra.mxu0 %v9259
        %9878 = vmatprep.mubr.bf16.mxu0 %v7984
        %9879 = vmatmul.mubr.bf16.gmra.mxu0 %v7983
        %v9880 = vpop.f32.mrf.mxu0
        %v9881 = vadd.f32 %v9840, %v9880
        %v9882 = vpop.f32.mrf.mxu0
        %v9883 = vadd.f32 %v9842, %v9882
        %v9884 = vpop.f32.mrf.mxu0
        %v9885 = vpop.f32.mrf.mxu0
        %9886 = vdwg.mxu0
        %9887 = vmatprep.subr.bf16.mxu0 %v9290
        %9888 = vmatpush1.bf16.msra.mxu0 %v9289
        %9889 = vmatprep.subr.bf16.mxu0 %v9288
        %9890 = vmatpush1.bf16.msra.mxu0 %v9287
        %9891 = vmatprep.subr.bf16.mxu0 %v9286
        %9892 = vmatpush1.bf16.msra.mxu0 %v9285
        %9893 = vmatprep.subr.bf16.mxu0 %v9284
        %9894 = vmatpush1.bf16.msra.mxu0 %v9283
        %9895 = vmatprep.subr.bf16.mxu0 %v9282
        %9896 = vmatpush1.bf16.msra.mxu0 %v9281
        %9897 = vmatprep.subr.bf16.mxu0 %v9280
        %9898 = vmatpush1.bf16.msra.mxu0 %v9279
        %9899 = vmatprep.subr.bf16.mxu0 %v9278
        %9900 = vmatpush1.bf16.msra.mxu0 %v9277
        %9901 = vmatprep.subr.bf16.mxu0 %v9276
        %9902 = vmatpush1.bf16.msra.mxu0 %v9275
        %9903 = vmatprep.subr.bf16.mxu0 %v9306
        %9904 = vmatpush2.bf16.msra.mxu0 %v9305
        %9905 = vmatprep.subr.bf16.mxu0 %v9304
        %9906 = vmatpush2.bf16.msra.mxu0 %v9303
        %9907 = vmatprep.subr.bf16.mxu0 %v9302
        %9908 = vmatpush2.bf16.msra.mxu0 %v9301
        %9909 = vmatprep.subr.bf16.mxu0 %v9300
        %9910 = vmatpush2.bf16.msra.mxu0 %v9299
        %9911 = vmatprep.subr.bf16.mxu0 %v9298
        %9912 = vmatpush2.bf16.msra.mxu0 %v9297
        %9913 = vmatprep.subr.bf16.mxu0 %v9296
        %9914 = vmatpush2.bf16.msra.mxu0 %v9295
        %9915 = vmatprep.subr.bf16.mxu0 %v9294
        %9916 = vmatpush2.bf16.msra.mxu0 %v9293
        %9917 = vmatprep.subr.bf16.mxu0 %v9292
        %9918 = vmatpush2.bf16.msra.mxu0 %v9291
        %9919 = vmatprep.mubr.bf16.mxu0 %v7986
        %9920 = vmatmul.mubr.bf16.gmra.mxu0 %v7985
        %v9921 = vpop.f32.mrf.mxu0
        %v9922 = vadd.f32 %v9881, %v9921
        %v9923 = vpop.f32.mrf.mxu0
        %v9924 = vadd.f32 %v9883, %v9923
        %v9925 = vpop.f32.mrf.mxu0
        %v9926 = vpop.f32.mrf.mxu0
        %9927 = vdwg.mxu0
        %9928 = vmatprep.subr.bf16.mxu0 %v9322
        %9929 = vmatpush1.bf16.msra.mxu0 %v9321
        %9930 = vmatprep.subr.bf16.mxu0 %v9320
        %9931 = vmatpush1.bf16.msra.mxu0 %v9319
        %9932 = vmatprep.subr.bf16.mxu0 %v9318
        %9933 = vmatpush1.bf16.msra.mxu0 %v9317
        %9934 = vmatprep.subr.bf16.mxu0 %v9316
        %9935 = vmatpush1.bf16.msra.mxu0 %v9315
        %9936 = vmatprep.subr.bf16.mxu0 %v9314
        %9937 = vmatpush1.bf16.msra.mxu0 %v9313
        %9938 = vmatprep.subr.bf16.mxu0 %v9312
        %9939 = vmatpush1.bf16.msra.mxu0 %v9311
        %9940 = vmatprep.subr.bf16.mxu0 %v9310
        %9941 = vmatpush1.bf16.msra.mxu0 %v9309
        %9942 = vmatprep.subr.bf16.mxu0 %v9308
        %9943 = vmatpush1.bf16.msra.mxu0 %v9307
        %9944 = vmatprep.subr.bf16.mxu0 %v9338
        %9945 = vmatpush2.bf16.msra.mxu0 %v9337
        %9946 = vmatprep.subr.bf16.mxu0 %v9336
        %9947 = vmatpush2.bf16.msra.mxu0 %v9335
        %9948 = vmatprep.subr.bf16.mxu0 %v9334
        %9949 = vmatpush2.bf16.msra.mxu0 %v9333
        %9950 = vmatprep.subr.bf16.mxu0 %v9332
        %9951 = vmatpush2.bf16.msra.mxu0 %v9331
        %9952 = vmatprep.subr.bf16.mxu0 %v9330
        %9953 = vmatpush2.bf16.msra.mxu0 %v9329
        %9954 = vmatprep.subr.bf16.mxu0 %v9328
        %9955 = vmatpush2.bf16.msra.mxu0 %v9327
        %9956 = vmatprep.subr.bf16.mxu0 %v9326
        %9957 = vmatpush2.bf16.msra.mxu0 %v9325
        %9958 = vmatprep.subr.bf16.mxu0 %v9324
        %9959 = vmatpush2.bf16.msra.mxu0 %v9323
        %9960 = vmatprep.mubr.bf16.mxu0 %v7988
        %9961 = vmatmul.mubr.bf16.gmra.mxu0 %v7987
        %v9962 = vpop.f32.mrf.mxu0
        %v9963 = vadd.f32 %v9922, %v9962
        %v9964 = vpop.f32.mrf.mxu0
        %v9965 = vadd.f32 %v9924, %v9964
        %v9966 = vpop.f32.mrf.mxu0
        %v9967 = vpop.f32.mrf.mxu0
        %9968 = vdwg.mxu0
        %9969 = vmatprep.subr.bf16.mxu0 %v9354
        %9970 = vmatpush1.bf16.msra.mxu0 %v9353
        %9971 = vmatprep.subr.bf16.mxu0 %v9352
        %9972 = vmatpush1.bf16.msra.mxu0 %v9351
        %9973 = vmatprep.subr.bf16.mxu0 %v9350
        %9974 = vmatpush1.bf16.msra.mxu0 %v9349
        %9975 = vmatprep.subr.bf16.mxu0 %v9348
        %9976 = vmatpush1.bf16.msra.mxu0 %v9347
        %9977 = vmatprep.subr.bf16.mxu0 %v9346
        %9978 = vmatpush1.bf16.msra.mxu0 %v9345
        %9979 = vmatprep.subr.bf16.mxu0 %v9344
        %9980 = vmatpush1.bf16.msra.mxu0 %v9343
        %9981 = vmatprep.subr.bf16.mxu0 %v9342
        %9982 = vmatpush1.bf16.msra.mxu0 %v9341
        %9983 = vmatprep.subr.bf16.mxu0 %v9340
        %9984 = vmatpush1.bf16.msra.mxu0 %v9339
        %9985 = vmatprep.subr.bf16.mxu0 %v9370
        %9986 = vmatpush2.bf16.msra.mxu0 %v9369
        %9987 = vmatprep.subr.bf16.mxu0 %v9368
        %9988 = vmatpush2.bf16.msra.mxu0 %v9367
        %9989 = vmatprep.subr.bf16.mxu0 %v9366
        %9990 = vmatpush2.bf16.msra.mxu0 %v9365
        %9991 = vmatprep.subr.bf16.mxu0 %v9364
        %9992 = vmatpush2.bf16.msra.mxu0 %v9363
        %9993 = vmatprep.subr.bf16.mxu0 %v9362
        %9994 = vmatpush2.bf16.msra.mxu0 %v9361
        %9995 = vmatprep.subr.bf16.mxu0 %v9360
        %9996 = vmatpush2.bf16.msra.mxu0 %v9359
        %9997 = vmatprep.subr.bf16.mxu0 %v9358
        %9998 = vmatpush2.bf16.msra.mxu0 %v9357
        %9999 = vmatprep.subr.bf16.mxu0 %v9356
        %10000 = vmatpush2.bf16.msra.mxu0 %v9355
        %10001 = vmatprep.mubr.bf16.mxu0 %v7990
        %10002 = vmatmul.mubr.bf16.gmra.mxu0 %v7989
        %v10003 = vpop.f32.mrf.mxu0
        %v10004 = vadd.f32 %v9963, %v10003
        %v10005 = vpop.f32.mrf.mxu0
        %v10006 = vadd.f32 %v9965, %v10005
        %v10007 = vpop.f32.mrf.mxu0
        %v10008 = vpop.f32.mrf.mxu0
        %10009 = vdwg.mxu0
        %10010 = vmatprep.subr.bf16.mxu0 %v9386
        %10011 = vmatpush1.bf16.msra.mxu0 %v9385
        %10012 = vmatprep.subr.bf16.mxu0 %v9384
        %10013 = vmatpush1.bf16.msra.mxu0 %v9383
        %10014 = vmatprep.subr.bf16.mxu0 %v9382
        %10015 = vmatpush1.bf16.msra.mxu0 %v9381
        %10016 = vmatprep.subr.bf16.mxu0 %v9380
        %10017 = vmatpush1.bf16.msra.mxu0 %v9379
        %10018 = vmatprep.subr.bf16.mxu0 %v9378
        %10019 = vmatpush1.bf16.msra.mxu0 %v9377
        %10020 = vmatprep.subr.bf16.mxu0 %v9376
        %10021 = vmatpush1.bf16.msra.mxu0 %v9375
        %10022 = vmatprep.subr.bf16.mxu0 %v9374
        %10023 = vmatpush1.bf16.msra.mxu0 %v9373
        %10024 = vmatprep.subr.bf16.mxu0 %v9372
        %10025 = vmatpush1.bf16.msra.mxu0 %v9371
        %10026 = vmatprep.subr.bf16.mxu0 %v9402
        %10027 = vmatpush2.bf16.msra.mxu0 %v9401
        %10028 = vmatprep.subr.bf16.mxu0 %v9400
        %10029 = vmatpush2.bf16.msra.mxu0 %v9399
        %10030 = vmatprep.subr.bf16.mxu0 %v9398
        %10031 = vmatpush2.bf16.msra.mxu0 %v9397
        %10032 = vmatprep.subr.bf16.mxu0 %v9396
        %10033 = vmatpush2.bf16.msra.mxu0 %v9395
        %10034 = vmatprep.subr.bf16.mxu0 %v9394
        %10035 = vmatpush2.bf16.msra.mxu0 %v9393
        %10036 = vmatprep.subr.bf16.mxu0 %v9392
        %10037 = vmatpush2.bf16.msra.mxu0 %v9391
        %10038 = vmatprep.subr.bf16.mxu0 %v9390
        %10039 = vmatpush2.bf16.msra.mxu0 %v9389
        %10040 = vmatprep.subr.bf16.mxu0 %v9388
        %10041 = vmatpush2.bf16.msra.mxu0 %v9387
        %10042 = vmatprep.mubr.bf16.mxu0 %v7992
        %10043 = vmatmul.mubr.bf16.gmra.mxu0 %v7991
        %v10044 = vpop.f32.mrf.mxu0
        %v10045 = vadd.f32 %v10004, %v10044
        %v10046 = vpop.f32.mrf.mxu0
        %v10047 = vadd.f32 %v10006, %v10046
        %v10048 = vpop.f32.mrf.mxu0
        %v10049 = vpop.f32.mrf.mxu0
        %10050 = vdwg.mxu0
        %10051 = vmatprep.subr.bf16.mxu0 %v9418
        %10052 = vmatpush1.bf16.msra.mxu0 %v9417
        %10053 = vmatprep.subr.bf16.mxu0 %v9416
        %10054 = vmatpush1.bf16.msra.mxu0 %v9415
        %10055 = vmatprep.subr.bf16.mxu0 %v9414
        %10056 = vmatpush1.bf16.msra.mxu0 %v9413
        %10057 = vmatprep.subr.bf16.mxu0 %v9412
        %10058 = vmatpush1.bf16.msra.mxu0 %v9411
        %10059 = vmatprep.subr.bf16.mxu0 %v9410
        %10060 = vmatpush1.bf16.msra.mxu0 %v9409
        %10061 = vmatprep.subr.bf16.mxu0 %v9408
        %10062 = vmatpush1.bf16.msra.mxu0 %v9407
        %10063 = vmatprep.subr.bf16.mxu0 %v9406
        %10064 = vmatpush1.bf16.msra.mxu0 %v9405
        %10065 = vmatprep.subr.bf16.mxu0 %v9404
        %10066 = vmatpush1.bf16.msra.mxu0 %v9403
        %10067 = vmatprep.subr.bf16.mxu0 %v9434
        %10068 = vmatpush2.bf16.msra.mxu0 %v9433
        %10069 = vmatprep.subr.bf16.mxu0 %v9432
        %10070 = vmatpush2.bf16.msra.mxu0 %v9431
        %10071 = vmatprep.subr.bf16.mxu0 %v9430
        %10072 = vmatpush2.bf16.msra.mxu0 %v9429
        %10073 = vmatprep.subr.bf16.mxu0 %v9428
        %10074 = vmatpush2.bf16.msra.mxu0 %v9427
        %10075 = vmatprep.subr.bf16.mxu0 %v9426
        %10076 = vmatpush2.bf16.msra.mxu0 %v9425
        %10077 = vmatprep.subr.bf16.mxu0 %v9424
        %10078 = vmatpush2.bf16.msra.mxu0 %v9423
        %10079 = vmatprep.subr.bf16.mxu0 %v9422
        %10080 = vmatpush2.bf16.msra.mxu0 %v9421
        %10081 = vmatprep.subr.bf16.mxu0 %v9420
        %10082 = vmatpush2.bf16.msra.mxu0 %v9419
        %10083 = vmatprep.mubr.bf16.mxu0 %v7994
        %10084 = vmatmul.mubr.bf16.gmra.mxu0 %v7993
        %v10085 = vpop.f32.mrf.mxu0
        %v10086 = vadd.f32 %v10045, %v10085
        %v10087 = vpop.f32.mrf.mxu0
        %v10088 = vadd.f32 %v10047, %v10087
        %v10089 = vpop.f32.mrf.mxu0
        %v10090 = vpop.f32.mrf.mxu0
        %10091 = vdwg.mxu0
        %v10093 = vrot.slane %v10086, 1
        %10094 = vrot.lane.b32.xlu0 %v10093, 96
        %v10095 = vpop.permute.xlu0 %10094
        %v10097 = vadd.f32 %v10086, %v10095
        %v10098 = vrot.slane %v10086, 2
        %10099 = vrot.lane.b32.xlu0 %v10098, 64
        %v10100 = vpop.permute.xlu0 %10099
        %v10102 = vadd.f32 %v10097, %v10100
        %v10103 = vrot.slane %v10086, 3
        %10104 = vrot.lane.b32.xlu0 %v10103, 32
        %v10105 = vpop.permute.xlu0 %10104
        %v10107 = vadd.f32 %v10102, %v10105
        %v10109 = vrot.slane %v10088, 4
        %v10111 = vadd.f32 %v10107, %v10109
        %v10112 = vrot.slane %v10088, 5
        %10113 = vrot.lane.b32.xlu0 %v10112, 96
        %v10114 = vpop.permute.xlu0 %10113
        %v10116 = vadd.f32 %v10111, %v10114
        %v10117 = vrot.slane %v10088, 6
        %10118 = vrot.lane.b32.xlu0 %v10117, 64
        %v10119 = vpop.permute.xlu0 %10118
        %v10121 = vadd.f32 %v10116, %v10119
        %v10122 = vrot.slane %v10088, 7
        %10123 = vrot.lane.b32.xlu0 %v10122, 32
        %v10124 = vpop.permute.xlu0 %10123
        %v10126 = vadd.f32 %v10121, %v10124
        %v10127 = vtanh.pop %v10126
        %vm10128 = vcmask 253952
        %10129 = vst.msk [vmem:[%s216] sm:$0x1] %vm10128, %v10127
        %s10130 = sand.u32 %s137, 1
        %s10131 = scalar_lea.sflag [#allocation5], %s10130
        %s10132 = sand.u32 %s137, 1
        %s10133 = scalar_lea.vmem [#allocation4], %s10132
        // Predicated region
        $region41: #{cnet_forward.1} parent=39 // pred_check
          %p10134 = pneg %p147
        $region42: #{cnet_forward.1} parent=39 // pred_check_branch
          %10136 = sbr.rel (%p10134) target = $region44
        $region43: #{cnet_forward.1} parent=39 // pred_region
          %s10138 = ssub.s32 16, 16
          %10139 = vsyncadd %s10131, %s10138
          %s10140 = smul.addr %s19, 16
          %s10141 = scalar_lea.hbm %s5, %s10140
          %s10143 = sshll.u32 %s10133, 4
          %s10144 = int_to_ptr.vmem [resolvable:$true] %s10143
          %10146 = dma.vmem_to_hbm [thread:$0]  %s10144, 16, %s10141, %s10131
        $region44: #{cnet_forward.1} parent=39 // pred_fallthru
          _
      $region40: #{cnet_forward.1} parent=5 // pred_fallthru
        _
      %p10147 = scmp.le.s32.totalorder 2, %s14
      // Predicated region
      $region45: #{cnet_forward.1} parent=5 // pred_check
        %p10148 = pneg %p10147
      $region46: #{cnet_forward.1} parent=5 // pred_check_branch
        %10150 = sbr.rel (%p10148) target = $region48
      $region47: #{cnet_forward.1} parent=5 // pred_region
        %s10151 = ssub.s32 %s14, 2
        // Predicated region
        $region49: #{cnet_forward.1} parent=47 // pred_check
          %p10152 = pneg %p153
        $region50: #{cnet_forward.1} parent=47 // pred_check_branch
          %10154 = sbr.rel (%p10152) target = $region52
        $region51: #{cnet_forward.1} parent=47 // pred_region
          %s10155 = sand.u32 %s138, 1
          %s10156 = scalar_lea.sflag [#allocation5], %s10155
          %s10157 = sand.u32 %s138, 1
          %s10158 = scalar_lea.vmem [#allocation4], %s10157
          %10159 = dma.done %s10156, 16
        $region52: #{cnet_forward.1} parent=47 // pred_fallthru
          _
      $region48: #{cnet_forward.1} parent=5 // pred_fallthru
        _
    $region6: #{cnet_forward.1} parent=1 // loop_footer
      %s18 = sadd.s32 1, %s14
    $region7: #{cnet_forward.1} parent=1 // loop_footer_branch
      %13 = sbr.rel target = $region3
    $region8: #{cnet_forward.1} parent=1 // loop_exit
      _
    %10160 = vsyncpa [#allocation5], 1
    %s10161 = scalar_lea.sflag [#allocation5], 1
    %10162 = vsyncpa %s10161, 1

</llo_original>
